<compile_context>
chip_gen: v7x
topology: tpu7x:2x2x1
jax: 0.10.0
libtpu: 0.0.40
codegen_flags: <defaults>
</compile_context>

<pallas_src>
import jax
import jax.numpy as jnp
from jax.experimental import pallas as pl
from jax.experimental.pallas import tpu as pltpu

EPS = 1e-5
MXU_DTYPE = jnp.float32   # set to jnp.bfloat16 for single-pass MXU (review item), small accuracy cost

_VMEM = pl.BlockSpec(memory_space=pltpu.MemorySpace.VMEM)


# ----------------------------------------------------------------------------
# fused forward kernel (specialized on batch size N; 28x28 input, hidden=588)
# ----------------------------------------------------------------------------

def _make_fused_kernel(N):
    H1, W1 = 14, 14       # layer-1 output spatial (28x28, stride 2)
    H2, W2 = 7, 7         # layer-2 / layer-3 output spatial
    CC = 12               # conv channels

    def kernel(p1_ref, w1_ref, b1_ref, g1_ref, be1_ref,
               w2_ref, b2_ref, g2_ref, be2_ref,
               w3_ref, b3_ref, g3_ref, be3_ref,
               wfr_ref, bf_ref,
               out_ref,
               act1_ref, a2_00, a2_01, a2_10, a2_11, act3_ref,
               pmid_ref, pflat_ref, ys_ref):
        a2 = ((a2_00, a2_01), (a2_10, a2_11))     # a2[row_phase][col_phase]

        def bn_sigmoid(y, g_ref, be_ref):
            # training-mode BatchNorm (biased batch variance over all rows) + sigmoid
            mu = jnp.mean(y, axis=0, keepdims=True)
            var = jnp.mean((y - mu) ** 2, axis=0, keepdims=True)
            z = g_ref[...] * ((y - mu) * jax.lax.rsqrt(var + EPS)) + be_ref[...]
            # exp on the EUP, reciprocal instead of an explicit divide
            return pl.reciprocal(1.0 + jnp.exp(-z), approx=False)

        def conv_matmul(p, w_ref, b_ref):
            return jnp.dot(p.astype(MXU_DTYPE), w_ref[...].astype(MXU_DTYPE),
                           preferred_element_type=jnp.float32) + b_ref[...]

        # Scratch VMEM is uninitialized -> zero the zero-padded activation buffers.
        for ph in range(2):
            for qw in range(2):
                a2[ph][qw][...] = jnp.zeros_like(a2[ph][qw])
        act3_ref[...] = jnp.zeros_like(act3_ref)

        # ------------------ layer 1: conv(stride 2) + BN + sigmoid ------------------
        act1_ref[...] = bn_sigmoid(conv_matmul(p1_ref[...], w1_ref, b1_ref),
                                   g1_ref, be1_ref)

        # Scatter layer-1 output (rows ordered (n, ho, wo%2, wo//2)) into the four
        # phase-decomposed, zero-padded layer-2 input buffers:
        #     a2[p][q][n, i, j, c] == pad2(act1)[n, 2*i + p, 2*j + q, c]
        for n in range(N):
            for ho in range(H1):
                base = (n * H1 + ho) * W1
                i = ho // 2 + 1                    # padded row ho+2 -> phase ho%2
                for qw in range(2):
                    blk = act1_ref[pl.ds(base + qw * (W1 // 2), W1 // 2), :]   # (7, 12)
                    a2[ho % 2][qw][n, i, 1:1 + W1 // 2, :] = blk

        # ------------------ layer 2: conv(stride 2) + BN + sigmoid ------------------
        # In-kernel im2col: stride-2 access becomes contiguous slices of the phases.
        for kh in range(5):
            for kw in range(5):
                src = a2[kh % 2][kw % 2][:, kh // 2:kh // 2 + H2,
                                         kw // 2:kw // 2 + W2, :]      # (N, 7, 7, 12)
                c0 = (kh * 5 + kw) * CC
                pmid_ref[:, :, c0:c0 + CC] = src.reshape(N * H2, W2, CC)
        for r in range(N * H2):
            pflat_ref[pl.ds(r * W2, W2), :] = pmid_ref[r]

        ys_ref[...] = bn_sigmoid(conv_matmul(pflat_ref[...], w2_ref, b2_ref),
                                 g2_ref, be2_ref)

        # Scatter layer-2 output (rows ordered (n, ho, wo)) into padded NHWC act3.
        for n in range(N):
            for ho in range(H2):
                act3_ref[n, ho + 2, 2:2 + W2, :] = \
                    ys_ref[pl.ds((n * H2 + ho) * W2, W2), :]

        # ------------------ layer 3: conv(stride 1) + BN + sigmoid ------------------
        for kh in range(5):
            for kw in range(5):
                src = act3_ref[:, kh:kh + H2, kw:kw + W2, :]            # (N, 7, 7, 12)
                c0 = (kh * 5 + kw) * CC
                pmid_ref[:, :, c0:c0 + CC] = src.reshape(N * H2, W2, CC)
        for r in range(N * H2):
            pflat_ref[pl.ds(r * W2, W2), :] = pmid_ref[r]

        ys_ref[...] = bn_sigmoid(conv_matmul(pflat_ref[...], w3_ref, b3_ref),
                                 g3_ref, be3_ref)

        # ------------------ FC over the NCHW flatten ------------------
        # logits[n, o] = sum_{hw, c} ys[n*49 + hw, c] * wfr[c, hw, o] + bf[o]
        # (wfr is the FC weight pre-permuted at init so no transpose is needed here)
        hw = H2 * W2
        noc = out_ref.shape[1]
        for n in range(N):
            blk = ys_ref[pl.ds(n * hw, hw), :]                          # (49, 12)
            acc = jnp.zeros((hw, noc), jnp.float32)
            for c in range(CC):
                acc = acc + blk[:, c:c + 1] * wfr_ref[c]                # (49, noc)
            out_ref[pl.ds(n, 1), :] = jnp.sum(acc, axis=0, keepdims=True) + bf_ref[...]

    return kernel


def _lenet_pallas_call(p1, w1m, b1, g1, be1, w2m, b2, g2, be2,
                       w3m, b3, g3, be3, wfr, bf, N, num_classes):
    H2, W2, CC = 7, 7, 12
    KK = 25 * CC
    scratch = [
        pltpu.VMEM((N * 14 * 14, CC), jnp.float32),     # layer-1 activation
        pltpu.VMEM((N, 9, 9, CC), jnp.float32),          # layer-2 input, phase (0,0)
        pltpu.VMEM((N, 9, 9, CC), jnp.float32),          # phase (0,1)
        pltpu.VMEM((N, 9, 9, CC), jnp.float32),          # phase (1,0)
        pltpu.VMEM((N, 9, 9, CC), jnp.float32),          # phase (1,1)
        pltpu.VMEM((N, 11, 11, CC), jnp.float32),        # padded layer-3 input (NHWC)
        pltpu.VMEM((N * H2, W2, KK), jnp.float32),       # im2col staging (n*ho, wo, K)
        pltpu.VMEM((N * H2 * W2, KK), jnp.float32),      # im2col (M, K) fed to the MXU
        pltpu.VMEM((N * H2 * W2, CC), jnp.float32),      # layer-2 / layer-3 activation
    ]
    return pl.pallas_call(
        _make_fused_kernel(N),
        out_shape=jax.ShapeDtypeStruct((N, num_classes), jnp.float32),
        in_specs=[_VMEM] * 15,
        out_specs=_VMEM,
        scratch_shapes=scratch,
    )(p1, w1m, b1, g1, be1, w2m, b2, g2, be2, w3m, b3, g3, be3, wfr, bf)


# ----------------------------------------------------------------------------
# parameter init (kernel-ready layouts are built once here, not per forward)
# ----------------------------------------------------------------------------

def init_conv(key, cin, cout, k):
    kw_, kb = jax.random.split(key)
    bound = 1.0 / float(cin * k * k) ** 0.5
    w = jax.random.uniform(kw_, (cout, cin, k, k), jnp.float32, -bound, bound)
    b = jax.random.uniform(kb, (cout,), jnp.float32, -bound, bound)
    return w, b


def init_linear(key, fin, fout):
    kw_, kb = jax.random.split(key)
    bound = 1.0 / float(fin) ** 0.5
    w = jax.random.uniform(kw_, (fout, fin), jnp.float32, -bound, bound)
    b = jax.random.uniform(kb, (fout,), jnp.float32, -bound, bound)
    return w, b


def _conv_w_to_kernel_layout(w):
    """torch (Cout, Cin, 5, 5) -> (25*Cin, Cout), K ordered (kh, kw, cin)."""
    cout, cin = w.shape[0], w.shape[1]
    return jnp.transpose(w, (2, 3, 1, 0)).reshape(25 * cin, cout)


def init_lenet_params(key, channel=1, hidden=588, num_classes=10):
    assert hidden == 12 * 7 * 7
    ks = jax.random.split(key, 4)
    w1, b1 = init_conv(ks[0], channel, 12, 5)
    w2, b2 = init_conv(ks[1], 12, 12, 5)
    w3, b3 = init_conv(ks[2], 12, 12, 5)
    wf, bf = init_linear(ks[3], hidden, num_classes)

    k1 = 25 * channel
    k1p = ((k1 + 7) // 8) * 8                      # pad layer-1 im2col K (25 -> 32)

    return {
        # kernel-ready conv weights, hoisted out of the forward path
        "w1m": jnp.pad(_conv_w_to_kernel_layout(w1), ((0, k1p - k1), (0, 0))),
        "w2m": _conv_w_to_kernel_layout(w2),
        "w3m": _conv_w_to_kernel_layout(w3),
        "b1": b1.reshape(1, 12), "b2": b2.reshape(1, 12), "b3": b3.reshape(1, 12),
        # BatchNorm2d defaults: weight=1, bias=0
        "g1": jnp.ones((1, 12), jnp.float32), "be1": jnp.zeros((1, 12), jnp.float32),
        "g2": jnp.ones((1, 12), jnp.float32), "be2": jnp.zeros((1, 12), jnp.float32),
        "g3": jnp.ones((1, 12), jnp.float32), "be3": jnp.zeros((1, 12), jnp.float32),
        # FC weight permuted for the in-kernel contraction: wfr[c, hw, o] = wf[o, c*49 + hw]
        "wfr": wf.reshape(num_classes, 12, 49).transpose(1, 2, 0),
        "bf": bf.reshape(1, num_classes),
    }


# ----------------------------------------------------------------------------
# full forward
# ----------------------------------------------------------------------------

@jax.jit
def lenet_forward(params, x):
    """x: (N, C, 28, 28) NCHW -> logits (N, num_classes)."""
    N, C, H, W = x.shape
    assert (H, W) == (28, 28), "hidden=588 implies a 28x28 input"
    k1p = params["w1m"].shape[0]
    num_classes = params["bf"].shape[1]

    # Layer-1 im2col is prepared once from the raw HBM input (tiny: N*196 x 32 f32).
    # Rows are ordered (n, ho, wo%2, wo//2) so the kernel can phase-split layer-1's
    # output for the stride-2 layer 2 using only contiguous slices.
    Ho, Wo = 14, 14
    xp = jnp.pad(x, ((0, 0), (0, 0), (2, 2), (2, 2)))
    cols = []
    for kh in range(5):
        for kw in range(5):
            cols.append(xp[:, :, kh:kh + 2 * Ho:2, kw:kw + 2 * Wo:2])    # (N, C, 14, 14)
    p1 = jnp.stack(cols, axis=-1)                     # (N, C, Ho, Wo, 25)
    p1 = p1.transpose(0, 2, 3, 4, 1)                  # (N, Ho, Wo, 25, C) -> K=(kh,kw,c)
    p1 = p1.reshape(N, Ho, Wo // 2, 2, 25 * C)        # wo -> (wo//2, wo%2)
    p1 = p1.transpose(0, 1, 3, 2, 4)                  # (N, Ho, wo%2, wo//2, K)
    p1 = p1.reshape(N * Ho * Wo, 25 * C)
    p1 = jnp.pad(p1, ((0, 0), (0, k1p - 25 * C))).astype(jnp.float32)

    return _lenet_pallas_call(
        p1,
        params["w1m"], params["b1"], params["g1"], params["be1"],
        params["w2m"], params["b2"], params["g2"], params["be2"],
        params["w3m"], params["b3"], params["g3"], params["be3"],
        params["wfr"], params["bf"], N, num_classes)


if __name__ == "__main__":
    key = jax.random.PRNGKey(0)
    kp, kx = jax.random.split(key)

    # hidden=588 = 12*7*7 implies a 28x28 single-channel input (e.g. MNIST).
    batch, channel, H, W = 2, 1, 28, 28
    params = init_lenet_params(kp, channel=channel, hidden=588, num_classes=10)
    x = jax.random.normal(kx, (batch, channel, H, W), jnp.float32)

    logits = lenet_forward(params, x)
    jax.block_until_ready(logits)
    assert logits.shape == (batch, 10)
    print("KERNEL_OK")
</pallas_src>

<mosaic_0001>
module attributes {stable_mosaic.version = 11 : i64} {
  func.func @kernel(%arg0: memref<392x32xf32, #tpu.memory_space<vmem>>, %arg1: memref<32x12xf32, #tpu.memory_space<vmem>>, %arg2: memref<1x12xf32, #tpu.memory_space<vmem>>, %arg3: memref<1x12xf32, #tpu.memory_space<vmem>>, %arg4: memref<1x12xf32, #tpu.memory_space<vmem>>, %arg5: memref<300x12xf32, #tpu.memory_space<vmem>>, %arg6: memref<1x12xf32, #tpu.memory_space<vmem>>, %arg7: memref<1x12xf32, #tpu.memory_space<vmem>>, %arg8: memref<1x12xf32, #tpu.memory_space<vmem>>, %arg9: memref<300x12xf32, #tpu.memory_space<vmem>>, %arg10: memref<1x12xf32, #tpu.memory_space<vmem>>, %arg11: memref<1x12xf32, #tpu.memory_space<vmem>>, %arg12: memref<1x12xf32, #tpu.memory_space<vmem>>, %arg13: memref<12x49x10xf32, #tpu.memory_space<vmem>>, %arg14: memref<1x10xf32, #tpu.memory_space<vmem>>, %arg15: memref<2x10xf32, #tpu.memory_space<vmem>>, %arg16: memref<392x12xf32, #tpu.memory_space<vmem>>, %arg17: memref<2x9x9x12xf32, #tpu.memory_space<vmem>>, %arg18: memref<2x9x9x12xf32, #tpu.memory_space<vmem>>, %arg19: memref<2x9x9x12xf32, #tpu.memory_space<vmem>>, %arg20: memref<2x9x9x12xf32, #tpu.memory_space<vmem>>, %arg21: memref<2x11x11x12xf32, #tpu.memory_space<vmem>>, %arg22: memref<14x7x300xf32, #tpu.memory_space<vmem>>, %arg23: memref<98x300xf32, #tpu.memory_space<vmem>>, %arg24: memref<98x12xf32, #tpu.memory_space<vmem>>) attributes {dimension_semantics = [], scalar_prefetch = 0 : i64, scratch_operands = 9 : i64, tpu.core_type = #tpu.core_type<tc>} {
    %cst = arith.constant 0.000000e+00 : f32
    %0 = vector.broadcast %cst : f32 to vector<2x9x9x12xf32>
    %c0 = arith.constant 0 : index
    %c0_0 = arith.constant 0 : index
    %c0_1 = arith.constant 0 : index
    %c0_2 = arith.constant 0 : index
    %1 = vector.load %arg17[%c0, %c0_0, %c0_1, %c0_2] : memref<2x9x9x12xf32, #tpu.memory_space<vmem>>, vector<2x9x9x12xf32>
    tpu.vector_store %arg17[%c0, %c0_0, %c0_1, %c0_2], %0 {strides = array<i32>} : memref<2x9x9x12xf32, #tpu.memory_space<vmem>>, vector<2x9x9x12xf32>,
    %cst_3 = arith.constant 0.000000e+00 : f32
    %2 = vector.broadcast %cst_3 : f32 to vector<2x9x9x12xf32>
    %c0_4 = arith.constant 0 : index
    %c0_5 = arith.constant 0 : index
    %c0_6 = arith.constant 0 : index
    %c0_7 = arith.constant 0 : index
    %3 = vector.load %arg18[%c0_4, %c0_5, %c0_6, %c0_7] : memref<2x9x9x12xf32, #tpu.memory_space<vmem>>, vector<2x9x9x12xf32>
    tpu.vector_store %arg18[%c0_4, %c0_5, %c0_6, %c0_7], %2 {strides = array<i32>} : memref<2x9x9x12xf32, #tpu.memory_space<vmem>>, vector<2x9x9x12xf32>,
    %cst_8 = arith.constant 0.000000e+00 : f32
    %4 = vector.broadcast %cst_8 : f32 to vector<2x9x9x12xf32>
    %c0_9 = arith.constant 0 : index
    %c0_10 = arith.constant 0 : index
    %c0_11 = arith.constant 0 : index
    %c0_12 = arith.constant 0 : index
    %5 = vector.load %arg19[%c0_9, %c0_10, %c0_11, %c0_12] : memref<2x9x9x12xf32, #tpu.memory_space<vmem>>, vector<2x9x9x12xf32>
    tpu.vector_store %arg19[%c0_9, %c0_10, %c0_11, %c0_12], %4 {strides = array<i32>} : memref<2x9x9x12xf32, #tpu.memory_space<vmem>>, vector<2x9x9x12xf32>,
    %cst_13 = arith.constant 0.000000e+00 : f32
    %6 = vector.broadcast %cst_13 : f32 to vector<2x9x9x12xf32>
    %c0_14 = arith.constant 0 : index
    %c0_15 = arith.constant 0 : index
    %c0_16 = arith.constant 0 : index
    %c0_17 = arith.constant 0 : index
    %7 = vector.load %arg20[%c0_14, %c0_15, %c0_16, %c0_17] : memref<2x9x9x12xf32, #tpu.memory_space<vmem>>, vector<2x9x9x12xf32>
    tpu.vector_store %arg20[%c0_14, %c0_15, %c0_16, %c0_17], %6 {strides = array<i32>} : memref<2x9x9x12xf32, #tpu.memory_space<vmem>>, vector<2x9x9x12xf32>,
    %cst_18 = arith.constant 0.000000e+00 : f32
    %8 = vector.broadcast %cst_18 : f32 to vector<2x11x11x12xf32>
    %c0_19 = arith.constant 0 : index
    %c0_20 = arith.constant 0 : index
    %c0_21 = arith.constant 0 : index
    %c0_22 = arith.constant 0 : index
    %9 = vector.load %arg21[%c0_19, %c0_20, %c0_21, %c0_22] : memref<2x11x11x12xf32, #tpu.memory_space<vmem>>, vector<2x11x11x12xf32>
    tpu.vector_store %arg21[%c0_19, %c0_20, %c0_21, %c0_22], %8 {strides = array<i32>} : memref<2x11x11x12xf32, #tpu.memory_space<vmem>>, vector<2x11x11x12xf32>,
    %c0_23 = arith.constant 0 : index
    %c0_24 = arith.constant 0 : index
    %10 = vector.load %arg0[%c0_23, %c0_24] : memref<392x32xf32, #tpu.memory_space<vmem>>, vector<392x32xf32>
    %c0_25 = arith.constant 0 : index
    %c0_26 = arith.constant 0 : index
    %11 = vector.load %arg1[%c0_25, %c0_26] : memref<32x12xf32, #tpu.memory_space<vmem>>, vector<32x12xf32>
    %cst_27 = arith.constant dense<0.000000e+00> : vector<392x12xf32>
    %12 = tpu.matmul %10, %11, %cst_27 {dimension_numbers = #tpu.dot_dimension_numbers<[1], [0], [0], [1], [0, 0, 1, 1], [], []>} : vector<392x32xf32>, vector<32x12xf32>, vector<392x12xf32> -> vector<392x12xf32>
    %c0_28 = arith.constant 0 : index
    %c0_29 = arith.constant 0 : index
    %13 = vector.load %arg2[%c0_28, %c0_29] : memref<1x12xf32, #tpu.memory_space<vmem>>, vector<1x12xf32>
    %14 = vector.broadcast %13 : vector<1x12xf32> to vector<392x12xf32>
    %15 = arith.addf %12, %14 : vector<392x12xf32>
    %cst_30 = arith.constant dense<0.000000e+00> : vector<12xf32>
    %16 = vector.multi_reduction <add>, %15, %cst_30 [0] : vector<392x12xf32> to vector<12xf32>
    %17 = vector.shape_cast %16 : vector<12xf32> to vector<1x12xf32>
    %cst_31 = arith.constant 3.920000e+02 : f32
    %18 = vector.broadcast %cst_31 : f32 to vector<1x12xf32>
    %19 = arith.divf %17, %18 : vector<1x12xf32>
    %20 = vector.broadcast %19 : vector<1x12xf32> to vector<392x12xf32>
    %21 = arith.subf %15, %20 : vector<392x12xf32>
    %22 = arith.mulf %21, %21 : vector<392x12xf32>
    %cst_32 = arith.constant dense<0.000000e+00> : vector<12xf32>
    %23 = vector.multi_reduction <add>, %22, %cst_32 [0] : vector<392x12xf32> to vector<12xf32>
    %24 = vector.shape_cast %23 : vector<12xf32> to vector<1x12xf32>
    %cst_33 = arith.constant 3.920000e+02 : f32
    %25 = vector.broadcast %cst_33 : f32 to vector<1x12xf32>
    %26 = arith.divf %24, %25 : vector<1x12xf32>
    %c0_34 = arith.constant 0 : index
    %c0_35 = arith.constant 0 : index
    %27 = vector.load %arg3[%c0_34, %c0_35] : memref<1x12xf32, #tpu.memory_space<vmem>>, vector<1x12xf32>
    %28 = vector.broadcast %19 : vector<1x12xf32> to vector<392x12xf32>
    %29 = arith.subf %15, %28 : vector<392x12xf32>
    %cst_36 = arith.constant 9.99999974E-6 : f32
    %30 = vector.broadcast %cst_36 : f32 to vector<1x12xf32>
    %31 = arith.addf %26, %30 : vector<1x12xf32>
    %32 = math.rsqrt %31 : vector<1x12xf32>
    %33 = vector.broadcast %32 : vector<1x12xf32> to vector<392x12xf32>
    %34 = arith.mulf %29, %33 : vector<392x12xf32>
    %35 = vector.broadcast %27 : vector<1x12xf32> to vector<392x12xf32>
    %36 = arith.mulf %35, %34 : vector<392x12xf32>
    %c0_37 = arith.constant 0 : index
    %c0_38 = arith.constant 0 : index
    %37 = vector.load %arg4[%c0_37, %c0_38] : memref<1x12xf32, #tpu.memory_space<vmem>>, vector<1x12xf32>
    %38 = vector.broadcast %37 : vector<1x12xf32> to vector<392x12xf32>
    %39 = arith.addf %36, %38 : vector<392x12xf32>
    %cst_39 = arith.constant 0.000000e+00 : f32
    %40 = vector.broadcast %cst_39 : f32 to vector<392x12xf32>
    %41 = arith.subf %40, %39 : vector<392x12xf32>
    %42 = math.exp %41 : vector<392x12xf32>
    %cst_40 = arith.constant 1.000000e+00 : f32
    %43 = vector.broadcast %cst_40 : f32 to vector<392x12xf32>
    %44 = arith.addf %43, %42 : vector<392x12xf32>
    %45 = tpu.reciprocal %44 : vector<392x12xf32> -> vector<392x12xf32>
    %c0_41 = arith.constant 0 : index
    %c0_42 = arith.constant 0 : index
    %46 = vector.load %arg16[%c0_41, %c0_42] : memref<392x12xf32, #tpu.memory_space<vmem>>, vector<392x12xf32>
    tpu.vector_store %arg16[%c0_41, %c0_42], %45 {strides = array<i32>} : memref<392x12xf32, #tpu.memory_space<vmem>>, vector<392x12xf32>,
    %c0_43 = arith.constant 0 : index
    %c0_44 = arith.constant 0 : index
    %47 = vector.load %arg16[%c0_43, %c0_44] : memref<392x12xf32, #tpu.memory_space<vmem>>, vector<7x12xf32>
    %c0_45 = arith.constant 0 : index
    %c1 = arith.constant 1 : index
    %c1_46 = arith.constant 1 : index
    %c0_47 = arith.constant 0 : index
    %48 = vector.load %arg17[%c0_45, %c1, %c1_46, %c0_47] : memref<2x9x9x12xf32, #tpu.memory_space<vmem>>, vector<1x1x7x12xf32>
    %49 = vector.shape_cast %48 : vector<1x1x7x12xf32> to vector<7x12xf32>
    %50 = vector.shape_cast %47 : vector<7x12xf32> to vector<1x1x7x12xf32>
    tpu.vector_store %arg17[%c0_45, %c1, %c1_46, %c0_47], %50 {strides = array<i32>} : memref<2x9x9x12xf32, #tpu.memory_space<vmem>>, vector<1x1x7x12xf32>,
    %c7 = arith.constant 7 : index
    %c0_48 = arith.constant 0 : index
    %51 = vector.load %arg16[%c7, %c0_48] : memref<392x12xf32, #tpu.memory_space<vmem>>, vector<7x12xf32>
    %c0_49 = arith.constant 0 : index
    %c1_50 = arith.constant 1 : index
    %c1_51 = arith.constant 1 : index
    %c0_52 = arith.constant 0 : index
    %52 = vector.load %arg18[%c0_49, %c1_50, %c1_51, %c0_52] : memref<2x9x9x12xf32, #tpu.memory_space<vmem>>, vector<1x1x7x12xf32>
    %53 = vector.shape_cast %52 : vector<1x1x7x12xf32> to vector<7x12xf32>
    %54 = vector.shape_cast %51 : vector<7x12xf32> to vector<1x1x7x12xf32>
    tpu.vector_store %arg18[%c0_49, %c1_50, %c1_51, %c0_52], %54 {strides = array<i32>} : memref<2x9x9x12xf32, #tpu.memory_space<vmem>>, vector<1x1x7x12xf32>,
    %c14 = arith.constant 14 : index
    %c0_53 = arith.constant 0 : index
    %55 = vector.load %arg16[%c14, %c0_53] : memref<392x12xf32, #tpu.memory_space<vmem>>, vector<7x12xf32>
    %c0_54 = arith.constant 0 : index
    %c1_55 = arith.constant 1 : index
    %c1_56 = arith.constant 1 : index
    %c0_57 = arith.constant 0 : index
    %56 = vector.load %arg19[%c0_54, %c1_55, %c1_56, %c0_57] : memref<2x9x9x12xf32, #tpu.memory_space<vmem>>, vector<1x1x7x12xf32>
    %57 = vector.shape_cast %56 : vector<1x1x7x12xf32> to vector<7x12xf32>
    %58 = vector.shape_cast %55 : vector<7x12xf32> to vector<1x1x7x12xf32>
    tpu.vector_store %arg19[%c0_54, %c1_55, %c1_56, %c0_57], %58 {strides = array<i32>} : memref<2x9x9x12xf32, #tpu.memory_space<vmem>>, vector<1x1x7x12xf32>,
    %c21 = arith.constant 21 : index
    %c0_58 = arith.constant 0 : index
    %59 = vector.load %arg16[%c21, %c0_58] : memref<392x12xf32, #tpu.memory_space<vmem>>, vector<7x12xf32>
    %c0_59 = arith.constant 0 : index
    %c1_60 = arith.constant 1 : index
    %c1_61 = arith.constant 1 : index
    %c0_62 = arith.constant 0 : index
    %60 = vector.load %arg20[%c0_59, %c1_60, %c1_61, %c0_62] : memref<2x9x9x12xf32, #tpu.memory_space<vmem>>, vector<1x1x7x12xf32>
    %61 = vector.shape_cast %60 : vector<1x1x7x12xf32> to vector<7x12xf32>
    %62 = vector.shape_cast %59 : vector<7x12xf32> to vector<1x1x7x12xf32>
    tpu.vector_store %arg20[%c0_59, %c1_60, %c1_61, %c0_62], %62 {strides = array<i32>} : memref<2x9x9x12xf32, #tpu.memory_space<vmem>>, vector<1x1x7x12xf32>,
    %c28 = arith.constant 28 : index
    %c0_63 = arith.constant 0 : index
    %63 = vector.load %arg16[%c28, %c0_63] : memref<392x12xf32, #tpu.memory_space<vmem>>, vector<7x12xf32>
    %c0_64 = arith.constant 0 : index
    %c2 = arith.constant 2 : index
    %c1_65 = arith.constant 1 : index
    %c0_66 = arith.constant 0 : index
    %64 = vector.load %arg17[%c0_64, %c2, %c1_65, %c0_66] : memref<2x9x9x12xf32, #tpu.memory_space<vmem>>, vector<1x1x7x12xf32>
    %65 = vector.shape_cast %64 : vector<1x1x7x12xf32> to vector<7x12xf32>
    %66 = vector.shape_cast %63 : vector<7x12xf32> to vector<1x1x7x12xf32>
    tpu.vector_store %arg17[%c0_64, %c2, %c1_65, %c0_66], %66 {strides = array<i32>} : memref<2x9x9x12xf32, #tpu.memory_space<vmem>>, vector<1x1x7x12xf32>,
    %c35 = arith.constant 35 : index
    %c0_67 = arith.constant 0 : index
    %67 = vector.load %arg16[%c35, %c0_67] : memref<392x12xf32, #tpu.memory_space<vmem>>, vector<7x12xf32>
    %c0_68 = arith.constant 0 : index
    %c2_69 = arith.constant 2 : index
    %c1_70 = arith.constant 1 : index
    %c0_71 = arith.constant 0 : index
    %68 = vector.load %arg18[%c0_68, %c2_69, %c1_70, %c0_71] : memref<2x9x9x12xf32, #tpu.memory_space<vmem>>, vector<1x1x7x12xf32>
    %69 = vector.shape_cast %68 : vector<1x1x7x12xf32> to vector<7x12xf32>
    %70 = vector.shape_cast %67 : vector<7x12xf32> to vector<1x1x7x12xf32>
    tpu.vector_store %arg18[%c0_68, %c2_69, %c1_70, %c0_71], %70 {strides = array<i32>} : memref<2x9x9x12xf32, #tpu.memory_space<vmem>>, vector<1x1x7x12xf32>,
    %c42 = arith.constant 42 : index
    %c0_72 = arith.constant 0 : index
    %71 = vector.load %arg16[%c42, %c0_72] : memref<392x12xf32, #tpu.memory_space<vmem>>, vector<7x12xf32>
    %c0_73 = arith.constant 0 : index
    %c2_74 = arith.constant 2 : index
    %c1_75 = arith.constant 1 : index
    %c0_76 = arith.constant 0 : index
    %72 = vector.load %arg19[%c0_73, %c2_74, %c1_75, %c0_76] : memref<2x9x9x12xf32, #tpu.memory_space<vmem>>, vector<1x1x7x12xf32>
    %73 = vector.shape_cast %72 : vector<1x1x7x12xf32> to vector<7x12xf32>
    %74 = vector.shape_cast %71 : vector<7x12xf32> to vector<1x1x7x12xf32>
    tpu.vector_store %arg19[%c0_73, %c2_74, %c1_75, %c0_76], %74 {strides = array<i32>} : memref<2x9x9x12xf32, #tpu.memory_space<vmem>>, vector<1x1x7x12xf32>,
    %c49 = arith.constant 49 : index
    %c0_77 = arith.constant 0 : index
    %75 = vector.load %arg16[%c49, %c0_77] : memref<392x12xf32, #tpu.memory_space<vmem>>, vector<7x12xf32>
    %c0_78 = arith.constant 0 : index
    %c2_79 = arith.constant 2 : index
    %c1_80 = arith.constant 1 : index
    %c0_81 = arith.constant 0 : index
    %76 = vector.load %arg20[%c0_78, %c2_79, %c1_80, %c0_81] : memref<2x9x9x12xf32, #tpu.memory_space<vmem>>, vector<1x1x7x12xf32>
    %77 = vector.shape_cast %76 : vector<1x1x7x12xf32> to vector<7x12xf32>
    %78 = vector.shape_cast %75 : vector<7x12xf32> to vector<1x1x7x12xf32>
    tpu.vector_store %arg20[%c0_78, %c2_79, %c1_80, %c0_81], %78 {strides = array<i32>} : memref<2x9x9x12xf32, #tpu.memory_space<vmem>>, vector<1x1x7x12xf32>,
    %c56 = arith.constant 56 : index
    %c0_82 = arith.constant 0 : index
    %79 = vector.load %arg16[%c56, %c0_82] : memref<392x12xf32, #tpu.memory_space<vmem>>, vector<7x12xf32>
    %c0_83 = arith.constant 0 : index
    %c3 = arith.constant 3 : index
    %c1_84 = arith.constant 1 : index
    %c0_85 = arith.constant 0 : index
    %80 = vector.load %arg17[%c0_83, %c3, %c1_84, %c0_85] : memref<2x9x9x12xf32, #tpu.memory_space<vmem>>, vector<1x1x7x12xf32>
    %81 = vector.shape_cast %80 : vector<1x1x7x12xf32> to vector<7x12xf32>
    %82 = vector.shape_cast %79 : vector<7x12xf32> to vector<1x1x7x12xf32>
    tpu.vector_store %arg17[%c0_83, %c3, %c1_84, %c0_85], %82 {strides = array<i32>} : memref<2x9x9x12xf32, #tpu.memory_space<vmem>>, vector<1x1x7x12xf32>,
    %c63 = arith.constant 63 : index
    %c0_86 = arith.constant 0 : index
    %83 = vector.load %arg16[%c63, %c0_86] : memref<392x12xf32, #tpu.memory_space<vmem>>, vector<7x12xf32>
    %c0_87 = arith.constant 0 : index
    %c3_88 = arith.constant 3 : index
    %c1_89 = arith.constant 1 : index
    %c0_90 = arith.constant 0 : index
    %84 = vector.load %arg18[%c0_87, %c3_88, %c1_89, %c0_90] : memref<2x9x9x12xf32, #tpu.memory_space<vmem>>, vector<1x1x7x12xf32>
    %85 = vector.shape_cast %84 : vector<1x1x7x12xf32> to vector<7x12xf32>
    %86 = vector.shape_cast %83 : vector<7x12xf32> to vector<1x1x7x12xf32>
    tpu.vector_store %arg18[%c0_87, %c3_88, %c1_89, %c0_90], %86 {strides = array<i32>} : memref<2x9x9x12xf32, #tpu.memory_space<vmem>>, vector<1x1x7x12xf32>,
    %c70 = arith.constant 70 : index
    %c0_91 = arith.constant 0 : index
    %87 = vector.load %arg16[%c70, %c0_91] : memref<392x12xf32, #tpu.memory_space<vmem>>, vector<7x12xf32>
    %c0_92 = arith.constant 0 : index
    %c3_93 = arith.constant 3 : index
    %c1_94 = arith.constant 1 : index
    %c0_95 = arith.constant 0 : index
    %88 = vector.load %arg19[%c0_92, %c3_93, %c1_94, %c0_95] : memref<2x9x9x12xf32, #tpu.memory_space<vmem>>, vector<1x1x7x12xf32>
    %89 = vector.shape_cast %88 : vector<1x1x7x12xf32> to vector<7x12xf32>
    %90 = vector.shape_cast %87 : vector<7x12xf32> to vector<1x1x7x12xf32>
    tpu.vector_store %arg19[%c0_92, %c3_93, %c1_94, %c0_95], %90 {strides = array<i32>} : memref<2x9x9x12xf32, #tpu.memory_space<vmem>>, vector<1x1x7x12xf32>,
    %c77 = arith.constant 77 : index
    %c0_96 = arith.constant 0 : index
    %91 = vector.load %arg16[%c77, %c0_96] : memref<392x12xf32, #tpu.memory_space<vmem>>, vector<7x12xf32>
    %c0_97 = arith.constant 0 : index
    %c3_98 = arith.constant 3 : index
    %c1_99 = arith.constant 1 : index
    %c0_100 = arith.constant 0 : index
    %92 = vector.load %arg20[%c0_97, %c3_98, %c1_99, %c0_100] : memref<2x9x9x12xf32, #tpu.memory_space<vmem>>, vector<1x1x7x12xf32>
    %93 = vector.shape_cast %92 : vector<1x1x7x12xf32> to vector<7x12xf32>
    %94 = vector.shape_cast %91 : vector<7x12xf32> to vector<1x1x7x12xf32>
    tpu.vector_store %arg20[%c0_97, %c3_98, %c1_99, %c0_100], %94 {strides = array<i32>} : memref<2x9x9x12xf32, #tpu.memory_space<vmem>>, vector<1x1x7x12xf32>,
    %c84 = arith.constant 84 : index
    %c0_101 = arith.constant 0 : index
    %95 = vector.load %arg16[%c84, %c0_101] : memref<392x12xf32, #tpu.memory_space<vmem>>, vector<7x12xf32>
    %c0_102 = arith.constant 0 : index
    %c4 = arith.constant 4 : index
    %c1_103 = arith.constant 1 : index
    %c0_104 = arith.constant 0 : index
    %96 = vector.load %arg17[%c0_102, %c4, %c1_103, %c0_104] : memref<2x9x9x12xf32, #tpu.memory_space<vmem>>, vector<1x1x7x12xf32>
    %97 = vector.shape_cast %96 : vector<1x1x7x12xf32> to vector<7x12xf32>
    %98 = vector.shape_cast %95 : vector<7x12xf32> to vector<1x1x7x12xf32>
    tpu.vector_store %arg17[%c0_102, %c4, %c1_103, %c0_104], %98 {strides = array<i32>} : memref<2x9x9x12xf32, #tpu.memory_space<vmem>>, vector<1x1x7x12xf32>,
    %c91 = arith.constant 91 : index
    %c0_105 = arith.constant 0 : index
    %99 = vector.load %arg16[%c91, %c0_105] : memref<392x12xf32, #tpu.memory_space<vmem>>, vector<7x12xf32>
    %c0_106 = arith.constant 0 : index
    %c4_107 = arith.constant 4 : index
    %c1_108 = arith.constant 1 : index
    %c0_109 = arith.constant 0 : index
    %100 = vector.load %arg18[%c0_106, %c4_107, %c1_108, %c0_109] : memref<2x9x9x12xf32, #tpu.memory_space<vmem>>, vector<1x1x7x12xf32>
    %101 = vector.shape_cast %100 : vector<1x1x7x12xf32> to vector<7x12xf32>
    %102 = vector.shape_cast %99 : vector<7x12xf32> to vector<1x1x7x12xf32>
    tpu.vector_store %arg18[%c0_106, %c4_107, %c1_108, %c0_109], %102 {strides = array<i32>} : memref<2x9x9x12xf32, #tpu.memory_space<vmem>>, vector<1x1x7x12xf32>,
    %c98 = arith.constant 98 : index
    %c0_110 = arith.constant 0 : index
    %103 = vector.load %arg16[%c98, %c0_110] : memref<392x12xf32, #tpu.memory_space<vmem>>, vector<7x12xf32>
    %c0_111 = arith.constant 0 : index
    %c4_112 = arith.constant 4 : index
    %c1_113 = arith.constant 1 : index
    %c0_114 = arith.constant 0 : index
    %104 = vector.load %arg19[%c0_111, %c4_112, %c1_113, %c0_114] : memref<2x9x9x12xf32, #tpu.memory_space<vmem>>, vector<1x1x7x12xf32>
    %105 = vector.shape_cast %104 : vector<1x1x7x12xf32> to vector<7x12xf32>
    %106 = vector.shape_cast %103 : vector<7x12xf32> to vector<1x1x7x12xf32>
    tpu.vector_store %arg19[%c0_111, %c4_112, %c1_113, %c0_114], %106 {strides = array<i32>} : memref<2x9x9x12xf32, #tpu.memory_space<vmem>>, vector<1x1x7x12xf32>,
    %c105 = arith.constant 105 : index
    %c0_115 = arith.constant 0 : index
    %107 = vector.load %arg16[%c105, %c0_115] : memref<392x12xf32, #tpu.memory_space<vmem>>, vector<7x12xf32>
    %c0_116 = arith.constant 0 : index
    %c4_117 = arith.constant 4 : index
    %c1_118 = arith.constant 1 : index
    %c0_119 = arith.constant 0 : index
    %108 = vector.load %arg20[%c0_116, %c4_117, %c1_118, %c0_119] : memref<2x9x9x12xf32, #tpu.memory_space<vmem>>, vector<1x1x7x12xf32>
    %109 = vector.shape_cast %108 : vector<1x1x7x12xf32> to vector<7x12xf32>
    %110 = vector.shape_cast %107 : vector<7x12xf32> to vector<1x1x7x12xf32>
    tpu.vector_store %arg20[%c0_116, %c4_117, %c1_118, %c0_119], %110 {strides = array<i32>} : memref<2x9x9x12xf32, #tpu.memory_space<vmem>>, vector<1x1x7x12xf32>,
    %c112 = arith.constant 112 : index
    %c0_120 = arith.constant 0 : index
    %111 = vector.load %arg16[%c112, %c0_120] : memref<392x12xf32, #tpu.memory_space<vmem>>, vector<7x12xf32>
    %c0_121 = arith.constant 0 : index
    %c5 = arith.constant 5 : index
    %c1_122 = arith.constant 1 : index
    %c0_123 = arith.constant 0 : index
    %112 = vector.load %arg17[%c0_121, %c5, %c1_122, %c0_123] : memref<2x9x9x12xf32, #tpu.memory_space<vmem>>, vector<1x1x7x12xf32>
    %113 = vector.shape_cast %112 : vector<1x1x7x12xf32> to vector<7x12xf32>
    %114 = vector.shape_cast %111 : vector<7x12xf32> to vector<1x1x7x12xf32>
    tpu.vector_store %arg17[%c0_121, %c5, %c1_122, %c0_123], %114 {strides = array<i32>} : memref<2x9x9x12xf32, #tpu.memory_space<vmem>>, vector<1x1x7x12xf32>,
    %c119 = arith.constant 119 : index
    %c0_124 = arith.constant 0 : index
    %115 = vector.load %arg16[%c119, %c0_124] : memref<392x12xf32, #tpu.memory_space<vmem>>, vector<7x12xf32>
    %c0_125 = arith.constant 0 : index
    %c5_126 = arith.constant 5 : index
    %c1_127 = arith.constant 1 : index
    %c0_128 = arith.constant 0 : index
    %116 = vector.load %arg18[%c0_125, %c5_126, %c1_127, %c0_128] : memref<2x9x9x12xf32, #tpu.memory_space<vmem>>, vector<1x1x7x12xf32>
    %117 = vector.shape_cast %116 : vector<1x1x7x12xf32> to vector<7x12xf32>
    %118 = vector.shape_cast %115 : vector<7x12xf32> to vector<1x1x7x12xf32>
    tpu.vector_store %arg18[%c0_125, %c5_126, %c1_127, %c0_128], %118 {strides = array<i32>} : memref<2x9x9x12xf32, #tpu.memory_space<vmem>>, vector<1x1x7x12xf32>,
    %c126 = arith.constant 126 : index
    %c0_129 = arith.constant 0 : index
    %119 = vector.load %arg16[%c126, %c0_129] : memref<392x12xf32, #tpu.memory_space<vmem>>, vector<7x12xf32>
    %c0_130 = arith.constant 0 : index
    %c5_131 = arith.constant 5 : index
    %c1_132 = arith.constant 1 : index
    %c0_133 = arith.constant 0 : index
    %120 = vector.load %arg19[%c0_130, %c5_131, %c1_132, %c0_133] : memref<2x9x9x12xf32, #tpu.memory_space<vmem>>, vector<1x1x7x12xf32>
    %121 = vector.shape_cast %120 : vector<1x1x7x12xf32> to vector<7x12xf32>
    %122 = vector.shape_cast %119 : vector<7x12xf32> to vector<1x1x7x12xf32>
    tpu.vector_store %arg19[%c0_130, %c5_131, %c1_132, %c0_133], %122 {strides = array<i32>} : memref<2x9x9x12xf32, #tpu.memory_space<vmem>>, vector<1x1x7x12xf32>,
    %c133 = arith.constant 133 : index
    %c0_134 = arith.constant 0 : index
    %123 = vector.load %arg16[%c133, %c0_134] : memref<392x12xf32, #tpu.memory_space<vmem>>, vector<7x12xf32>
    %c0_135 = arith.constant 0 : index
    %c5_136 = arith.constant 5 : index
    %c1_137 = arith.constant 1 : index
    %c0_138 = arith.constant 0 : index
    %124 = vector.load %arg20[%c0_135, %c5_136, %c1_137, %c0_138] : memref<2x9x9x12xf32, #tpu.memory_space<vmem>>, vector<1x1x7x12xf32>
    %125 = vector.shape_cast %124 : vector<1x1x7x12xf32> to vector<7x12xf32>
    %126 = vector.shape_cast %123 : vector<7x12xf32> to vector<1x1x7x12xf32>
    tpu.vector_store %arg20[%c0_135, %c5_136, %c1_137, %c0_138], %126 {strides = array<i32>} : memref<2x9x9x12xf32, #tpu.memory_space<vmem>>, vector<1x1x7x12xf32>,
    %c140 = arith.constant 140 : index
    %c0_139 = arith.constant 0 : index
    %127 = vector.load %arg16[%c140, %c0_139] : memref<392x12xf32, #tpu.memory_space<vmem>>, vector<7x12xf32>
    %c0_140 = arith.constant 0 : index
    %c6 = arith.constant 6 : index
    %c1_141 = arith.constant 1 : index
    %c0_142 = arith.constant 0 : index
    %128 = vector.load %arg17[%c0_140, %c6, %c1_141, %c0_142] : memref<2x9x9x12xf32, #tpu.memory_space<vmem>>, vector<1x1x7x12xf32>
    %129 = vector.shape_cast %128 : vector<1x1x7x12xf32> to vector<7x12xf32>
    %130 = vector.shape_cast %127 : vector<7x12xf32> to vector<1x1x7x12xf32>
    tpu.vector_store %arg17[%c0_140, %c6, %c1_141, %c0_142], %130 {strides = array<i32>} : memref<2x9x9x12xf32, #tpu.memory_space<vmem>>, vector<1x1x7x12xf32>,
    %c147 = arith.constant 147 : index
    %c0_143 = arith.constant 0 : index
    %131 = vector.load %arg16[%c147, %c0_143] : memref<392x12xf32, #tpu.memory_space<vmem>>, vector<7x12xf32>
    %c0_144 = arith.constant 0 : index
    %c6_145 = arith.constant 6 : index
    %c1_146 = arith.constant 1 : index
    %c0_147 = arith.constant 0 : index
    %132 = vector.load %arg18[%c0_144, %c6_145, %c1_146, %c0_147] : memref<2x9x9x12xf32, #tpu.memory_space<vmem>>, vector<1x1x7x12xf32>
    %133 = vector.shape_cast %132 : vector<1x1x7x12xf32> to vector<7x12xf32>
    %134 = vector.shape_cast %131 : vector<7x12xf32> to vector<1x1x7x12xf32>
    tpu.vector_store %arg18[%c0_144, %c6_145, %c1_146, %c0_147], %134 {strides = array<i32>} : memref<2x9x9x12xf32, #tpu.memory_space<vmem>>, vector<1x1x7x12xf32>,
    %c154 = arith.constant 154 : index
    %c0_148 = arith.constant 0 : index
    %135 = vector.load %arg16[%c154, %c0_148] : memref<392x12xf32, #tpu.memory_space<vmem>>, vector<7x12xf32>
    %c0_149 = arith.constant 0 : index
    %c6_150 = arith.constant 6 : index
    %c1_151 = arith.constant 1 : index
    %c0_152 = arith.constant 0 : index
    %136 = vector.load %arg19[%c0_149, %c6_150, %c1_151, %c0_152] : memref<2x9x9x12xf32, #tpu.memory_space<vmem>>, vector<1x1x7x12xf32>
    %137 = vector.shape_cast %136 : vector<1x1x7x12xf32> to vector<7x12xf32>
    %138 = vector.shape_cast %135 : vector<7x12xf32> to vector<1x1x7x12xf32>
    tpu.vector_store %arg19[%c0_149, %c6_150, %c1_151, %c0_152], %138 {strides = array<i32>} : memref<2x9x9x12xf32, #tpu.memory_space<vmem>>, vector<1x1x7x12xf32>,
    %c161 = arith.constant 161 : index
    %c0_153 = arith.constant 0 : index
    %139 = vector.load %arg16[%c161, %c0_153] : memref<392x12xf32, #tpu.memory_space<vmem>>, vector<7x12xf32>
    %c0_154 = arith.constant 0 : index
    %c6_155 = arith.constant 6 : index
    %c1_156 = arith.constant 1 : index
    %c0_157 = arith.constant 0 : index
    %140 = vector.load %arg20[%c0_154, %c6_155, %c1_156, %c0_157] : memref<2x9x9x12xf32, #tpu.memory_space<vmem>>, vector<1x1x7x12xf32>
    %141 = vector.shape_cast %140 : vector<1x1x7x12xf32> to vector<7x12xf32>
    %142 = vector.shape_cast %139 : vector<7x12xf32> to vector<1x1x7x12xf32>
    tpu.vector_store %arg20[%c0_154, %c6_155, %c1_156, %c0_157], %142 {strides = array<i32>} : memref<2x9x9x12xf32, #tpu.memory_space<vmem>>, vector<1x1x7x12xf32>,
    %c168 = arith.constant 168 : index
    %c0_158 = arith.constant 0 : index
    %143 = vector.load %arg16[%c168, %c0_158] : memref<392x12xf32, #tpu.memory_space<vmem>>, vector<7x12xf32>
    %c0_159 = arith.constant 0 : index
    %c7_160 = arith.constant 7 : index
    %c1_161 = arith.constant 1 : index
    %c0_162 = arith.constant 0 : index
    %144 = vector.load %arg17[%c0_159, %c7_160, %c1_161, %c0_162] : memref<2x9x9x12xf32, #tpu.memory_space<vmem>>, vector<1x1x7x12xf32>
    %145 = vector.shape_cast %144 : vector<1x1x7x12xf32> to vector<7x12xf32>
    %146 = vector.shape_cast %143 : vector<7x12xf32> to vector<1x1x7x12xf32>
    tpu.vector_store %arg17[%c0_159, %c7_160, %c1_161, %c0_162], %146 {strides = array<i32>} : memref<2x9x9x12xf32, #tpu.memory_space<vmem>>, vector<1x1x7x12xf32>,
    %c175 = arith.constant 175 : index
    %c0_163 = arith.constant 0 : index
    %147 = vector.load %arg16[%c175, %c0_163] : memref<392x12xf32, #tpu.memory_space<vmem>>, vector<7x12xf32>
    %c0_164 = arith.constant 0 : index
    %c7_165 = arith.constant 7 : index
    %c1_166 = arith.constant 1 : index
    %c0_167 = arith.constant 0 : index
    %148 = vector.load %arg18[%c0_164, %c7_165, %c1_166, %c0_167] : memref<2x9x9x12xf32, #tpu.memory_space<vmem>>, vector<1x1x7x12xf32>
    %149 = vector.shape_cast %148 : vector<1x1x7x12xf32> to vector<7x12xf32>
    %150 = vector.shape_cast %147 : vector<7x12xf32> to vector<1x1x7x12xf32>
    tpu.vector_store %arg18[%c0_164, %c7_165, %c1_166, %c0_167], %150 {strides = array<i32>} : memref<2x9x9x12xf32, #tpu.memory_space<vmem>>, vector<1x1x7x12xf32>,
    %c182 = arith.constant 182 : index
    %c0_168 = arith.constant 0 : index
    %151 = vector.load %arg16[%c182, %c0_168] : memref<392x12xf32, #tpu.memory_space<vmem>>, vector<7x12xf32>
    %c0_169 = arith.constant 0 : index
    %c7_170 = arith.constant 7 : index
    %c1_171 = arith.constant 1 : index
    %c0_172 = arith.constant 0 : index
    %152 = vector.load %arg19[%c0_169, %c7_170, %c1_171, %c0_172] : memref<2x9x9x12xf32, #tpu.memory_space<vmem>>, vector<1x1x7x12xf32>
    %153 = vector.shape_cast %152 : vector<1x1x7x12xf32> to vector<7x12xf32>
    %154 = vector.shape_cast %151 : vector<7x12xf32> to vector<1x1x7x12xf32>
    tpu.vector_store %arg19[%c0_169, %c7_170, %c1_171, %c0_172], %154 {strides = array<i32>} : memref<2x9x9x12xf32, #tpu.memory_space<vmem>>, vector<1x1x7x12xf32>,
    %c189 = arith.constant 189 : index
    %c0_173 = arith.constant 0 : index
    %155 = vector.load %arg16[%c189, %c0_173] : memref<392x12xf32, #tpu.memory_space<vmem>>, vector<7x12xf32>
    %c0_174 = arith.constant 0 : index
    %c7_175 = arith.constant 7 : index
    %c1_176 = arith.constant 1 : index
    %c0_177 = arith.constant 0 : index
    %156 = vector.load %arg20[%c0_174, %c7_175, %c1_176, %c0_177] : memref<2x9x9x12xf32, #tpu.memory_space<vmem>>, vector<1x1x7x12xf32>
    %157 = vector.shape_cast %156 : vector<1x1x7x12xf32> to vector<7x12xf32>
    %158 = vector.shape_cast %155 : vector<7x12xf32> to vector<1x1x7x12xf32>
    tpu.vector_store %arg20[%c0_174, %c7_175, %c1_176, %c0_177], %158 {strides = array<i32>} : memref<2x9x9x12xf32, #tpu.memory_space<vmem>>, vector<1x1x7x12xf32>,
    %c196 = arith.constant 196 : index
    %c0_178 = arith.constant 0 : index
    %159 = vector.load %arg16[%c196, %c0_178] : memref<392x12xf32, #tpu.memory_space<vmem>>, vector<7x12xf32>
    %c1_179 = arith.constant 1 : index
    %c1_180 = arith.constant 1 : index
    %c1_181 = arith.constant 1 : index
    %c0_182 = arith.constant 0 : index
    %160 = vector.load %arg17[%c1_179, %c1_180, %c1_181, %c0_182] : memref<2x9x9x12xf32, #tpu.memory_space<vmem>>, vector<1x1x7x12xf32>
    %161 = vector.shape_cast %160 : vector<1x1x7x12xf32> to vector<7x12xf32>
    %162 = vector.shape_cast %159 : vector<7x12xf32> to vector<1x1x7x12xf32>
    tpu.vector_store %arg17[%c1_179, %c1_180, %c1_181, %c0_182], %162 {strides = array<i32>} : memref<2x9x9x12xf32, #tpu.memory_space<vmem>>, vector<1x1x7x12xf32>,
    %c203 = arith.constant 203 : index
    %c0_183 = arith.constant 0 : index
    %163 = vector.load %arg16[%c203, %c0_183] : memref<392x12xf32, #tpu.memory_space<vmem>>, vector<7x12xf32>
    %c1_184 = arith.constant 1 : index
    %c1_185 = arith.constant 1 : index
    %c1_186 = arith.constant 1 : index
    %c0_187 = arith.constant 0 : index
    %164 = vector.load %arg18[%c1_184, %c1_185, %c1_186, %c0_187] : memref<2x9x9x12xf32, #tpu.memory_space<vmem>>, vector<1x1x7x12xf32>
    %165 = vector.shape_cast %164 : vector<1x1x7x12xf32> to vector<7x12xf32>
    %166 = vector.shape_cast %163 : vector<7x12xf32> to vector<1x1x7x12xf32>
    tpu.vector_store %arg18[%c1_184, %c1_185, %c1_186, %c0_187], %166 {strides = array<i32>} : memref<2x9x9x12xf32, #tpu.memory_space<vmem>>, vector<1x1x7x12xf32>,
    %c210 = arith.constant 210 : index
    %c0_188 = arith.constant 0 : index
    %167 = vector.load %arg16[%c210, %c0_188] : memref<392x12xf32, #tpu.memory_space<vmem>>, vector<7x12xf32>
    %c1_189 = arith.constant 1 : index
    %c1_190 = arith.constant 1 : index
    %c1_191 = arith.constant 1 : index
    %c0_192 = arith.constant 0 : index
    %168 = vector.load %arg19[%c1_189, %c1_190, %c1_191, %c0_192] : memref<2x9x9x12xf32, #tpu.memory_space<vmem>>, vector<1x1x7x12xf32>
    %169 = vector.shape_cast %168 : vector<1x1x7x12xf32> to vector<7x12xf32>
    %170 = vector.shape_cast %167 : vector<7x12xf32> to vector<1x1x7x12xf32>
    tpu.vector_store %arg19[%c1_189, %c1_190, %c1_191, %c0_192], %170 {strides = array<i32>} : memref<2x9x9x12xf32, #tpu.memory_space<vmem>>, vector<1x1x7x12xf32>,
    %c217 = arith.constant 217 : index
    %c0_193 = arith.constant 0 : index
    %171 = vector.load %arg16[%c217, %c0_193] : memref<392x12xf32, #tpu.memory_space<vmem>>, vector<7x12xf32>
    %c1_194 = arith.constant 1 : index
    %c1_195 = arith.constant 1 : index
    %c1_196 = arith.constant 1 : index
    %c0_197 = arith.constant 0 : index
    %172 = vector.load %arg20[%c1_194, %c1_195, %c1_196, %c0_197] : memref<2x9x9x12xf32, #tpu.memory_space<vmem>>, vector<1x1x7x12xf32>
    %173 = vector.shape_cast %172 : vector<1x1x7x12xf32> to vector<7x12xf32>
    %174 = vector.shape_cast %171 : vector<7x12xf32> to vector<1x1x7x12xf32>
    tpu.vector_store %arg20[%c1_194, %c1_195, %c1_196, %c0_197], %174 {strides = array<i32>} : memref<2x9x9x12xf32, #tpu.memory_space<vmem>>, vector<1x1x7x12xf32>,
    %c224 = arith.constant 224 : index
    %c0_198 = arith.constant 0 : index
    %175 = vector.load %arg16[%c224, %c0_198] : memref<392x12xf32, #tpu.memory_space<vmem>>, vector<7x12xf32>
    %c1_199 = arith.constant 1 : index
    %c2_200 = arith.constant 2 : index
    %c1_201 = arith.constant 1 : index
    %c0_202 = arith.constant 0 : index
    %176 = vector.load %arg17[%c1_199, %c2_200, %c1_201, %c0_202] : memref<2x9x9x12xf32, #tpu.memory_space<vmem>>, vector<1x1x7x12xf32>
    %177 = vector.shape_cast %176 : vector<1x1x7x12xf32> to vector<7x12xf32>
    %178 = vector.shape_cast %175 : vector<7x12xf32> to vector<1x1x7x12xf32>
    tpu.vector_store %arg17[%c1_199, %c2_200, %c1_201, %c0_202], %178 {strides = array<i32>} : memref<2x9x9x12xf32, #tpu.memory_space<vmem>>, vector<1x1x7x12xf32>,
    %c231 = arith.constant 231 : index
    %c0_203 = arith.constant 0 : index
    %179 = vector.load %arg16[%c231, %c0_203] : memref<392x12xf32, #tpu.memory_space<vmem>>, vector<7x12xf32>
    %c1_204 = arith.constant 1 : index
    %c2_205 = arith.constant 2 : index
    %c1_206 = arith.constant 1 : index
    %c0_207 = arith.constant 0 : index
    %180 = vector.load %arg18[%c1_204, %c2_205, %c1_206, %c0_207] : memref<2x9x9x12xf32, #tpu.memory_space<vmem>>, vector<1x1x7x12xf32>
    %181 = vector.shape_cast %180 : vector<1x1x7x12xf32> to vector<7x12xf32>
    %182 = vector.shape_cast %179 : vector<7x12xf32> to vector<1x1x7x12xf32>
    tpu.vector_store %arg18[%c1_204, %c2_205, %c1_206, %c0_207], %182 {strides = array<i32>} : memref<2x9x9x12xf32, #tpu.memory_space<vmem>>, vector<1x1x7x12xf32>,
    %c238 = arith.constant 238 : index
    %c0_208 = arith.constant 0 : index
    %183 = vector.load %arg16[%c238, %c0_208] : memref<392x12xf32, #tpu.memory_space<vmem>>, vector<7x12xf32>
    %c1_209 = arith.constant 1 : index
    %c2_210 = arith.constant 2 : index
    %c1_211 = arith.constant 1 : index
    %c0_212 = arith.constant 0 : index
    %184 = vector.load %arg19[%c1_209, %c2_210, %c1_211, %c0_212] : memref<2x9x9x12xf32, #tpu.memory_space<vmem>>, vector<1x1x7x12xf32>
    %185 = vector.shape_cast %184 : vector<1x1x7x12xf32> to vector<7x12xf32>
    %186 = vector.shape_cast %183 : vector<7x12xf32> to vector<1x1x7x12xf32>
    tpu.vector_store %arg19[%c1_209, %c2_210, %c1_211, %c0_212], %186 {strides = array<i32>} : memref<2x9x9x12xf32, #tpu.memory_space<vmem>>, vector<1x1x7x12xf32>,
    %c245 = arith.constant 245 : index
    %c0_213 = arith.constant 0 : index
    %187 = vector.load %arg16[%c245, %c0_213] : memref<392x12xf32, #tpu.memory_space<vmem>>, vector<7x12xf32>
    %c1_214 = arith.constant 1 : index
    %c2_215 = arith.constant 2 : index
    %c1_216 = arith.constant 1 : index
    %c0_217 = arith.constant 0 : index
    %188 = vector.load %arg20[%c1_214, %c2_215, %c1_216, %c0_217] : memref<2x9x9x12xf32, #tpu.memory_space<vmem>>, vector<1x1x7x12xf32>
    %189 = vector.shape_cast %188 : vector<1x1x7x12xf32> to vector<7x12xf32>
    %190 = vector.shape_cast %187 : vector<7x12xf32> to vector<1x1x7x12xf32>
    tpu.vector_store %arg20[%c1_214, %c2_215, %c1_216, %c0_217], %190 {strides = array<i32>} : memref<2x9x9x12xf32, #tpu.memory_space<vmem>>, vector<1x1x7x12xf32>,
    %c252 = arith.constant 252 : index
    %c0_218 = arith.constant 0 : index
    %191 = vector.load %arg16[%c252, %c0_218] : memref<392x12xf32, #tpu.memory_space<vmem>>, vector<7x12xf32>
    %c1_219 = arith.constant 1 : index
    %c3_220 = arith.constant 3 : index
    %c1_221 = arith.constant 1 : index
    %c0_222 = arith.constant 0 : index
    %192 = vector.load %arg17[%c1_219, %c3_220, %c1_221, %c0_222] : memref<2x9x9x12xf32, #tpu.memory_space<vmem>>, vector<1x1x7x12xf32>
    %193 = vector.shape_cast %192 : vector<1x1x7x12xf32> to vector<7x12xf32>
    %194 = vector.shape_cast %191 : vector<7x12xf32> to vector<1x1x7x12xf32>
    tpu.vector_store %arg17[%c1_219, %c3_220, %c1_221, %c0_222], %194 {strides = array<i32>} : memref<2x9x9x12xf32, #tpu.memory_space<vmem>>, vector<1x1x7x12xf32>,
    %c259 = arith.constant 259 : index
    %c0_223 = arith.constant 0 : index
    %195 = vector.load %arg16[%c259, %c0_223] : memref<392x12xf32, #tpu.memory_space<vmem>>, vector<7x12xf32>
    %c1_224 = arith.constant 1 : index
    %c3_225 = arith.constant 3 : index
    %c1_226 = arith.constant 1 : index
    %c0_227 = arith.constant 0 : index
    %196 = vector.load %arg18[%c1_224, %c3_225, %c1_226, %c0_227] : memref<2x9x9x12xf32, #tpu.memory_space<vmem>>, vector<1x1x7x12xf32>
    %197 = vector.shape_cast %196 : vector<1x1x7x12xf32> to vector<7x12xf32>
    %198 = vector.shape_cast %195 : vector<7x12xf32> to vector<1x1x7x12xf32>
    tpu.vector_store %arg18[%c1_224, %c3_225, %c1_226, %c0_227], %198 {strides = array<i32>} : memref<2x9x9x12xf32, #tpu.memory_space<vmem>>, vector<1x1x7x12xf32>,
    %c266 = arith.constant 266 : index
    %c0_228 = arith.constant 0 : index
    %199 = vector.load %arg16[%c266, %c0_228] : memref<392x12xf32, #tpu.memory_space<vmem>>, vector<7x12xf32>
    %c1_229 = arith.constant 1 : index
    %c3_230 = arith.constant 3 : index
    %c1_231 = arith.constant 1 : index
    %c0_232 = arith.constant 0 : index
    %200 = vector.load %arg19[%c1_229, %c3_230, %c1_231, %c0_232] : memref<2x9x9x12xf32, #tpu.memory_space<vmem>>, vector<1x1x7x12xf32>
    %201 = vector.shape_cast %200 : vector<1x1x7x12xf32> to vector<7x12xf32>
    %202 = vector.shape_cast %199 : vector<7x12xf32> to vector<1x1x7x12xf32>
    tpu.vector_store %arg19[%c1_229, %c3_230, %c1_231, %c0_232], %202 {strides = array<i32>} : memref<2x9x9x12xf32, #tpu.memory_space<vmem>>, vector<1x1x7x12xf32>,
    %c273 = arith.constant 273 : index
    %c0_233 = arith.constant 0 : index
    %203 = vector.load %arg16[%c273, %c0_233] : memref<392x12xf32, #tpu.memory_space<vmem>>, vector<7x12xf32>
    %c1_234 = arith.constant 1 : index
    %c3_235 = arith.constant 3 : index
    %c1_236 = arith.constant 1 : index
    %c0_237 = arith.constant 0 : index
    %204 = vector.load %arg20[%c1_234, %c3_235, %c1_236, %c0_237] : memref<2x9x9x12xf32, #tpu.memory_space<vmem>>, vector<1x1x7x12xf32>
    %205 = vector.shape_cast %204 : vector<1x1x7x12xf32> to vector<7x12xf32>
    %206 = vector.shape_cast %203 : vector<7x12xf32> to vector<1x1x7x12xf32>
    tpu.vector_store %arg20[%c1_234, %c3_235, %c1_236, %c0_237], %206 {strides = array<i32>} : memref<2x9x9x12xf32, #tpu.memory_space<vmem>>, vector<1x1x7x12xf32>,
    %c280 = arith.constant 280 : index
    %c0_238 = arith.constant 0 : index
    %207 = vector.load %arg16[%c280, %c0_238] : memref<392x12xf32, #tpu.memory_space<vmem>>, vector<7x12xf32>
    %c1_239 = arith.constant 1 : index
    %c4_240 = arith.constant 4 : index
    %c1_241 = arith.constant 1 : index
    %c0_242 = arith.constant 0 : index
    %208 = vector.load %arg17[%c1_239, %c4_240, %c1_241, %c0_242] : memref<2x9x9x12xf32, #tpu.memory_space<vmem>>, vector<1x1x7x12xf32>
    %209 = vector.shape_cast %208 : vector<1x1x7x12xf32> to vector<7x12xf32>
    %210 = vector.shape_cast %207 : vector<7x12xf32> to vector<1x1x7x12xf32>
    tpu.vector_store %arg17[%c1_239, %c4_240, %c1_241, %c0_242], %210 {strides = array<i32>} : memref<2x9x9x12xf32, #tpu.memory_space<vmem>>, vector<1x1x7x12xf32>,
    %c287 = arith.constant 287 : index
    %c0_243 = arith.constant 0 : index
    %211 = vector.load %arg16[%c287, %c0_243] : memref<392x12xf32, #tpu.memory_space<vmem>>, vector<7x12xf32>
    %c1_244 = arith.constant 1 : index
    %c4_245 = arith.constant 4 : index
    %c1_246 = arith.constant 1 : index
    %c0_247 = arith.constant 0 : index
    %212 = vector.load %arg18[%c1_244, %c4_245, %c1_246, %c0_247] : memref<2x9x9x12xf32, #tpu.memory_space<vmem>>, vector<1x1x7x12xf32>
    %213 = vector.shape_cast %212 : vector<1x1x7x12xf32> to vector<7x12xf32>
    %214 = vector.shape_cast %211 : vector<7x12xf32> to vector<1x1x7x12xf32>
    tpu.vector_store %arg18[%c1_244, %c4_245, %c1_246, %c0_247], %214 {strides = array<i32>} : memref<2x9x9x12xf32, #tpu.memory_space<vmem>>, vector<1x1x7x12xf32>,
    %c294 = arith.constant 294 : index
    %c0_248 = arith.constant 0 : index
    %215 = vector.load %arg16[%c294, %c0_248] : memref<392x12xf32, #tpu.memory_space<vmem>>, vector<7x12xf32>
    %c1_249 = arith.constant 1 : index
    %c4_250 = arith.constant 4 : index
    %c1_251 = arith.constant 1 : index
    %c0_252 = arith.constant 0 : index
    %216 = vector.load %arg19[%c1_249, %c4_250, %c1_251, %c0_252] : memref<2x9x9x12xf32, #tpu.memory_space<vmem>>, vector<1x1x7x12xf32>
    %217 = vector.shape_cast %216 : vector<1x1x7x12xf32> to vector<7x12xf32>
    %218 = vector.shape_cast %215 : vector<7x12xf32> to vector<1x1x7x12xf32>
    tpu.vector_store %arg19[%c1_249, %c4_250, %c1_251, %c0_252], %218 {strides = array<i32>} : memref<2x9x9x12xf32, #tpu.memory_space<vmem>>, vector<1x1x7x12xf32>,
    %c301 = arith.constant 301 : index
    %c0_253 = arith.constant 0 : index
    %219 = vector.load %arg16[%c301, %c0_253] : memref<392x12xf32, #tpu.memory_space<vmem>>, vector<7x12xf32>
    %c1_254 = arith.constant 1 : index
    %c4_255 = arith.constant 4 : index
    %c1_256 = arith.constant 1 : index
    %c0_257 = arith.constant 0 : index
    %220 = vector.load %arg20[%c1_254, %c4_255, %c1_256, %c0_257] : memref<2x9x9x12xf32, #tpu.memory_space<vmem>>, vector<1x1x7x12xf32>
    %221 = vector.shape_cast %220 : vector<1x1x7x12xf32> to vector<7x12xf32>
    %222 = vector.shape_cast %219 : vector<7x12xf32> to vector<1x1x7x12xf32>
    tpu.vector_store %arg20[%c1_254, %c4_255, %c1_256, %c0_257], %222 {strides = array<i32>} : memref<2x9x9x12xf32, #tpu.memory_space<vmem>>, vector<1x1x7x12xf32>,
    %c308 = arith.constant 308 : index
    %c0_258 = arith.constant 0 : index
    %223 = vector.load %arg16[%c308, %c0_258] : memref<392x12xf32, #tpu.memory_space<vmem>>, vector<7x12xf32>
    %c1_259 = arith.constant 1 : index
    %c5_260 = arith.constant 5 : index
    %c1_261 = arith.constant 1 : index
    %c0_262 = arith.constant 0 : index
    %224 = vector.load %arg17[%c1_259, %c5_260, %c1_261, %c0_262] : memref<2x9x9x12xf32, #tpu.memory_space<vmem>>, vector<1x1x7x12xf32>
    %225 = vector.shape_cast %224 : vector<1x1x7x12xf32> to vector<7x12xf32>
    %226 = vector.shape_cast %223 : vector<7x12xf32> to vector<1x1x7x12xf32>
    tpu.vector_store %arg17[%c1_259, %c5_260, %c1_261, %c0_262], %226 {strides = array<i32>} : memref<2x9x9x12xf32, #tpu.memory_space<vmem>>, vector<1x1x7x12xf32>,
    %c315 = arith.constant 315 : index
    %c0_263 = arith.constant 0 : index
    %227 = vector.load %arg16[%c315, %c0_263] : memref<392x12xf32, #tpu.memory_space<vmem>>, vector<7x12xf32>
    %c1_264 = arith.constant 1 : index
    %c5_265 = arith.constant 5 : index
    %c1_266 = arith.constant 1 : index
    %c0_267 = arith.constant 0 : index
    %228 = vector.load %arg18[%c1_264, %c5_265, %c1_266, %c0_267] : memref<2x9x9x12xf32, #tpu.memory_space<vmem>>, vector<1x1x7x12xf32>
    %229 = vector.shape_cast %228 : vector<1x1x7x12xf32> to vector<7x12xf32>
    %230 = vector.shape_cast %227 : vector<7x12xf32> to vector<1x1x7x12xf32>
    tpu.vector_store %arg18[%c1_264, %c5_265, %c1_266, %c0_267], %230 {strides = array<i32>} : memref<2x9x9x12xf32, #tpu.memory_space<vmem>>, vector<1x1x7x12xf32>,
    %c322 = arith.constant 322 : index
    %c0_268 = arith.constant 0 : index
    %231 = vector.load %arg16[%c322, %c0_268] : memref<392x12xf32, #tpu.memory_space<vmem>>, vector<7x12xf32>
    %c1_269 = arith.constant 1 : index
    %c5_270 = arith.constant 5 : index
    %c1_271 = arith.constant 1 : index
    %c0_272 = arith.constant 0 : index
    %232 = vector.load %arg19[%c1_269, %c5_270, %c1_271, %c0_272] : memref<2x9x9x12xf32, #tpu.memory_space<vmem>>, vector<1x1x7x12xf32>
    %233 = vector.shape_cast %232 : vector<1x1x7x12xf32> to vector<7x12xf32>
    %234 = vector.shape_cast %231 : vector<7x12xf32> to vector<1x1x7x12xf32>
    tpu.vector_store %arg19[%c1_269, %c5_270, %c1_271, %c0_272], %234 {strides = array<i32>} : memref<2x9x9x12xf32, #tpu.memory_space<vmem>>, vector<1x1x7x12xf32>,
    %c329 = arith.constant 329 : index
    %c0_273 = arith.constant 0 : index
    %235 = vector.load %arg16[%c329, %c0_273] : memref<392x12xf32, #tpu.memory_space<vmem>>, vector<7x12xf32>
    %c1_274 = arith.constant 1 : index
    %c5_275 = arith.constant 5 : index
    %c1_276 = arith.constant 1 : index
    %c0_277 = arith.constant 0 : index
    %236 = vector.load %arg20[%c1_274, %c5_275, %c1_276, %c0_277] : memref<2x9x9x12xf32, #tpu.memory_space<vmem>>, vector<1x1x7x12xf32>
    %237 = vector.shape_cast %236 : vector<1x1x7x12xf32> to vector<7x12xf32>
    %238 = vector.shape_cast %235 : vector<7x12xf32> to vector<1x1x7x12xf32>
    tpu.vector_store %arg20[%c1_274, %c5_275, %c1_276, %c0_277], %238 {strides = array<i32>} : memref<2x9x9x12xf32, #tpu.memory_space<vmem>>, vector<1x1x7x12xf32>,
    %c336 = arith.constant 336 : index
    %c0_278 = arith.constant 0 : index
    %239 = vector.load %arg16[%c336, %c0_278] : memref<392x12xf32, #tpu.memory_space<vmem>>, vector<7x12xf32>
    %c1_279 = arith.constant 1 : index
    %c6_280 = arith.constant 6 : index
    %c1_281 = arith.constant 1 : index
    %c0_282 = arith.constant 0 : index
    %240 = vector.load %arg17[%c1_279, %c6_280, %c1_281, %c0_282] : memref<2x9x9x12xf32, #tpu.memory_space<vmem>>, vector<1x1x7x12xf32>
    %241 = vector.shape_cast %240 : vector<1x1x7x12xf32> to vector<7x12xf32>
    %242 = vector.shape_cast %239 : vector<7x12xf32> to vector<1x1x7x12xf32>
    tpu.vector_store %arg17[%c1_279, %c6_280, %c1_281, %c0_282], %242 {strides = array<i32>} : memref<2x9x9x12xf32, #tpu.memory_space<vmem>>, vector<1x1x7x12xf32>,
    %c343 = arith.constant 343 : index
    %c0_283 = arith.constant 0 : index
    %243 = vector.load %arg16[%c343, %c0_283] : memref<392x12xf32, #tpu.memory_space<vmem>>, vector<7x12xf32>
    %c1_284 = arith.constant 1 : index
    %c6_285 = arith.constant 6 : index
    %c1_286 = arith.constant 1 : index
    %c0_287 = arith.constant 0 : index
    %244 = vector.load %arg18[%c1_284, %c6_285, %c1_286, %c0_287] : memref<2x9x9x12xf32, #tpu.memory_space<vmem>>, vector<1x1x7x12xf32>
    %245 = vector.shape_cast %244 : vector<1x1x7x12xf32> to vector<7x12xf32>
    %246 = vector.shape_cast %243 : vector<7x12xf32> to vector<1x1x7x12xf32>
    tpu.vector_store %arg18[%c1_284, %c6_285, %c1_286, %c0_287], %246 {strides = array<i32>} : memref<2x9x9x12xf32, #tpu.memory_space<vmem>>, vector<1x1x7x12xf32>,
    %c350 = arith.constant 350 : index
    %c0_288 = arith.constant 0 : index
    %247 = vector.load %arg16[%c350, %c0_288] : memref<392x12xf32, #tpu.memory_space<vmem>>, vector<7x12xf32>
    %c1_289 = arith.constant 1 : index
    %c6_290 = arith.constant 6 : index
    %c1_291 = arith.constant 1 : index
    %c0_292 = arith.constant 0 : index
    %248 = vector.load %arg19[%c1_289, %c6_290, %c1_291, %c0_292] : memref<2x9x9x12xf32, #tpu.memory_space<vmem>>, vector<1x1x7x12xf32>
    %249 = vector.shape_cast %248 : vector<1x1x7x12xf32> to vector<7x12xf32>
    %250 = vector.shape_cast %247 : vector<7x12xf32> to vector<1x1x7x12xf32>
    tpu.vector_store %arg19[%c1_289, %c6_290, %c1_291, %c0_292], %250 {strides = array<i32>} : memref<2x9x9x12xf32, #tpu.memory_space<vmem>>, vector<1x1x7x12xf32>,
    %c357 = arith.constant 357 : index
    %c0_293 = arith.constant 0 : index
    %251 = vector.load %arg16[%c357, %c0_293] : memref<392x12xf32, #tpu.memory_space<vmem>>, vector<7x12xf32>
    %c1_294 = arith.constant 1 : index
    %c6_295 = arith.constant 6 : index
    %c1_296 = arith.constant 1 : index
    %c0_297 = arith.constant 0 : index
    %252 = vector.load %arg20[%c1_294, %c6_295, %c1_296, %c0_297] : memref<2x9x9x12xf32, #tpu.memory_space<vmem>>, vector<1x1x7x12xf32>
    %253 = vector.shape_cast %252 : vector<1x1x7x12xf32> to vector<7x12xf32>
    %254 = vector.shape_cast %251 : vector<7x12xf32> to vector<1x1x7x12xf32>
    tpu.vector_store %arg20[%c1_294, %c6_295, %c1_296, %c0_297], %254 {strides = array<i32>} : memref<2x9x9x12xf32, #tpu.memory_space<vmem>>, vector<1x1x7x12xf32>,
    %c364 = arith.constant 364 : index
    %c0_298 = arith.constant 0 : index
    %255 = vector.load %arg16[%c364, %c0_298] : memref<392x12xf32, #tpu.memory_space<vmem>>, vector<7x12xf32>
    %c1_299 = arith.constant 1 : index
    %c7_300 = arith.constant 7 : index
    %c1_301 = arith.constant 1 : index
    %c0_302 = arith.constant 0 : index
    %256 = vector.load %arg17[%c1_299, %c7_300, %c1_301, %c0_302] : memref<2x9x9x12xf32, #tpu.memory_space<vmem>>, vector<1x1x7x12xf32>
    %257 = vector.shape_cast %256 : vector<1x1x7x12xf32> to vector<7x12xf32>
    %258 = vector.shape_cast %255 : vector<7x12xf32> to vector<1x1x7x12xf32>
    tpu.vector_store %arg17[%c1_299, %c7_300, %c1_301, %c0_302], %258 {strides = array<i32>} : memref<2x9x9x12xf32, #tpu.memory_space<vmem>>, vector<1x1x7x12xf32>,
    %c371 = arith.constant 371 : index
    %c0_303 = arith.constant 0 : index
    %259 = vector.load %arg16[%c371, %c0_303] : memref<392x12xf32, #tpu.memory_space<vmem>>, vector<7x12xf32>
    %c1_304 = arith.constant 1 : index
    %c7_305 = arith.constant 7 : index
    %c1_306 = arith.constant 1 : index
    %c0_307 = arith.constant 0 : index
    %260 = vector.load %arg18[%c1_304, %c7_305, %c1_306, %c0_307] : memref<2x9x9x12xf32, #tpu.memory_space<vmem>>, vector<1x1x7x12xf32>
    %261 = vector.shape_cast %260 : vector<1x1x7x12xf32> to vector<7x12xf32>
    %262 = vector.shape_cast %259 : vector<7x12xf32> to vector<1x1x7x12xf32>
    tpu.vector_store %arg18[%c1_304, %c7_305, %c1_306, %c0_307], %262 {strides = array<i32>} : memref<2x9x9x12xf32, #tpu.memory_space<vmem>>, vector<1x1x7x12xf32>,
    %c378 = arith.constant 378 : index
    %c0_308 = arith.constant 0 : index
    %263 = vector.load %arg16[%c378, %c0_308] : memref<392x12xf32, #tpu.memory_space<vmem>>, vector<7x12xf32>
    %c1_309 = arith.constant 1 : index
    %c7_310 = arith.constant 7 : index
    %c1_311 = arith.constant 1 : index
    %c0_312 = arith.constant 0 : index
    %264 = vector.load %arg19[%c1_309, %c7_310, %c1_311, %c0_312] : memref<2x9x9x12xf32, #tpu.memory_space<vmem>>, vector<1x1x7x12xf32>
    %265 = vector.shape_cast %264 : vector<1x1x7x12xf32> to vector<7x12xf32>
    %266 = vector.shape_cast %263 : vector<7x12xf32> to vector<1x1x7x12xf32>
    tpu.vector_store %arg19[%c1_309, %c7_310, %c1_311, %c0_312], %266 {strides = array<i32>} : memref<2x9x9x12xf32, #tpu.memory_space<vmem>>, vector<1x1x7x12xf32>,
    %c385 = arith.constant 385 : index
    %c0_313 = arith.constant 0 : index
    %267 = vector.load %arg16[%c385, %c0_313] : memref<392x12xf32, #tpu.memory_space<vmem>>, vector<7x12xf32>
    %c1_314 = arith.constant 1 : index
    %c7_315 = arith.constant 7 : index
    %c1_316 = arith.constant 1 : index
    %c0_317 = arith.constant 0 : index
    %268 = vector.load %arg20[%c1_314, %c7_315, %c1_316, %c0_317] : memref<2x9x9x12xf32, #tpu.memory_space<vmem>>, vector<1x1x7x12xf32>
    %269 = vector.shape_cast %268 : vector<1x1x7x12xf32> to vector<7x12xf32>
    %270 = vector.shape_cast %267 : vector<7x12xf32> to vector<1x1x7x12xf32>
    tpu.vector_store %arg20[%c1_314, %c7_315, %c1_316, %c0_317], %270 {strides = array<i32>} : memref<2x9x9x12xf32, #tpu.memory_space<vmem>>, vector<1x1x7x12xf32>,
    %c0_318 = arith.constant 0 : index
    %c0_319 = arith.constant 0 : index
    %c0_320 = arith.constant 0 : index
    %c0_321 = arith.constant 0 : index
    %271 = vector.load %arg17[%c0_318, %c0_319, %c0_320, %c0_321] : memref<2x9x9x12xf32, #tpu.memory_space<vmem>>, vector<2x7x7x12xf32>
    %272 = vector.shape_cast %271 : vector<2x7x7x12xf32> to vector<14x7x12xf32>
    %c0_322 = arith.constant 0 : index
    %c0_323 = arith.constant 0 : index
    %c0_324 = arith.constant 0 : index
    %273 = vector.load %arg22[%c0_322, %c0_323, %c0_324] : memref<14x7x300xf32, #tpu.memory_space<vmem>>, vector<14x7x12xf32>
    tpu.vector_store %arg22[%c0_322, %c0_323, %c0_324], %272 {strides = array<i32>} : memref<14x7x300xf32, #tpu.memory_space<vmem>>, vector<14x7x12xf32>,
    %c0_325 = arith.constant 0 : index
    %c0_326 = arith.constant 0 : index
    %c0_327 = arith.constant 0 : index
    %c0_328 = arith.constant 0 : index
    %274 = vector.load %arg18[%c0_325, %c0_326, %c0_327, %c0_328] : memref<2x9x9x12xf32, #tpu.memory_space<vmem>>, vector<2x7x7x12xf32>
    %275 = vector.shape_cast %274 : vector<2x7x7x12xf32> to vector<14x7x12xf32>
    %c0_329 = arith.constant 0 : index
    %c0_330 = arith.constant 0 : index
    %c12 = arith.constant 12 : index
    %276 = vector.load %arg22[%c0_329, %c0_330, %c12] : memref<14x7x300xf32, #tpu.memory_space<vmem>>, vector<14x7x12xf32>
    tpu.vector_store %arg22[%c0_329, %c0_330, %c12], %275 {strides = array<i32>} : memref<14x7x300xf32, #tpu.memory_space<vmem>>, vector<14x7x12xf32>,
    %c0_331 = arith.constant 0 : index
    %c0_332 = arith.constant 0 : index
    %c1_333 = arith.constant 1 : index
    %c0_334 = arith.constant 0 : index
    %277 = vector.load %arg17[%c0_331, %c0_332, %c1_333, %c0_334] : memref<2x9x9x12xf32, #tpu.memory_space<vmem>>, vector<2x7x7x12xf32>
    %278 = vector.shape_cast %277 : vector<2x7x7x12xf32> to vector<14x7x12xf32>
    %c0_335 = arith.constant 0 : index
    %c0_336 = arith.constant 0 : index
    %c24 = arith.constant 24 : index
    %279 = vector.load %arg22[%c0_335, %c0_336, %c24] : memref<14x7x300xf32, #tpu.memory_space<vmem>>, vector<14x7x12xf32>
    tpu.vector_store %arg22[%c0_335, %c0_336, %c24], %278 {strides = array<i32>} : memref<14x7x300xf32, #tpu.memory_space<vmem>>, vector<14x7x12xf32>,
    %c0_337 = arith.constant 0 : index
    %c0_338 = arith.constant 0 : index
    %c1_339 = arith.constant 1 : index
    %c0_340 = arith.constant 0 : index
    %280 = vector.load %arg18[%c0_337, %c0_338, %c1_339, %c0_340] : memref<2x9x9x12xf32, #tpu.memory_space<vmem>>, vector<2x7x7x12xf32>
    %281 = vector.shape_cast %280 : vector<2x7x7x12xf32> to vector<14x7x12xf32>
    %c0_341 = arith.constant 0 : index
    %c0_342 = arith.constant 0 : index
    %c36 = arith.constant 36 : index
    %282 = vector.load %arg22[%c0_341, %c0_342, %c36] : memref<14x7x300xf32, #tpu.memory_space<vmem>>, vector<14x7x12xf32>
    tpu.vector_store %arg22[%c0_341, %c0_342, %c36], %281 {strides = array<i32>} : memref<14x7x300xf32, #tpu.memory_space<vmem>>, vector<14x7x12xf32>,
    %c0_343 = arith.constant 0 : index
    %c0_344 = arith.constant 0 : index
    %c2_345 = arith.constant 2 : index
    %c0_346 = arith.constant 0 : index
    %283 = vector.load %arg17[%c0_343, %c0_344, %c2_345, %c0_346] : memref<2x9x9x12xf32, #tpu.memory_space<vmem>>, vector<2x7x7x12xf32>
    %284 = vector.shape_cast %283 : vector<2x7x7x12xf32> to vector<14x7x12xf32>
    %c0_347 = arith.constant 0 : index
    %c0_348 = arith.constant 0 : index
    %c48 = arith.constant 48 : index
    %285 = vector.load %arg22[%c0_347, %c0_348, %c48] : memref<14x7x300xf32, #tpu.memory_space<vmem>>, vector<14x7x12xf32>
    tpu.vector_store %arg22[%c0_347, %c0_348, %c48], %284 {strides = array<i32>} : memref<14x7x300xf32, #tpu.memory_space<vmem>>, vector<14x7x12xf32>,
    %c0_349 = arith.constant 0 : index
    %c0_350 = arith.constant 0 : index
    %c0_351 = arith.constant 0 : index
    %c0_352 = arith.constant 0 : index
    %286 = vector.load %arg19[%c0_349, %c0_350, %c0_351, %c0_352] : memref<2x9x9x12xf32, #tpu.memory_space<vmem>>, vector<2x7x7x12xf32>
    %287 = vector.shape_cast %286 : vector<2x7x7x12xf32> to vector<14x7x12xf32>
    %c0_353 = arith.constant 0 : index
    %c0_354 = arith.constant 0 : index
    %c60 = arith.constant 60 : index
    %288 = vector.load %arg22[%c0_353, %c0_354, %c60] : memref<14x7x300xf32, #tpu.memory_space<vmem>>, vector<14x7x12xf32>
    tpu.vector_store %arg22[%c0_353, %c0_354, %c60], %287 {strides = array<i32>} : memref<14x7x300xf32, #tpu.memory_space<vmem>>, vector<14x7x12xf32>,
    %c0_355 = arith.constant 0 : index
    %c0_356 = arith.constant 0 : index
    %c0_357 = arith.constant 0 : index
    %c0_358 = arith.constant 0 : index
    %289 = vector.load %arg20[%c0_355, %c0_356, %c0_357, %c0_358] : memref<2x9x9x12xf32, #tpu.memory_space<vmem>>, vector<2x7x7x12xf32>
    %290 = vector.shape_cast %289 : vector<2x7x7x12xf32> to vector<14x7x12xf32>
    %c0_359 = arith.constant 0 : index
    %c0_360 = arith.constant 0 : index
    %c72 = arith.constant 72 : index
    %291 = vector.load %arg22[%c0_359, %c0_360, %c72] : memref<14x7x300xf32, #tpu.memory_space<vmem>>, vector<14x7x12xf32>
    tpu.vector_store %arg22[%c0_359, %c0_360, %c72], %290 {strides = array<i32>} : memref<14x7x300xf32, #tpu.memory_space<vmem>>, vector<14x7x12xf32>,
    %c0_361 = arith.constant 0 : index
    %c0_362 = arith.constant 0 : index
    %c1_363 = arith.constant 1 : index
    %c0_364 = arith.constant 0 : index
    %292 = vector.load %arg19[%c0_361, %c0_362, %c1_363, %c0_364] : memref<2x9x9x12xf32, #tpu.memory_space<vmem>>, vector<2x7x7x12xf32>
    %293 = vector.shape_cast %292 : vector<2x7x7x12xf32> to vector<14x7x12xf32>
    %c0_365 = arith.constant 0 : index
    %c0_366 = arith.constant 0 : index
    %c84_367 = arith.constant 84 : index
    %294 = vector.load %arg22[%c0_365, %c0_366, %c84_367] : memref<14x7x300xf32, #tpu.memory_space<vmem>>, vector<14x7x12xf32>
    tpu.vector_store %arg22[%c0_365, %c0_366, %c84_367], %293 {strides = array<i32>} : memref<14x7x300xf32, #tpu.memory_space<vmem>>, vector<14x7x12xf32>,
    %c0_368 = arith.constant 0 : index
    %c0_369 = arith.constant 0 : index
    %c1_370 = arith.constant 1 : index
    %c0_371 = arith.constant 0 : index
    %295 = vector.load %arg20[%c0_368, %c0_369, %c1_370, %c0_371] : memref<2x9x9x12xf32, #tpu.memory_space<vmem>>, vector<2x7x7x12xf32>
    %296 = vector.shape_cast %295 : vector<2x7x7x12xf32> to vector<14x7x12xf32>
    %c0_372 = arith.constant 0 : index
    %c0_373 = arith.constant 0 : index
    %c96 = arith.constant 96 : index
    %297 = vector.load %arg22[%c0_372, %c0_373, %c96] : memref<14x7x300xf32, #tpu.memory_space<vmem>>, vector<14x7x12xf32>
    tpu.vector_store %arg22[%c0_372, %c0_373, %c96], %296 {strides = array<i32>} : memref<14x7x300xf32, #tpu.memory_space<vmem>>, vector<14x7x12xf32>,
    %c0_374 = arith.constant 0 : index
    %c0_375 = arith.constant 0 : index
    %c2_376 = arith.constant 2 : index
    %c0_377 = arith.constant 0 : index
    %298 = vector.load %arg19[%c0_374, %c0_375, %c2_376, %c0_377] : memref<2x9x9x12xf32, #tpu.memory_space<vmem>>, vector<2x7x7x12xf32>
    %299 = vector.shape_cast %298 : vector<2x7x7x12xf32> to vector<14x7x12xf32>
    %c0_378 = arith.constant 0 : index
    %c0_379 = arith.constant 0 : index
    %c108 = arith.constant 108 : index
    %300 = vector.load %arg22[%c0_378, %c0_379, %c108] : memref<14x7x300xf32, #tpu.memory_space<vmem>>, vector<14x7x12xf32>
    tpu.vector_store %arg22[%c0_378, %c0_379, %c108], %299 {strides = array<i32>} : memref<14x7x300xf32, #tpu.memory_space<vmem>>, vector<14x7x12xf32>,
    %c0_380 = arith.constant 0 : index
    %c1_381 = arith.constant 1 : index
    %c0_382 = arith.constant 0 : index
    %c0_383 = arith.constant 0 : index
    %301 = vector.load %arg17[%c0_380, %c1_381, %c0_382, %c0_383] : memref<2x9x9x12xf32, #tpu.memory_space<vmem>>, vector<2x7x7x12xf32>
    %302 = vector.shape_cast %301 : vector<2x7x7x12xf32> to vector<14x7x12xf32>
    %c0_384 = arith.constant 0 : index
    %c0_385 = arith.constant 0 : index
    %c120 = arith.constant 120 : index
    %303 = vector.load %arg22[%c0_384, %c0_385, %c120] : memref<14x7x300xf32, #tpu.memory_space<vmem>>, vector<14x7x12xf32>
    tpu.vector_store %arg22[%c0_384, %c0_385, %c120], %302 {strides = array<i32>} : memref<14x7x300xf32, #tpu.memory_space<vmem>>, vector<14x7x12xf32>,
    %c0_386 = arith.constant 0 : index
    %c1_387 = arith.constant 1 : index
    %c0_388 = arith.constant 0 : index
    %c0_389 = arith.constant 0 : index
    %304 = vector.load %arg18[%c0_386, %c1_387, %c0_388, %c0_389] : memref<2x9x9x12xf32, #tpu.memory_space<vmem>>, vector<2x7x7x12xf32>
    %305 = vector.shape_cast %304 : vector<2x7x7x12xf32> to vector<14x7x12xf32>
    %c0_390 = arith.constant 0 : index
    %c0_391 = arith.constant 0 : index
    %c132 = arith.constant 132 : index
    %306 = vector.load %arg22[%c0_390, %c0_391, %c132] : memref<14x7x300xf32, #tpu.memory_space<vmem>>, vector<14x7x12xf32>
    tpu.vector_store %arg22[%c0_390, %c0_391, %c132], %305 {strides = array<i32>} : memref<14x7x300xf32, #tpu.memory_space<vmem>>, vector<14x7x12xf32>,
    %c0_392 = arith.constant 0 : index
    %c1_393 = arith.constant 1 : index
    %c1_394 = arith.constant 1 : index
    %c0_395 = arith.constant 0 : index
    %307 = vector.load %arg17[%c0_392, %c1_393, %c1_394, %c0_395] : memref<2x9x9x12xf32, #tpu.memory_space<vmem>>, vector<2x7x7x12xf32>
    %308 = vector.shape_cast %307 : vector<2x7x7x12xf32> to vector<14x7x12xf32>
    %c0_396 = arith.constant 0 : index
    %c0_397 = arith.constant 0 : index
    %c144 = arith.constant 144 : index
    %309 = vector.load %arg22[%c0_396, %c0_397, %c144] : memref<14x7x300xf32, #tpu.memory_space<vmem>>, vector<14x7x12xf32>
    tpu.vector_store %arg22[%c0_396, %c0_397, %c144], %308 {strides = array<i32>} : memref<14x7x300xf32, #tpu.memory_space<vmem>>, vector<14x7x12xf32>,
    %c0_398 = arith.constant 0 : index
    %c1_399 = arith.constant 1 : index
    %c1_400 = arith.constant 1 : index
    %c0_401 = arith.constant 0 : index
    %310 = vector.load %arg18[%c0_398, %c1_399, %c1_400, %c0_401] : memref<2x9x9x12xf32, #tpu.memory_space<vmem>>, vector<2x7x7x12xf32>
    %311 = vector.shape_cast %310 : vector<2x7x7x12xf32> to vector<14x7x12xf32>
    %c0_402 = arith.constant 0 : index
    %c0_403 = arith.constant 0 : index
    %c156 = arith.constant 156 : index
    %312 = vector.load %arg22[%c0_402, %c0_403, %c156] : memref<14x7x300xf32, #tpu.memory_space<vmem>>, vector<14x7x12xf32>
    tpu.vector_store %arg22[%c0_402, %c0_403, %c156], %311 {strides = array<i32>} : memref<14x7x300xf32, #tpu.memory_space<vmem>>, vector<14x7x12xf32>,
    %c0_404 = arith.constant 0 : index
    %c1_405 = arith.constant 1 : index
    %c2_406 = arith.constant 2 : index
    %c0_407 = arith.constant 0 : index
    %313 = vector.load %arg17[%c0_404, %c1_405, %c2_406, %c0_407] : memref<2x9x9x12xf32, #tpu.memory_space<vmem>>, vector<2x7x7x12xf32>
    %314 = vector.shape_cast %313 : vector<2x7x7x12xf32> to vector<14x7x12xf32>
    %c0_408 = arith.constant 0 : index
    %c0_409 = arith.constant 0 : index
    %c168_410 = arith.constant 168 : index
    %315 = vector.load %arg22[%c0_408, %c0_409, %c168_410] : memref<14x7x300xf32, #tpu.memory_space<vmem>>, vector<14x7x12xf32>
    tpu.vector_store %arg22[%c0_408, %c0_409, %c168_410], %314 {strides = array<i32>} : memref<14x7x300xf32, #tpu.memory_space<vmem>>, vector<14x7x12xf32>,
    %c0_411 = arith.constant 0 : index
    %c1_412 = arith.constant 1 : index
    %c0_413 = arith.constant 0 : index
    %c0_414 = arith.constant 0 : index
    %316 = vector.load %arg19[%c0_411, %c1_412, %c0_413, %c0_414] : memref<2x9x9x12xf32, #tpu.memory_space<vmem>>, vector<2x7x7x12xf32>
    %317 = vector.shape_cast %316 : vector<2x7x7x12xf32> to vector<14x7x12xf32>
    %c0_415 = arith.constant 0 : index
    %c0_416 = arith.constant 0 : index
    %c180 = arith.constant 180 : index
    %318 = vector.load %arg22[%c0_415, %c0_416, %c180] : memref<14x7x300xf32, #tpu.memory_space<vmem>>, vector<14x7x12xf32>
    tpu.vector_store %arg22[%c0_415, %c0_416, %c180], %317 {strides = array<i32>} : memref<14x7x300xf32, #tpu.memory_space<vmem>>, vector<14x7x12xf32>,
    %c0_417 = arith.constant 0 : index
    %c1_418 = arith.constant 1 : index
    %c0_419 = arith.constant 0 : index
    %c0_420 = arith.constant 0 : index
    %319 = vector.load %arg20[%c0_417, %c1_418, %c0_419, %c0_420] : memref<2x9x9x12xf32, #tpu.memory_space<vmem>>, vector<2x7x7x12xf32>
    %320 = vector.shape_cast %319 : vector<2x7x7x12xf32> to vector<14x7x12xf32>
    %c0_421 = arith.constant 0 : index
    %c0_422 = arith.constant 0 : index
    %c192 = arith.constant 192 : index
    %321 = vector.load %arg22[%c0_421, %c0_422, %c192] : memref<14x7x300xf32, #tpu.memory_space<vmem>>, vector<14x7x12xf32>
    tpu.vector_store %arg22[%c0_421, %c0_422, %c192], %320 {strides = array<i32>} : memref<14x7x300xf32, #tpu.memory_space<vmem>>, vector<14x7x12xf32>,
    %c0_423 = arith.constant 0 : index
    %c1_424 = arith.constant 1 : index
    %c1_425 = arith.constant 1 : index
    %c0_426 = arith.constant 0 : index
    %322 = vector.load %arg19[%c0_423, %c1_424, %c1_425, %c0_426] : memref<2x9x9x12xf32, #tpu.memory_space<vmem>>, vector<2x7x7x12xf32>
    %323 = vector.shape_cast %322 : vector<2x7x7x12xf32> to vector<14x7x12xf32>
    %c0_427 = arith.constant 0 : index
    %c0_428 = arith.constant 0 : index
    %c204 = arith.constant 204 : index
    %324 = vector.load %arg22[%c0_427, %c0_428, %c204] : memref<14x7x300xf32, #tpu.memory_space<vmem>>, vector<14x7x12xf32>
    tpu.vector_store %arg22[%c0_427, %c0_428, %c204], %323 {strides = array<i32>} : memref<14x7x300xf32, #tpu.memory_space<vmem>>, vector<14x7x12xf32>,
    %c0_429 = arith.constant 0 : index
    %c1_430 = arith.constant 1 : index
    %c1_431 = arith.constant 1 : index
    %c0_432 = arith.constant 0 : index
    %325 = vector.load %arg20[%c0_429, %c1_430, %c1_431, %c0_432] : memref<2x9x9x12xf32, #tpu.memory_space<vmem>>, vector<2x7x7x12xf32>
    %326 = vector.shape_cast %325 : vector<2x7x7x12xf32> to vector<14x7x12xf32>
    %c0_433 = arith.constant 0 : index
    %c0_434 = arith.constant 0 : index
    %c216 = arith.constant 216 : index
    %327 = vector.load %arg22[%c0_433, %c0_434, %c216] : memref<14x7x300xf32, #tpu.memory_space<vmem>>, vector<14x7x12xf32>
    tpu.vector_store %arg22[%c0_433, %c0_434, %c216], %326 {strides = array<i32>} : memref<14x7x300xf32, #tpu.memory_space<vmem>>, vector<14x7x12xf32>,
    %c0_435 = arith.constant 0 : index
    %c1_436 = arith.constant 1 : index
    %c2_437 = arith.constant 2 : index
    %c0_438 = arith.constant 0 : index
    %328 = vector.load %arg19[%c0_435, %c1_436, %c2_437, %c0_438] : memref<2x9x9x12xf32, #tpu.memory_space<vmem>>, vector<2x7x7x12xf32>
    %329 = vector.shape_cast %328 : vector<2x7x7x12xf32> to vector<14x7x12xf32>
    %c0_439 = arith.constant 0 : index
    %c0_440 = arith.constant 0 : index
    %c228 = arith.constant 228 : index
    %330 = vector.load %arg22[%c0_439, %c0_440, %c228] : memref<14x7x300xf32, #tpu.memory_space<vmem>>, vector<14x7x12xf32>
    tpu.vector_store %arg22[%c0_439, %c0_440, %c228], %329 {strides = array<i32>} : memref<14x7x300xf32, #tpu.memory_space<vmem>>, vector<14x7x12xf32>,
    %c0_441 = arith.constant 0 : index
    %c2_442 = arith.constant 2 : index
    %c0_443 = arith.constant 0 : index
    %c0_444 = arith.constant 0 : index
    %331 = vector.load %arg17[%c0_441, %c2_442, %c0_443, %c0_444] : memref<2x9x9x12xf32, #tpu.memory_space<vmem>>, vector<2x7x7x12xf32>
    %332 = vector.shape_cast %331 : vector<2x7x7x12xf32> to vector<14x7x12xf32>
    %c0_445 = arith.constant 0 : index
    %c0_446 = arith.constant 0 : index
    %c240 = arith.constant 240 : index
    %333 = vector.load %arg22[%c0_445, %c0_446, %c240] : memref<14x7x300xf32, #tpu.memory_space<vmem>>, vector<14x7x12xf32>
    tpu.vector_store %arg22[%c0_445, %c0_446, %c240], %332 {strides = array<i32>} : memref<14x7x300xf32, #tpu.memory_space<vmem>>, vector<14x7x12xf32>,
    %c0_447 = arith.constant 0 : index
    %c2_448 = arith.constant 2 : index
    %c0_449 = arith.constant 0 : index
    %c0_450 = arith.constant 0 : index
    %334 = vector.load %arg18[%c0_447, %c2_448, %c0_449, %c0_450] : memref<2x9x9x12xf32, #tpu.memory_space<vmem>>, vector<2x7x7x12xf32>
    %335 = vector.shape_cast %334 : vector<2x7x7x12xf32> to vector<14x7x12xf32>
    %c0_451 = arith.constant 0 : index
    %c0_452 = arith.constant 0 : index
    %c252_453 = arith.constant 252 : index
    %336 = vector.load %arg22[%c0_451, %c0_452, %c252_453] : memref<14x7x300xf32, #tpu.memory_space<vmem>>, vector<14x7x12xf32>
    tpu.vector_store %arg22[%c0_451, %c0_452, %c252_453], %335 {strides = array<i32>} : memref<14x7x300xf32, #tpu.memory_space<vmem>>, vector<14x7x12xf32>,
    %c0_454 = arith.constant 0 : index
    %c2_455 = arith.constant 2 : index
    %c1_456 = arith.constant 1 : index
    %c0_457 = arith.constant 0 : index
    %337 = vector.load %arg17[%c0_454, %c2_455, %c1_456, %c0_457] : memref<2x9x9x12xf32, #tpu.memory_space<vmem>>, vector<2x7x7x12xf32>
    %338 = vector.shape_cast %337 : vector<2x7x7x12xf32> to vector<14x7x12xf32>
    %c0_458 = arith.constant 0 : index
    %c0_459 = arith.constant 0 : index
    %c264 = arith.constant 264 : index
    %339 = vector.load %arg22[%c0_458, %c0_459, %c264] : memref<14x7x300xf32, #tpu.memory_space<vmem>>, vector<14x7x12xf32>
    tpu.vector_store %arg22[%c0_458, %c0_459, %c264], %338 {strides = array<i32>} : memref<14x7x300xf32, #tpu.memory_space<vmem>>, vector<14x7x12xf32>,
    %c0_460 = arith.constant 0 : index
    %c2_461 = arith.constant 2 : index
    %c1_462 = arith.constant 1 : index
    %c0_463 = arith.constant 0 : index
    %340 = vector.load %arg18[%c0_460, %c2_461, %c1_462, %c0_463] : memref<2x9x9x12xf32, #tpu.memory_space<vmem>>, vector<2x7x7x12xf32>
    %341 = vector.shape_cast %340 : vector<2x7x7x12xf32> to vector<14x7x12xf32>
    %c0_464 = arith.constant 0 : index
    %c0_465 = arith.constant 0 : index
    %c276 = arith.constant 276 : index
    %342 = vector.load %arg22[%c0_464, %c0_465, %c276] : memref<14x7x300xf32, #tpu.memory_space<vmem>>, vector<14x7x12xf32>
    tpu.vector_store %arg22[%c0_464, %c0_465, %c276], %341 {strides = array<i32>} : memref<14x7x300xf32, #tpu.memory_space<vmem>>, vector<14x7x12xf32>,
    %c0_466 = arith.constant 0 : index
    %c2_467 = arith.constant 2 : index
    %c2_468 = arith.constant 2 : index
    %c0_469 = arith.constant 0 : index
    %343 = vector.load %arg17[%c0_466, %c2_467, %c2_468, %c0_469] : memref<2x9x9x12xf32, #tpu.memory_space<vmem>>, vector<2x7x7x12xf32>
    %344 = vector.shape_cast %343 : vector<2x7x7x12xf32> to vector<14x7x12xf32>
    %c0_470 = arith.constant 0 : index
    %c0_471 = arith.constant 0 : index
    %c288 = arith.constant 288 : index
    %345 = vector.load %arg22[%c0_470, %c0_471, %c288] : memref<14x7x300xf32, #tpu.memory_space<vmem>>, vector<14x7x12xf32>
    tpu.vector_store %arg22[%c0_470, %c0_471, %c288], %344 {strides = array<i32>} : memref<14x7x300xf32, #tpu.memory_space<vmem>>, vector<14x7x12xf32>,
    %c0_472 = arith.constant 0 : index
    %c0_473 = arith.constant 0 : index
    %c0_474 = arith.constant 0 : index
    %346 = vector.load %arg22[%c0_472, %c0_473, %c0_474] : memref<14x7x300xf32, #tpu.memory_space<vmem>>, vector<1x7x300xf32>
    %347 = vector.shape_cast %346 : vector<1x7x300xf32> to vector<7x300xf32>
    %c0_475 = arith.constant 0 : index
    %c0_476 = arith.constant 0 : index
    %348 = vector.load %arg23[%c0_475, %c0_476] : memref<98x300xf32, #tpu.memory_space<vmem>>, vector<7x300xf32>
    tpu.vector_store %arg23[%c0_475, %c0_476], %347 {strides = array<i32>} : memref<98x300xf32, #tpu.memory_space<vmem>>, vector<7x300xf32>,
    %c1_477 = arith.constant 1 : index
    %c0_478 = arith.constant 0 : index
    %c0_479 = arith.constant 0 : index
    %349 = vector.load %arg22[%c1_477, %c0_478, %c0_479] : memref<14x7x300xf32, #tpu.memory_space<vmem>>, vector<1x7x300xf32>
    %350 = vector.shape_cast %349 : vector<1x7x300xf32> to vector<7x300xf32>
    %c7_480 = arith.constant 7 : index
    %c0_481 = arith.constant 0 : index
    %351 = vector.load %arg23[%c7_480, %c0_481] : memref<98x300xf32, #tpu.memory_space<vmem>>, vector<7x300xf32>
    tpu.vector_store %arg23[%c7_480, %c0_481], %350 {strides = array<i32>} : memref<98x300xf32, #tpu.memory_space<vmem>>, vector<7x300xf32>,
    %c2_482 = arith.constant 2 : index
    %c0_483 = arith.constant 0 : index
    %c0_484 = arith.constant 0 : index
    %352 = vector.load %arg22[%c2_482, %c0_483, %c0_484] : memref<14x7x300xf32, #tpu.memory_space<vmem>>, vector<1x7x300xf32>
    %353 = vector.shape_cast %352 : vector<1x7x300xf32> to vector<7x300xf32>
    %c14_485 = arith.constant 14 : index
    %c0_486 = arith.constant 0 : index
    %354 = vector.load %arg23[%c14_485, %c0_486] : memref<98x300xf32, #tpu.memory_space<vmem>>, vector<7x300xf32>
    tpu.vector_store %arg23[%c14_485, %c0_486], %353 {strides = array<i32>} : memref<98x300xf32, #tpu.memory_space<vmem>>, vector<7x300xf32>,
    %c3_487 = arith.constant 3 : index
    %c0_488 = arith.constant 0 : index
    %c0_489 = arith.constant 0 : index
    %355 = vector.load %arg22[%c3_487, %c0_488, %c0_489] : memref<14x7x300xf32, #tpu.memory_space<vmem>>, vector<1x7x300xf32>
    %356 = vector.shape_cast %355 : vector<1x7x300xf32> to vector<7x300xf32>
    %c21_490 = arith.constant 21 : index
    %c0_491 = arith.constant 0 : index
    %357 = vector.load %arg23[%c21_490, %c0_491] : memref<98x300xf32, #tpu.memory_space<vmem>>, vector<7x300xf32>
    tpu.vector_store %arg23[%c21_490, %c0_491], %356 {strides = array<i32>} : memref<98x300xf32, #tpu.memory_space<vmem>>, vector<7x300xf32>,
    %c4_492 = arith.constant 4 : index
    %c0_493 = arith.constant 0 : index
    %c0_494 = arith.constant 0 : index
    %358 = vector.load %arg22[%c4_492, %c0_493, %c0_494] : memref<14x7x300xf32, #tpu.memory_space<vmem>>, vector<1x7x300xf32>
    %359 = vector.shape_cast %358 : vector<1x7x300xf32> to vector<7x300xf32>
    %c28_495 = arith.constant 28 : index
    %c0_496 = arith.constant 0 : index
    %360 = vector.load %arg23[%c28_495, %c0_496] : memref<98x300xf32, #tpu.memory_space<vmem>>, vector<7x300xf32>
    tpu.vector_store %arg23[%c28_495, %c0_496], %359 {strides = array<i32>} : memref<98x300xf32, #tpu.memory_space<vmem>>, vector<7x300xf32>,
    %c5_497 = arith.constant 5 : index
    %c0_498 = arith.constant 0 : index
    %c0_499 = arith.constant 0 : index
    %361 = vector.load %arg22[%c5_497, %c0_498, %c0_499] : memref<14x7x300xf32, #tpu.memory_space<vmem>>, vector<1x7x300xf32>
    %362 = vector.shape_cast %361 : vector<1x7x300xf32> to vector<7x300xf32>
    %c35_500 = arith.constant 35 : index
    %c0_501 = arith.constant 0 : index
    %363 = vector.load %arg23[%c35_500, %c0_501] : memref<98x300xf32, #tpu.memory_space<vmem>>, vector<7x300xf32>
    tpu.vector_store %arg23[%c35_500, %c0_501], %362 {strides = array<i32>} : memref<98x300xf32, #tpu.memory_space<vmem>>, vector<7x300xf32>,
    %c6_502 = arith.constant 6 : index
    %c0_503 = arith.constant 0 : index
    %c0_504 = arith.constant 0 : index
    %364 = vector.load %arg22[%c6_502, %c0_503, %c0_504] : memref<14x7x300xf32, #tpu.memory_space<vmem>>, vector<1x7x300xf32>
    %365 = vector.shape_cast %364 : vector<1x7x300xf32> to vector<7x300xf32>
    %c42_505 = arith.constant 42 : index
    %c0_506 = arith.constant 0 : index
    %366 = vector.load %arg23[%c42_505, %c0_506] : memref<98x300xf32, #tpu.memory_space<vmem>>, vector<7x300xf32>
    tpu.vector_store %arg23[%c42_505, %c0_506], %365 {strides = array<i32>} : memref<98x300xf32, #tpu.memory_space<vmem>>, vector<7x300xf32>,
    %c7_507 = arith.constant 7 : index
    %c0_508 = arith.constant 0 : index
    %c0_509 = arith.constant 0 : index
    %367 = vector.load %arg22[%c7_507, %c0_508, %c0_509] : memref<14x7x300xf32, #tpu.memory_space<vmem>>, vector<1x7x300xf32>
    %368 = vector.shape_cast %367 : vector<1x7x300xf32> to vector<7x300xf32>
    %c49_510 = arith.constant 49 : index
    %c0_511 = arith.constant 0 : index
    %369 = vector.load %arg23[%c49_510, %c0_511] : memref<98x300xf32, #tpu.memory_space<vmem>>, vector<7x300xf32>
    tpu.vector_store %arg23[%c49_510, %c0_511], %368 {strides = array<i32>} : memref<98x300xf32, #tpu.memory_space<vmem>>, vector<7x300xf32>,
    %c8 = arith.constant 8 : index
    %c0_512 = arith.constant 0 : index
    %c0_513 = arith.constant 0 : index
    %370 = vector.load %arg22[%c8, %c0_512, %c0_513] : memref<14x7x300xf32, #tpu.memory_space<vmem>>, vector<1x7x300xf32>
    %371 = vector.shape_cast %370 : vector<1x7x300xf32> to vector<7x300xf32>
    %c56_514 = arith.constant 56 : index
    %c0_515 = arith.constant 0 : index
    %372 = vector.load %arg23[%c56_514, %c0_515] : memref<98x300xf32, #tpu.memory_space<vmem>>, vector<7x300xf32>
    tpu.vector_store %arg23[%c56_514, %c0_515], %371 {strides = array<i32>} : memref<98x300xf32, #tpu.memory_space<vmem>>, vector<7x300xf32>,
    %c9 = arith.constant 9 : index
    %c0_516 = arith.constant 0 : index
    %c0_517 = arith.constant 0 : index
    %373 = vector.load %arg22[%c9, %c0_516, %c0_517] : memref<14x7x300xf32, #tpu.memory_space<vmem>>, vector<1x7x300xf32>
    %374 = vector.shape_cast %373 : vector<1x7x300xf32> to vector<7x300xf32>
    %c63_518 = arith.constant 63 : index
    %c0_519 = arith.constant 0 : index
    %375 = vector.load %arg23[%c63_518, %c0_519] : memref<98x300xf32, #tpu.memory_space<vmem>>, vector<7x300xf32>
    tpu.vector_store %arg23[%c63_518, %c0_519], %374 {strides = array<i32>} : memref<98x300xf32, #tpu.memory_space<vmem>>, vector<7x300xf32>,
    %c10 = arith.constant 10 : index
    %c0_520 = arith.constant 0 : index
    %c0_521 = arith.constant 0 : index
    %376 = vector.load %arg22[%c10, %c0_520, %c0_521] : memref<14x7x300xf32, #tpu.memory_space<vmem>>, vector<1x7x300xf32>
    %377 = vector.shape_cast %376 : vector<1x7x300xf32> to vector<7x300xf32>
    %c70_522 = arith.constant 70 : index
    %c0_523 = arith.constant 0 : index
    %378 = vector.load %arg23[%c70_522, %c0_523] : memref<98x300xf32, #tpu.memory_space<vmem>>, vector<7x300xf32>
    tpu.vector_store %arg23[%c70_522, %c0_523], %377 {strides = array<i32>} : memref<98x300xf32, #tpu.memory_space<vmem>>, vector<7x300xf32>,
    %c11 = arith.constant 11 : index
    %c0_524 = arith.constant 0 : index
    %c0_525 = arith.constant 0 : index
    %379 = vector.load %arg22[%c11, %c0_524, %c0_525] : memref<14x7x300xf32, #tpu.memory_space<vmem>>, vector<1x7x300xf32>
    %380 = vector.shape_cast %379 : vector<1x7x300xf32> to vector<7x300xf32>
    %c77_526 = arith.constant 77 : index
    %c0_527 = arith.constant 0 : index
    %381 = vector.load %arg23[%c77_526, %c0_527] : memref<98x300xf32, #tpu.memory_space<vmem>>, vector<7x300xf32>
    tpu.vector_store %arg23[%c77_526, %c0_527], %380 {strides = array<i32>} : memref<98x300xf32, #tpu.memory_space<vmem>>, vector<7x300xf32>,
    %c12_528 = arith.constant 12 : index
    %c0_529 = arith.constant 0 : index
    %c0_530 = arith.constant 0 : index
    %382 = vector.load %arg22[%c12_528, %c0_529, %c0_530] : memref<14x7x300xf32, #tpu.memory_space<vmem>>, vector<1x7x300xf32>
    %383 = vector.shape_cast %382 : vector<1x7x300xf32> to vector<7x300xf32>
    %c84_531 = arith.constant 84 : index
    %c0_532 = arith.constant 0 : index
    %384 = vector.load %arg23[%c84_531, %c0_532] : memref<98x300xf32, #tpu.memory_space<vmem>>, vector<7x300xf32>
    tpu.vector_store %arg23[%c84_531, %c0_532], %383 {strides = array<i32>} : memref<98x300xf32, #tpu.memory_space<vmem>>, vector<7x300xf32>,
    %c13 = arith.constant 13 : index
    %c0_533 = arith.constant 0 : index
    %c0_534 = arith.constant 0 : index
    %385 = vector.load %arg22[%c13, %c0_533, %c0_534] : memref<14x7x300xf32, #tpu.memory_space<vmem>>, vector<1x7x300xf32>
    %386 = vector.shape_cast %385 : vector<1x7x300xf32> to vector<7x300xf32>
    %c91_535 = arith.constant 91 : index
    %c0_536 = arith.constant 0 : index
    %387 = vector.load %arg23[%c91_535, %c0_536] : memref<98x300xf32, #tpu.memory_space<vmem>>, vector<7x300xf32>
    tpu.vector_store %arg23[%c91_535, %c0_536], %386 {strides = array<i32>} : memref<98x300xf32, #tpu.memory_space<vmem>>, vector<7x300xf32>,
    %c0_537 = arith.constant 0 : index
    %c0_538 = arith.constant 0 : index
    %388 = vector.load %arg23[%c0_537, %c0_538] : memref<98x300xf32, #tpu.memory_space<vmem>>, vector<98x300xf32>
    %c0_539 = arith.constant 0 : index
    %c0_540 = arith.constant 0 : index
    %389 = vector.load %arg5[%c0_539, %c0_540] : memref<300x12xf32, #tpu.memory_space<vmem>>, vector<300x12xf32>
    %cst_541 = arith.constant dense<0.000000e+00> : vector<98x12xf32>
    %390 = tpu.matmul %388, %389, %cst_541 {dimension_numbers = #tpu.dot_dimension_numbers<[1], [0], [0], [1], [0, 0, 1, 1], [], []>} : vector<98x300xf32>, vector<300x12xf32>, vector<98x12xf32> -> vector<98x12xf32>
    %c0_542 = arith.constant 0 : index
    %c0_543 = arith.constant 0 : index
    %391 = vector.load %arg6[%c0_542, %c0_543] : memref<1x12xf32, #tpu.memory_space<vmem>>, vector<1x12xf32>
    %392 = vector.broadcast %391 : vector<1x12xf32> to vector<98x12xf32>
    %393 = arith.addf %390, %392 : vector<98x12xf32>
    %cst_544 = arith.constant dense<0.000000e+00> : vector<12xf32>
    %394 = vector.multi_reduction <add>, %393, %cst_544 [0] : vector<98x12xf32> to vector<12xf32>
    %395 = vector.shape_cast %394 : vector<12xf32> to vector<1x12xf32>
    %cst_545 = arith.constant 9.800000e+01 : f32
    %396 = vector.broadcast %cst_545 : f32 to vector<1x12xf32>
    %397 = arith.divf %395, %396 : vector<1x12xf32>
    %398 = vector.broadcast %397 : vector<1x12xf32> to vector<98x12xf32>
    %399 = arith.subf %393, %398 : vector<98x12xf32>
    %400 = arith.mulf %399, %399 : vector<98x12xf32>
    %cst_546 = arith.constant dense<0.000000e+00> : vector<12xf32>
    %401 = vector.multi_reduction <add>, %400, %cst_546 [0] : vector<98x12xf32> to vector<12xf32>
    %402 = vector.shape_cast %401 : vector<12xf32> to vector<1x12xf32>
    %cst_547 = arith.constant 9.800000e+01 : f32
    %403 = vector.broadcast %cst_547 : f32 to vector<1x12xf32>
    %404 = arith.divf %402, %403 : vector<1x12xf32>
    %c0_548 = arith.constant 0 : index
    %c0_549 = arith.constant 0 : index
    %405 = vector.load %arg7[%c0_548, %c0_549] : memref<1x12xf32, #tpu.memory_space<vmem>>, vector<1x12xf32>
    %406 = vector.broadcast %397 : vector<1x12xf32> to vector<98x12xf32>
    %407 = arith.subf %393, %406 : vector<98x12xf32>
    %cst_550 = arith.constant 9.99999974E-6 : f32
    %408 = vector.broadcast %cst_550 : f32 to vector<1x12xf32>
    %409 = arith.addf %404, %408 : vector<1x12xf32>
    %410 = math.rsqrt %409 : vector<1x12xf32>
    %411 = vector.broadcast %410 : vector<1x12xf32> to vector<98x12xf32>
    %412 = arith.mulf %407, %411 : vector<98x12xf32>
    %413 = vector.broadcast %405 : vector<1x12xf32> to vector<98x12xf32>
    %414 = arith.mulf %413, %412 : vector<98x12xf32>
    %c0_551 = arith.constant 0 : index
    %c0_552 = arith.constant 0 : index
    %415 = vector.load %arg8[%c0_551, %c0_552] : memref<1x12xf32, #tpu.memory_space<vmem>>, vector<1x12xf32>
    %416 = vector.broadcast %415 : vector<1x12xf32> to vector<98x12xf32>
    %417 = arith.addf %414, %416 : vector<98x12xf32>
    %cst_553 = arith.constant 0.000000e+00 : f32
    %418 = vector.broadcast %cst_553 : f32 to vector<98x12xf32>
    %419 = arith.subf %418, %417 : vector<98x12xf32>
    %420 = math.exp %419 : vector<98x12xf32>
    %cst_554 = arith.constant 1.000000e+00 : f32
    %421 = vector.broadcast %cst_554 : f32 to vector<98x12xf32>
    %422 = arith.addf %421, %420 : vector<98x12xf32>
    %423 = tpu.reciprocal %422 : vector<98x12xf32> -> vector<98x12xf32>
    %c0_555 = arith.constant 0 : index
    %c0_556 = arith.constant 0 : index
    %424 = vector.load %arg24[%c0_555, %c0_556] : memref<98x12xf32, #tpu.memory_space<vmem>>, vector<98x12xf32>
    tpu.vector_store %arg24[%c0_555, %c0_556], %423 {strides = array<i32>} : memref<98x12xf32, #tpu.memory_space<vmem>>, vector<98x12xf32>,
    %c0_557 = arith.constant 0 : index
    %c0_558 = arith.constant 0 : index
    %425 = vector.load %arg24[%c0_557, %c0_558] : memref<98x12xf32, #tpu.memory_space<vmem>>, vector<7x12xf32>
    %c0_559 = arith.constant 0 : index
    %c2_560 = arith.constant 2 : index
    %c2_561 = arith.constant 2 : index
    %c0_562 = arith.constant 0 : index
    %426 = vector.load %arg21[%c0_559, %c2_560, %c2_561, %c0_562] : memref<2x11x11x12xf32, #tpu.memory_space<vmem>>, vector<1x1x7x12xf32>
    %427 = vector.shape_cast %426 : vector<1x1x7x12xf32> to vector<7x12xf32>
    %428 = vector.shape_cast %425 : vector<7x12xf32> to vector<1x1x7x12xf32>
    tpu.vector_store %arg21[%c0_559, %c2_560, %c2_561, %c0_562], %428 {strides = array<i32>} : memref<2x11x11x12xf32, #tpu.memory_space<vmem>>, vector<1x1x7x12xf32>,
    %c7_563 = arith.constant 7 : index
    %c0_564 = arith.constant 0 : index
    %429 = vector.load %arg24[%c7_563, %c0_564] : memref<98x12xf32, #tpu.memory_space<vmem>>, vector<7x12xf32>
    %c0_565 = arith.constant 0 : index
    %c3_566 = arith.constant 3 : index
    %c2_567 = arith.constant 2 : index
    %c0_568 = arith.constant 0 : index
    %430 = vector.load %arg21[%c0_565, %c3_566, %c2_567, %c0_568] : memref<2x11x11x12xf32, #tpu.memory_space<vmem>>, vector<1x1x7x12xf32>
    %431 = vector.shape_cast %430 : vector<1x1x7x12xf32> to vector<7x12xf32>
    %432 = vector.shape_cast %429 : vector<7x12xf32> to vector<1x1x7x12xf32>
    tpu.vector_store %arg21[%c0_565, %c3_566, %c2_567, %c0_568], %432 {strides = array<i32>} : memref<2x11x11x12xf32, #tpu.memory_space<vmem>>, vector<1x1x7x12xf32>,
    %c14_569 = arith.constant 14 : index
    %c0_570 = arith.constant 0 : index
    %433 = vector.load %arg24[%c14_569, %c0_570] : memref<98x12xf32, #tpu.memory_space<vmem>>, vector<7x12xf32>
    %c0_571 = arith.constant 0 : index
    %c4_572 = arith.constant 4 : index
    %c2_573 = arith.constant 2 : index
    %c0_574 = arith.constant 0 : index
    %434 = vector.load %arg21[%c0_571, %c4_572, %c2_573, %c0_574] : memref<2x11x11x12xf32, #tpu.memory_space<vmem>>, vector<1x1x7x12xf32>
    %435 = vector.shape_cast %434 : vector<1x1x7x12xf32> to vector<7x12xf32>
    %436 = vector.shape_cast %433 : vector<7x12xf32> to vector<1x1x7x12xf32>
    tpu.vector_store %arg21[%c0_571, %c4_572, %c2_573, %c0_574], %436 {strides = array<i32>} : memref<2x11x11x12xf32, #tpu.memory_space<vmem>>, vector<1x1x7x12xf32>,
    %c21_575 = arith.constant 21 : index
    %c0_576 = arith.constant 0 : index
    %437 = vector.load %arg24[%c21_575, %c0_576] : memref<98x12xf32, #tpu.memory_space<vmem>>, vector<7x12xf32>
    %c0_577 = arith.constant 0 : index
    %c5_578 = arith.constant 5 : index
    %c2_579 = arith.constant 2 : index
    %c0_580 = arith.constant 0 : index
    %438 = vector.load %arg21[%c0_577, %c5_578, %c2_579, %c0_580] : memref<2x11x11x12xf32, #tpu.memory_space<vmem>>, vector<1x1x7x12xf32>
    %439 = vector.shape_cast %438 : vector<1x1x7x12xf32> to vector<7x12xf32>
    %440 = vector.shape_cast %437 : vector<7x12xf32> to vector<1x1x7x12xf32>
    tpu.vector_store %arg21[%c0_577, %c5_578, %c2_579, %c0_580], %440 {strides = array<i32>} : memref<2x11x11x12xf32, #tpu.memory_space<vmem>>, vector<1x1x7x12xf32>,
    %c28_581 = arith.constant 28 : index
    %c0_582 = arith.constant 0 : index
    %441 = vector.load %arg24[%c28_581, %c0_582] : memref<98x12xf32, #tpu.memory_space<vmem>>, vector<7x12xf32>
    %c0_583 = arith.constant 0 : index
    %c6_584 = arith.constant 6 : index
    %c2_585 = arith.constant 2 : index
    %c0_586 = arith.constant 0 : index
    %442 = vector.load %arg21[%c0_583, %c6_584, %c2_585, %c0_586] : memref<2x11x11x12xf32, #tpu.memory_space<vmem>>, vector<1x1x7x12xf32>
    %443 = vector.shape_cast %442 : vector<1x1x7x12xf32> to vector<7x12xf32>
    %444 = vector.shape_cast %441 : vector<7x12xf32> to vector<1x1x7x12xf32>
    tpu.vector_store %arg21[%c0_583, %c6_584, %c2_585, %c0_586], %444 {strides = array<i32>} : memref<2x11x11x12xf32, #tpu.memory_space<vmem>>, vector<1x1x7x12xf32>,
    %c35_587 = arith.constant 35 : index
    %c0_588 = arith.constant 0 : index
    %445 = vector.load %arg24[%c35_587, %c0_588] : memref<98x12xf32, #tpu.memory_space<vmem>>, vector<7x12xf32>
    %c0_589 = arith.constant 0 : index
    %c7_590 = arith.constant 7 : index
    %c2_591 = arith.constant 2 : index
    %c0_592 = arith.constant 0 : index
    %446 = vector.load %arg21[%c0_589, %c7_590, %c2_591, %c0_592] : memref<2x11x11x12xf32, #tpu.memory_space<vmem>>, vector<1x1x7x12xf32>
    %447 = vector.shape_cast %446 : vector<1x1x7x12xf32> to vector<7x12xf32>
    %448 = vector.shape_cast %445 : vector<7x12xf32> to vector<1x1x7x12xf32>
    tpu.vector_store %arg21[%c0_589, %c7_590, %c2_591, %c0_592], %448 {strides = array<i32>} : memref<2x11x11x12xf32, #tpu.memory_space<vmem>>, vector<1x1x7x12xf32>,
    %c42_593 = arith.constant 42 : index
    %c0_594 = arith.constant 0 : index
    %449 = vector.load %arg24[%c42_593, %c0_594] : memref<98x12xf32, #tpu.memory_space<vmem>>, vector<7x12xf32>
    %c0_595 = arith.constant 0 : index
    %c8_596 = arith.constant 8 : index
    %c2_597 = arith.constant 2 : index
    %c0_598 = arith.constant 0 : index
    %450 = vector.load %arg21[%c0_595, %c8_596, %c2_597, %c0_598] : memref<2x11x11x12xf32, #tpu.memory_space<vmem>>, vector<1x1x7x12xf32>
    %451 = vector.shape_cast %450 : vector<1x1x7x12xf32> to vector<7x12xf32>
    %452 = vector.shape_cast %449 : vector<7x12xf32> to vector<1x1x7x12xf32>
    tpu.vector_store %arg21[%c0_595, %c8_596, %c2_597, %c0_598], %452 {strides = array<i32>} : memref<2x11x11x12xf32, #tpu.memory_space<vmem>>, vector<1x1x7x12xf32>,
    %c49_599 = arith.constant 49 : index
    %c0_600 = arith.constant 0 : index
    %453 = vector.load %arg24[%c49_599, %c0_600] : memref<98x12xf32, #tpu.memory_space<vmem>>, vector<7x12xf32>
    %c1_601 = arith.constant 1 : index
    %c2_602 = arith.constant 2 : index
    %c2_603 = arith.constant 2 : index
    %c0_604 = arith.constant 0 : index
    %454 = vector.load %arg21[%c1_601, %c2_602, %c2_603, %c0_604] : memref<2x11x11x12xf32, #tpu.memory_space<vmem>>, vector<1x1x7x12xf32>
    %455 = vector.shape_cast %454 : vector<1x1x7x12xf32> to vector<7x12xf32>
    %456 = vector.shape_cast %453 : vector<7x12xf32> to vector<1x1x7x12xf32>
    tpu.vector_store %arg21[%c1_601, %c2_602, %c2_603, %c0_604], %456 {strides = array<i32>} : memref<2x11x11x12xf32, #tpu.memory_space<vmem>>, vector<1x1x7x12xf32>,
    %c56_605 = arith.constant 56 : index
    %c0_606 = arith.constant 0 : index
    %457 = vector.load %arg24[%c56_605, %c0_606] : memref<98x12xf32, #tpu.memory_space<vmem>>, vector<7x12xf32>
    %c1_607 = arith.constant 1 : index
    %c3_608 = arith.constant 3 : index
    %c2_609 = arith.constant 2 : index
    %c0_610 = arith.constant 0 : index
    %458 = vector.load %arg21[%c1_607, %c3_608, %c2_609, %c0_610] : memref<2x11x11x12xf32, #tpu.memory_space<vmem>>, vector<1x1x7x12xf32>
    %459 = vector.shape_cast %458 : vector<1x1x7x12xf32> to vector<7x12xf32>
    %460 = vector.shape_cast %457 : vector<7x12xf32> to vector<1x1x7x12xf32>
    tpu.vector_store %arg21[%c1_607, %c3_608, %c2_609, %c0_610], %460 {strides = array<i32>} : memref<2x11x11x12xf32, #tpu.memory_space<vmem>>, vector<1x1x7x12xf32>,
    %c63_611 = arith.constant 63 : index
    %c0_612 = arith.constant 0 : index
    %461 = vector.load %arg24[%c63_611, %c0_612] : memref<98x12xf32, #tpu.memory_space<vmem>>, vector<7x12xf32>
    %c1_613 = arith.constant 1 : index
    %c4_614 = arith.constant 4 : index
    %c2_615 = arith.constant 2 : index
    %c0_616 = arith.constant 0 : index
    %462 = vector.load %arg21[%c1_613, %c4_614, %c2_615, %c0_616] : memref<2x11x11x12xf32, #tpu.memory_space<vmem>>, vector<1x1x7x12xf32>
    %463 = vector.shape_cast %462 : vector<1x1x7x12xf32> to vector<7x12xf32>
    %464 = vector.shape_cast %461 : vector<7x12xf32> to vector<1x1x7x12xf32>
    tpu.vector_store %arg21[%c1_613, %c4_614, %c2_615, %c0_616], %464 {strides = array<i32>} : memref<2x11x11x12xf32, #tpu.memory_space<vmem>>, vector<1x1x7x12xf32>,
    %c70_617 = arith.constant 70 : index
    %c0_618 = arith.constant 0 : index
    %465 = vector.load %arg24[%c70_617, %c0_618] : memref<98x12xf32, #tpu.memory_space<vmem>>, vector<7x12xf32>
    %c1_619 = arith.constant 1 : index
    %c5_620 = arith.constant 5 : index
    %c2_621 = arith.constant 2 : index
    %c0_622 = arith.constant 0 : index
    %466 = vector.load %arg21[%c1_619, %c5_620, %c2_621, %c0_622] : memref<2x11x11x12xf32, #tpu.memory_space<vmem>>, vector<1x1x7x12xf32>
    %467 = vector.shape_cast %466 : vector<1x1x7x12xf32> to vector<7x12xf32>
    %468 = vector.shape_cast %465 : vector<7x12xf32> to vector<1x1x7x12xf32>
    tpu.vector_store %arg21[%c1_619, %c5_620, %c2_621, %c0_622], %468 {strides = array<i32>} : memref<2x11x11x12xf32, #tpu.memory_space<vmem>>, vector<1x1x7x12xf32>,
    %c77_623 = arith.constant 77 : index
    %c0_624 = arith.constant 0 : index
    %469 = vector.load %arg24[%c77_623, %c0_624] : memref<98x12xf32, #tpu.memory_space<vmem>>, vector<7x12xf32>
    %c1_625 = arith.constant 1 : index
    %c6_626 = arith.constant 6 : index
    %c2_627 = arith.constant 2 : index
    %c0_628 = arith.constant 0 : index
    %470 = vector.load %arg21[%c1_625, %c6_626, %c2_627, %c0_628] : memref<2x11x11x12xf32, #tpu.memory_space<vmem>>, vector<1x1x7x12xf32>
    %471 = vector.shape_cast %470 : vector<1x1x7x12xf32> to vector<7x12xf32>
    %472 = vector.shape_cast %469 : vector<7x12xf32> to vector<1x1x7x12xf32>
    tpu.vector_store %arg21[%c1_625, %c6_626, %c2_627, %c0_628], %472 {strides = array<i32>} : memref<2x11x11x12xf32, #tpu.memory_space<vmem>>, vector<1x1x7x12xf32>,
    %c84_629 = arith.constant 84 : index
    %c0_630 = arith.constant 0 : index
    %473 = vector.load %arg24[%c84_629, %c0_630] : memref<98x12xf32, #tpu.memory_space<vmem>>, vector<7x12xf32>
    %c1_631 = arith.constant 1 : index
    %c7_632 = arith.constant 7 : index
    %c2_633 = arith.constant 2 : index
    %c0_634 = arith.constant 0 : index
    %474 = vector.load %arg21[%c1_631, %c7_632, %c2_633, %c0_634] : memref<2x11x11x12xf32, #tpu.memory_space<vmem>>, vector<1x1x7x12xf32>
    %475 = vector.shape_cast %474 : vector<1x1x7x12xf32> to vector<7x12xf32>
    %476 = vector.shape_cast %473 : vector<7x12xf32> to vector<1x1x7x12xf32>
    tpu.vector_store %arg21[%c1_631, %c7_632, %c2_633, %c0_634], %476 {strides = array<i32>} : memref<2x11x11x12xf32, #tpu.memory_space<vmem>>, vector<1x1x7x12xf32>,
    %c91_635 = arith.constant 91 : index
    %c0_636 = arith.constant 0 : index
    %477 = vector.load %arg24[%c91_635, %c0_636] : memref<98x12xf32, #tpu.memory_space<vmem>>, vector<7x12xf32>
    %c1_637 = arith.constant 1 : index
    %c8_638 = arith.constant 8 : index
    %c2_639 = arith.constant 2 : index
    %c0_640 = arith.constant 0 : index
    %478 = vector.load %arg21[%c1_637, %c8_638, %c2_639, %c0_640] : memref<2x11x11x12xf32, #tpu.memory_space<vmem>>, vector<1x1x7x12xf32>
    %479 = vector.shape_cast %478 : vector<1x1x7x12xf32> to vector<7x12xf32>
    %480 = vector.shape_cast %477 : vector<7x12xf32> to vector<1x1x7x12xf32>
    tpu.vector_store %arg21[%c1_637, %c8_638, %c2_639, %c0_640], %480 {strides = array<i32>} : memref<2x11x11x12xf32, #tpu.memory_space<vmem>>, vector<1x1x7x12xf32>,
    %c0_641 = arith.constant 0 : index
    %c0_642 = arith.constant 0 : index
    %c0_643 = arith.constant 0 : index
    %c0_644 = arith.constant 0 : index
    %481 = vector.load %arg21[%c0_641, %c0_642, %c0_643, %c0_644] : memref<2x11x11x12xf32, #tpu.memory_space<vmem>>, vector<2x7x7x12xf32>
    %482 = vector.shape_cast %481 : vector<2x7x7x12xf32> to vector<14x7x12xf32>
    %c0_645 = arith.constant 0 : index
    %c0_646 = arith.constant 0 : index
    %c0_647 = arith.constant 0 : index
    %483 = vector.load %arg22[%c0_645, %c0_646, %c0_647] : memref<14x7x300xf32, #tpu.memory_space<vmem>>, vector<14x7x12xf32>
    tpu.vector_store %arg22[%c0_645, %c0_646, %c0_647], %482 {strides = array<i32>} : memref<14x7x300xf32, #tpu.memory_space<vmem>>, vector<14x7x12xf32>,
    %c0_648 = arith.constant 0 : index
    %c0_649 = arith.constant 0 : index
    %c1_650 = arith.constant 1 : index
    %c0_651 = arith.constant 0 : index
    %484 = vector.load %arg21[%c0_648, %c0_649, %c1_650, %c0_651] : memref<2x11x11x12xf32, #tpu.memory_space<vmem>>, vector<2x7x7x12xf32>
    %485 = vector.shape_cast %484 : vector<2x7x7x12xf32> to vector<14x7x12xf32>
    %c0_652 = arith.constant 0 : index
    %c0_653 = arith.constant 0 : index
    %c12_654 = arith.constant 12 : index
    %486 = vector.load %arg22[%c0_652, %c0_653, %c12_654] : memref<14x7x300xf32, #tpu.memory_space<vmem>>, vector<14x7x12xf32>
    tpu.vector_store %arg22[%c0_652, %c0_653, %c12_654], %485 {strides = array<i32>} : memref<14x7x300xf32, #tpu.memory_space<vmem>>, vector<14x7x12xf32>,
    %c0_655 = arith.constant 0 : index
    %c0_656 = arith.constant 0 : index
    %c2_657 = arith.constant 2 : index
    %c0_658 = arith.constant 0 : index
    %487 = vector.load %arg21[%c0_655, %c0_656, %c2_657, %c0_658] : memref<2x11x11x12xf32, #tpu.memory_space<vmem>>, vector<2x7x7x12xf32>
    %488 = vector.shape_cast %487 : vector<2x7x7x12xf32> to vector<14x7x12xf32>
    %c0_659 = arith.constant 0 : index
    %c0_660 = arith.constant 0 : index
    %c24_661 = arith.constant 24 : index
    %489 = vector.load %arg22[%c0_659, %c0_660, %c24_661] : memref<14x7x300xf32, #tpu.memory_space<vmem>>, vector<14x7x12xf32>
    tpu.vector_store %arg22[%c0_659, %c0_660, %c24_661], %488 {strides = array<i32>} : memref<14x7x300xf32, #tpu.memory_space<vmem>>, vector<14x7x12xf32>,
    %c0_662 = arith.constant 0 : index
    %c0_663 = arith.constant 0 : index
    %c3_664 = arith.constant 3 : index
    %c0_665 = arith.constant 0 : index
    %490 = vector.load %arg21[%c0_662, %c0_663, %c3_664, %c0_665] : memref<2x11x11x12xf32, #tpu.memory_space<vmem>>, vector<2x7x7x12xf32>
    %491 = vector.shape_cast %490 : vector<2x7x7x12xf32> to vector<14x7x12xf32>
    %c0_666 = arith.constant 0 : index
    %c0_667 = arith.constant 0 : index
    %c36_668 = arith.constant 36 : index
    %492 = vector.load %arg22[%c0_666, %c0_667, %c36_668] : memref<14x7x300xf32, #tpu.memory_space<vmem>>, vector<14x7x12xf32>
    tpu.vector_store %arg22[%c0_666, %c0_667, %c36_668], %491 {strides = array<i32>} : memref<14x7x300xf32, #tpu.memory_space<vmem>>, vector<14x7x12xf32>,
    %c0_669 = arith.constant 0 : index
    %c0_670 = arith.constant 0 : index
    %c4_671 = arith.constant 4 : index
    %c0_672 = arith.constant 0 : index
    %493 = vector.load %arg21[%c0_669, %c0_670, %c4_671, %c0_672] : memref<2x11x11x12xf32, #tpu.memory_space<vmem>>, vector<2x7x7x12xf32>
    %494 = vector.shape_cast %493 : vector<2x7x7x12xf32> to vector<14x7x12xf32>
    %c0_673 = arith.constant 0 : index
    %c0_674 = arith.constant 0 : index
    %c48_675 = arith.constant 48 : index
    %495 = vector.load %arg22[%c0_673, %c0_674, %c48_675] : memref<14x7x300xf32, #tpu.memory_space<vmem>>, vector<14x7x12xf32>
    tpu.vector_store %arg22[%c0_673, %c0_674, %c48_675], %494 {strides = array<i32>} : memref<14x7x300xf32, #tpu.memory_space<vmem>>, vector<14x7x12xf32>,
    %c0_676 = arith.constant 0 : index
    %c1_677 = arith.constant 1 : index
    %c0_678 = arith.constant 0 : index
    %c0_679 = arith.constant 0 : index
    %496 = vector.load %arg21[%c0_676, %c1_677, %c0_678, %c0_679] : memref<2x11x11x12xf32, #tpu.memory_space<vmem>>, vector<2x7x7x12xf32>
    %497 = vector.shape_cast %496 : vector<2x7x7x12xf32> to vector<14x7x12xf32>
    %c0_680 = arith.constant 0 : index
    %c0_681 = arith.constant 0 : index
    %c60_682 = arith.constant 60 : index
    %498 = vector.load %arg22[%c0_680, %c0_681, %c60_682] : memref<14x7x300xf32, #tpu.memory_space<vmem>>, vector<14x7x12xf32>
    tpu.vector_store %arg22[%c0_680, %c0_681, %c60_682], %497 {strides = array<i32>} : memref<14x7x300xf32, #tpu.memory_space<vmem>>, vector<14x7x12xf32>,
    %c0_683 = arith.constant 0 : index
    %c1_684 = arith.constant 1 : index
    %c1_685 = arith.constant 1 : index
    %c0_686 = arith.constant 0 : index
    %499 = vector.load %arg21[%c0_683, %c1_684, %c1_685, %c0_686] : memref<2x11x11x12xf32, #tpu.memory_space<vmem>>, vector<2x7x7x12xf32>
    %500 = vector.shape_cast %499 : vector<2x7x7x12xf32> to vector<14x7x12xf32>
    %c0_687 = arith.constant 0 : index
    %c0_688 = arith.constant 0 : index
    %c72_689 = arith.constant 72 : index
    %501 = vector.load %arg22[%c0_687, %c0_688, %c72_689] : memref<14x7x300xf32, #tpu.memory_space<vmem>>, vector<14x7x12xf32>
    tpu.vector_store %arg22[%c0_687, %c0_688, %c72_689], %500 {strides = array<i32>} : memref<14x7x300xf32, #tpu.memory_space<vmem>>, vector<14x7x12xf32>,
    %c0_690 = arith.constant 0 : index
    %c1_691 = arith.constant 1 : index
    %c2_692 = arith.constant 2 : index
    %c0_693 = arith.constant 0 : index
    %502 = vector.load %arg21[%c0_690, %c1_691, %c2_692, %c0_693] : memref<2x11x11x12xf32, #tpu.memory_space<vmem>>, vector<2x7x7x12xf32>
    %503 = vector.shape_cast %502 : vector<2x7x7x12xf32> to vector<14x7x12xf32>
    %c0_694 = arith.constant 0 : index
    %c0_695 = arith.constant 0 : index
    %c84_696 = arith.constant 84 : index
    %504 = vector.load %arg22[%c0_694, %c0_695, %c84_696] : memref<14x7x300xf32, #tpu.memory_space<vmem>>, vector<14x7x12xf32>
    tpu.vector_store %arg22[%c0_694, %c0_695, %c84_696], %503 {strides = array<i32>} : memref<14x7x300xf32, #tpu.memory_space<vmem>>, vector<14x7x12xf32>,
    %c0_697 = arith.constant 0 : index
    %c1_698 = arith.constant 1 : index
    %c3_699 = arith.constant 3 : index
    %c0_700 = arith.constant 0 : index
    %505 = vector.load %arg21[%c0_697, %c1_698, %c3_699, %c0_700] : memref<2x11x11x12xf32, #tpu.memory_space<vmem>>, vector<2x7x7x12xf32>
    %506 = vector.shape_cast %505 : vector<2x7x7x12xf32> to vector<14x7x12xf32>
    %c0_701 = arith.constant 0 : index
    %c0_702 = arith.constant 0 : index
    %c96_703 = arith.constant 96 : index
    %507 = vector.load %arg22[%c0_701, %c0_702, %c96_703] : memref<14x7x300xf32, #tpu.memory_space<vmem>>, vector<14x7x12xf32>
    tpu.vector_store %arg22[%c0_701, %c0_702, %c96_703], %506 {strides = array<i32>} : memref<14x7x300xf32, #tpu.memory_space<vmem>>, vector<14x7x12xf32>,
    %c0_704 = arith.constant 0 : index
    %c1_705 = arith.constant 1 : index
    %c4_706 = arith.constant 4 : index
    %c0_707 = arith.constant 0 : index
    %508 = vector.load %arg21[%c0_704, %c1_705, %c4_706, %c0_707] : memref<2x11x11x12xf32, #tpu.memory_space<vmem>>, vector<2x7x7x12xf32>
    %509 = vector.shape_cast %508 : vector<2x7x7x12xf32> to vector<14x7x12xf32>
    %c0_708 = arith.constant 0 : index
    %c0_709 = arith.constant 0 : index
    %c108_710 = arith.constant 108 : index
    %510 = vector.load %arg22[%c0_708, %c0_709, %c108_710] : memref<14x7x300xf32, #tpu.memory_space<vmem>>, vector<14x7x12xf32>
    tpu.vector_store %arg22[%c0_708, %c0_709, %c108_710], %509 {strides = array<i32>} : memref<14x7x300xf32, #tpu.memory_space<vmem>>, vector<14x7x12xf32>,
    %c0_711 = arith.constant 0 : index
    %c2_712 = arith.constant 2 : index
    %c0_713 = arith.constant 0 : index
    %c0_714 = arith.constant 0 : index
    %511 = vector.load %arg21[%c0_711, %c2_712, %c0_713, %c0_714] : memref<2x11x11x12xf32, #tpu.memory_space<vmem>>, vector<2x7x7x12xf32>
    %512 = vector.shape_cast %511 : vector<2x7x7x12xf32> to vector<14x7x12xf32>
    %c0_715 = arith.constant 0 : index
    %c0_716 = arith.constant 0 : index
    %c120_717 = arith.constant 120 : index
    %513 = vector.load %arg22[%c0_715, %c0_716, %c120_717] : memref<14x7x300xf32, #tpu.memory_space<vmem>>, vector<14x7x12xf32>
    tpu.vector_store %arg22[%c0_715, %c0_716, %c120_717], %512 {strides = array<i32>} : memref<14x7x300xf32, #tpu.memory_space<vmem>>, vector<14x7x12xf32>,
    %c0_718 = arith.constant 0 : index
    %c2_719 = arith.constant 2 : index
    %c1_720 = arith.constant 1 : index
    %c0_721 = arith.constant 0 : index
    %514 = vector.load %arg21[%c0_718, %c2_719, %c1_720, %c0_721] : memref<2x11x11x12xf32, #tpu.memory_space<vmem>>, vector<2x7x7x12xf32>
    %515 = vector.shape_cast %514 : vector<2x7x7x12xf32> to vector<14x7x12xf32>
    %c0_722 = arith.constant 0 : index
    %c0_723 = arith.constant 0 : index
    %c132_724 = arith.constant 132 : index
    %516 = vector.load %arg22[%c0_722, %c0_723, %c132_724] : memref<14x7x300xf32, #tpu.memory_space<vmem>>, vector<14x7x12xf32>
    tpu.vector_store %arg22[%c0_722, %c0_723, %c132_724], %515 {strides = array<i32>} : memref<14x7x300xf32, #tpu.memory_space<vmem>>, vector<14x7x12xf32>,
    %c0_725 = arith.constant 0 : index
    %c2_726 = arith.constant 2 : index
    %c2_727 = arith.constant 2 : index
    %c0_728 = arith.constant 0 : index
    %517 = vector.load %arg21[%c0_725, %c2_726, %c2_727, %c0_728] : memref<2x11x11x12xf32, #tpu.memory_space<vmem>>, vector<2x7x7x12xf32>
    %518 = vector.shape_cast %517 : vector<2x7x7x12xf32> to vector<14x7x12xf32>
    %c0_729 = arith.constant 0 : index
    %c0_730 = arith.constant 0 : index
    %c144_731 = arith.constant 144 : index
    %519 = vector.load %arg22[%c0_729, %c0_730, %c144_731] : memref<14x7x300xf32, #tpu.memory_space<vmem>>, vector<14x7x12xf32>
    tpu.vector_store %arg22[%c0_729, %c0_730, %c144_731], %518 {strides = array<i32>} : memref<14x7x300xf32, #tpu.memory_space<vmem>>, vector<14x7x12xf32>,
    %c0_732 = arith.constant 0 : index
    %c2_733 = arith.constant 2 : index
    %c3_734 = arith.constant 3 : index
    %c0_735 = arith.constant 0 : index
    %520 = vector.load %arg21[%c0_732, %c2_733, %c3_734, %c0_735] : memref<2x11x11x12xf32, #tpu.memory_space<vmem>>, vector<2x7x7x12xf32>
    %521 = vector.shape_cast %520 : vector<2x7x7x12xf32> to vector<14x7x12xf32>
    %c0_736 = arith.constant 0 : index
    %c0_737 = arith.constant 0 : index
    %c156_738 = arith.constant 156 : index
    %522 = vector.load %arg22[%c0_736, %c0_737, %c156_738] : memref<14x7x300xf32, #tpu.memory_space<vmem>>, vector<14x7x12xf32>
    tpu.vector_store %arg22[%c0_736, %c0_737, %c156_738], %521 {strides = array<i32>} : memref<14x7x300xf32, #tpu.memory_space<vmem>>, vector<14x7x12xf32>,
    %c0_739 = arith.constant 0 : index
    %c2_740 = arith.constant 2 : index
    %c4_741 = arith.constant 4 : index
    %c0_742 = arith.constant 0 : index
    %523 = vector.load %arg21[%c0_739, %c2_740, %c4_741, %c0_742] : memref<2x11x11x12xf32, #tpu.memory_space<vmem>>, vector<2x7x7x12xf32>
    %524 = vector.shape_cast %523 : vector<2x7x7x12xf32> to vector<14x7x12xf32>
    %c0_743 = arith.constant 0 : index
    %c0_744 = arith.constant 0 : index
    %c168_745 = arith.constant 168 : index
    %525 = vector.load %arg22[%c0_743, %c0_744, %c168_745] : memref<14x7x300xf32, #tpu.memory_space<vmem>>, vector<14x7x12xf32>
    tpu.vector_store %arg22[%c0_743, %c0_744, %c168_745], %524 {strides = array<i32>} : memref<14x7x300xf32, #tpu.memory_space<vmem>>, vector<14x7x12xf32>,
    %c0_746 = arith.constant 0 : index
    %c3_747 = arith.constant 3 : index
    %c0_748 = arith.constant 0 : index
    %c0_749 = arith.constant 0 : index
    %526 = vector.load %arg21[%c0_746, %c3_747, %c0_748, %c0_749] : memref<2x11x11x12xf32, #tpu.memory_space<vmem>>, vector<2x7x7x12xf32>
    %527 = vector.shape_cast %526 : vector<2x7x7x12xf32> to vector<14x7x12xf32>
    %c0_750 = arith.constant 0 : index
    %c0_751 = arith.constant 0 : index
    %c180_752 = arith.constant 180 : index
    %528 = vector.load %arg22[%c0_750, %c0_751, %c180_752] : memref<14x7x300xf32, #tpu.memory_space<vmem>>, vector<14x7x12xf32>
    tpu.vector_store %arg22[%c0_750, %c0_751, %c180_752], %527 {strides = array<i32>} : memref<14x7x300xf32, #tpu.memory_space<vmem>>, vector<14x7x12xf32>,
    %c0_753 = arith.constant 0 : index
    %c3_754 = arith.constant 3 : index
    %c1_755 = arith.constant 1 : index
    %c0_756 = arith.constant 0 : index
    %529 = vector.load %arg21[%c0_753, %c3_754, %c1_755, %c0_756] : memref<2x11x11x12xf32, #tpu.memory_space<vmem>>, vector<2x7x7x12xf32>
    %530 = vector.shape_cast %529 : vector<2x7x7x12xf32> to vector<14x7x12xf32>
    %c0_757 = arith.constant 0 : index
    %c0_758 = arith.constant 0 : index
    %c192_759 = arith.constant 192 : index
    %531 = vector.load %arg22[%c0_757, %c0_758, %c192_759] : memref<14x7x300xf32, #tpu.memory_space<vmem>>, vector<14x7x12xf32>
    tpu.vector_store %arg22[%c0_757, %c0_758, %c192_759], %530 {strides = array<i32>} : memref<14x7x300xf32, #tpu.memory_space<vmem>>, vector<14x7x12xf32>,
    %c0_760 = arith.constant 0 : index
    %c3_761 = arith.constant 3 : index
    %c2_762 = arith.constant 2 : index
    %c0_763 = arith.constant 0 : index
    %532 = vector.load %arg21[%c0_760, %c3_761, %c2_762, %c0_763] : memref<2x11x11x12xf32, #tpu.memory_space<vmem>>, vector<2x7x7x12xf32>
    %533 = vector.shape_cast %532 : vector<2x7x7x12xf32> to vector<14x7x12xf32>
    %c0_764 = arith.constant 0 : index
    %c0_765 = arith.constant 0 : index
    %c204_766 = arith.constant 204 : index
    %534 = vector.load %arg22[%c0_764, %c0_765, %c204_766] : memref<14x7x300xf32, #tpu.memory_space<vmem>>, vector<14x7x12xf32>
    tpu.vector_store %arg22[%c0_764, %c0_765, %c204_766], %533 {strides = array<i32>} : memref<14x7x300xf32, #tpu.memory_space<vmem>>, vector<14x7x12xf32>,
    %c0_767 = arith.constant 0 : index
    %c3_768 = arith.constant 3 : index
    %c3_769 = arith.constant 3 : index
    %c0_770 = arith.constant 0 : index
    %535 = vector.load %arg21[%c0_767, %c3_768, %c3_769, %c0_770] : memref<2x11x11x12xf32, #tpu.memory_space<vmem>>, vector<2x7x7x12xf32>
    %536 = vector.shape_cast %535 : vector<2x7x7x12xf32> to vector<14x7x12xf32>
    %c0_771 = arith.constant 0 : index
    %c0_772 = arith.constant 0 : index
    %c216_773 = arith.constant 216 : index
    %537 = vector.load %arg22[%c0_771, %c0_772, %c216_773] : memref<14x7x300xf32, #tpu.memory_space<vmem>>, vector<14x7x12xf32>
    tpu.vector_store %arg22[%c0_771, %c0_772, %c216_773], %536 {strides = array<i32>} : memref<14x7x300xf32, #tpu.memory_space<vmem>>, vector<14x7x12xf32>,
    %c0_774 = arith.constant 0 : index
    %c3_775 = arith.constant 3 : index
    %c4_776 = arith.constant 4 : index
    %c0_777 = arith.constant 0 : index
    %538 = vector.load %arg21[%c0_774, %c3_775, %c4_776, %c0_777] : memref<2x11x11x12xf32, #tpu.memory_space<vmem>>, vector<2x7x7x12xf32>
    %539 = vector.shape_cast %538 : vector<2x7x7x12xf32> to vector<14x7x12xf32>
    %c0_778 = arith.constant 0 : index
    %c0_779 = arith.constant 0 : index
    %c228_780 = arith.constant 228 : index
    %540 = vector.load %arg22[%c0_778, %c0_779, %c228_780] : memref<14x7x300xf32, #tpu.memory_space<vmem>>, vector<14x7x12xf32>
    tpu.vector_store %arg22[%c0_778, %c0_779, %c228_780], %539 {strides = array<i32>} : memref<14x7x300xf32, #tpu.memory_space<vmem>>, vector<14x7x12xf32>,
    %c0_781 = arith.constant 0 : index
    %c4_782 = arith.constant 4 : index
    %c0_783 = arith.constant 0 : index
    %c0_784 = arith.constant 0 : index
    %541 = vector.load %arg21[%c0_781, %c4_782, %c0_783, %c0_784] : memref<2x11x11x12xf32, #tpu.memory_space<vmem>>, vector<2x7x7x12xf32>
    %542 = vector.shape_cast %541 : vector<2x7x7x12xf32> to vector<14x7x12xf32>
    %c0_785 = arith.constant 0 : index
    %c0_786 = arith.constant 0 : index
    %c240_787 = arith.constant 240 : index
    %543 = vector.load %arg22[%c0_785, %c0_786, %c240_787] : memref<14x7x300xf32, #tpu.memory_space<vmem>>, vector<14x7x12xf32>
    tpu.vector_store %arg22[%c0_785, %c0_786, %c240_787], %542 {strides = array<i32>} : memref<14x7x300xf32, #tpu.memory_space<vmem>>, vector<14x7x12xf32>,
    %c0_788 = arith.constant 0 : index
    %c4_789 = arith.constant 4 : index
    %c1_790 = arith.constant 1 : index
    %c0_791 = arith.constant 0 : index
    %544 = vector.load %arg21[%c0_788, %c4_789, %c1_790, %c0_791] : memref<2x11x11x12xf32, #tpu.memory_space<vmem>>, vector<2x7x7x12xf32>
    %545 = vector.shape_cast %544 : vector<2x7x7x12xf32> to vector<14x7x12xf32>
    %c0_792 = arith.constant 0 : index
    %c0_793 = arith.constant 0 : index
    %c252_794 = arith.constant 252 : index
    %546 = vector.load %arg22[%c0_792, %c0_793, %c252_794] : memref<14x7x300xf32, #tpu.memory_space<vmem>>, vector<14x7x12xf32>
    tpu.vector_store %arg22[%c0_792, %c0_793, %c252_794], %545 {strides = array<i32>} : memref<14x7x300xf32, #tpu.memory_space<vmem>>, vector<14x7x12xf32>,
    %c0_795 = arith.constant 0 : index
    %c4_796 = arith.constant 4 : index
    %c2_797 = arith.constant 2 : index
    %c0_798 = arith.constant 0 : index
    %547 = vector.load %arg21[%c0_795, %c4_796, %c2_797, %c0_798] : memref<2x11x11x12xf32, #tpu.memory_space<vmem>>, vector<2x7x7x12xf32>
    %548 = vector.shape_cast %547 : vector<2x7x7x12xf32> to vector<14x7x12xf32>
    %c0_799 = arith.constant 0 : index
    %c0_800 = arith.constant 0 : index
    %c264_801 = arith.constant 264 : index
    %549 = vector.load %arg22[%c0_799, %c0_800, %c264_801] : memref<14x7x300xf32, #tpu.memory_space<vmem>>, vector<14x7x12xf32>
    tpu.vector_store %arg22[%c0_799, %c0_800, %c264_801], %548 {strides = array<i32>} : memref<14x7x300xf32, #tpu.memory_space<vmem>>, vector<14x7x12xf32>,
    %c0_802 = arith.constant 0 : index
    %c4_803 = arith.constant 4 : index
    %c3_804 = arith.constant 3 : index
    %c0_805 = arith.constant 0 : index
    %550 = vector.load %arg21[%c0_802, %c4_803, %c3_804, %c0_805] : memref<2x11x11x12xf32, #tpu.memory_space<vmem>>, vector<2x7x7x12xf32>
    %551 = vector.shape_cast %550 : vector<2x7x7x12xf32> to vector<14x7x12xf32>
    %c0_806 = arith.constant 0 : index
    %c0_807 = arith.constant 0 : index
    %c276_808 = arith.constant 276 : index
    %552 = vector.load %arg22[%c0_806, %c0_807, %c276_808] : memref<14x7x300xf32, #tpu.memory_space<vmem>>, vector<14x7x12xf32>
    tpu.vector_store %arg22[%c0_806, %c0_807, %c276_808], %551 {strides = array<i32>} : memref<14x7x300xf32, #tpu.memory_space<vmem>>, vector<14x7x12xf32>,
    %c0_809 = arith.constant 0 : index
    %c4_810 = arith.constant 4 : index
    %c4_811 = arith.constant 4 : index
    %c0_812 = arith.constant 0 : index
    %553 = vector.load %arg21[%c0_809, %c4_810, %c4_811, %c0_812] : memref<2x11x11x12xf32, #tpu.memory_space<vmem>>, vector<2x7x7x12xf32>
    %554 = vector.shape_cast %553 : vector<2x7x7x12xf32> to vector<14x7x12xf32>
    %c0_813 = arith.constant 0 : index
    %c0_814 = arith.constant 0 : index
    %c288_815 = arith.constant 288 : index
    %555 = vector.load %arg22[%c0_813, %c0_814, %c288_815] : memref<14x7x300xf32, #tpu.memory_space<vmem>>, vector<14x7x12xf32>
    tpu.vector_store %arg22[%c0_813, %c0_814, %c288_815], %554 {strides = array<i32>} : memref<14x7x300xf32, #tpu.memory_space<vmem>>, vector<14x7x12xf32>,
    %c0_816 = arith.constant 0 : index
    %c0_817 = arith.constant 0 : index
    %c0_818 = arith.constant 0 : index
    %556 = vector.load %arg22[%c0_816, %c0_817, %c0_818] : memref<14x7x300xf32, #tpu.memory_space<vmem>>, vector<1x7x300xf32>
    %557 = vector.shape_cast %556 : vector<1x7x300xf32> to vector<7x300xf32>
    %c0_819 = arith.constant 0 : index
    %c0_820 = arith.constant 0 : index
    %558 = vector.load %arg23[%c0_819, %c0_820] : memref<98x300xf32, #tpu.memory_space<vmem>>, vector<7x300xf32>
    tpu.vector_store %arg23[%c0_819, %c0_820], %557 {strides = array<i32>} : memref<98x300xf32, #tpu.memory_space<vmem>>, vector<7x300xf32>,
    %c1_821 = arith.constant 1 : index
    %c0_822 = arith.constant 0 : index
    %c0_823 = arith.constant 0 : index
    %559 = vector.load %arg22[%c1_821, %c0_822, %c0_823] : memref<14x7x300xf32, #tpu.memory_space<vmem>>, vector<1x7x300xf32>
    %560 = vector.shape_cast %559 : vector<1x7x300xf32> to vector<7x300xf32>
    %c7_824 = arith.constant 7 : index
    %c0_825 = arith.constant 0 : index
    %561 = vector.load %arg23[%c7_824, %c0_825] : memref<98x300xf32, #tpu.memory_space<vmem>>, vector<7x300xf32>
    tpu.vector_store %arg23[%c7_824, %c0_825], %560 {strides = array<i32>} : memref<98x300xf32, #tpu.memory_space<vmem>>, vector<7x300xf32>,
    %c2_826 = arith.constant 2 : index
    %c0_827 = arith.constant 0 : index
    %c0_828 = arith.constant 0 : index
    %562 = vector.load %arg22[%c2_826, %c0_827, %c0_828] : memref<14x7x300xf32, #tpu.memory_space<vmem>>, vector<1x7x300xf32>
    %563 = vector.shape_cast %562 : vector<1x7x300xf32> to vector<7x300xf32>
    %c14_829 = arith.constant 14 : index
    %c0_830 = arith.constant 0 : index
    %564 = vector.load %arg23[%c14_829, %c0_830] : memref<98x300xf32, #tpu.memory_space<vmem>>, vector<7x300xf32>
    tpu.vector_store %arg23[%c14_829, %c0_830], %563 {strides = array<i32>} : memref<98x300xf32, #tpu.memory_space<vmem>>, vector<7x300xf32>,
    %c3_831 = arith.constant 3 : index
    %c0_832 = arith.constant 0 : index
    %c0_833 = arith.constant 0 : index
    %565 = vector.load %arg22[%c3_831, %c0_832, %c0_833] : memref<14x7x300xf32, #tpu.memory_space<vmem>>, vector<1x7x300xf32>
    %566 = vector.shape_cast %565 : vector<1x7x300xf32> to vector<7x300xf32>
    %c21_834 = arith.constant 21 : index
    %c0_835 = arith.constant 0 : index
    %567 = vector.load %arg23[%c21_834, %c0_835] : memref<98x300xf32, #tpu.memory_space<vmem>>, vector<7x300xf32>
    tpu.vector_store %arg23[%c21_834, %c0_835], %566 {strides = array<i32>} : memref<98x300xf32, #tpu.memory_space<vmem>>, vector<7x300xf32>,
    %c4_836 = arith.constant 4 : index
    %c0_837 = arith.constant 0 : index
    %c0_838 = arith.constant 0 : index
    %568 = vector.load %arg22[%c4_836, %c0_837, %c0_838] : memref<14x7x300xf32, #tpu.memory_space<vmem>>, vector<1x7x300xf32>
    %569 = vector.shape_cast %568 : vector<1x7x300xf32> to vector<7x300xf32>
    %c28_839 = arith.constant 28 : index
    %c0_840 = arith.constant 0 : index
    %570 = vector.load %arg23[%c28_839, %c0_840] : memref<98x300xf32, #tpu.memory_space<vmem>>, vector<7x300xf32>
    tpu.vector_store %arg23[%c28_839, %c0_840], %569 {strides = array<i32>} : memref<98x300xf32, #tpu.memory_space<vmem>>, vector<7x300xf32>,
    %c5_841 = arith.constant 5 : index
    %c0_842 = arith.constant 0 : index
    %c0_843 = arith.constant 0 : index
    %571 = vector.load %arg22[%c5_841, %c0_842, %c0_843] : memref<14x7x300xf32, #tpu.memory_space<vmem>>, vector<1x7x300xf32>
    %572 = vector.shape_cast %571 : vector<1x7x300xf32> to vector<7x300xf32>
    %c35_844 = arith.constant 35 : index
    %c0_845 = arith.constant 0 : index
    %573 = vector.load %arg23[%c35_844, %c0_845] : memref<98x300xf32, #tpu.memory_space<vmem>>, vector<7x300xf32>
    tpu.vector_store %arg23[%c35_844, %c0_845], %572 {strides = array<i32>} : memref<98x300xf32, #tpu.memory_space<vmem>>, vector<7x300xf32>,
    %c6_846 = arith.constant 6 : index
    %c0_847 = arith.constant 0 : index
    %c0_848 = arith.constant 0 : index
    %574 = vector.load %arg22[%c6_846, %c0_847, %c0_848] : memref<14x7x300xf32, #tpu.memory_space<vmem>>, vector<1x7x300xf32>
    %575 = vector.shape_cast %574 : vector<1x7x300xf32> to vector<7x300xf32>
    %c42_849 = arith.constant 42 : index
    %c0_850 = arith.constant 0 : index
    %576 = vector.load %arg23[%c42_849, %c0_850] : memref<98x300xf32, #tpu.memory_space<vmem>>, vector<7x300xf32>
    tpu.vector_store %arg23[%c42_849, %c0_850], %575 {strides = array<i32>} : memref<98x300xf32, #tpu.memory_space<vmem>>, vector<7x300xf32>,
    %c7_851 = arith.constant 7 : index
    %c0_852 = arith.constant 0 : index
    %c0_853 = arith.constant 0 : index
    %577 = vector.load %arg22[%c7_851, %c0_852, %c0_853] : memref<14x7x300xf32, #tpu.memory_space<vmem>>, vector<1x7x300xf32>
    %578 = vector.shape_cast %577 : vector<1x7x300xf32> to vector<7x300xf32>
    %c49_854 = arith.constant 49 : index
    %c0_855 = arith.constant 0 : index
    %579 = vector.load %arg23[%c49_854, %c0_855] : memref<98x300xf32, #tpu.memory_space<vmem>>, vector<7x300xf32>
    tpu.vector_store %arg23[%c49_854, %c0_855], %578 {strides = array<i32>} : memref<98x300xf32, #tpu.memory_space<vmem>>, vector<7x300xf32>,
    %c8_856 = arith.constant 8 : index
    %c0_857 = arith.constant 0 : index
    %c0_858 = arith.constant 0 : index
    %580 = vector.load %arg22[%c8_856, %c0_857, %c0_858] : memref<14x7x300xf32, #tpu.memory_space<vmem>>, vector<1x7x300xf32>
    %581 = vector.shape_cast %580 : vector<1x7x300xf32> to vector<7x300xf32>
    %c56_859 = arith.constant 56 : index
    %c0_860 = arith.constant 0 : index
    %582 = vector.load %arg23[%c56_859, %c0_860] : memref<98x300xf32, #tpu.memory_space<vmem>>, vector<7x300xf32>
    tpu.vector_store %arg23[%c56_859, %c0_860], %581 {strides = array<i32>} : memref<98x300xf32, #tpu.memory_space<vmem>>, vector<7x300xf32>,
    %c9_861 = arith.constant 9 : index
    %c0_862 = arith.constant 0 : index
    %c0_863 = arith.constant 0 : index
    %583 = vector.load %arg22[%c9_861, %c0_862, %c0_863] : memref<14x7x300xf32, #tpu.memory_space<vmem>>, vector<1x7x300xf32>
    %584 = vector.shape_cast %583 : vector<1x7x300xf32> to vector<7x300xf32>
    %c63_864 = arith.constant 63 : index
    %c0_865 = arith.constant 0 : index
    %585 = vector.load %arg23[%c63_864, %c0_865] : memref<98x300xf32, #tpu.memory_space<vmem>>, vector<7x300xf32>
    tpu.vector_store %arg23[%c63_864, %c0_865], %584 {strides = array<i32>} : memref<98x300xf32, #tpu.memory_space<vmem>>, vector<7x300xf32>,
    %c10_866 = arith.constant 10 : index
    %c0_867 = arith.constant 0 : index
    %c0_868 = arith.constant 0 : index
    %586 = vector.load %arg22[%c10_866, %c0_867, %c0_868] : memref<14x7x300xf32, #tpu.memory_space<vmem>>, vector<1x7x300xf32>
    %587 = vector.shape_cast %586 : vector<1x7x300xf32> to vector<7x300xf32>
    %c70_869 = arith.constant 70 : index
    %c0_870 = arith.constant 0 : index
    %588 = vector.load %arg23[%c70_869, %c0_870] : memref<98x300xf32, #tpu.memory_space<vmem>>, vector<7x300xf32>
    tpu.vector_store %arg23[%c70_869, %c0_870], %587 {strides = array<i32>} : memref<98x300xf32, #tpu.memory_space<vmem>>, vector<7x300xf32>,
    %c11_871 = arith.constant 11 : index
    %c0_872 = arith.constant 0 : index
    %c0_873 = arith.constant 0 : index
    %589 = vector.load %arg22[%c11_871, %c0_872, %c0_873] : memref<14x7x300xf32, #tpu.memory_space<vmem>>, vector<1x7x300xf32>
    %590 = vector.shape_cast %589 : vector<1x7x300xf32> to vector<7x300xf32>
    %c77_874 = arith.constant 77 : index
    %c0_875 = arith.constant 0 : index
    %591 = vector.load %arg23[%c77_874, %c0_875] : memref<98x300xf32, #tpu.memory_space<vmem>>, vector<7x300xf32>
    tpu.vector_store %arg23[%c77_874, %c0_875], %590 {strides = array<i32>} : memref<98x300xf32, #tpu.memory_space<vmem>>, vector<7x300xf32>,
    %c12_876 = arith.constant 12 : index
    %c0_877 = arith.constant 0 : index
    %c0_878 = arith.constant 0 : index
    %592 = vector.load %arg22[%c12_876, %c0_877, %c0_878] : memref<14x7x300xf32, #tpu.memory_space<vmem>>, vector<1x7x300xf32>
    %593 = vector.shape_cast %592 : vector<1x7x300xf32> to vector<7x300xf32>
    %c84_879 = arith.constant 84 : index
    %c0_880 = arith.constant 0 : index
    %594 = vector.load %arg23[%c84_879, %c0_880] : memref<98x300xf32, #tpu.memory_space<vmem>>, vector<7x300xf32>
    tpu.vector_store %arg23[%c84_879, %c0_880], %593 {strides = array<i32>} : memref<98x300xf32, #tpu.memory_space<vmem>>, vector<7x300xf32>,
    %c13_881 = arith.constant 13 : index
    %c0_882 = arith.constant 0 : index
    %c0_883 = arith.constant 0 : index
    %595 = vector.load %arg22[%c13_881, %c0_882, %c0_883] : memref<14x7x300xf32, #tpu.memory_space<vmem>>, vector<1x7x300xf32>
    %596 = vector.shape_cast %595 : vector<1x7x300xf32> to vector<7x300xf32>
    %c91_884 = arith.constant 91 : index
    %c0_885 = arith.constant 0 : index
    %597 = vector.load %arg23[%c91_884, %c0_885] : memref<98x300xf32, #tpu.memory_space<vmem>>, vector<7x300xf32>
    tpu.vector_store %arg23[%c91_884, %c0_885], %596 {strides = array<i32>} : memref<98x300xf32, #tpu.memory_space<vmem>>, vector<7x300xf32>,
    %c0_886 = arith.constant 0 : index
    %c0_887 = arith.constant 0 : index
    %598 = vector.load %arg23[%c0_886, %c0_887] : memref<98x300xf32, #tpu.memory_space<vmem>>, vector<98x300xf32>
    %c0_888 = arith.constant 0 : index
    %c0_889 = arith.constant 0 : index
    %599 = vector.load %arg9[%c0_888, %c0_889] : memref<300x12xf32, #tpu.memory_space<vmem>>, vector<300x12xf32>
    %cst_890 = arith.constant dense<0.000000e+00> : vector<98x12xf32>
    %600 = tpu.matmul %598, %599, %cst_890 {dimension_numbers = #tpu.dot_dimension_numbers<[1], [0], [0], [1], [0, 0, 1, 1], [], []>} : vector<98x300xf32>, vector<300x12xf32>, vector<98x12xf32> -> vector<98x12xf32>
    %c0_891 = arith.constant 0 : index
    %c0_892 = arith.constant 0 : index
    %601 = vector.load %arg10[%c0_891, %c0_892] : memref<1x12xf32, #tpu.memory_space<vmem>>, vector<1x12xf32>
    %602 = vector.broadcast %601 : vector<1x12xf32> to vector<98x12xf32>
    %603 = arith.addf %600, %602 : vector<98x12xf32>
    %cst_893 = arith.constant dense<0.000000e+00> : vector<12xf32>
    %604 = vector.multi_reduction <add>, %603, %cst_893 [0] : vector<98x12xf32> to vector<12xf32>
    %605 = vector.shape_cast %604 : vector<12xf32> to vector<1x12xf32>
    %cst_894 = arith.constant 9.800000e+01 : f32
    %606 = vector.broadcast %cst_894 : f32 to vector<1x12xf32>
    %607 = arith.divf %605, %606 : vector<1x12xf32>
    %608 = vector.broadcast %607 : vector<1x12xf32> to vector<98x12xf32>
    %609 = arith.subf %603, %608 : vector<98x12xf32>
    %610 = arith.mulf %609, %609 : vector<98x12xf32>
    %cst_895 = arith.constant dense<0.000000e+00> : vector<12xf32>
    %611 = vector.multi_reduction <add>, %610, %cst_895 [0] : vector<98x12xf32> to vector<12xf32>
    %612 = vector.shape_cast %611 : vector<12xf32> to vector<1x12xf32>
    %cst_896 = arith.constant 9.800000e+01 : f32
    %613 = vector.broadcast %cst_896 : f32 to vector<1x12xf32>
    %614 = arith.divf %612, %613 : vector<1x12xf32>
    %c0_897 = arith.constant 0 : index
    %c0_898 = arith.constant 0 : index
    %615 = vector.load %arg11[%c0_897, %c0_898] : memref<1x12xf32, #tpu.memory_space<vmem>>, vector<1x12xf32>
    %616 = vector.broadcast %607 : vector<1x12xf32> to vector<98x12xf32>
    %617 = arith.subf %603, %616 : vector<98x12xf32>
    %cst_899 = arith.constant 9.99999974E-6 : f32
    %618 = vector.broadcast %cst_899 : f32 to vector<1x12xf32>
    %619 = arith.addf %614, %618 : vector<1x12xf32>
    %620 = math.rsqrt %619 : vector<1x12xf32>
    %621 = vector.broadcast %620 : vector<1x12xf32> to vector<98x12xf32>
    %622 = arith.mulf %617, %621 : vector<98x12xf32>
    %623 = vector.broadcast %615 : vector<1x12xf32> to vector<98x12xf32>
    %624 = arith.mulf %623, %622 : vector<98x12xf32>
    %c0_900 = arith.constant 0 : index
    %c0_901 = arith.constant 0 : index
    %625 = vector.load %arg12[%c0_900, %c0_901] : memref<1x12xf32, #tpu.memory_space<vmem>>, vector<1x12xf32>
    %626 = vector.broadcast %625 : vector<1x12xf32> to vector<98x12xf32>
    %627 = arith.addf %624, %626 : vector<98x12xf32>
    %cst_902 = arith.constant 0.000000e+00 : f32
    %628 = vector.broadcast %cst_902 : f32 to vector<98x12xf32>
    %629 = arith.subf %628, %627 : vector<98x12xf32>
    %630 = math.exp %629 : vector<98x12xf32>
    %cst_903 = arith.constant 1.000000e+00 : f32
    %631 = vector.broadcast %cst_903 : f32 to vector<98x12xf32>
    %632 = arith.addf %631, %630 : vector<98x12xf32>
    %633 = tpu.reciprocal %632 : vector<98x12xf32> -> vector<98x12xf32>
    %c0_904 = arith.constant 0 : index
    %c0_905 = arith.constant 0 : index
    %634 = vector.load %arg24[%c0_904, %c0_905] : memref<98x12xf32, #tpu.memory_space<vmem>>, vector<98x12xf32>
    tpu.vector_store %arg24[%c0_904, %c0_905], %633 {strides = array<i32>} : memref<98x12xf32, #tpu.memory_space<vmem>>, vector<98x12xf32>,
    %c0_906 = arith.constant 0 : index
    %c0_907 = arith.constant 0 : index
    %635 = vector.load %arg24[%c0_906, %c0_907] : memref<98x12xf32, #tpu.memory_space<vmem>>, vector<49x12xf32>
    %cst_908 = arith.constant 0.000000e+00 : f32
    %636 = vector.broadcast %cst_908 : f32 to vector<49x10xf32>
    %637 = vector.extract_strided_slice %635 {offsets = [0, 0], sizes = [49, 1], strides = [1, 1]} : vector<49x12xf32> to vector<49x1xf32>
    %c0_909 = arith.constant 0 : index
    %c0_910 = arith.constant 0 : index
    %c0_911 = arith.constant 0 : index
    %638 = vector.load %arg13[%c0_909, %c0_910, %c0_911] : memref<12x49x10xf32, #tpu.memory_space<vmem>>, vector<1x49x10xf32>
    %639 = vector.shape_cast %638 : vector<1x49x10xf32> to vector<49x10xf32>
    %640 = vector.broadcast %637 : vector<49x1xf32> to vector<49x10xf32>
    %641 = arith.mulf %640, %639 : vector<49x10xf32>
    %642 = arith.addf %636, %641 : vector<49x10xf32>
    %643 = vector.extract_strided_slice %635 {offsets = [0, 1], sizes = [49, 1], strides = [1, 1]} : vector<49x12xf32> to vector<49x1xf32>
    %c1_912 = arith.constant 1 : index
    %c0_913 = arith.constant 0 : index
    %c0_914 = arith.constant 0 : index
    %644 = vector.load %arg13[%c1_912, %c0_913, %c0_914] : memref<12x49x10xf32, #tpu.memory_space<vmem>>, vector<1x49x10xf32>
    %645 = vector.shape_cast %644 : vector<1x49x10xf32> to vector<49x10xf32>
    %646 = vector.broadcast %643 : vector<49x1xf32> to vector<49x10xf32>
    %647 = arith.mulf %646, %645 : vector<49x10xf32>
    %648 = arith.addf %642, %647 : vector<49x10xf32>
    %649 = vector.extract_strided_slice %635 {offsets = [0, 2], sizes = [49, 1], strides = [1, 1]} : vector<49x12xf32> to vector<49x1xf32>
    %c2_915 = arith.constant 2 : index
    %c0_916 = arith.constant 0 : index
    %c0_917 = arith.constant 0 : index
    %650 = vector.load %arg13[%c2_915, %c0_916, %c0_917] : memref<12x49x10xf32, #tpu.memory_space<vmem>>, vector<1x49x10xf32>
    %651 = vector.shape_cast %650 : vector<1x49x10xf32> to vector<49x10xf32>
    %652 = vector.broadcast %649 : vector<49x1xf32> to vector<49x10xf32>
    %653 = arith.mulf %652, %651 : vector<49x10xf32>
    %654 = arith.addf %648, %653 : vector<49x10xf32>
    %655 = vector.extract_strided_slice %635 {offsets = [0, 3], sizes = [49, 1], strides = [1, 1]} : vector<49x12xf32> to vector<49x1xf32>
    %c3_918 = arith.constant 3 : index
    %c0_919 = arith.constant 0 : index
    %c0_920 = arith.constant 0 : index
    %656 = vector.load %arg13[%c3_918, %c0_919, %c0_920] : memref<12x49x10xf32, #tpu.memory_space<vmem>>, vector<1x49x10xf32>
    %657 = vector.shape_cast %656 : vector<1x49x10xf32> to vector<49x10xf32>
    %658 = vector.broadcast %655 : vector<49x1xf32> to vector<49x10xf32>
    %659 = arith.mulf %658, %657 : vector<49x10xf32>
    %660 = arith.addf %654, %659 : vector<49x10xf32>
    %661 = vector.extract_strided_slice %635 {offsets = [0, 4], sizes = [49, 1], strides = [1, 1]} : vector<49x12xf32> to vector<49x1xf32>
    %c4_921 = arith.constant 4 : index
    %c0_922 = arith.constant 0 : index
    %c0_923 = arith.constant 0 : index
    %662 = vector.load %arg13[%c4_921, %c0_922, %c0_923] : memref<12x49x10xf32, #tpu.memory_space<vmem>>, vector<1x49x10xf32>
    %663 = vector.shape_cast %662 : vector<1x49x10xf32> to vector<49x10xf32>
    %664 = vector.broadcast %661 : vector<49x1xf32> to vector<49x10xf32>
    %665 = arith.mulf %664, %663 : vector<49x10xf32>
    %666 = arith.addf %660, %665 : vector<49x10xf32>
    %667 = vector.extract_strided_slice %635 {offsets = [0, 5], sizes = [49, 1], strides = [1, 1]} : vector<49x12xf32> to vector<49x1xf32>
    %c5_924 = arith.constant 5 : index
    %c0_925 = arith.constant 0 : index
    %c0_926 = arith.constant 0 : index
    %668 = vector.load %arg13[%c5_924, %c0_925, %c0_926] : memref<12x49x10xf32, #tpu.memory_space<vmem>>, vector<1x49x10xf32>
    %669 = vector.shape_cast %668 : vector<1x49x10xf32> to vector<49x10xf32>
    %670 = vector.broadcast %667 : vector<49x1xf32> to vector<49x10xf32>
    %671 = arith.mulf %670, %669 : vector<49x10xf32>
    %672 = arith.addf %666, %671 : vector<49x10xf32>
    %673 = vector.extract_strided_slice %635 {offsets = [0, 6], sizes = [49, 1], strides = [1, 1]} : vector<49x12xf32> to vector<49x1xf32>
    %c6_927 = arith.constant 6 : index
    %c0_928 = arith.constant 0 : index
    %c0_929 = arith.constant 0 : index
    %674 = vector.load %arg13[%c6_927, %c0_928, %c0_929] : memref<12x49x10xf32, #tpu.memory_space<vmem>>, vector<1x49x10xf32>
    %675 = vector.shape_cast %674 : vector<1x49x10xf32> to vector<49x10xf32>
    %676 = vector.broadcast %673 : vector<49x1xf32> to vector<49x10xf32>
    %677 = arith.mulf %676, %675 : vector<49x10xf32>
    %678 = arith.addf %672, %677 : vector<49x10xf32>
    %679 = vector.extract_strided_slice %635 {offsets = [0, 7], sizes = [49, 1], strides = [1, 1]} : vector<49x12xf32> to vector<49x1xf32>
    %c7_930 = arith.constant 7 : index
    %c0_931 = arith.constant 0 : index
    %c0_932 = arith.constant 0 : index
    %680 = vector.load %arg13[%c7_930, %c0_931, %c0_932] : memref<12x49x10xf32, #tpu.memory_space<vmem>>, vector<1x49x10xf32>
    %681 = vector.shape_cast %680 : vector<1x49x10xf32> to vector<49x10xf32>
    %682 = vector.broadcast %679 : vector<49x1xf32> to vector<49x10xf32>
    %683 = arith.mulf %682, %681 : vector<49x10xf32>
    %684 = arith.addf %678, %683 : vector<49x10xf32>
    %685 = vector.extract_strided_slice %635 {offsets = [0, 8], sizes = [49, 1], strides = [1, 1]} : vector<49x12xf32> to vector<49x1xf32>
    %c8_933 = arith.constant 8 : index
    %c0_934 = arith.constant 0 : index
    %c0_935 = arith.constant 0 : index
    %686 = vector.load %arg13[%c8_933, %c0_934, %c0_935] : memref<12x49x10xf32, #tpu.memory_space<vmem>>, vector<1x49x10xf32>
    %687 = vector.shape_cast %686 : vector<1x49x10xf32> to vector<49x10xf32>
    %688 = vector.broadcast %685 : vector<49x1xf32> to vector<49x10xf32>
    %689 = arith.mulf %688, %687 : vector<49x10xf32>
    %690 = arith.addf %684, %689 : vector<49x10xf32>
    %691 = vector.extract_strided_slice %635 {offsets = [0, 9], sizes = [49, 1], strides = [1, 1]} : vector<49x12xf32> to vector<49x1xf32>
    %c9_936 = arith.constant 9 : index
    %c0_937 = arith.constant 0 : index
    %c0_938 = arith.constant 0 : index
    %692 = vector.load %arg13[%c9_936, %c0_937, %c0_938] : memref<12x49x10xf32, #tpu.memory_space<vmem>>, vector<1x49x10xf32>
    %693 = vector.shape_cast %692 : vector<1x49x10xf32> to vector<49x10xf32>
    %694 = vector.broadcast %691 : vector<49x1xf32> to vector<49x10xf32>
    %695 = arith.mulf %694, %693 : vector<49x10xf32>
    %696 = arith.addf %690, %695 : vector<49x10xf32>
    %697 = vector.extract_strided_slice %635 {offsets = [0, 10], sizes = [49, 1], strides = [1, 1]} : vector<49x12xf32> to vector<49x1xf32>
    %c10_939 = arith.constant 10 : index
    %c0_940 = arith.constant 0 : index
    %c0_941 = arith.constant 0 : index
    %698 = vector.load %arg13[%c10_939, %c0_940, %c0_941] : memref<12x49x10xf32, #tpu.memory_space<vmem>>, vector<1x49x10xf32>
    %699 = vector.shape_cast %698 : vector<1x49x10xf32> to vector<49x10xf32>
    %700 = vector.broadcast %697 : vector<49x1xf32> to vector<49x10xf32>
    %701 = arith.mulf %700, %699 : vector<49x10xf32>
    %702 = arith.addf %696, %701 : vector<49x10xf32>
    %703 = vector.extract_strided_slice %635 {offsets = [0, 11], sizes = [49, 1], strides = [1, 1]} : vector<49x12xf32> to vector<49x1xf32>
    %c11_942 = arith.constant 11 : index
    %c0_943 = arith.constant 0 : index
    %c0_944 = arith.constant 0 : index
    %704 = vector.load %arg13[%c11_942, %c0_943, %c0_944] : memref<12x49x10xf32, #tpu.memory_space<vmem>>, vector<1x49x10xf32>
    %705 = vector.shape_cast %704 : vector<1x49x10xf32> to vector<49x10xf32>
    %706 = vector.broadcast %703 : vector<49x1xf32> to vector<49x10xf32>
    %707 = arith.mulf %706, %705 : vector<49x10xf32>
    %708 = arith.addf %702, %707 : vector<49x10xf32>
    %cst_945 = arith.constant dense<0.000000e+00> : vector<10xf32>
    %709 = vector.multi_reduction <add>, %708, %cst_945 [0] : vector<49x10xf32> to vector<10xf32>
    %710 = vector.shape_cast %709 : vector<10xf32> to vector<1x10xf32>
    %c0_946 = arith.constant 0 : index
    %c0_947 = arith.constant 0 : index
    %711 = vector.load %arg14[%c0_946, %c0_947] : memref<1x10xf32, #tpu.memory_space<vmem>>, vector<1x10xf32>
    %712 = arith.addf %710, %711 : vector<1x10xf32>
    %c0_948 = arith.constant 0 : index
    %c0_949 = arith.constant 0 : index
    %713 = vector.load %arg15[%c0_948, %c0_949] : memref<2x10xf32, #tpu.memory_space<vmem>>, vector<1x10xf32>
    tpu.vector_store %arg15[%c0_948, %c0_949], %712 {strides = array<i32>} : memref<2x10xf32, #tpu.memory_space<vmem>>, vector<1x10xf32>,
    %c49_950 = arith.constant 49 : index
    %c0_951 = arith.constant 0 : index
    %714 = vector.load %arg24[%c49_950, %c0_951] : memref<98x12xf32, #tpu.memory_space<vmem>>, vector<49x12xf32>
    %cst_952 = arith.constant 0.000000e+00 : f32
    %715 = vector.broadcast %cst_952 : f32 to vector<49x10xf32>
    %716 = vector.extract_strided_slice %714 {offsets = [0, 0], sizes = [49, 1], strides = [1, 1]} : vector<49x12xf32> to vector<49x1xf32>
    %c0_953 = arith.constant 0 : index
    %c0_954 = arith.constant 0 : index
    %c0_955 = arith.constant 0 : index
    %717 = vector.load %arg13[%c0_953, %c0_954, %c0_955] : memref<12x49x10xf32, #tpu.memory_space<vmem>>, vector<1x49x10xf32>
    %718 = vector.shape_cast %717 : vector<1x49x10xf32> to vector<49x10xf32>
    %719 = vector.broadcast %716 : vector<49x1xf32> to vector<49x10xf32>
    %720 = arith.mulf %719, %718 : vector<49x10xf32>
    %721 = arith.addf %715, %720 : vector<49x10xf32>
    %722 = vector.extract_strided_slice %714 {offsets = [0, 1], sizes = [49, 1], strides = [1, 1]} : vector<49x12xf32> to vector<49x1xf32>
    %c1_956 = arith.constant 1 : index
    %c0_957 = arith.constant 0 : index
    %c0_958 = arith.constant 0 : index
    %723 = vector.load %arg13[%c1_956, %c0_957, %c0_958] : memref<12x49x10xf32, #tpu.memory_space<vmem>>, vector<1x49x10xf32>
    %724 = vector.shape_cast %723 : vector<1x49x10xf32> to vector<49x10xf32>
    %725 = vector.broadcast %722 : vector<49x1xf32> to vector<49x10xf32>
    %726 = arith.mulf %725, %724 : vector<49x10xf32>
    %727 = arith.addf %721, %726 : vector<49x10xf32>
    %728 = vector.extract_strided_slice %714 {offsets = [0, 2], sizes = [49, 1], strides = [1, 1]} : vector<49x12xf32> to vector<49x1xf32>
    %c2_959 = arith.constant 2 : index
    %c0_960 = arith.constant 0 : index
    %c0_961 = arith.constant 0 : index
    %729 = vector.load %arg13[%c2_959, %c0_960, %c0_961] : memref<12x49x10xf32, #tpu.memory_space<vmem>>, vector<1x49x10xf32>
    %730 = vector.shape_cast %729 : vector<1x49x10xf32> to vector<49x10xf32>
    %731 = vector.broadcast %728 : vector<49x1xf32> to vector<49x10xf32>
    %732 = arith.mulf %731, %730 : vector<49x10xf32>
    %733 = arith.addf %727, %732 : vector<49x10xf32>
    %734 = vector.extract_strided_slice %714 {offsets = [0, 3], sizes = [49, 1], strides = [1, 1]} : vector<49x12xf32> to vector<49x1xf32>
    %c3_962 = arith.constant 3 : index
    %c0_963 = arith.constant 0 : index
    %c0_964 = arith.constant 0 : index
    %735 = vector.load %arg13[%c3_962, %c0_963, %c0_964] : memref<12x49x10xf32, #tpu.memory_space<vmem>>, vector<1x49x10xf32>
    %736 = vector.shape_cast %735 : vector<1x49x10xf32> to vector<49x10xf32>
    %737 = vector.broadcast %734 : vector<49x1xf32> to vector<49x10xf32>
    %738 = arith.mulf %737, %736 : vector<49x10xf32>
    %739 = arith.addf %733, %738 : vector<49x10xf32>
    %740 = vector.extract_strided_slice %714 {offsets = [0, 4], sizes = [49, 1], strides = [1, 1]} : vector<49x12xf32> to vector<49x1xf32>
    %c4_965 = arith.constant 4 : index
    %c0_966 = arith.constant 0 : index
    %c0_967 = arith.constant 0 : index
    %741 = vector.load %arg13[%c4_965, %c0_966, %c0_967] : memref<12x49x10xf32, #tpu.memory_space<vmem>>, vector<1x49x10xf32>
    %742 = vector.shape_cast %741 : vector<1x49x10xf32> to vector<49x10xf32>
    %743 = vector.broadcast %740 : vector<49x1xf32> to vector<49x10xf32>
    %744 = arith.mulf %743, %742 : vector<49x10xf32>
    %745 = arith.addf %739, %744 : vector<49x10xf32>
    %746 = vector.extract_strided_slice %714 {offsets = [0, 5], sizes = [49, 1], strides = [1, 1]} : vector<49x12xf32> to vector<49x1xf32>
    %c5_968 = arith.constant 5 : index
    %c0_969 = arith.constant 0 : index
    %c0_970 = arith.constant 0 : index
    %747 = vector.load %arg13[%c5_968, %c0_969, %c0_970] : memref<12x49x10xf32, #tpu.memory_space<vmem>>, vector<1x49x10xf32>
    %748 = vector.shape_cast %747 : vector<1x49x10xf32> to vector<49x10xf32>
    %749 = vector.broadcast %746 : vector<49x1xf32> to vector<49x10xf32>
    %750 = arith.mulf %749, %748 : vector<49x10xf32>
    %751 = arith.addf %745, %750 : vector<49x10xf32>
    %752 = vector.extract_strided_slice %714 {offsets = [0, 6], sizes = [49, 1], strides = [1, 1]} : vector<49x12xf32> to vector<49x1xf32>
    %c6_971 = arith.constant 6 : index
    %c0_972 = arith.constant 0 : index
    %c0_973 = arith.constant 0 : index
    %753 = vector.load %arg13[%c6_971, %c0_972, %c0_973] : memref<12x49x10xf32, #tpu.memory_space<vmem>>, vector<1x49x10xf32>
    %754 = vector.shape_cast %753 : vector<1x49x10xf32> to vector<49x10xf32>
    %755 = vector.broadcast %752 : vector<49x1xf32> to vector<49x10xf32>
    %756 = arith.mulf %755, %754 : vector<49x10xf32>
    %757 = arith.addf %751, %756 : vector<49x10xf32>
    %758 = vector.extract_strided_slice %714 {offsets = [0, 7], sizes = [49, 1], strides = [1, 1]} : vector<49x12xf32> to vector<49x1xf32>
    %c7_974 = arith.constant 7 : index
    %c0_975 = arith.constant 0 : index
    %c0_976 = arith.constant 0 : index
    %759 = vector.load %arg13[%c7_974, %c0_975, %c0_976] : memref<12x49x10xf32, #tpu.memory_space<vmem>>, vector<1x49x10xf32>
    %760 = vector.shape_cast %759 : vector<1x49x10xf32> to vector<49x10xf32>
    %761 = vector.broadcast %758 : vector<49x1xf32> to vector<49x10xf32>
    %762 = arith.mulf %761, %760 : vector<49x10xf32>
    %763 = arith.addf %757, %762 : vector<49x10xf32>
    %764 = vector.extract_strided_slice %714 {offsets = [0, 8], sizes = [49, 1], strides = [1, 1]} : vector<49x12xf32> to vector<49x1xf32>
    %c8_977 = arith.constant 8 : index
    %c0_978 = arith.constant 0 : index
    %c0_979 = arith.constant 0 : index
    %765 = vector.load %arg13[%c8_977, %c0_978, %c0_979] : memref<12x49x10xf32, #tpu.memory_space<vmem>>, vector<1x49x10xf32>
    %766 = vector.shape_cast %765 : vector<1x49x10xf32> to vector<49x10xf32>
    %767 = vector.broadcast %764 : vector<49x1xf32> to vector<49x10xf32>
    %768 = arith.mulf %767, %766 : vector<49x10xf32>
    %769 = arith.addf %763, %768 : vector<49x10xf32>
    %770 = vector.extract_strided_slice %714 {offsets = [0, 9], sizes = [49, 1], strides = [1, 1]} : vector<49x12xf32> to vector<49x1xf32>
    %c9_980 = arith.constant 9 : index
    %c0_981 = arith.constant 0 : index
    %c0_982 = arith.constant 0 : index
    %771 = vector.load %arg13[%c9_980, %c0_981, %c0_982] : memref<12x49x10xf32, #tpu.memory_space<vmem>>, vector<1x49x10xf32>
    %772 = vector.shape_cast %771 : vector<1x49x10xf32> to vector<49x10xf32>
    %773 = vector.broadcast %770 : vector<49x1xf32> to vector<49x10xf32>
    %774 = arith.mulf %773, %772 : vector<49x10xf32>
    %775 = arith.addf %769, %774 : vector<49x10xf32>
    %776 = vector.extract_strided_slice %714 {offsets = [0, 10], sizes = [49, 1], strides = [1, 1]} : vector<49x12xf32> to vector<49x1xf32>
    %c10_983 = arith.constant 10 : index
    %c0_984 = arith.constant 0 : index
    %c0_985 = arith.constant 0 : index
    %777 = vector.load %arg13[%c10_983, %c0_984, %c0_985] : memref<12x49x10xf32, #tpu.memory_space<vmem>>, vector<1x49x10xf32>
    %778 = vector.shape_cast %777 : vector<1x49x10xf32> to vector<49x10xf32>
    %779 = vector.broadcast %776 : vector<49x1xf32> to vector<49x10xf32>
    %780 = arith.mulf %779, %778 : vector<49x10xf32>
    %781 = arith.addf %775, %780 : vector<49x10xf32>
    %782 = vector.extract_strided_slice %714 {offsets = [0, 11], sizes = [49, 1], strides = [1, 1]} : vector<49x12xf32> to vector<49x1xf32>
    %c11_986 = arith.constant 11 : index
    %c0_987 = arith.constant 0 : index
    %c0_988 = arith.constant 0 : index
    %783 = vector.load %arg13[%c11_986, %c0_987, %c0_988] : memref<12x49x10xf32, #tpu.memory_space<vmem>>, vector<1x49x10xf32>
    %784 = vector.shape_cast %783 : vector<1x49x10xf32> to vector<49x10xf32>
    %785 = vector.broadcast %782 : vector<49x1xf32> to vector<49x10xf32>
    %786 = arith.mulf %785, %784 : vector<49x10xf32>
    %787 = arith.addf %781, %786 : vector<49x10xf32>
    %cst_989 = arith.constant dense<0.000000e+00> : vector<10xf32>
    %788 = vector.multi_reduction <add>, %787, %cst_989 [0] : vector<49x10xf32> to vector<10xf32>
    %789 = vector.shape_cast %788 : vector<10xf32> to vector<1x10xf32>
    %c0_990 = arith.constant 0 : index
    %c0_991 = arith.constant 0 : index
    %790 = vector.load %arg14[%c0_990, %c0_991] : memref<1x10xf32, #tpu.memory_space<vmem>>, vector<1x10xf32>
    %791 = arith.addf %789, %790 : vector<1x10xf32>
    %c1_992 = arith.constant 1 : index
    %c0_993 = arith.constant 0 : index
    %792 = vector.load %arg15[%c1_992, %c0_993] : memref<2x10xf32, #tpu.memory_space<vmem>>, vector<1x10xf32>
    tpu.vector_store %arg15[%c1_992, %c0_993], %791 {strides = array<i32>} : memref<2x10xf32, #tpu.memory_space<vmem>>, vector<1x10xf32>,
    return
  }
}

</mosaic_0001>

<llo_original>
// kernel: lenet_forward.1
$region0: #{lenet_forward.1}
  #allocation0 [shape = 'u32[]', space=smem, size = 0x4, offset = 0x4, fixed_abs, tag = 'smem constant byte address 0x4 - core index']
  #allocation1 [shape = 'u32[144,128]{1,0:T(1,128)}', space=vmem, size = 0x12000, scoped, tag = 'internal scratch']
  #allocation2 [shape = 'f32[392,12]{1,0:T(8,128)}', space=vmem, size = 0x31000, scoped, tag = 'scratch operand']
  #allocation3 [shape = 'f32[2,9,9,12]{3,2,1,0:T(8,128)}', space=vmem, size = 0x24000, scoped, tag = 'scratch operand']
  #allocation4 [shape = 'f32[2,9,9,12]{3,2,1,0:T(8,128)}', space=vmem, size = 0x24000, scoped, tag = 'scratch operand']
  #allocation5 [shape = 'f32[2,9,9,12]{3,2,1,0:T(8,128)}', space=vmem, size = 0x24000, scoped, tag = 'scratch operand']
  #allocation6 [shape = 'f32[2,9,9,12]{3,2,1,0:T(8,128)}', space=vmem, size = 0x24000, scoped, tag = 'scratch operand']
  #allocation7 [shape = 'f32[2,11,11,12]{3,2,1,0:T(8,128)}', space=vmem, size = 0x2c000, scoped, tag = 'scratch operand']
  #allocation8 [shape = 'f32[14,7,300]{2,1,0:T(8,128)}', space=vmem, size = 0x2a000, scoped, tag = 'scratch operand']
  #allocation9 [shape = 'f32[98,300]{1,0:T(8,128)}', space=vmem, size = 0x27000, scoped, tag = 'scratch operand']
  #allocation10 [shape = 'f32[98,12]{1,0:T(8,128)}', space=vmem, size = 0xd000, scoped, tag = 'scratch operand']
  %s0 = inlined_call_operand.vmem [shape: f32[392,32], index: 0, kind: input, shape index: {}]
  %s1 = inlined_call_operand.vmem [shape: f32[32,12], index: 1, kind: input, shape index: {}]
  %s2 = inlined_call_operand.vmem [shape: f32[1,12], index: 2, kind: input, shape index: {}]
  %s3 = inlined_call_operand.vmem [shape: f32[1,12], index: 3, kind: input, shape index: {}]
  %s4 = inlined_call_operand.vmem [shape: f32[1,12], index: 4, kind: input, shape index: {}]
  %s5 = inlined_call_operand.vmem [shape: f32[300,12], index: 5, kind: input, shape index: {}]
  %s6 = inlined_call_operand.vmem [shape: f32[1,12], index: 6, kind: input, shape index: {}]
  %s7 = inlined_call_operand.vmem [shape: f32[1,12], index: 7, kind: input, shape index: {}]
  %s8 = inlined_call_operand.vmem [shape: f32[1,12], index: 8, kind: input, shape index: {}]
  %s9 = inlined_call_operand.vmem [shape: f32[300,12], index: 9, kind: input, shape index: {}]
  %s10 = inlined_call_operand.vmem [shape: f32[1,12], index: 10, kind: input, shape index: {}]
  %s11 = inlined_call_operand.vmem [shape: f32[1,12], index: 11, kind: input, shape index: {}]
  %s12 = inlined_call_operand.vmem [shape: f32[1,12], index: 12, kind: input, shape index: {}]
  %s13 = inlined_call_operand.vmem [shape: f32[12,49,10], index: 13, kind: input, shape index: {}]
  %s14 = inlined_call_operand.vmem [shape: f32[1,10], index: 14, kind: input, shape index: {}]
  %s15 = inlined_call_operand.hbm [shape: f32[2,10], index: 15, kind: output, shape index: {}]
  %s16 = sld [smem:[#allocation0]]
  $region70: #{lenet_forward.1} parent=0
    _
  %s18 = ssub.s32 1, %s16
  %s19 = scalar_select 0, %s18, %s16
  $region1: #{lenet_forward.1} parent=0
    #allocation11 [shape = 'u8[1024]{0}', space=vmem, size = 0x400, scoped, tag = 'output window, operand 0, single buffered']
    #allocation12 [shape = 's32[1]{0}', space=sflag, size = 0x4, scoped, tag = 'scoped memory for lenet_forward.1']
    %20 = vsyncpa [#allocation12], 0
    // Predicated region
    $region2: #{lenet_forward.1} parent=1 // pred_check
      _
    $region3: #{lenet_forward.1} parent=1 // pred_check_branch
      %22 = sbr.rel (0) target = $region5
    $region4: #{lenet_forward.1} parent=1 // pred_region
      _
    $region5: #{lenet_forward.1} parent=1 // pred_fallthru
      _
    // Predicated region
    $region6: #{lenet_forward.1} parent=1 // pred_check
      _
    $region7: #{lenet_forward.1} parent=1 // pred_check_branch
      %24 = sbr.rel (0) target = $region9
    $region8: #{lenet_forward.1} parent=1 // pred_region
      _
    $region9: #{lenet_forward.1} parent=1 // pred_fallthru
      _
    // Predicated region
    $region10: #{lenet_forward.1} parent=1 // pred_check
      _
    $region11: #{lenet_forward.1} parent=1 // pred_check_branch
      %26 = sbr.rel (0) target = $region13
    $region12: #{lenet_forward.1} parent=1 // pred_region
      _
    $region13: #{lenet_forward.1} parent=1 // pred_fallthru
      _
    // Predicated region
    $region14: #{lenet_forward.1} parent=1 // pred_check
      _
    $region15: #{lenet_forward.1} parent=1 // pred_check_branch
      %28 = sbr.rel (0) target = $region17
    $region16: #{lenet_forward.1} parent=1 // pred_region
      _
    $region17: #{lenet_forward.1} parent=1 // pred_fallthru
      _
    // Predicated region
    $region18: #{lenet_forward.1} parent=1 // pred_check
      _
    $region19: #{lenet_forward.1} parent=1 // pred_check_branch
      %30 = sbr.rel (0) target = $region21
    $region20: #{lenet_forward.1} parent=1 // pred_region
      _
    $region21: #{lenet_forward.1} parent=1 // pred_fallthru
      _
    // Predicated region
    $region22: #{lenet_forward.1} parent=1 // pred_check
      _
    $region23: #{lenet_forward.1} parent=1 // pred_check_branch
      %32 = sbr.rel (0) target = $region25
    $region24: #{lenet_forward.1} parent=1 // pred_region
      _
    $region25: #{lenet_forward.1} parent=1 // pred_fallthru
      _
    // Predicated region
    $region26: #{lenet_forward.1} parent=1 // pred_check
      _
    $region27: #{lenet_forward.1} parent=1 // pred_check_branch
      %34 = sbr.rel (0) target = $region29
    $region28: #{lenet_forward.1} parent=1 // pred_region
      _
    $region29: #{lenet_forward.1} parent=1 // pred_fallthru
      _
    // Predicated region
    $region30: #{lenet_forward.1} parent=1 // pred_check
      _
    $region31: #{lenet_forward.1} parent=1 // pred_check_branch
      %36 = sbr.rel (0) target = $region33
    $region32: #{lenet_forward.1} parent=1 // pred_region
      _
    $region33: #{lenet_forward.1} parent=1 // pred_fallthru
      _
    // Predicated region
    $region34: #{lenet_forward.1} parent=1 // pred_check
      _
    $region35: #{lenet_forward.1} parent=1 // pred_check_branch
      %38 = sbr.rel (0) target = $region37
    $region36: #{lenet_forward.1} parent=1 // pred_region
      _
    $region37: #{lenet_forward.1} parent=1 // pred_fallthru
      _
    // Predicated region
    $region38: #{lenet_forward.1} parent=1 // pred_check
      _
    $region39: #{lenet_forward.1} parent=1 // pred_check_branch
      %40 = sbr.rel (0) target = $region41
    $region40: #{lenet_forward.1} parent=1 // pred_region
      _
    $region41: #{lenet_forward.1} parent=1 // pred_fallthru
      _
    // Predicated region
    $region42: #{lenet_forward.1} parent=1 // pred_check
      _
    $region43: #{lenet_forward.1} parent=1 // pred_check_branch
      %42 = sbr.rel (0) target = $region45
    $region44: #{lenet_forward.1} parent=1 // pred_region
      _
    $region45: #{lenet_forward.1} parent=1 // pred_fallthru
      _
    // Predicated region
    $region46: #{lenet_forward.1} parent=1 // pred_check
      _
    $region47: #{lenet_forward.1} parent=1 // pred_check_branch
      %44 = sbr.rel (0) target = $region49
    $region48: #{lenet_forward.1} parent=1 // pred_region
      _
    $region49: #{lenet_forward.1} parent=1 // pred_fallthru
      _
    // Predicated region
    $region50: #{lenet_forward.1} parent=1 // pred_check
      _
    $region51: #{lenet_forward.1} parent=1 // pred_check_branch
      %46 = sbr.rel (0) target = $region53
    $region52: #{lenet_forward.1} parent=1 // pred_region
      _
    $region53: #{lenet_forward.1} parent=1 // pred_fallthru
      _
    // Predicated region
    $region54: #{lenet_forward.1} parent=1 // pred_check
      _
    $region55: #{lenet_forward.1} parent=1 // pred_check_branch
      %48 = sbr.rel (0) target = $region57
    $region56: #{lenet_forward.1} parent=1 // pred_region
      _
    $region57: #{lenet_forward.1} parent=1 // pred_fallthru
      _
    // Predicated region
    $region58: #{lenet_forward.1} parent=1 // pred_check
      _
    $region59: #{lenet_forward.1} parent=1 // pred_check_branch
      %50 = sbr.rel (0) target = $region61
    $region60: #{lenet_forward.1} parent=1 // pred_region
      _
    $region61: #{lenet_forward.1} parent=1 // pred_fallthru
      _
    %vm51 = vcmask 97280
    %52 = vst.msk [vmem:[#allocation3] sm:$0xff] %vm51, 0.0
    %vm53 = vcmask 90112
    %54 = vst.msk [vmem:[#allocation3 + $0x8] sm:$0x1] %vm53, 0.0
    %55 = vst.msk [vmem:[#allocation3 + $0x10] sm:$0xff] %vm51, 0.0
    %56 = vst.msk [vmem:[#allocation3 + $0x18] sm:$0x1] %vm53, 0.0
    %57 = vst.msk [vmem:[#allocation3 + $0x20] sm:$0xff] %vm51, 0.0
    %58 = vst.msk [vmem:[#allocation3 + $0x28] sm:$0x1] %vm53, 0.0
    %59 = vst.msk [vmem:[#allocation3 + $0x30] sm:$0xff] %vm51, 0.0
    %60 = vst.msk [vmem:[#allocation3 + $0x38] sm:$0x1] %vm53, 0.0
    %61 = vst.msk [vmem:[#allocation3 + $0x40] sm:$0xff] %vm51, 0.0
    %62 = vst.msk [vmem:[#allocation3 + $0x48] sm:$0x1] %vm53, 0.0
    %63 = vst.msk [vmem:[#allocation3 + $0x50] sm:$0xff] %vm51, 0.0
    %64 = vst.msk [vmem:[#allocation3 + $0x58] sm:$0x1] %vm53, 0.0
    %65 = vst.msk [vmem:[#allocation3 + $0x60] sm:$0xff] %vm51, 0.0
    %66 = vst.msk [vmem:[#allocation3 + $0x68] sm:$0x1] %vm53, 0.0
    %67 = vst.msk [vmem:[#allocation3 + $0x70] sm:$0xff] %vm51, 0.0
    %68 = vst.msk [vmem:[#allocation3 + $0x78] sm:$0x1] %vm53, 0.0
    %69 = vst.msk [vmem:[#allocation3 + $0x80] sm:$0xff] %vm51, 0.0
    %70 = vst.msk [vmem:[#allocation3 + $0x88] sm:$0x1] %vm53, 0.0
    %71 = vst.msk [vmem:[#allocation3 + $0x90] sm:$0xff] %vm51, 0.0
    %72 = vst.msk [vmem:[#allocation3 + $0x98] sm:$0x1] %vm53, 0.0
    %73 = vst.msk [vmem:[#allocation3 + $0xa0] sm:$0xff] %vm51, 0.0
    %74 = vst.msk [vmem:[#allocation3 + $0xa8] sm:$0x1] %vm53, 0.0
    %75 = vst.msk [vmem:[#allocation3 + $0xb0] sm:$0xff] %vm51, 0.0
    %76 = vst.msk [vmem:[#allocation3 + $0xb8] sm:$0x1] %vm53, 0.0
    %77 = vst.msk [vmem:[#allocation3 + $0xc0] sm:$0xff] %vm51, 0.0
    %78 = vst.msk [vmem:[#allocation3 + $0xc8] sm:$0x1] %vm53, 0.0
    %79 = vst.msk [vmem:[#allocation3 + $0xd0] sm:$0xff] %vm51, 0.0
    %80 = vst.msk [vmem:[#allocation3 + $0xd8] sm:$0x1] %vm53, 0.0
    %81 = vst.msk [vmem:[#allocation3 + $0xe0] sm:$0xff] %vm51, 0.0
    %82 = vst.msk [vmem:[#allocation3 + $0xe8] sm:$0x1] %vm53, 0.0
    %83 = vst.msk [vmem:[#allocation3 + $0xf0] sm:$0xff] %vm51, 0.0
    %84 = vst.msk [vmem:[#allocation3 + $0xf8] sm:$0x1] %vm53, 0.0
    %85 = vst.msk [vmem:[#allocation3 + $0x100] sm:$0xff] %vm51, 0.0
    %86 = vst.msk [vmem:[#allocation3 + $0x108] sm:$0x1] %vm53, 0.0
    %87 = vst.msk [vmem:[#allocation3 + $0x110] sm:$0xff] %vm51, 0.0
    %88 = vst.msk [vmem:[#allocation3 + $0x118] sm:$0x1] %vm53, 0.0
    %89 = vst.msk [vmem:[#allocation4] sm:$0xff] %vm51, 0.0
    %90 = vst.msk [vmem:[#allocation4 + $0x8] sm:$0x1] %vm53, 0.0
    %91 = vst.msk [vmem:[#allocation4 + $0x10] sm:$0xff] %vm51, 0.0
    %92 = vst.msk [vmem:[#allocation4 + $0x18] sm:$0x1] %vm53, 0.0
    %93 = vst.msk [vmem:[#allocation4 + $0x20] sm:$0xff] %vm51, 0.0
    %94 = vst.msk [vmem:[#allocation4 + $0x28] sm:$0x1] %vm53, 0.0
    %95 = vst.msk [vmem:[#allocation4 + $0x30] sm:$0xff] %vm51, 0.0
    %96 = vst.msk [vmem:[#allocation4 + $0x38] sm:$0x1] %vm53, 0.0
    %97 = vst.msk [vmem:[#allocation4 + $0x40] sm:$0xff] %vm51, 0.0
    %98 = vst.msk [vmem:[#allocation4 + $0x48] sm:$0x1] %vm53, 0.0
    %99 = vst.msk [vmem:[#allocation4 + $0x50] sm:$0xff] %vm51, 0.0
    %100 = vst.msk [vmem:[#allocation4 + $0x58] sm:$0x1] %vm53, 0.0
    %101 = vst.msk [vmem:[#allocation4 + $0x60] sm:$0xff] %vm51, 0.0
    %102 = vst.msk [vmem:[#allocation4 + $0x68] sm:$0x1] %vm53, 0.0
    %103 = vst.msk [vmem:[#allocation4 + $0x70] sm:$0xff] %vm51, 0.0
    %104 = vst.msk [vmem:[#allocation4 + $0x78] sm:$0x1] %vm53, 0.0
    %105 = vst.msk [vmem:[#allocation4 + $0x80] sm:$0xff] %vm51, 0.0
    %106 = vst.msk [vmem:[#allocation4 + $0x88] sm:$0x1] %vm53, 0.0
    %107 = vst.msk [vmem:[#allocation4 + $0x90] sm:$0xff] %vm51, 0.0
    %108 = vst.msk [vmem:[#allocation4 + $0x98] sm:$0x1] %vm53, 0.0
    %109 = vst.msk [vmem:[#allocation4 + $0xa0] sm:$0xff] %vm51, 0.0
    %110 = vst.msk [vmem:[#allocation4 + $0xa8] sm:$0x1] %vm53, 0.0
    %111 = vst.msk [vmem:[#allocation4 + $0xb0] sm:$0xff] %vm51, 0.0
    %112 = vst.msk [vmem:[#allocation4 + $0xb8] sm:$0x1] %vm53, 0.0
    %113 = vst.msk [vmem:[#allocation4 + $0xc0] sm:$0xff] %vm51, 0.0
    %114 = vst.msk [vmem:[#allocation4 + $0xc8] sm:$0x1] %vm53, 0.0
    %115 = vst.msk [vmem:[#allocation4 + $0xd0] sm:$0xff] %vm51, 0.0
    %116 = vst.msk [vmem:[#allocation4 + $0xd8] sm:$0x1] %vm53, 0.0
    %117 = vst.msk [vmem:[#allocation4 + $0xe0] sm:$0xff] %vm51, 0.0
    %118 = vst.msk [vmem:[#allocation4 + $0xe8] sm:$0x1] %vm53, 0.0
    %119 = vst.msk [vmem:[#allocation4 + $0xf0] sm:$0xff] %vm51, 0.0
    %120 = vst.msk [vmem:[#allocation4 + $0xf8] sm:$0x1] %vm53, 0.0
    %121 = vst.msk [vmem:[#allocation4 + $0x100] sm:$0xff] %vm51, 0.0
    %122 = vst.msk [vmem:[#allocation4 + $0x108] sm:$0x1] %vm53, 0.0
    %123 = vst.msk [vmem:[#allocation4 + $0x110] sm:$0xff] %vm51, 0.0
    %124 = vst.msk [vmem:[#allocation4 + $0x118] sm:$0x1] %vm53, 0.0
    %125 = vst.msk [vmem:[#allocation5] sm:$0xff] %vm51, 0.0
    %126 = vst.msk [vmem:[#allocation5 + $0x8] sm:$0x1] %vm53, 0.0
    %127 = vst.msk [vmem:[#allocation5 + $0x10] sm:$0xff] %vm51, 0.0
    %128 = vst.msk [vmem:[#allocation5 + $0x18] sm:$0x1] %vm53, 0.0
    %129 = vst.msk [vmem:[#allocation5 + $0x20] sm:$0xff] %vm51, 0.0
    %130 = vst.msk [vmem:[#allocation5 + $0x28] sm:$0x1] %vm53, 0.0
    %131 = vst.msk [vmem:[#allocation5 + $0x30] sm:$0xff] %vm51, 0.0
    %132 = vst.msk [vmem:[#allocation5 + $0x38] sm:$0x1] %vm53, 0.0
    %133 = vst.msk [vmem:[#allocation5 + $0x40] sm:$0xff] %vm51, 0.0
    %134 = vst.msk [vmem:[#allocation5 + $0x48] sm:$0x1] %vm53, 0.0
    %135 = vst.msk [vmem:[#allocation5 + $0x50] sm:$0xff] %vm51, 0.0
    %136 = vst.msk [vmem:[#allocation5 + $0x58] sm:$0x1] %vm53, 0.0
    %137 = vst.msk [vmem:[#allocation5 + $0x60] sm:$0xff] %vm51, 0.0
    %138 = vst.msk [vmem:[#allocation5 + $0x68] sm:$0x1] %vm53, 0.0
    %139 = vst.msk [vmem:[#allocation5 + $0x70] sm:$0xff] %vm51, 0.0
    %140 = vst.msk [vmem:[#allocation5 + $0x78] sm:$0x1] %vm53, 0.0
    %141 = vst.msk [vmem:[#allocation5 + $0x80] sm:$0xff] %vm51, 0.0
    %142 = vst.msk [vmem:[#allocation5 + $0x88] sm:$0x1] %vm53, 0.0
    %143 = vst.msk [vmem:[#allocation5 + $0x90] sm:$0xff] %vm51, 0.0
    %144 = vst.msk [vmem:[#allocation5 + $0x98] sm:$0x1] %vm53, 0.0
    %145 = vst.msk [vmem:[#allocation5 + $0xa0] sm:$0xff] %vm51, 0.0
    %146 = vst.msk [vmem:[#allocation5 + $0xa8] sm:$0x1] %vm53, 0.0
    %147 = vst.msk [vmem:[#allocation5 + $0xb0] sm:$0xff] %vm51, 0.0
    %148 = vst.msk [vmem:[#allocation5 + $0xb8] sm:$0x1] %vm53, 0.0
    %149 = vst.msk [vmem:[#allocation5 + $0xc0] sm:$0xff] %vm51, 0.0
    %150 = vst.msk [vmem:[#allocation5 + $0xc8] sm:$0x1] %vm53, 0.0
    %151 = vst.msk [vmem:[#allocation5 + $0xd0] sm:$0xff] %vm51, 0.0
    %152 = vst.msk [vmem:[#allocation5 + $0xd8] sm:$0x1] %vm53, 0.0
    %153 = vst.msk [vmem:[#allocation5 + $0xe0] sm:$0xff] %vm51, 0.0
    %154 = vst.msk [vmem:[#allocation5 + $0xe8] sm:$0x1] %vm53, 0.0
    %155 = vst.msk [vmem:[#allocation5 + $0xf0] sm:$0xff] %vm51, 0.0
    %156 = vst.msk [vmem:[#allocation5 + $0xf8] sm:$0x1] %vm53, 0.0
    %157 = vst.msk [vmem:[#allocation5 + $0x100] sm:$0xff] %vm51, 0.0
    %158 = vst.msk [vmem:[#allocation5 + $0x108] sm:$0x1] %vm53, 0.0
    %159 = vst.msk [vmem:[#allocation5 + $0x110] sm:$0xff] %vm51, 0.0
    %160 = vst.msk [vmem:[#allocation5 + $0x118] sm:$0x1] %vm53, 0.0
    %161 = vst.msk [vmem:[#allocation6] sm:$0xff] %vm51, 0.0
    %162 = vst.msk [vmem:[#allocation6 + $0x8] sm:$0x1] %vm53, 0.0
    %163 = vst.msk [vmem:[#allocation6 + $0x10] sm:$0xff] %vm51, 0.0
    %164 = vst.msk [vmem:[#allocation6 + $0x18] sm:$0x1] %vm53, 0.0
    %165 = vst.msk [vmem:[#allocation6 + $0x20] sm:$0xff] %vm51, 0.0
    %166 = vst.msk [vmem:[#allocation6 + $0x28] sm:$0x1] %vm53, 0.0
    %167 = vst.msk [vmem:[#allocation6 + $0x30] sm:$0xff] %vm51, 0.0
    %168 = vst.msk [vmem:[#allocation6 + $0x38] sm:$0x1] %vm53, 0.0
    %169 = vst.msk [vmem:[#allocation6 + $0x40] sm:$0xff] %vm51, 0.0
    %170 = vst.msk [vmem:[#allocation6 + $0x48] sm:$0x1] %vm53, 0.0
    %171 = vst.msk [vmem:[#allocation6 + $0x50] sm:$0xff] %vm51, 0.0
    %172 = vst.msk [vmem:[#allocation6 + $0x58] sm:$0x1] %vm53, 0.0
    %173 = vst.msk [vmem:[#allocation6 + $0x60] sm:$0xff] %vm51, 0.0
    %174 = vst.msk [vmem:[#allocation6 + $0x68] sm:$0x1] %vm53, 0.0
    %175 = vst.msk [vmem:[#allocation6 + $0x70] sm:$0xff] %vm51, 0.0
    %176 = vst.msk [vmem:[#allocation6 + $0x78] sm:$0x1] %vm53, 0.0
    %177 = vst.msk [vmem:[#allocation6 + $0x80] sm:$0xff] %vm51, 0.0
    %178 = vst.msk [vmem:[#allocation6 + $0x88] sm:$0x1] %vm53, 0.0
    %179 = vst.msk [vmem:[#allocation6 + $0x90] sm:$0xff] %vm51, 0.0
    %180 = vst.msk [vmem:[#allocation6 + $0x98] sm:$0x1] %vm53, 0.0
    %181 = vst.msk [vmem:[#allocation6 + $0xa0] sm:$0xff] %vm51, 0.0
    %182 = vst.msk [vmem:[#allocation6 + $0xa8] sm:$0x1] %vm53, 0.0
    %183 = vst.msk [vmem:[#allocation6 + $0xb0] sm:$0xff] %vm51, 0.0
    %184 = vst.msk [vmem:[#allocation6 + $0xb8] sm:$0x1] %vm53, 0.0
    %185 = vst.msk [vmem:[#allocation6 + $0xc0] sm:$0xff] %vm51, 0.0
    %186 = vst.msk [vmem:[#allocation6 + $0xc8] sm:$0x1] %vm53, 0.0
    %187 = vst.msk [vmem:[#allocation6 + $0xd0] sm:$0xff] %vm51, 0.0
    %188 = vst.msk [vmem:[#allocation6 + $0xd8] sm:$0x1] %vm53, 0.0
    %189 = vst.msk [vmem:[#allocation6 + $0xe0] sm:$0xff] %vm51, 0.0
    %190 = vst.msk [vmem:[#allocation6 + $0xe8] sm:$0x1] %vm53, 0.0
    %191 = vst.msk [vmem:[#allocation6 + $0xf0] sm:$0xff] %vm51, 0.0
    %192 = vst.msk [vmem:[#allocation6 + $0xf8] sm:$0x1] %vm53, 0.0
    %193 = vst.msk [vmem:[#allocation6 + $0x100] sm:$0xff] %vm51, 0.0
    %194 = vst.msk [vmem:[#allocation6 + $0x108] sm:$0x1] %vm53, 0.0
    %195 = vst.msk [vmem:[#allocation6 + $0x110] sm:$0xff] %vm51, 0.0
    %196 = vst.msk [vmem:[#allocation6 + $0x118] sm:$0x1] %vm53, 0.0
    %197 = vst.msk [vmem:[#allocation7] sm:$0xff] %vm51, 0.0
    %vm198 = vcmask 92160
    %199 = vst.msk [vmem:[#allocation7 + $0x8] sm:$0x7] %vm198, 0.0
    %200 = vst.msk [vmem:[#allocation7 + $0x10] sm:$0xff] %vm51, 0.0
    %201 = vst.msk [vmem:[#allocation7 + $0x18] sm:$0x7] %vm198, 0.0
    %202 = vst.msk [vmem:[#allocation7 + $0x20] sm:$0xff] %vm51, 0.0
    %203 = vst.msk [vmem:[#allocation7 + $0x28] sm:$0x7] %vm198, 0.0
    %204 = vst.msk [vmem:[#allocation7 + $0x30] sm:$0xff] %vm51, 0.0
    %205 = vst.msk [vmem:[#allocation7 + $0x38] sm:$0x7] %vm198, 0.0
    %206 = vst.msk [vmem:[#allocation7 + $0x40] sm:$0xff] %vm51, 0.0
    %207 = vst.msk [vmem:[#allocation7 + $0x48] sm:$0x7] %vm198, 0.0
    %208 = vst.msk [vmem:[#allocation7 + $0x50] sm:$0xff] %vm51, 0.0
    %209 = vst.msk [vmem:[#allocation7 + $0x58] sm:$0x7] %vm198, 0.0
    %210 = vst.msk [vmem:[#allocation7 + $0x60] sm:$0xff] %vm51, 0.0
    %211 = vst.msk [vmem:[#allocation7 + $0x68] sm:$0x7] %vm198, 0.0
    %212 = vst.msk [vmem:[#allocation7 + $0x70] sm:$0xff] %vm51, 0.0
    %213 = vst.msk [vmem:[#allocation7 + $0x78] sm:$0x7] %vm198, 0.0
    %214 = vst.msk [vmem:[#allocation7 + $0x80] sm:$0xff] %vm51, 0.0
    %215 = vst.msk [vmem:[#allocation7 + $0x88] sm:$0x7] %vm198, 0.0
    %216 = vst.msk [vmem:[#allocation7 + $0x90] sm:$0xff] %vm51, 0.0
    %217 = vst.msk [vmem:[#allocation7 + $0x98] sm:$0x7] %vm198, 0.0
    %218 = vst.msk [vmem:[#allocation7 + $0xa0] sm:$0xff] %vm51, 0.0
    %219 = vst.msk [vmem:[#allocation7 + $0xa8] sm:$0x7] %vm198, 0.0
    %220 = vst.msk [vmem:[#allocation7 + $0xb0] sm:$0xff] %vm51, 0.0
    %221 = vst.msk [vmem:[#allocation7 + $0xb8] sm:$0x7] %vm198, 0.0
    %222 = vst.msk [vmem:[#allocation7 + $0xc0] sm:$0xff] %vm51, 0.0
    %223 = vst.msk [vmem:[#allocation7 + $0xc8] sm:$0x7] %vm198, 0.0
    %224 = vst.msk [vmem:[#allocation7 + $0xd0] sm:$0xff] %vm51, 0.0
    %225 = vst.msk [vmem:[#allocation7 + $0xd8] sm:$0x7] %vm198, 0.0
    %226 = vst.msk [vmem:[#allocation7 + $0xe0] sm:$0xff] %vm51, 0.0
    %227 = vst.msk [vmem:[#allocation7 + $0xe8] sm:$0x7] %vm198, 0.0
    %228 = vst.msk [vmem:[#allocation7 + $0xf0] sm:$0xff] %vm51, 0.0
    %229 = vst.msk [vmem:[#allocation7 + $0xf8] sm:$0x7] %vm198, 0.0
    %230 = vst.msk [vmem:[#allocation7 + $0x100] sm:$0xff] %vm51, 0.0
    %231 = vst.msk [vmem:[#allocation7 + $0x108] sm:$0x7] %vm198, 0.0
    %232 = vst.msk [vmem:[#allocation7 + $0x110] sm:$0xff] %vm51, 0.0
    %233 = vst.msk [vmem:[#allocation7 + $0x118] sm:$0x7] %vm198, 0.0
    %234 = vst.msk [vmem:[#allocation7 + $0x120] sm:$0xff] %vm51, 0.0
    %235 = vst.msk [vmem:[#allocation7 + $0x128] sm:$0x7] %vm198, 0.0
    %236 = vst.msk [vmem:[#allocation7 + $0x130] sm:$0xff] %vm51, 0.0
    %237 = vst.msk [vmem:[#allocation7 + $0x138] sm:$0x7] %vm198, 0.0
    %238 = vst.msk [vmem:[#allocation7 + $0x140] sm:$0xff] %vm51, 0.0
    %239 = vst.msk [vmem:[#allocation7 + $0x148] sm:$0x7] %vm198, 0.0
    %240 = vst.msk [vmem:[#allocation7 + $0x150] sm:$0xff] %vm51, 0.0
    %241 = vst.msk [vmem:[#allocation7 + $0x158] sm:$0x7] %vm198, 0.0
    %v242 = vld [vmem:[%s0] sm:$0xff]
    %v243 = vld [vmem:[%s0 + $0x8] sm:$0xff]
    %v244 = vld [vmem:[%s0 + $0x10] sm:$0xff]
    %v245 = vld [vmem:[%s0 + $0x18] sm:$0xff]
    %v246 = vld [vmem:[%s0 + $0x20] sm:$0xff]
    %v247 = vld [vmem:[%s0 + $0x28] sm:$0xff]
    %v248 = vld [vmem:[%s0 + $0x30] sm:$0xff]
    %v249 = vld [vmem:[%s0 + $0x38] sm:$0xff]
    %v250 = vld [vmem:[%s0 + $0x40] sm:$0xff]
    %v251 = vld [vmem:[%s0 + $0x48] sm:$0xff]
    %v252 = vld [vmem:[%s0 + $0x50] sm:$0xff]
    %v253 = vld [vmem:[%s0 + $0x58] sm:$0xff]
    %v254 = vld [vmem:[%s0 + $0x60] sm:$0xff]
    %v255 = vld [vmem:[%s0 + $0x68] sm:$0xff]
    %v256 = vld [vmem:[%s0 + $0x70] sm:$0xff]
    %v257 = vld [vmem:[%s0 + $0x78] sm:$0xff]
    %v258 = vld [vmem:[%s0 + $0x80] sm:$0xff]
    %v259 = vld [vmem:[%s0 + $0x88] sm:$0xff]
    %v260 = vld [vmem:[%s0 + $0x90] sm:$0xff]
    %v261 = vld [vmem:[%s0 + $0x98] sm:$0xff]
    %v262 = vld [vmem:[%s0 + $0xa0] sm:$0xff]
    %v263 = vld [vmem:[%s0 + $0xa8] sm:$0xff]
    %v264 = vld [vmem:[%s0 + $0xb0] sm:$0xff]
    %v265 = vld [vmem:[%s0 + $0xb8] sm:$0xff]
    %v266 = vld [vmem:[%s0 + $0xc0] sm:$0xff]
    %v267 = vld [vmem:[%s0 + $0xc8] sm:$0xff]
    %v268 = vld [vmem:[%s0 + $0xd0] sm:$0xff]
    %v269 = vld [vmem:[%s0 + $0xd8] sm:$0xff]
    %v270 = vld [vmem:[%s0 + $0xe0] sm:$0xff]
    %v271 = vld [vmem:[%s0 + $0xe8] sm:$0xff]
    %v272 = vld [vmem:[%s0 + $0xf0] sm:$0xff]
    %v273 = vld [vmem:[%s0 + $0xf8] sm:$0xff]
    %v274 = vld [vmem:[%s0 + $0x100] sm:$0xff]
    %v275 = vld [vmem:[%s0 + $0x108] sm:$0xff]
    %v276 = vld [vmem:[%s0 + $0x110] sm:$0xff]
    %v277 = vld [vmem:[%s0 + $0x118] sm:$0xff]
    %v278 = vld [vmem:[%s0 + $0x120] sm:$0xff]
    %v279 = vld [vmem:[%s0 + $0x128] sm:$0xff]
    %v280 = vld [vmem:[%s0 + $0x130] sm:$0xff]
    %v281 = vld [vmem:[%s0 + $0x138] sm:$0xff]
    %v282 = vld [vmem:[%s0 + $0x140] sm:$0xff]
    %v283 = vld [vmem:[%s0 + $0x148] sm:$0xff]
    %v284 = vld [vmem:[%s0 + $0x150] sm:$0xff]
    %v285 = vld [vmem:[%s0 + $0x158] sm:$0xff]
    %v286 = vld [vmem:[%s0 + $0x160] sm:$0xff]
    %v287 = vld [vmem:[%s0 + $0x168] sm:$0xff]
    %v288 = vld [vmem:[%s0 + $0x170] sm:$0xff]
    %v289 = vld [vmem:[%s0 + $0x178] sm:$0xff]
    %v290 = vld [vmem:[%s0 + $0x180] sm:$0xff]
    %v291 = vld [vmem:[%s1] sm:$0xff]
    %v292 = vld [vmem:[%s1 + $0x8] sm:$0xff]
    %v293 = vld [vmem:[%s1 + $0x10] sm:$0xff]
    %v294 = vld [vmem:[%s1 + $0x18] sm:$0xff]
    %v295 = vld [vmem:[%s2] sm:$0x1]
    %v297 = vlaneseq
    %v298 = vshrl.u32 %v297, 7
    %v299 = vsub.s32 0, %v298
    %v300 = vrot.slane %v295, %v299
    %vm302 = vcmask 261120
    %v304 = vsel %vm302, %v242, 0
    %v307 = vsel %vm302, %v243, 0
    %v310 = vsel %vm302, %v244, 0
    %v313 = vsel %vm302, %v245, 0
    %v316 = vsel %vm302, %v246, 0
    %v319 = vsel %vm302, %v247, 0
    %v322 = vsel %vm302, %v248, 0
    %v325 = vsel %vm302, %v249, 0
    %v328 = vsel %vm302, %v250, 0
    %v331 = vsel %vm302, %v251, 0
    %v334 = vsel %vm302, %v252, 0
    %v337 = vsel %vm302, %v253, 0
    %v340 = vsel %vm302, %v254, 0
    %v343 = vsel %vm302, %v255, 0
    %v346 = vsel %vm302, %v256, 0
    %v349 = vsel %vm302, %v257, 0
    %v352 = vsel %vm302, %v258, 0
    %v355 = vsel %vm302, %v259, 0
    %v358 = vsel %vm302, %v260, 0
    %v361 = vsel %vm302, %v261, 0
    %v364 = vsel %vm302, %v262, 0
    %v367 = vsel %vm302, %v263, 0
    %v370 = vsel %vm302, %v264, 0
    %v373 = vsel %vm302, %v265, 0
    %v376 = vsel %vm302, %v266, 0
    %v379 = vsel %vm302, %v267, 0
    %v382 = vsel %vm302, %v268, 0
    %v385 = vsel %vm302, %v269, 0
    %v388 = vsel %vm302, %v270, 0
    %v391 = vsel %vm302, %v271, 0
    %v394 = vsel %vm302, %v272, 0
    %v397 = vsel %vm302, %v273, 0
    %v400 = vsel %vm302, %v274, 0
    %v403 = vsel %vm302, %v275, 0
    %v406 = vsel %vm302, %v276, 0
    %v409 = vsel %vm302, %v277, 0
    %v412 = vsel %vm302, %v278, 0
    %v415 = vsel %vm302, %v279, 0
    %v418 = vsel %vm302, %v280, 0
    %v421 = vsel %vm302, %v281, 0
    %v424 = vsel %vm302, %v282, 0
    %v427 = vsel %vm302, %v283, 0
    %v430 = vsel %vm302, %v284, 0
    %v433 = vsel %vm302, %v285, 0
    %v436 = vsel %vm302, %v286, 0
    %v439 = vsel %vm302, %v287, 0
    %v442 = vsel %vm302, %v288, 0
    %v445 = vsel %vm302, %v289, 0
    %v448 = vsel %vm302, %v290, 0
    %450 = vmatprep.subr.mxu0 0.0
    %451 = vmatpush1.msra.mxu0 %v291
    %452 = vmatprep.subr.mxu0 0.0
    %453 = vmatpush1.msra.mxu0 %v292
    %454 = vmatprep.subr.mxu0 0.0
    %455 = vmatpush1.msra.mxu0 %v293
    %456 = vmatprep.subr.mxu0 0.0
    %457 = vmatpush1.msra.mxu0 %v294
    %458 = vmatprep.subr.mxu0 0.0
    %459 = vmatpush1.msra.mxu0 0.0
    %460 = vmatprep.subr.mxu0 0.0
    %461 = vmatpush1.msra.mxu0 0.0
    %462 = vmatprep.subr.mxu0 0.0
    %463 = vmatpush1.msra.mxu0 0.0
    %464 = vmatprep.subr.mxu0 0.0
    %465 = vmatpush1.msra.mxu0 0.0
    %466 = vmatprep.subr.mxu0 0.0
    %467 = vmatpush1.msra.mxu0 0.0
    %468 = vmatprep.subr.mxu0 0.0
    %469 = vmatpush1.msra.mxu0 0.0
    %470 = vmatprep.subr.mxu0 0.0
    %471 = vmatpush1.msra.mxu0 0.0
    %472 = vmatprep.subr.mxu0 0.0
    %473 = vmatpush1.msra.mxu0 0.0
    %474 = vmatprep.subr.mxu0 0.0
    %475 = vmatpush1.msra.mxu0 0.0
    %476 = vmatprep.subr.mxu0 0.0
    %477 = vmatpush1.msra.mxu0 0.0
    %478 = vmatprep.subr.mxu0 0.0
    %479 = vmatpush1.msra.mxu0 0.0
    %480 = vmatprep.subr.mxu0 0.0
    %481 = vmatpush1.msra.mxu0 0.0
    %482 = vmatprep.subr.mxu0 0.0
    %483 = vmatpush1.msra.mxu0 0.0
    %484 = vmatprep.subr.mxu0 0.0
    %485 = vmatpush1.msra.mxu0 0.0
    %486 = vmatprep.subr.mxu0 0.0
    %487 = vmatpush1.msra.mxu0 0.0
    %488 = vmatprep.subr.mxu0 0.0
    %489 = vmatpush1.msra.mxu0 0.0
    %490 = vmatprep.subr.mxu0 0.0
    %491 = vmatpush1.msra.mxu0 0.0
    %492 = vmatprep.subr.mxu0 0.0
    %493 = vmatpush1.msra.mxu0 0.0
    %494 = vmatprep.subr.mxu0 0.0
    %495 = vmatpush1.msra.mxu0 0.0
    %496 = vmatprep.subr.mxu0 0.0
    %497 = vmatpush1.msra.mxu0 0.0
    %498 = vmatprep.subr.mxu0 0.0
    %499 = vmatpush1.msra.mxu0 0.0
    %500 = vmatprep.subr.mxu0 0.0
    %501 = vmatpush1.msra.mxu0 0.0
    %502 = vmatprep.subr.mxu0 0.0
    %503 = vmatpush1.msra.mxu0 0.0
    %504 = vmatprep.subr.mxu0 0.0
    %505 = vmatpush1.msra.mxu0 0.0
    %506 = vmatprep.subr.mxu0 0.0
    %507 = vmatpush1.msra.mxu0 0.0
    %508 = vmatprep.subr.mxu0 0.0
    %509 = vmatpush1.msra.mxu0 0.0
    %510 = vmatprep.subr.mxu0 0.0
    %511 = vmatpush1.msra.mxu0 0.0
    %512 = vmatprep.subr.mxu0 0.0
    %513 = vmatpush1.msra.mxu0 0.0
    %514 = vmatprep.mubr.f32.mxu0 0.0
    %515 = vmatmul.mubr.f32.gmra.mrb[0].mxu0 %v304
    %v516 = vpop.f32.mrb[0].mxu0
    %v517 = vadd.f32 %v300, %v516
    %v518 = vpop.f32.mrb[0].mxu0
    %519 = vmatprep.mubr.f32.mxu0 0.0
    %520 = vmatmul.mubr.f32.gmra.mrb[0].mxu0 %v307
    %v521 = vpop.f32.mrb[0].mxu0
    %v522 = vadd.f32 %v300, %v521
    %v523 = vpop.f32.mrb[0].mxu0
    %524 = vmatprep.mubr.f32.mxu0 0.0
    %525 = vmatmul.mubr.f32.gmra.mrb[0].mxu0 %v310
    %v526 = vpop.f32.mrb[0].mxu0
    %v527 = vadd.f32 %v300, %v526
    %v528 = vpop.f32.mrb[0].mxu0
    %529 = vmatprep.mubr.f32.mxu0 0.0
    %530 = vmatmul.mubr.f32.gmra.mrb[0].mxu0 %v313
    %v531 = vpop.f32.mrb[0].mxu0
    %v532 = vadd.f32 %v300, %v531
    %v533 = vpop.f32.mrb[0].mxu0
    %534 = vmatprep.mubr.f32.mxu0 0.0
    %535 = vmatmul.mubr.f32.gmra.mrb[0].mxu0 %v316
    %v536 = vpop.f32.mrb[0].mxu0
    %v537 = vadd.f32 %v300, %v536
    %v538 = vpop.f32.mrb[0].mxu0
    %539 = vmatprep.mubr.f32.mxu0 0.0
    %540 = vmatmul.mubr.f32.gmra.mrb[0].mxu0 %v319
    %v541 = vpop.f32.mrb[0].mxu0
    %v542 = vadd.f32 %v300, %v541
    %v543 = vpop.f32.mrb[0].mxu0
    %544 = vmatprep.mubr.f32.mxu0 0.0
    %545 = vmatmul.mubr.f32.gmra.mrb[0].mxu0 %v322
    %v546 = vpop.f32.mrb[0].mxu0
    %v547 = vadd.f32 %v300, %v546
    %v548 = vpop.f32.mrb[0].mxu0
    %549 = vmatprep.mubr.f32.mxu0 0.0
    %550 = vmatmul.mubr.f32.gmra.mrb[0].mxu0 %v325
    %v551 = vpop.f32.mrb[0].mxu0
    %v552 = vadd.f32 %v300, %v551
    %v553 = vpop.f32.mrb[0].mxu0
    %554 = vmatprep.mubr.f32.mxu0 0.0
    %555 = vmatmul.mubr.f32.gmra.mrb[0].mxu0 %v328
    %v556 = vpop.f32.mrb[0].mxu0
    %v557 = vadd.f32 %v300, %v556
    %v558 = vpop.f32.mrb[0].mxu0
    %559 = vmatprep.mubr.f32.mxu0 0.0
    %560 = vmatmul.mubr.f32.gmra.mrb[0].mxu0 %v331
    %v561 = vpop.f32.mrb[0].mxu0
    %v562 = vadd.f32 %v300, %v561
    %v563 = vpop.f32.mrb[0].mxu0
    %564 = vmatprep.mubr.f32.mxu0 0.0
    %565 = vmatmul.mubr.f32.gmra.mrb[0].mxu0 %v334
    %v566 = vpop.f32.mrb[0].mxu0
    %v567 = vadd.f32 %v300, %v566
    %v568 = vpop.f32.mrb[0].mxu0
    %569 = vmatprep.mubr.f32.mxu0 0.0
    %570 = vmatmul.mubr.f32.gmra.mrb[0].mxu0 %v337
    %v571 = vpop.f32.mrb[0].mxu0
    %v572 = vadd.f32 %v300, %v571
    %v573 = vpop.f32.mrb[0].mxu0
    %574 = vmatprep.mubr.f32.mxu0 0.0
    %575 = vmatmul.mubr.f32.gmra.mrb[0].mxu0 %v340
    %v576 = vpop.f32.mrb[0].mxu0
    %v577 = vadd.f32 %v300, %v576
    %v578 = vpop.f32.mrb[0].mxu0
    %579 = vmatprep.mubr.f32.mxu0 0.0
    %580 = vmatmul.mubr.f32.gmra.mrb[0].mxu0 %v343
    %v581 = vpop.f32.mrb[0].mxu0
    %v582 = vadd.f32 %v300, %v581
    %v583 = vpop.f32.mrb[0].mxu0
    %584 = vmatprep.mubr.f32.mxu0 0.0
    %585 = vmatmul.mubr.f32.gmra.mrb[0].mxu0 %v346
    %v586 = vpop.f32.mrb[0].mxu0
    %v587 = vadd.f32 %v300, %v586
    %v588 = vpop.f32.mrb[0].mxu0
    %589 = vmatprep.mubr.f32.mxu0 0.0
    %590 = vmatmul.mubr.f32.gmra.mrb[0].mxu0 %v349
    %v591 = vpop.f32.mrb[0].mxu0
    %v592 = vadd.f32 %v300, %v591
    %v593 = vpop.f32.mrb[0].mxu0
    %594 = vmatprep.mubr.f32.mxu0 0.0
    %595 = vmatmul.mubr.f32.gmra.mrb[0].mxu0 %v352
    %v596 = vpop.f32.mrb[0].mxu0
    %v597 = vadd.f32 %v300, %v596
    %v598 = vpop.f32.mrb[0].mxu0
    %599 = vmatprep.mubr.f32.mxu0 0.0
    %600 = vmatmul.mubr.f32.gmra.mrb[0].mxu0 %v355
    %v601 = vpop.f32.mrb[0].mxu0
    %v602 = vadd.f32 %v300, %v601
    %v603 = vpop.f32.mrb[0].mxu0
    %604 = vmatprep.mubr.f32.mxu0 0.0
    %605 = vmatmul.mubr.f32.gmra.mrb[0].mxu0 %v358
    %v606 = vpop.f32.mrb[0].mxu0
    %v607 = vadd.f32 %v300, %v606
    %v608 = vpop.f32.mrb[0].mxu0
    %609 = vmatprep.mubr.f32.mxu0 0.0
    %610 = vmatmul.mubr.f32.gmra.mrb[0].mxu0 %v361
    %v611 = vpop.f32.mrb[0].mxu0
    %v612 = vadd.f32 %v300, %v611
    %v613 = vpop.f32.mrb[0].mxu0
    %614 = vmatprep.mubr.f32.mxu0 0.0
    %615 = vmatmul.mubr.f32.gmra.mrb[0].mxu0 %v364
    %v616 = vpop.f32.mrb[0].mxu0
    %v617 = vadd.f32 %v300, %v616
    %v618 = vpop.f32.mrb[0].mxu0
    %619 = vmatprep.mubr.f32.mxu0 0.0
    %620 = vmatmul.mubr.f32.gmra.mrb[0].mxu0 %v367
    %v621 = vpop.f32.mrb[0].mxu0
    %v622 = vadd.f32 %v300, %v621
    %v623 = vpop.f32.mrb[0].mxu0
    %624 = vmatprep.mubr.f32.mxu0 0.0
    %625 = vmatmul.mubr.f32.gmra.mrb[0].mxu0 %v370
    %v626 = vpop.f32.mrb[0].mxu0
    %v627 = vadd.f32 %v300, %v626
    %v628 = vpop.f32.mrb[0].mxu0
    %629 = vmatprep.mubr.f32.mxu0 0.0
    %630 = vmatmul.mubr.f32.gmra.mrb[0].mxu0 %v373
    %v631 = vpop.f32.mrb[0].mxu0
    %v632 = vadd.f32 %v300, %v631
    %v633 = vpop.f32.mrb[0].mxu0
    %634 = vmatprep.mubr.f32.mxu0 0.0
    %635 = vmatmul.mubr.f32.gmra.mrb[0].mxu0 %v376
    %v636 = vpop.f32.mrb[0].mxu0
    %v637 = vadd.f32 %v300, %v636
    %v638 = vpop.f32.mrb[0].mxu0
    %639 = vmatprep.mubr.f32.mxu0 0.0
    %640 = vmatmul.mubr.f32.gmra.mrb[0].mxu0 %v379
    %v641 = vpop.f32.mrb[0].mxu0
    %v642 = vadd.f32 %v300, %v641
    %v643 = vpop.f32.mrb[0].mxu0
    %644 = vmatprep.mubr.f32.mxu0 0.0
    %645 = vmatmul.mubr.f32.gmra.mrb[0].mxu0 %v382
    %v646 = vpop.f32.mrb[0].mxu0
    %v647 = vadd.f32 %v300, %v646
    %v648 = vpop.f32.mrb[0].mxu0
    %649 = vmatprep.mubr.f32.mxu0 0.0
    %650 = vmatmul.mubr.f32.gmra.mrb[0].mxu0 %v385
    %v651 = vpop.f32.mrb[0].mxu0
    %v652 = vadd.f32 %v300, %v651
    %v653 = vpop.f32.mrb[0].mxu0
    %654 = vmatprep.mubr.f32.mxu0 0.0
    %655 = vmatmul.mubr.f32.gmra.mrb[0].mxu0 %v388
    %v656 = vpop.f32.mrb[0].mxu0
    %v657 = vadd.f32 %v300, %v656
    %v658 = vpop.f32.mrb[0].mxu0
    %659 = vmatprep.mubr.f32.mxu0 0.0
    %660 = vmatmul.mubr.f32.gmra.mrb[0].mxu0 %v391
    %v661 = vpop.f32.mrb[0].mxu0
    %v662 = vadd.f32 %v300, %v661
    %v663 = vpop.f32.mrb[0].mxu0
    %664 = vmatprep.mubr.f32.mxu0 0.0
    %665 = vmatmul.mubr.f32.gmra.mrb[0].mxu0 %v394
    %v666 = vpop.f32.mrb[0].mxu0
    %v667 = vadd.f32 %v300, %v666
    %v668 = vpop.f32.mrb[0].mxu0
    %669 = vmatprep.mubr.f32.mxu0 0.0
    %670 = vmatmul.mubr.f32.gmra.mrb[0].mxu0 %v397
    %v671 = vpop.f32.mrb[0].mxu0
    %v672 = vadd.f32 %v300, %v671
    %v673 = vpop.f32.mrb[0].mxu0
    %674 = vmatprep.mubr.f32.mxu0 0.0
    %675 = vmatmul.mubr.f32.gmra.mrb[0].mxu0 %v400
    %v676 = vpop.f32.mrb[0].mxu0
    %v677 = vadd.f32 %v300, %v676
    %v678 = vpop.f32.mrb[0].mxu0
    %679 = vmatprep.mubr.f32.mxu0 0.0
    %680 = vmatmul.mubr.f32.gmra.mrb[0].mxu0 %v403
    %v681 = vpop.f32.mrb[0].mxu0
    %v682 = vadd.f32 %v300, %v681
    %v683 = vpop.f32.mrb[0].mxu0
    %684 = vmatprep.mubr.f32.mxu0 0.0
    %685 = vmatmul.mubr.f32.gmra.mrb[0].mxu0 %v406
    %v686 = vpop.f32.mrb[0].mxu0
    %v687 = vadd.f32 %v300, %v686
    %v688 = vpop.f32.mrb[0].mxu0
    %689 = vmatprep.mubr.f32.mxu0 0.0
    %690 = vmatmul.mubr.f32.gmra.mrb[0].mxu0 %v409
    %v691 = vpop.f32.mrb[0].mxu0
    %v692 = vadd.f32 %v300, %v691
    %v693 = vpop.f32.mrb[0].mxu0
    %694 = vmatprep.mubr.f32.mxu0 0.0
    %695 = vmatmul.mubr.f32.gmra.mrb[0].mxu0 %v412
    %v696 = vpop.f32.mrb[0].mxu0
    %v697 = vadd.f32 %v300, %v696
    %v698 = vpop.f32.mrb[0].mxu0
    %699 = vmatprep.mubr.f32.mxu0 0.0
    %700 = vmatmul.mubr.f32.gmra.mrb[0].mxu0 %v415
    %v701 = vpop.f32.mrb[0].mxu0
    %v702 = vadd.f32 %v300, %v701
    %v703 = vpop.f32.mrb[0].mxu0
    %704 = vmatprep.mubr.f32.mxu0 0.0
    %705 = vmatmul.mubr.f32.gmra.mrb[0].mxu0 %v418
    %v706 = vpop.f32.mrb[0].mxu0
    %v707 = vadd.f32 %v300, %v706
    %v708 = vpop.f32.mrb[0].mxu0
    %709 = vmatprep.mubr.f32.mxu0 0.0
    %710 = vmatmul.mubr.f32.gmra.mrb[0].mxu0 %v421
    %v711 = vpop.f32.mrb[0].mxu0
    %v712 = vadd.f32 %v300, %v711
    %v713 = vpop.f32.mrb[0].mxu0
    %714 = vmatprep.mubr.f32.mxu0 0.0
    %715 = vmatmul.mubr.f32.gmra.mrb[0].mxu0 %v424
    %v716 = vpop.f32.mrb[0].mxu0
    %v717 = vadd.f32 %v300, %v716
    %v718 = vpop.f32.mrb[0].mxu0
    %719 = vmatprep.mubr.f32.mxu0 0.0
    %720 = vmatmul.mubr.f32.gmra.mrb[0].mxu0 %v427
    %v721 = vpop.f32.mrb[0].mxu0
    %v722 = vadd.f32 %v300, %v721
    %v723 = vpop.f32.mrb[0].mxu0
    %724 = vmatprep.mubr.f32.mxu0 0.0
    %725 = vmatmul.mubr.f32.gmra.mrb[0].mxu0 %v430
    %v726 = vpop.f32.mrb[0].mxu0
    %v727 = vadd.f32 %v300, %v726
    %v728 = vpop.f32.mrb[0].mxu0
    %729 = vmatprep.mubr.f32.mxu0 0.0
    %730 = vmatmul.mubr.f32.gmra.mrb[0].mxu0 %v433
    %v731 = vpop.f32.mrb[0].mxu0
    %v732 = vadd.f32 %v300, %v731
    %v733 = vpop.f32.mrb[0].mxu0
    %734 = vmatprep.mubr.f32.mxu0 0.0
    %735 = vmatmul.mubr.f32.gmra.mrb[0].mxu0 %v436
    %v736 = vpop.f32.mrb[0].mxu0
    %v737 = vadd.f32 %v300, %v736
    %v738 = vpop.f32.mrb[0].mxu0
    %739 = vmatprep.mubr.f32.mxu0 0.0
    %740 = vmatmul.mubr.f32.gmra.mrb[0].mxu0 %v439
    %v741 = vpop.f32.mrb[0].mxu0
    %v742 = vadd.f32 %v300, %v741
    %v743 = vpop.f32.mrb[0].mxu0
    %744 = vmatprep.mubr.f32.mxu0 0.0
    %745 = vmatmul.mubr.f32.gmra.mrb[0].mxu0 %v442
    %v746 = vpop.f32.mrb[0].mxu0
    %v747 = vadd.f32 %v300, %v746
    %v748 = vpop.f32.mrb[0].mxu0
    %749 = vmatprep.mubr.f32.mxu0 0.0
    %750 = vmatmul.mubr.f32.gmra.mrb[0].mxu0 %v445
    %v751 = vpop.f32.mrb[0].mxu0
    %v752 = vadd.f32 %v300, %v751
    %v753 = vpop.f32.mrb[0].mxu0
    %754 = vmatprep.mubr.f32.mxu0 0.0
    %755 = vmatmul.mubr.f32.gmra.mrb[0].mxu0 %v448
    %v756 = vpop.f32.mrb[0].mxu0
    %v757 = vadd.f32 %v300, %v756
    %v758 = vpop.f32.mrb[0].mxu0
    %759 = vdwg.mxu0
    %v760 = vsel %vm51, %v517, 0.0
    %v761 = vsel %vm51, %v522, 0.0
    %v762 = vadd.f32 %v760, %v761
    %v763 = vsel %vm51, %v527, 0.0
    %v764 = vadd.f32 %v762, %v763
    %v765 = vsel %vm51, %v532, 0.0
    %v766 = vadd.f32 %v764, %v765
    %v767 = vsel %vm51, %v537, 0.0
    %v768 = vadd.f32 %v766, %v767
    %v769 = vsel %vm51, %v542, 0.0
    %v770 = vadd.f32 %v768, %v769
    %v771 = vsel %vm51, %v547, 0.0
    %v772 = vadd.f32 %v770, %v771
    %v773 = vsel %vm51, %v552, 0.0
    %v774 = vadd.f32 %v772, %v773
    %v775 = vsel %vm51, %v557, 0.0
    %v776 = vadd.f32 %v774, %v775
    %v777 = vsel %vm51, %v562, 0.0
    %v778 = vadd.f32 %v776, %v777
    %v779 = vsel %vm51, %v567, 0.0
    %v780 = vadd.f32 %v778, %v779
    %v781 = vsel %vm51, %v572, 0.0
    %v782 = vadd.f32 %v780, %v781
    %v783 = vsel %vm51, %v577, 0.0
    %v784 = vadd.f32 %v782, %v783
    %v785 = vsel %vm51, %v582, 0.0
    %v786 = vadd.f32 %v784, %v785
    %v787 = vsel %vm51, %v587, 0.0
    %v788 = vadd.f32 %v786, %v787
    %v789 = vsel %vm51, %v592, 0.0
    %v790 = vadd.f32 %v788, %v789
    %v791 = vsel %vm51, %v597, 0.0
    %v792 = vadd.f32 %v790, %v791
    %v793 = vsel %vm51, %v602, 0.0
    %v794 = vadd.f32 %v792, %v793
    %v795 = vsel %vm51, %v607, 0.0
    %v796 = vadd.f32 %v794, %v795
    %v797 = vsel %vm51, %v612, 0.0
    %v798 = vadd.f32 %v796, %v797
    %v799 = vsel %vm51, %v617, 0.0
    %v800 = vadd.f32 %v798, %v799
    %v801 = vsel %vm51, %v622, 0.0
    %v802 = vadd.f32 %v800, %v801
    %v803 = vsel %vm51, %v627, 0.0
    %v804 = vadd.f32 %v802, %v803
    %v805 = vsel %vm51, %v632, 0.0
    %v806 = vadd.f32 %v804, %v805
    %v807 = vsel %vm51, %v637, 0.0
    %v808 = vadd.f32 %v806, %v807
    %v809 = vsel %vm51, %v642, 0.0
    %v810 = vadd.f32 %v808, %v809
    %v811 = vsel %vm51, %v647, 0.0
    %v812 = vadd.f32 %v810, %v811
    %v813 = vsel %vm51, %v652, 0.0
    %v814 = vadd.f32 %v812, %v813
    %v815 = vsel %vm51, %v657, 0.0
    %v816 = vadd.f32 %v814, %v815
    %v817 = vsel %vm51, %v662, 0.0
    %v818 = vadd.f32 %v816, %v817
    %v819 = vsel %vm51, %v667, 0.0
    %v820 = vadd.f32 %v818, %v819
    %v821 = vsel %vm51, %v672, 0.0
    %v822 = vadd.f32 %v820, %v821
    %v823 = vsel %vm51, %v677, 0.0
    %v824 = vadd.f32 %v822, %v823
    %v825 = vsel %vm51, %v682, 0.0
    %v826 = vadd.f32 %v824, %v825
    %v827 = vsel %vm51, %v687, 0.0
    %v828 = vadd.f32 %v826, %v827
    %v829 = vsel %vm51, %v692, 0.0
    %v830 = vadd.f32 %v828, %v829
    %v831 = vsel %vm51, %v697, 0.0
    %v832 = vadd.f32 %v830, %v831
    %v833 = vsel %vm51, %v702, 0.0
    %v834 = vadd.f32 %v832, %v833
    %v835 = vsel %vm51, %v707, 0.0
    %v836 = vadd.f32 %v834, %v835
    %v837 = vsel %vm51, %v712, 0.0
    %v838 = vadd.f32 %v836, %v837
    %v839 = vsel %vm51, %v717, 0.0
    %v840 = vadd.f32 %v838, %v839
    %v841 = vsel %vm51, %v722, 0.0
    %v842 = vadd.f32 %v840, %v841
    %v843 = vsel %vm51, %v727, 0.0
    %v844 = vadd.f32 %v842, %v843
    %v845 = vsel %vm51, %v732, 0.0
    %v846 = vadd.f32 %v844, %v845
    %v847 = vsel %vm51, %v737, 0.0
    %v848 = vadd.f32 %v846, %v847
    %v849 = vsel %vm51, %v742, 0.0
    %v850 = vadd.f32 %v848, %v849
    %v851 = vsel %vm51, %v747, 0.0
    %v852 = vadd.f32 %v850, %v851
    %v853 = vsel %vm51, %v752, 0.0
    %v854 = vadd.f32 %v852, %v853
    %v855 = vsel %vm51, %v757, 0.0
    %v856 = vadd.f32 %v854, %v855
    %v857 = vrot.slane %v856, 4
    %v858 = vadd.f32 %v856, %v857
    %v859 = vrot.slane %v858, 2
    %v860 = vadd.f32 %v858, %v859
    %v861 = vrot.slane %v860, 1
    %v862 = vadd.f32 %v860, %v861
    %v863 = vrcp.pop 392.0
    %v864 = vmul.f32 %v862, %v863
    %v865 = vsub.f32 %v517, %v864
    %v866 = vsub.f32 %v522, %v864
    %v867 = vsub.f32 %v527, %v864
    %v868 = vsub.f32 %v532, %v864
    %v869 = vsub.f32 %v537, %v864
    %v870 = vsub.f32 %v542, %v864
    %v871 = vsub.f32 %v547, %v864
    %v872 = vsub.f32 %v552, %v864
    %v873 = vsub.f32 %v557, %v864
    %v874 = vsub.f32 %v562, %v864
    %v875 = vsub.f32 %v567, %v864
    %v876 = vsub.f32 %v572, %v864
    %v877 = vsub.f32 %v577, %v864
    %v878 = vsub.f32 %v582, %v864
    %v879 = vsub.f32 %v587, %v864
    %v880 = vsub.f32 %v592, %v864
    %v881 = vsub.f32 %v597, %v864
    %v882 = vsub.f32 %v602, %v864
    %v883 = vsub.f32 %v607, %v864
    %v884 = vsub.f32 %v612, %v864
    %v885 = vsub.f32 %v617, %v864
    %v886 = vsub.f32 %v622, %v864
    %v887 = vsub.f32 %v627, %v864
    %v888 = vsub.f32 %v632, %v864
    %v889 = vsub.f32 %v637, %v864
    %v890 = vsub.f32 %v642, %v864
    %v891 = vsub.f32 %v647, %v864
    %v892 = vsub.f32 %v652, %v864
    %v893 = vsub.f32 %v657, %v864
    %v894 = vsub.f32 %v662, %v864
    %v895 = vsub.f32 %v667, %v864
    %v896 = vsub.f32 %v672, %v864
    %v897 = vsub.f32 %v677, %v864
    %v898 = vsub.f32 %v682, %v864
    %v899 = vsub.f32 %v687, %v864
    %v900 = vsub.f32 %v692, %v864
    %v901 = vsub.f32 %v697, %v864
    %v902 = vsub.f32 %v702, %v864
    %v903 = vsub.f32 %v707, %v864
    %v904 = vsub.f32 %v712, %v864
    %v905 = vsub.f32 %v717, %v864
    %v906 = vsub.f32 %v722, %v864
    %v907 = vsub.f32 %v727, %v864
    %v908 = vsub.f32 %v732, %v864
    %v909 = vsub.f32 %v737, %v864
    %v910 = vsub.f32 %v742, %v864
    %v911 = vsub.f32 %v747, %v864
    %v912 = vsub.f32 %v752, %v864
    %v913 = vsub.f32 %v757, %v864
    %v914 = vmul.f32 %v865, %v865
    %v915 = vmul.f32 %v866, %v866
    %v916 = vmul.f32 %v867, %v867
    %v917 = vmul.f32 %v868, %v868
    %v918 = vmul.f32 %v869, %v869
    %v919 = vmul.f32 %v870, %v870
    %v920 = vmul.f32 %v871, %v871
    %v921 = vmul.f32 %v872, %v872
    %v922 = vmul.f32 %v873, %v873
    %v923 = vmul.f32 %v874, %v874
    %v924 = vmul.f32 %v875, %v875
    %v925 = vmul.f32 %v876, %v876
    %v926 = vmul.f32 %v877, %v877
    %v927 = vmul.f32 %v878, %v878
    %v928 = vmul.f32 %v879, %v879
    %v929 = vmul.f32 %v880, %v880
    %v930 = vmul.f32 %v881, %v881
    %v931 = vmul.f32 %v882, %v882
    %v932 = vmul.f32 %v883, %v883
    %v933 = vmul.f32 %v884, %v884
    %v934 = vmul.f32 %v885, %v885
    %v935 = vmul.f32 %v886, %v886
    %v936 = vmul.f32 %v887, %v887
    %v937 = vmul.f32 %v888, %v888
    %v938 = vmul.f32 %v889, %v889
    %v939 = vmul.f32 %v890, %v890
    %v940 = vmul.f32 %v891, %v891
    %v941 = vmul.f32 %v892, %v892
    %v942 = vmul.f32 %v893, %v893
    %v943 = vmul.f32 %v894, %v894
    %v944 = vmul.f32 %v895, %v895
    %v945 = vmul.f32 %v896, %v896
    %v946 = vmul.f32 %v897, %v897
    %v947 = vmul.f32 %v898, %v898
    %v948 = vmul.f32 %v899, %v899
    %v949 = vmul.f32 %v900, %v900
    %v950 = vmul.f32 %v901, %v901
    %v951 = vmul.f32 %v902, %v902
    %v952 = vmul.f32 %v903, %v903
    %v953 = vmul.f32 %v904, %v904
    %v954 = vmul.f32 %v905, %v905
    %v955 = vmul.f32 %v906, %v906
    %v956 = vmul.f32 %v907, %v907
    %v957 = vmul.f32 %v908, %v908
    %v958 = vmul.f32 %v909, %v909
    %v959 = vmul.f32 %v910, %v910
    %v960 = vmul.f32 %v911, %v911
    %v961 = vmul.f32 %v912, %v912
    %v962 = vmul.f32 %v913, %v913
    %v963 = vsel %vm51, %v914, 0.0
    %v964 = vsel %vm51, %v915, 0.0
    %v965 = vadd.f32 %v963, %v964
    %v966 = vsel %vm51, %v916, 0.0
    %v967 = vadd.f32 %v965, %v966
    %v968 = vsel %vm51, %v917, 0.0
    %v969 = vadd.f32 %v967, %v968
    %v970 = vsel %vm51, %v918, 0.0
    %v971 = vadd.f32 %v969, %v970
    %v972 = vsel %vm51, %v919, 0.0
    %v973 = vadd.f32 %v971, %v972
    %v974 = vsel %vm51, %v920, 0.0
    %v975 = vadd.f32 %v973, %v974
    %v976 = vsel %vm51, %v921, 0.0
    %v977 = vadd.f32 %v975, %v976
    %v978 = vsel %vm51, %v922, 0.0
    %v979 = vadd.f32 %v977, %v978
    %v980 = vsel %vm51, %v923, 0.0
    %v981 = vadd.f32 %v979, %v980
    %v982 = vsel %vm51, %v924, 0.0
    %v983 = vadd.f32 %v981, %v982
    %v984 = vsel %vm51, %v925, 0.0
    %v985 = vadd.f32 %v983, %v984
    %v986 = vsel %vm51, %v926, 0.0
    %v987 = vadd.f32 %v985, %v986
    %v988 = vsel %vm51, %v927, 0.0
    %v989 = vadd.f32 %v987, %v988
    %v990 = vsel %vm51, %v928, 0.0
    %v991 = vadd.f32 %v989, %v990
    %v992 = vsel %vm51, %v929, 0.0
    %v993 = vadd.f32 %v991, %v992
    %v994 = vsel %vm51, %v930, 0.0
    %v995 = vadd.f32 %v993, %v994
    %v996 = vsel %vm51, %v931, 0.0
    %v997 = vadd.f32 %v995, %v996
    %v998 = vsel %vm51, %v932, 0.0
    %v999 = vadd.f32 %v997, %v998
    %v1000 = vsel %vm51, %v933, 0.0
    %v1001 = vadd.f32 %v999, %v1000
    %v1002 = vsel %vm51, %v934, 0.0
    %v1003 = vadd.f32 %v1001, %v1002
    %v1004 = vsel %vm51, %v935, 0.0
    %v1005 = vadd.f32 %v1003, %v1004
    %v1006 = vsel %vm51, %v936, 0.0
    %v1007 = vadd.f32 %v1005, %v1006
    %v1008 = vsel %vm51, %v937, 0.0
    %v1009 = vadd.f32 %v1007, %v1008
    %v1010 = vsel %vm51, %v938, 0.0
    %v1011 = vadd.f32 %v1009, %v1010
    %v1012 = vsel %vm51, %v939, 0.0
    %v1013 = vadd.f32 %v1011, %v1012
    %v1014 = vsel %vm51, %v940, 0.0
    %v1015 = vadd.f32 %v1013, %v1014
    %v1016 = vsel %vm51, %v941, 0.0
    %v1017 = vadd.f32 %v1015, %v1016
    %v1018 = vsel %vm51, %v942, 0.0
    %v1019 = vadd.f32 %v1017, %v1018
    %v1020 = vsel %vm51, %v943, 0.0
    %v1021 = vadd.f32 %v1019, %v1020
    %v1022 = vsel %vm51, %v944, 0.0
    %v1023 = vadd.f32 %v1021, %v1022
    %v1024 = vsel %vm51, %v945, 0.0
    %v1025 = vadd.f32 %v1023, %v1024
    %v1026 = vsel %vm51, %v946, 0.0
    %v1027 = vadd.f32 %v1025, %v1026
    %v1028 = vsel %vm51, %v947, 0.0
    %v1029 = vadd.f32 %v1027, %v1028
    %v1030 = vsel %vm51, %v948, 0.0
    %v1031 = vadd.f32 %v1029, %v1030
    %v1032 = vsel %vm51, %v949, 0.0
    %v1033 = vadd.f32 %v1031, %v1032
    %v1034 = vsel %vm51, %v950, 0.0
    %v1035 = vadd.f32 %v1033, %v1034
    %v1036 = vsel %vm51, %v951, 0.0
    %v1037 = vadd.f32 %v1035, %v1036
    %v1038 = vsel %vm51, %v952, 0.0
    %v1039 = vadd.f32 %v1037, %v1038
    %v1040 = vsel %vm51, %v953, 0.0
    %v1041 = vadd.f32 %v1039, %v1040
    %v1042 = vsel %vm51, %v954, 0.0
    %v1043 = vadd.f32 %v1041, %v1042
    %v1044 = vsel %vm51, %v955, 0.0
    %v1045 = vadd.f32 %v1043, %v1044
    %v1046 = vsel %vm51, %v956, 0.0
    %v1047 = vadd.f32 %v1045, %v1046
    %v1048 = vsel %vm51, %v957, 0.0
    %v1049 = vadd.f32 %v1047, %v1048
    %v1050 = vsel %vm51, %v958, 0.0
    %v1051 = vadd.f32 %v1049, %v1050
    %v1052 = vsel %vm51, %v959, 0.0
    %v1053 = vadd.f32 %v1051, %v1052
    %v1054 = vsel %vm51, %v960, 0.0
    %v1055 = vadd.f32 %v1053, %v1054
    %v1056 = vsel %vm51, %v961, 0.0
    %v1057 = vadd.f32 %v1055, %v1056
    %v1058 = vsel %vm51, %v962, 0.0
    %v1059 = vadd.f32 %v1057, %v1058
    %v1060 = vrot.slane %v1059, 4
    %v1061 = vadd.f32 %v1059, %v1060
    %v1062 = vrot.slane %v1061, 2
    %v1063 = vadd.f32 %v1061, %v1062
    %v1064 = vrot.slane %v1063, 1
    %v1065 = vadd.f32 %v1063, %v1064
    %v1066 = vmul.f32 %v1065, %v863
    %v1067 = vld [vmem:[%s3] sm:$0x1]
    %v1068 = vadd.f32 %v1066, 1e-05
    %v1069 = vrsqrt.pop %v1068
    %v1070 = vmul.f32 %v865, %v1069
    %v1071 = vmul.f32 %v866, %v1069
    %v1072 = vmul.f32 %v867, %v1069
    %v1073 = vmul.f32 %v868, %v1069
    %v1074 = vmul.f32 %v869, %v1069
    %v1075 = vmul.f32 %v870, %v1069
    %v1076 = vmul.f32 %v871, %v1069
    %v1077 = vmul.f32 %v872, %v1069
    %v1078 = vmul.f32 %v873, %v1069
    %v1079 = vmul.f32 %v874, %v1069
    %v1080 = vmul.f32 %v875, %v1069
    %v1081 = vmul.f32 %v876, %v1069
    %v1082 = vmul.f32 %v877, %v1069
    %v1083 = vmul.f32 %v878, %v1069
    %v1084 = vmul.f32 %v879, %v1069
    %v1085 = vmul.f32 %v880, %v1069
    %v1086 = vmul.f32 %v881, %v1069
    %v1087 = vmul.f32 %v882, %v1069
    %v1088 = vmul.f32 %v883, %v1069
    %v1089 = vmul.f32 %v884, %v1069
    %v1090 = vmul.f32 %v885, %v1069
    %v1091 = vmul.f32 %v886, %v1069
    %v1092 = vmul.f32 %v887, %v1069
    %v1093 = vmul.f32 %v888, %v1069
    %v1094 = vmul.f32 %v889, %v1069
    %v1095 = vmul.f32 %v890, %v1069
    %v1096 = vmul.f32 %v891, %v1069
    %v1097 = vmul.f32 %v892, %v1069
    %v1098 = vmul.f32 %v893, %v1069
    %v1099 = vmul.f32 %v894, %v1069
    %v1100 = vmul.f32 %v895, %v1069
    %v1101 = vmul.f32 %v896, %v1069
    %v1102 = vmul.f32 %v897, %v1069
    %v1103 = vmul.f32 %v898, %v1069
    %v1104 = vmul.f32 %v899, %v1069
    %v1105 = vmul.f32 %v900, %v1069
    %v1106 = vmul.f32 %v901, %v1069
    %v1107 = vmul.f32 %v902, %v1069
    %v1108 = vmul.f32 %v903, %v1069
    %v1109 = vmul.f32 %v904, %v1069
    %v1110 = vmul.f32 %v905, %v1069
    %v1111 = vmul.f32 %v906, %v1069
    %v1112 = vmul.f32 %v907, %v1069
    %v1113 = vmul.f32 %v908, %v1069
    %v1114 = vmul.f32 %v909, %v1069
    %v1115 = vmul.f32 %v910, %v1069
    %v1116 = vmul.f32 %v911, %v1069
    %v1117 = vmul.f32 %v912, %v1069
    %v1118 = vmul.f32 %v913, %v1069
    %v1120 = vlaneseq
    %v1121 = vshrl.u32 %v1120, 7
    %v1122 = vsub.s32 0, %v1121
    %v1123 = vrot.slane %v1067, %v1122
    %v1125 = vmul.f32 %v1123, %v1070
    %v1126 = vmul.f32 %v1123, %v1071
    %v1127 = vmul.f32 %v1123, %v1072
    %v1128 = vmul.f32 %v1123, %v1073
    %v1129 = vmul.f32 %v1123, %v1074
    %v1130 = vmul.f32 %v1123, %v1075
    %v1131 = vmul.f32 %v1123, %v1076
    %v1132 = vmul.f32 %v1123, %v1077
    %v1133 = vmul.f32 %v1123, %v1078
    %v1134 = vmul.f32 %v1123, %v1079
    %v1135 = vmul.f32 %v1123, %v1080
    %v1136 = vmul.f32 %v1123, %v1081
    %v1137 = vmul.f32 %v1123, %v1082
    %v1138 = vmul.f32 %v1123, %v1083
    %v1139 = vmul.f32 %v1123, %v1084
    %v1140 = vmul.f32 %v1123, %v1085
    %v1141 = vmul.f32 %v1123, %v1086
    %v1142 = vmul.f32 %v1123, %v1087
    %v1143 = vmul.f32 %v1123, %v1088
    %v1144 = vmul.f32 %v1123, %v1089
    %v1145 = vmul.f32 %v1123, %v1090
    %v1146 = vmul.f32 %v1123, %v1091
    %v1147 = vmul.f32 %v1123, %v1092
    %v1148 = vmul.f32 %v1123, %v1093
    %v1149 = vmul.f32 %v1123, %v1094
    %v1150 = vmul.f32 %v1123, %v1095
    %v1151 = vmul.f32 %v1123, %v1096
    %v1152 = vmul.f32 %v1123, %v1097
    %v1153 = vmul.f32 %v1123, %v1098
    %v1154 = vmul.f32 %v1123, %v1099
    %v1155 = vmul.f32 %v1123, %v1100
    %v1156 = vmul.f32 %v1123, %v1101
    %v1157 = vmul.f32 %v1123, %v1102
    %v1158 = vmul.f32 %v1123, %v1103
    %v1159 = vmul.f32 %v1123, %v1104
    %v1160 = vmul.f32 %v1123, %v1105
    %v1161 = vmul.f32 %v1123, %v1106
    %v1162 = vmul.f32 %v1123, %v1107
    %v1163 = vmul.f32 %v1123, %v1108
    %v1164 = vmul.f32 %v1123, %v1109
    %v1165 = vmul.f32 %v1123, %v1110
    %v1166 = vmul.f32 %v1123, %v1111
    %v1167 = vmul.f32 %v1123, %v1112
    %v1168 = vmul.f32 %v1123, %v1113
    %v1169 = vmul.f32 %v1123, %v1114
    %v1170 = vmul.f32 %v1123, %v1115
    %v1171 = vmul.f32 %v1123, %v1116
    %v1172 = vmul.f32 %v1123, %v1117
    %v1173 = vmul.f32 %v1123, %v1118
    %v1174 = vld [vmem:[%s4] sm:$0x1]
    %v1176 = vlaneseq
    %v1177 = vshrl.u32 %v1176, 7
    %v1178 = vsub.s32 0, %v1177
    %v1179 = vrot.slane %v1174, %v1178
    %v1181 = vadd.f32 %v1125, %v1179
    %v1182 = vadd.f32 %v1126, %v1179
    %v1183 = vadd.f32 %v1127, %v1179
    %v1184 = vadd.f32 %v1128, %v1179
    %v1185 = vadd.f32 %v1129, %v1179
    %v1186 = vadd.f32 %v1130, %v1179
    %v1187 = vadd.f32 %v1131, %v1179
    %v1188 = vadd.f32 %v1132, %v1179
    %v1189 = vadd.f32 %v1133, %v1179
    %v1190 = vadd.f32 %v1134, %v1179
    %v1191 = vadd.f32 %v1135, %v1179
    %v1192 = vadd.f32 %v1136, %v1179
    %v1193 = vadd.f32 %v1137, %v1179
    %v1194 = vadd.f32 %v1138, %v1179
    %v1195 = vadd.f32 %v1139, %v1179
    %v1196 = vadd.f32 %v1140, %v1179
    %v1197 = vadd.f32 %v1141, %v1179
    %v1198 = vadd.f32 %v1142, %v1179
    %v1199 = vadd.f32 %v1143, %v1179
    %v1200 = vadd.f32 %v1144, %v1179
    %v1201 = vadd.f32 %v1145, %v1179
    %v1202 = vadd.f32 %v1146, %v1179
    %v1203 = vadd.f32 %v1147, %v1179
    %v1204 = vadd.f32 %v1148, %v1179
    %v1205 = vadd.f32 %v1149, %v1179
    %v1206 = vadd.f32 %v1150, %v1179
    %v1207 = vadd.f32 %v1151, %v1179
    %v1208 = vadd.f32 %v1152, %v1179
    %v1209 = vadd.f32 %v1153, %v1179
    %v1210 = vadd.f32 %v1154, %v1179
    %v1211 = vadd.f32 %v1155, %v1179
    %v1212 = vadd.f32 %v1156, %v1179
    %v1213 = vadd.f32 %v1157, %v1179
    %v1214 = vadd.f32 %v1158, %v1179
    %v1215 = vadd.f32 %v1159, %v1179
    %v1216 = vadd.f32 %v1160, %v1179
    %v1217 = vadd.f32 %v1161, %v1179
    %v1218 = vadd.f32 %v1162, %v1179
    %v1219 = vadd.f32 %v1163, %v1179
    %v1220 = vadd.f32 %v1164, %v1179
    %v1221 = vadd.f32 %v1165, %v1179
    %v1222 = vadd.f32 %v1166, %v1179
    %v1223 = vadd.f32 %v1167, %v1179
    %v1224 = vadd.f32 %v1168, %v1179
    %v1225 = vadd.f32 %v1169, %v1179
    %v1226 = vadd.f32 %v1170, %v1179
    %v1227 = vadd.f32 %v1171, %v1179
    %v1228 = vadd.f32 %v1172, %v1179
    %v1229 = vadd.f32 %v1173, %v1179
    %v1230 = vsub.f32 0.0, %v1181
    %v1231 = vsub.f32 0.0, %v1182
    %v1232 = vsub.f32 0.0, %v1183
    %v1233 = vsub.f32 0.0, %v1184
    %v1234 = vsub.f32 0.0, %v1185
    %v1235 = vsub.f32 0.0, %v1186
    %v1236 = vsub.f32 0.0, %v1187
    %v1237 = vsub.f32 0.0, %v1188
    %v1238 = vsub.f32 0.0, %v1189
    %v1239 = vsub.f32 0.0, %v1190
    %v1240 = vsub.f32 0.0, %v1191
    %v1241 = vsub.f32 0.0, %v1192
    %v1242 = vsub.f32 0.0, %v1193
    %v1243 = vsub.f32 0.0, %v1194
    %v1244 = vsub.f32 0.0, %v1195
    %v1245 = vsub.f32 0.0, %v1196
    %v1246 = vsub.f32 0.0, %v1197
    %v1247 = vsub.f32 0.0, %v1198
    %v1248 = vsub.f32 0.0, %v1199
    %v1249 = vsub.f32 0.0, %v1200
    %v1250 = vsub.f32 0.0, %v1201
    %v1251 = vsub.f32 0.0, %v1202
    %v1252 = vsub.f32 0.0, %v1203
    %v1253 = vsub.f32 0.0, %v1204
    %v1254 = vsub.f32 0.0, %v1205
    %v1255 = vsub.f32 0.0, %v1206
    %v1256 = vsub.f32 0.0, %v1207
    %v1257 = vsub.f32 0.0, %v1208
    %v1258 = vsub.f32 0.0, %v1209
    %v1259 = vsub.f32 0.0, %v1210
    %v1260 = vsub.f32 0.0, %v1211
    %v1261 = vsub.f32 0.0, %v1212
    %v1262 = vsub.f32 0.0, %v1213
    %v1263 = vsub.f32 0.0, %v1214
    %v1264 = vsub.f32 0.0, %v1215
    %v1265 = vsub.f32 0.0, %v1216
    %v1266 = vsub.f32 0.0, %v1217
    %v1267 = vsub.f32 0.0, %v1218
    %v1268 = vsub.f32 0.0, %v1219
    %v1269 = vsub.f32 0.0, %v1220
    %v1270 = vsub.f32 0.0, %v1221
    %v1271 = vsub.f32 0.0, %v1222
    %v1272 = vsub.f32 0.0, %v1223
    %v1273 = vsub.f32 0.0, %v1224
    %v1274 = vsub.f32 0.0, %v1225
    %v1275 = vsub.f32 0.0, %v1226
    %v1276 = vsub.f32 0.0, %v1227
    %v1277 = vsub.f32 0.0, %v1228
    %v1278 = vsub.f32 0.0, %v1229
    %v1279 = vmul.f32 %v1230, 1.442695
    %v1280 = vpow.pop %v1279
    %v1281 = vmul.f32 %v1231, 1.442695
    %v1282 = vpow.pop %v1281
    %v1283 = vmul.f32 %v1232, 1.442695
    %v1284 = vpow.pop %v1283
    %v1285 = vmul.f32 %v1233, 1.442695
    %v1286 = vpow.pop %v1285
    %v1287 = vmul.f32 %v1234, 1.442695
    %v1288 = vpow.pop %v1287
    %v1289 = vmul.f32 %v1235, 1.442695
    %v1290 = vpow.pop %v1289
    %v1291 = vmul.f32 %v1236, 1.442695
    %v1292 = vpow.pop %v1291
    %v1293 = vmul.f32 %v1237, 1.442695
    %v1294 = vpow.pop %v1293
    %v1295 = vmul.f32 %v1238, 1.442695
    %v1296 = vpow.pop %v1295
    %v1297 = vmul.f32 %v1239, 1.442695
    %v1298 = vpow.pop %v1297
    %v1299 = vmul.f32 %v1240, 1.442695
    %v1300 = vpow.pop %v1299
    %v1301 = vmul.f32 %v1241, 1.442695
    %v1302 = vpow.pop %v1301
    %v1303 = vmul.f32 %v1242, 1.442695
    %v1304 = vpow.pop %v1303
    %v1305 = vmul.f32 %v1243, 1.442695
    %v1306 = vpow.pop %v1305
    %v1307 = vmul.f32 %v1244, 1.442695
    %v1308 = vpow.pop %v1307
    %v1309 = vmul.f32 %v1245, 1.442695
    %v1310 = vpow.pop %v1309
    %v1311 = vmul.f32 %v1246, 1.442695
    %v1312 = vpow.pop %v1311
    %v1313 = vmul.f32 %v1247, 1.442695
    %v1314 = vpow.pop %v1313
    %v1315 = vmul.f32 %v1248, 1.442695
    %v1316 = vpow.pop %v1315
    %v1317 = vmul.f32 %v1249, 1.442695
    %v1318 = vpow.pop %v1317
    %v1319 = vmul.f32 %v1250, 1.442695
    %v1320 = vpow.pop %v1319
    %v1321 = vmul.f32 %v1251, 1.442695
    %v1322 = vpow.pop %v1321
    %v1323 = vmul.f32 %v1252, 1.442695
    %v1324 = vpow.pop %v1323
    %v1325 = vmul.f32 %v1253, 1.442695
    %v1326 = vpow.pop %v1325
    %v1327 = vmul.f32 %v1254, 1.442695
    %v1328 = vpow.pop %v1327
    %v1329 = vmul.f32 %v1255, 1.442695
    %v1330 = vpow.pop %v1329
    %v1331 = vmul.f32 %v1256, 1.442695
    %v1332 = vpow.pop %v1331
    %v1333 = vmul.f32 %v1257, 1.442695
    %v1334 = vpow.pop %v1333
    %v1335 = vmul.f32 %v1258, 1.442695
    %v1336 = vpow.pop %v1335
    %v1337 = vmul.f32 %v1259, 1.442695
    %v1338 = vpow.pop %v1337
    %v1339 = vmul.f32 %v1260, 1.442695
    %v1340 = vpow.pop %v1339
    %v1341 = vmul.f32 %v1261, 1.442695
    %v1342 = vpow.pop %v1341
    %v1343 = vmul.f32 %v1262, 1.442695
    %v1344 = vpow.pop %v1343
    %v1345 = vmul.f32 %v1263, 1.442695
    %v1346 = vpow.pop %v1345
    %v1347 = vmul.f32 %v1264, 1.442695
    %v1348 = vpow.pop %v1347
    %v1349 = vmul.f32 %v1265, 1.442695
    %v1350 = vpow.pop %v1349
    %v1351 = vmul.f32 %v1266, 1.442695
    %v1352 = vpow.pop %v1351
    %v1353 = vmul.f32 %v1267, 1.442695
    %v1354 = vpow.pop %v1353
    %v1355 = vmul.f32 %v1268, 1.442695
    %v1356 = vpow.pop %v1355
    %v1357 = vmul.f32 %v1269, 1.442695
    %v1358 = vpow.pop %v1357
    %v1359 = vmul.f32 %v1270, 1.442695
    %v1360 = vpow.pop %v1359
    %v1361 = vmul.f32 %v1271, 1.442695
    %v1362 = vpow.pop %v1361
    %v1363 = vmul.f32 %v1272, 1.442695
    %v1364 = vpow.pop %v1363
    %v1365 = vmul.f32 %v1273, 1.442695
    %v1366 = vpow.pop %v1365
    %v1367 = vmul.f32 %v1274, 1.442695
    %v1368 = vpow.pop %v1367
    %v1369 = vmul.f32 %v1275, 1.442695
    %v1370 = vpow.pop %v1369
    %v1371 = vmul.f32 %v1276, 1.442695
    %v1372 = vpow.pop %v1371
    %v1373 = vmul.f32 %v1277, 1.442695
    %v1374 = vpow.pop %v1373
    %v1375 = vmul.f32 %v1278, 1.442695
    %v1376 = vpow.pop %v1375
    %v1377 = vadd.f32 %v1280, 1.0
    %v1378 = vadd.f32 %v1282, 1.0
    %v1379 = vadd.f32 %v1284, 1.0
    %v1380 = vadd.f32 %v1286, 1.0
    %v1381 = vadd.f32 %v1288, 1.0
    %v1382 = vadd.f32 %v1290, 1.0
    %v1383 = vadd.f32 %v1292, 1.0
    %v1384 = vadd.f32 %v1294, 1.0
    %v1385 = vadd.f32 %v1296, 1.0
    %v1386 = vadd.f32 %v1298, 1.0
    %v1387 = vadd.f32 %v1300, 1.0
    %v1388 = vadd.f32 %v1302, 1.0
    %v1389 = vadd.f32 %v1304, 1.0
    %v1390 = vadd.f32 %v1306, 1.0
    %v1391 = vadd.f32 %v1308, 1.0
    %v1392 = vadd.f32 %v1310, 1.0
    %v1393 = vadd.f32 %v1312, 1.0
    %v1394 = vadd.f32 %v1314, 1.0
    %v1395 = vadd.f32 %v1316, 1.0
    %v1396 = vadd.f32 %v1318, 1.0
    %v1397 = vadd.f32 %v1320, 1.0
    %v1398 = vadd.f32 %v1322, 1.0
    %v1399 = vadd.f32 %v1324, 1.0
    %v1400 = vadd.f32 %v1326, 1.0
    %v1401 = vadd.f32 %v1328, 1.0
    %v1402 = vadd.f32 %v1330, 1.0
    %v1403 = vadd.f32 %v1332, 1.0
    %v1404 = vadd.f32 %v1334, 1.0
    %v1405 = vadd.f32 %v1336, 1.0
    %v1406 = vadd.f32 %v1338, 1.0
    %v1407 = vadd.f32 %v1340, 1.0
    %v1408 = vadd.f32 %v1342, 1.0
    %v1409 = vadd.f32 %v1344, 1.0
    %v1410 = vadd.f32 %v1346, 1.0
    %v1411 = vadd.f32 %v1348, 1.0
    %v1412 = vadd.f32 %v1350, 1.0
    %v1413 = vadd.f32 %v1352, 1.0
    %v1414 = vadd.f32 %v1354, 1.0
    %v1415 = vadd.f32 %v1356, 1.0
    %v1416 = vadd.f32 %v1358, 1.0
    %v1417 = vadd.f32 %v1360, 1.0
    %v1418 = vadd.f32 %v1362, 1.0
    %v1419 = vadd.f32 %v1364, 1.0
    %v1420 = vadd.f32 %v1366, 1.0
    %v1421 = vadd.f32 %v1368, 1.0
    %v1422 = vadd.f32 %v1370, 1.0
    %v1423 = vadd.f32 %v1372, 1.0
    %v1424 = vadd.f32 %v1374, 1.0
    %v1425 = vadd.f32 %v1376, 1.0
    %v1426 = vrcp.pop %v1377
    %v1427 = vrcp.pop %v1378
    %v1428 = vrcp.pop %v1379
    %v1429 = vrcp.pop %v1380
    %v1430 = vrcp.pop %v1381
    %v1431 = vrcp.pop %v1382
    %v1432 = vrcp.pop %v1383
    %v1433 = vrcp.pop %v1384
    %v1434 = vrcp.pop %v1385
    %v1435 = vrcp.pop %v1386
    %v1436 = vrcp.pop %v1387
    %v1437 = vrcp.pop %v1388
    %v1438 = vrcp.pop %v1389
    %v1439 = vrcp.pop %v1390
    %v1440 = vrcp.pop %v1391
    %v1441 = vrcp.pop %v1392
    %v1442 = vrcp.pop %v1393
    %v1443 = vrcp.pop %v1394
    %v1444 = vrcp.pop %v1395
    %v1445 = vrcp.pop %v1396
    %v1446 = vrcp.pop %v1397
    %v1447 = vrcp.pop %v1398
    %v1448 = vrcp.pop %v1399
    %v1449 = vrcp.pop %v1400
    %v1450 = vrcp.pop %v1401
    %v1451 = vrcp.pop %v1402
    %v1452 = vrcp.pop %v1403
    %v1453 = vrcp.pop %v1404
    %v1454 = vrcp.pop %v1405
    %v1455 = vrcp.pop %v1406
    %v1456 = vrcp.pop %v1407
    %v1457 = vrcp.pop %v1408
    %v1458 = vrcp.pop %v1409
    %v1459 = vrcp.pop %v1410
    %v1460 = vrcp.pop %v1411
    %v1461 = vrcp.pop %v1412
    %v1462 = vrcp.pop %v1413
    %v1463 = vrcp.pop %v1414
    %v1464 = vrcp.pop %v1415
    %v1465 = vrcp.pop %v1416
    %v1466 = vrcp.pop %v1417
    %v1467 = vrcp.pop %v1418
    %v1468 = vrcp.pop %v1419
    %v1469 = vrcp.pop %v1420
    %v1470 = vrcp.pop %v1421
    %v1471 = vrcp.pop %v1422
    %v1472 = vrcp.pop %v1423
    %v1473 = vrcp.pop %v1424
    %v1474 = vrcp.pop %v1425
    %1475 = vst.msk [vmem:[#allocation2] sm:$0xff] %vm51, %v1426
    %1476 = vst.msk [vmem:[#allocation2 + $0x8] sm:$0xff] %vm51, %v1427
    %1477 = vst.msk [vmem:[#allocation2 + $0x10] sm:$0xff] %vm51, %v1428
    %1478 = vst.msk [vmem:[#allocation2 + $0x18] sm:$0xff] %vm51, %v1429
    %1479 = vst.msk [vmem:[#allocation2 + $0x20] sm:$0xff] %vm51, %v1430
    %1480 = vst.msk [vmem:[#allocation2 + $0x28] sm:$0xff] %vm51, %v1431
    %1481 = vst.msk [vmem:[#allocation2 + $0x30] sm:$0xff] %vm51, %v1432
    %1482 = vst.msk [vmem:[#allocation2 + $0x38] sm:$0xff] %vm51, %v1433
    %1483 = vst.msk [vmem:[#allocation2 + $0x40] sm:$0xff] %vm51, %v1434
    %1484 = vst.msk [vmem:[#allocation2 + $0x48] sm:$0xff] %vm51, %v1435
    %1485 = vst.msk [vmem:[#allocation2 + $0x50] sm:$0xff] %vm51, %v1436
    %1486 = vst.msk [vmem:[#allocation2 + $0x58] sm:$0xff] %vm51, %v1437
    %1487 = vst.msk [vmem:[#allocation2 + $0x60] sm:$0xff] %vm51, %v1438
    %1488 = vst.msk [vmem:[#allocation2 + $0x68] sm:$0xff] %vm51, %v1439
    %1489 = vst.msk [vmem:[#allocation2 + $0x70] sm:$0xff] %vm51, %v1440
    %1490 = vst.msk [vmem:[#allocation2 + $0x78] sm:$0xff] %vm51, %v1441
    %1491 = vst.msk [vmem:[#allocation2 + $0x80] sm:$0xff] %vm51, %v1442
    %1492 = vst.msk [vmem:[#allocation2 + $0x88] sm:$0xff] %vm51, %v1443
    %1493 = vst.msk [vmem:[#allocation2 + $0x90] sm:$0xff] %vm51, %v1444
    %1494 = vst.msk [vmem:[#allocation2 + $0x98] sm:$0xff] %vm51, %v1445
    %1495 = vst.msk [vmem:[#allocation2 + $0xa0] sm:$0xff] %vm51, %v1446
    %1496 = vst.msk [vmem:[#allocation2 + $0xa8] sm:$0xff] %vm51, %v1447
    %1497 = vst.msk [vmem:[#allocation2 + $0xb0] sm:$0xff] %vm51, %v1448
    %1498 = vst.msk [vmem:[#allocation2 + $0xb8] sm:$0xff] %vm51, %v1449
    %1499 = vst.msk [vmem:[#allocation2 + $0xc0] sm:$0xff] %vm51, %v1450
    %1500 = vst.msk [vmem:[#allocation2 + $0xc8] sm:$0xff] %vm51, %v1451
    %1501 = vst.msk [vmem:[#allocation2 + $0xd0] sm:$0xff] %vm51, %v1452
    %1502 = vst.msk [vmem:[#allocation2 + $0xd8] sm:$0xff] %vm51, %v1453
    %1503 = vst.msk [vmem:[#allocation2 + $0xe0] sm:$0xff] %vm51, %v1454
    %1504 = vst.msk [vmem:[#allocation2 + $0xe8] sm:$0xff] %vm51, %v1455
    %1505 = vst.msk [vmem:[#allocation2 + $0xf0] sm:$0xff] %vm51, %v1456
    %1506 = vst.msk [vmem:[#allocation2 + $0xf8] sm:$0xff] %vm51, %v1457
    %1507 = vst.msk [vmem:[#allocation2 + $0x100] sm:$0xff] %vm51, %v1458
    %1508 = vst.msk [vmem:[#allocation2 + $0x108] sm:$0xff] %vm51, %v1459
    %1509 = vst.msk [vmem:[#allocation2 + $0x110] sm:$0xff] %vm51, %v1460
    %1510 = vst.msk [vmem:[#allocation2 + $0x118] sm:$0xff] %vm51, %v1461
    %1511 = vst.msk [vmem:[#allocation2 + $0x120] sm:$0xff] %vm51, %v1462
    %1512 = vst.msk [vmem:[#allocation2 + $0x128] sm:$0xff] %vm51, %v1463
    %1513 = vst.msk [vmem:[#allocation2 + $0x130] sm:$0xff] %vm51, %v1464
    %1514 = vst.msk [vmem:[#allocation2 + $0x138] sm:$0xff] %vm51, %v1465
    %1515 = vst.msk [vmem:[#allocation2 + $0x140] sm:$0xff] %vm51, %v1466
    %1516 = vst.msk [vmem:[#allocation2 + $0x148] sm:$0xff] %vm51, %v1467
    %1517 = vst.msk [vmem:[#allocation2 + $0x150] sm:$0xff] %vm51, %v1468
    %1518 = vst.msk [vmem:[#allocation2 + $0x158] sm:$0xff] %vm51, %v1469
    %1519 = vst.msk [vmem:[#allocation2 + $0x160] sm:$0xff] %vm51, %v1470
    %1520 = vst.msk [vmem:[#allocation2 + $0x168] sm:$0xff] %vm51, %v1471
    %1521 = vst.msk [vmem:[#allocation2 + $0x170] sm:$0xff] %vm51, %v1472
    %1522 = vst.msk [vmem:[#allocation2 + $0x178] sm:$0xff] %vm51, %v1473
    %1523 = vst.msk [vmem:[#allocation2 + $0x180] sm:$0xff] %vm51, %v1474
    %v1524 = vld [vmem:[#allocation2] sm:$0x7f]
    %s1525 = scalar_lea.vmem [#allocation3], 16
    %vm1526 = vcmask 96256
    %1527 = vst.msk [vmem:[%s1525 + $0x1] sm:$0x7f] %vm1526, %v1524
    %v1528 = vld [vmem:[#allocation2 + $0x7] sm:$0x7f]
    %s1529 = scalar_lea.vmem [#allocation4], 16
    %1530 = vst.msk [vmem:[%s1529 + $0x1] sm:$0x7f] %vm1526, %v1528
    %v1531 = vld [vmem:[#allocation2 + $0xe] sm:$0x7f]
    %s1532 = scalar_lea.vmem [#allocation5], 16
    %1533 = vst.msk [vmem:[%s1532 + $0x1] sm:$0x7f] %vm1526, %v1531
    %v1534 = vld [vmem:[#allocation2 + $0x15] sm:$0x7f]
    %s1535 = scalar_lea.vmem [#allocation6], 16
    %1536 = vst.msk [vmem:[%s1535 + $0x1] sm:$0x7f] %vm1526, %v1534
    %v1537 = vld [vmem:[#allocation2 + $0x1c] sm:$0x7f]
    %s1538 = scalar_lea.vmem [#allocation3], 32
    %1539 = vst.msk [vmem:[%s1538 + $0x1] sm:$0x7f] %vm1526, %v1537
    %v1540 = vld [vmem:[#allocation2 + $0x23] sm:$0x7f]
    %s1541 = scalar_lea.vmem [#allocation4], 32
    %1542 = vst.msk [vmem:[%s1541 + $0x1] sm:$0x7f] %vm1526, %v1540
    %v1543 = vld [vmem:[#allocation2 + $0x2a] sm:$0x7f]
    %s1544 = scalar_lea.vmem [#allocation5], 32
    %1545 = vst.msk [vmem:[%s1544 + $0x1] sm:$0x7f] %vm1526, %v1543
    %v1546 = vld [vmem:[#allocation2 + $0x31] sm:$0x7f]
    %s1547 = scalar_lea.vmem [#allocation6], 32
    %1548 = vst.msk [vmem:[%s1547 + $0x1] sm:$0x7f] %vm1526, %v1546
    %v1549 = vld [vmem:[#allocation2 + $0x38] sm:$0x7f]
    %s1550 = scalar_lea.vmem [#allocation3], 48
    %1551 = vst.msk [vmem:[%s1550 + $0x1] sm:$0x7f] %vm1526, %v1549
    %v1552 = vld [vmem:[#allocation2 + $0x3f] sm:$0x7f]
    %s1553 = scalar_lea.vmem [#allocation4], 48
    %1554 = vst.msk [vmem:[%s1553 + $0x1] sm:$0x7f] %vm1526, %v1552
    %v1555 = vld [vmem:[#allocation2 + $0x46] sm:$0x7f]
    %s1556 = scalar_lea.vmem [#allocation5], 48
    %1557 = vst.msk [vmem:[%s1556 + $0x1] sm:$0x7f] %vm1526, %v1555
    %v1558 = vld [vmem:[#allocation2 + $0x4d] sm:$0x7f]
    %s1559 = scalar_lea.vmem [#allocation6], 48
    %1560 = vst.msk [vmem:[%s1559 + $0x1] sm:$0x7f] %vm1526, %v1558
    %v1561 = vld [vmem:[#allocation2 + $0x54] sm:$0x7f]
    %s1562 = scalar_lea.vmem [#allocation3], 64
    %1563 = vst.msk [vmem:[%s1562 + $0x1] sm:$0x7f] %vm1526, %v1561
    %v1564 = vld [vmem:[#allocation2 + $0x5b] sm:$0x7f]
    %s1565 = scalar_lea.vmem [#allocation4], 64
    %1566 = vst.msk [vmem:[%s1565 + $0x1] sm:$0x7f] %vm1526, %v1564
    %v1567 = vld [vmem:[#allocation2 + $0x62] sm:$0x7f]
    %s1568 = scalar_lea.vmem [#allocation5], 64
    %1569 = vst.msk [vmem:[%s1568 + $0x1] sm:$0x7f] %vm1526, %v1567
    %v1570 = vld [vmem:[#allocation2 + $0x69] sm:$0x7f]
    %s1571 = scalar_lea.vmem [#allocation6], 64
    %1572 = vst.msk [vmem:[%s1571 + $0x1] sm:$0x7f] %vm1526, %v1570
    %v1573 = vld [vmem:[#allocation2 + $0x70] sm:$0x7f]
    %s1574 = scalar_lea.vmem [#allocation3], 80
    %1575 = vst.msk [vmem:[%s1574 + $0x1] sm:$0x7f] %vm1526, %v1573
    %v1576 = vld [vmem:[#allocation2 + $0x77] sm:$0x7f]
    %s1577 = scalar_lea.vmem [#allocation4], 80
    %1578 = vst.msk [vmem:[%s1577 + $0x1] sm:$0x7f] %vm1526, %v1576
    %v1579 = vld [vmem:[#allocation2 + $0x7e] sm:$0x7f]
    %s1580 = scalar_lea.vmem [#allocation5], 80
    %1581 = vst.msk [vmem:[%s1580 + $0x1] sm:$0x7f] %vm1526, %v1579
    %v1582 = vld [vmem:[#allocation2 + $0x85] sm:$0x7f]
    %s1583 = scalar_lea.vmem [#allocation6], 80
    %1584 = vst.msk [vmem:[%s1583 + $0x1] sm:$0x7f] %vm1526, %v1582
    %v1585 = vld [vmem:[#allocation2 + $0x8c] sm:$0x7f]
    %s1586 = scalar_lea.vmem [#allocation3], 96
    %1587 = vst.msk [vmem:[%s1586 + $0x1] sm:$0x7f] %vm1526, %v1585
    %v1588 = vld [vmem:[#allocation2 + $0x93] sm:$0x7f]
    %s1589 = scalar_lea.vmem [#allocation4], 96
    %1590 = vst.msk [vmem:[%s1589 + $0x1] sm:$0x7f] %vm1526, %v1588
    %v1591 = vld [vmem:[#allocation2 + $0x9a] sm:$0x7f]
    %s1592 = scalar_lea.vmem [#allocation5], 96
    %1593 = vst.msk [vmem:[%s1592 + $0x1] sm:$0x7f] %vm1526, %v1591
    %v1594 = vld [vmem:[#allocation2 + $0xa1] sm:$0x7f]
    %s1595 = scalar_lea.vmem [#allocation6], 96
    %1596 = vst.msk [vmem:[%s1595 + $0x1] sm:$0x7f] %vm1526, %v1594
    %v1597 = vld [vmem:[#allocation2 + $0xa8] sm:$0x7f]
    %s1598 = scalar_lea.vmem [#allocation3], 112
    %1599 = vst.msk [vmem:[%s1598 + $0x1] sm:$0x7f] %vm1526, %v1597
    %v1600 = vld [vmem:[#allocation2 + $0xaf] sm:$0x7f]
    %s1601 = scalar_lea.vmem [#allocation4], 112
    %1602 = vst.msk [vmem:[%s1601 + $0x1] sm:$0x7f] %vm1526, %v1600
    %v1603 = vld [vmem:[#allocation2 + $0xb6] sm:$0x7f]
    %s1604 = scalar_lea.vmem [#allocation5], 112
    %1605 = vst.msk [vmem:[%s1604 + $0x1] sm:$0x7f] %vm1526, %v1603
    %v1606 = vld [vmem:[#allocation2 + $0xbd] sm:$0x7f]
    %s1607 = scalar_lea.vmem [#allocation6], 112
    %1608 = vst.msk [vmem:[%s1607 + $0x1] sm:$0x7f] %vm1526, %v1606
    %v1609 = vld [vmem:[#allocation2 + $0xc4] sm:$0x7f]
    %s1610 = scalar_lea.vmem [#allocation3], 160
    %1611 = vst.msk [vmem:[%s1610 + $0x1] sm:$0x7f] %vm1526, %v1609
    %v1612 = vld [vmem:[#allocation2 + $0xcb] sm:$0x7f]
    %s1613 = scalar_lea.vmem [#allocation4], 160
    %1614 = vst.msk [vmem:[%s1613 + $0x1] sm:$0x7f] %vm1526, %v1612
    %v1615 = vld [vmem:[#allocation2 + $0xd2] sm:$0x7f]
    %s1616 = scalar_lea.vmem [#allocation5], 160
    %1617 = vst.msk [vmem:[%s1616 + $0x1] sm:$0x7f] %vm1526, %v1615
    %v1618 = vld [vmem:[#allocation2 + $0xd9] sm:$0x7f]
    %s1619 = scalar_lea.vmem [#allocation6], 160
    %1620 = vst.msk [vmem:[%s1619 + $0x1] sm:$0x7f] %vm1526, %v1618
    %v1621 = vld [vmem:[#allocation2 + $0xe0] sm:$0x7f]
    %s1622 = scalar_lea.vmem [#allocation3], 176
    %1623 = vst.msk [vmem:[%s1622 + $0x1] sm:$0x7f] %vm1526, %v1621
    %v1624 = vld [vmem:[#allocation2 + $0xe7] sm:$0x7f]
    %s1625 = scalar_lea.vmem [#allocation4], 176
    %1626 = vst.msk [vmem:[%s1625 + $0x1] sm:$0x7f] %vm1526, %v1624
    %v1627 = vld [vmem:[#allocation2 + $0xee] sm:$0x7f]
    %s1628 = scalar_lea.vmem [#allocation5], 176
    %1629 = vst.msk [vmem:[%s1628 + $0x1] sm:$0x7f] %vm1526, %v1627
    %v1630 = vld [vmem:[#allocation2 + $0xf5] sm:$0x7f]
    %s1631 = scalar_lea.vmem [#allocation6], 176
    %1632 = vst.msk [vmem:[%s1631 + $0x1] sm:$0x7f] %vm1526, %v1630
    %v1633 = vld [vmem:[#allocation2 + $0xfc] sm:$0x7f]
    %s1634 = scalar_lea.vmem [#allocation3], 192
    %1635 = vst.msk [vmem:[%s1634 + $0x1] sm:$0x7f] %vm1526, %v1633
    %v1636 = vld [vmem:[#allocation2 + $0x103] sm:$0x7f]
    %s1637 = scalar_lea.vmem [#allocation4], 192
    %1638 = vst.msk [vmem:[%s1637 + $0x1] sm:$0x7f] %vm1526, %v1636
    %v1639 = vld [vmem:[#allocation2 + $0x10a] sm:$0x7f]
    %s1640 = scalar_lea.vmem [#allocation5], 192
    %1641 = vst.msk [vmem:[%s1640 + $0x1] sm:$0x7f] %vm1526, %v1639
    %v1642 = vld [vmem:[#allocation2 + $0x111] sm:$0x7f]
    %s1643 = scalar_lea.vmem [#allocation6], 192
    %1644 = vst.msk [vmem:[%s1643 + $0x1] sm:$0x7f] %vm1526, %v1642
    %v1645 = vld [vmem:[#allocation2 + $0x118] sm:$0x7f]
    %s1646 = scalar_lea.vmem [#allocation3], 208
    %1647 = vst.msk [vmem:[%s1646 + $0x1] sm:$0x7f] %vm1526, %v1645
    %v1648 = vld [vmem:[#allocation2 + $0x11f] sm:$0x7f]
    %s1649 = scalar_lea.vmem [#allocation4], 208
    %1650 = vst.msk [vmem:[%s1649 + $0x1] sm:$0x7f] %vm1526, %v1648
    %v1651 = vld [vmem:[#allocation2 + $0x126] sm:$0x7f]
    %s1652 = scalar_lea.vmem [#allocation5], 208
    %1653 = vst.msk [vmem:[%s1652 + $0x1] sm:$0x7f] %vm1526, %v1651
    %v1654 = vld [vmem:[#allocation2 + $0x12d] sm:$0x7f]
    %s1655 = scalar_lea.vmem [#allocation6], 208
    %1656 = vst.msk [vmem:[%s1655 + $0x1] sm:$0x7f] %vm1526, %v1654
    %v1657 = vld [vmem:[#allocation2 + $0x134] sm:$0x7f]
    %s1658 = scalar_lea.vmem [#allocation3], 224
    %1659 = vst.msk [vmem:[%s1658 + $0x1] sm:$0x7f] %vm1526, %v1657
    %v1660 = vld [vmem:[#allocation2 + $0x13b] sm:$0x7f]
    %s1661 = scalar_lea.vmem [#allocation4], 224
    %1662 = vst.msk [vmem:[%s1661 + $0x1] sm:$0x7f] %vm1526, %v1660
    %v1663 = vld [vmem:[#allocation2 + $0x142] sm:$0x7f]
    %s1664 = scalar_lea.vmem [#allocation5], 224
    %1665 = vst.msk [vmem:[%s1664 + $0x1] sm:$0x7f] %vm1526, %v1663
    %v1666 = vld [vmem:[#allocation2 + $0x149] sm:$0x7f]
    %s1667 = scalar_lea.vmem [#allocation6], 224
    %1668 = vst.msk [vmem:[%s1667 + $0x1] sm:$0x7f] %vm1526, %v1666
    %v1669 = vld [vmem:[#allocation2 + $0x150] sm:$0x7f]
    %s1670 = scalar_lea.vmem [#allocation3], 240
    %1671 = vst.msk [vmem:[%s1670 + $0x1] sm:$0x7f] %vm1526, %v1669
    %v1672 = vld [vmem:[#allocation2 + $0x157] sm:$0x7f]
    %s1673 = scalar_lea.vmem [#allocation4], 240
    %1674 = vst.msk [vmem:[%s1673 + $0x1] sm:$0x7f] %vm1526, %v1672
    %v1675 = vld [vmem:[#allocation2 + $0x15e] sm:$0x7f]
    %s1676 = scalar_lea.vmem [#allocation5], 240
    %1677 = vst.msk [vmem:[%s1676 + $0x1] sm:$0x7f] %vm1526, %v1675
    %v1678 = vld [vmem:[#allocation2 + $0x165] sm:$0x7f]
    %s1679 = scalar_lea.vmem [#allocation6], 240
    %1680 = vst.msk [vmem:[%s1679 + $0x1] sm:$0x7f] %vm1526, %v1678
    %v1681 = vld [vmem:[#allocation2 + $0x16c] sm:$0x7f]
    %s1682 = scalar_lea.vmem [#allocation3], 256
    %1683 = vst.msk [vmem:[%s1682 + $0x1] sm:$0x7f] %vm1526, %v1681
    %v1684 = vld [vmem:[#allocation2 + $0x173] sm:$0x7f]
    %s1685 = scalar_lea.vmem [#allocation4], 256
    %1686 = vst.msk [vmem:[%s1685 + $0x1] sm:$0x7f] %vm1526, %v1684
    %v1687 = vld [vmem:[#allocation2 + $0x17a] sm:$0x7f]
    %s1688 = scalar_lea.vmem [#allocation5], 256
    %1689 = vst.msk [vmem:[%s1688 + $0x1] sm:$0x7f] %vm1526, %v1687
    %v1690 = vld [vmem:[#allocation2 + $0x181] sm:$0x7f]
    %s1691 = scalar_lea.vmem [#allocation6], 256
    %1692 = vst.msk [vmem:[%s1691 + $0x1] sm:$0x7f] %vm1526, %v1690
    %v1693 = vld [vmem:[#allocation3] sm:$0x7f]
    %v1694 = vld [vmem:[#allocation3 + $0x10] sm:$0x7f]
    %v1695 = vld [vmem:[#allocation3 + $0x20] sm:$0x7f]
    %v1696 = vld [vmem:[#allocation3 + $0x30] sm:$0x7f]
    %v1697 = vld [vmem:[#allocation3 + $0x40] sm:$0x7f]
    %v1698 = vld [vmem:[#allocation3 + $0x50] sm:$0x7f]
    %v1699 = vld [vmem:[#allocation3 + $0x60] sm:$0x7f]
    %v1700 = vld [vmem:[#allocation3 + $0x90] sm:$0x7f]
    %v1701 = vld [vmem:[#allocation3 + $0xa0] sm:$0x7f]
    %v1702 = vld [vmem:[#allocation3 + $0xb0] sm:$0x7f]
    %v1703 = vld [vmem:[#allocation3 + $0xc0] sm:$0x7f]
    %v1704 = vld [vmem:[#allocation3 + $0xd0] sm:$0x7f]
    %v1705 = vld [vmem:[#allocation3 + $0xe0] sm:$0x7f]
    %v1706 = vld [vmem:[#allocation3 + $0xf0] sm:$0x7f]
    %1707 = vst.msk [vmem:[#allocation8] sm:$0x7f] %vm1526, %v1693
    %1708 = vst.msk [vmem:[#allocation8 + $0x18] sm:$0x7f] %vm1526, %v1694
    %1709 = vst.msk [vmem:[#allocation8 + $0x30] sm:$0x7f] %vm1526, %v1695
    %1710 = vst.msk [vmem:[#allocation8 + $0x48] sm:$0x7f] %vm1526, %v1696
    %1711 = vst.msk [vmem:[#allocation8 + $0x60] sm:$0x7f] %vm1526, %v1697
    %1712 = vst.msk [vmem:[#allocation8 + $0x78] sm:$0x7f] %vm1526, %v1698
    %1713 = vst.msk [vmem:[#allocation8 + $0x90] sm:$0x7f] %vm1526, %v1699
    %1714 = vst.msk [vmem:[#allocation8 + $0xa8] sm:$0x7f] %vm1526, %v1700
    %1715 = vst.msk [vmem:[#allocation8 + $0xc0] sm:$0x7f] %vm1526, %v1701
    %1716 = vst.msk [vmem:[#allocation8 + $0xd8] sm:$0x7f] %vm1526, %v1702
    %1717 = vst.msk [vmem:[#allocation8 + $0xf0] sm:$0x7f] %vm1526, %v1703
    %1718 = vst.msk [vmem:[#allocation8 + $0x108] sm:$0x7f] %vm1526, %v1704
    %1719 = vst.msk [vmem:[#allocation8 + $0x120] sm:$0x7f] %vm1526, %v1705
    %1720 = vst.msk [vmem:[#allocation8 + $0x138] sm:$0x7f] %vm1526, %v1706
    %v1721 = vld [vmem:[#allocation4] sm:$0x7f]
    %v1722 = vld [vmem:[#allocation4 + $0x10] sm:$0x7f]
    %v1723 = vld [vmem:[#allocation4 + $0x20] sm:$0x7f]
    %v1724 = vld [vmem:[#allocation4 + $0x30] sm:$0x7f]
    %v1725 = vld [vmem:[#allocation4 + $0x40] sm:$0x7f]
    %v1726 = vld [vmem:[#allocation4 + $0x50] sm:$0x7f]
    %v1727 = vld [vmem:[#allocation4 + $0x60] sm:$0x7f]
    %v1728 = vld [vmem:[#allocation4 + $0x90] sm:$0x7f]
    %v1729 = vld [vmem:[#allocation4 + $0xa0] sm:$0x7f]
    %v1730 = vld [vmem:[#allocation4 + $0xb0] sm:$0x7f]
    %v1731 = vld [vmem:[#allocation4 + $0xc0] sm:$0x7f]
    %v1732 = vld [vmem:[#allocation4 + $0xd0] sm:$0x7f]
    %v1733 = vld [vmem:[#allocation4 + $0xe0] sm:$0x7f]
    %v1734 = vld [vmem:[#allocation4 + $0xf0] sm:$0x7f]
    %1749 = vrot.lane.b32.xlu0 %v1721, 12
    %v1750 = vpop.permute.xlu0 %1749
    %1751 = vrot.lane.b32.xlu0 %v1722, 12
    %v1752 = vpop.permute.xlu0 %1751
    %1753 = vrot.lane.b32.xlu0 %v1723, 12
    %v1754 = vpop.permute.xlu0 %1753
    %1755 = vrot.lane.b32.xlu0 %v1724, 12
    %v1756 = vpop.permute.xlu0 %1755
    %1757 = vrot.lane.b32.xlu0 %v1725, 12
    %v1758 = vpop.permute.xlu0 %1757
    %1759 = vrot.lane.b32.xlu0 %v1726, 12
    %v1760 = vpop.permute.xlu0 %1759
    %1761 = vrot.lane.b32.xlu0 %v1727, 12
    %v1762 = vpop.permute.xlu0 %1761
    %1763 = vrot.lane.b32.xlu0 %v1728, 12
    %v1764 = vpop.permute.xlu0 %1763
    %1765 = vrot.lane.b32.xlu0 %v1729, 12
    %v1766 = vpop.permute.xlu0 %1765
    %1767 = vrot.lane.b32.xlu0 %v1730, 12
    %v1768 = vpop.permute.xlu0 %1767
    %1769 = vrot.lane.b32.xlu0 %v1731, 12
    %v1770 = vpop.permute.xlu0 %1769
    %1771 = vrot.lane.b32.xlu0 %v1732, 12
    %v1772 = vpop.permute.xlu0 %1771
    %1773 = vrot.lane.b32.xlu0 %v1733, 12
    %v1774 = vpop.permute.xlu0 %1773
    %1775 = vrot.lane.b32.xlu0 %v1734, 12
    %v1776 = vpop.permute.xlu0 %1775
    %vm1791 = vcmask 194656
    %1792 = vst.msk [vmem:[#allocation8] sm:$0x7f] %vm1791, %v1750
    %1793 = vst.msk [vmem:[#allocation8 + $0x18] sm:$0x7f] %vm1791, %v1752
    %1794 = vst.msk [vmem:[#allocation8 + $0x30] sm:$0x7f] %vm1791, %v1754
    %1795 = vst.msk [vmem:[#allocation8 + $0x48] sm:$0x7f] %vm1791, %v1756
    %1796 = vst.msk [vmem:[#allocation8 + $0x60] sm:$0x7f] %vm1791, %v1758
    %1797 = vst.msk [vmem:[#allocation8 + $0x78] sm:$0x7f] %vm1791, %v1760
    %1798 = vst.msk [vmem:[#allocation8 + $0x90] sm:$0x7f] %vm1791, %v1762
    %1799 = vst.msk [vmem:[#allocation8 + $0xa8] sm:$0x7f] %vm1791, %v1764
    %1800 = vst.msk [vmem:[#allocation8 + $0xc0] sm:$0x7f] %vm1791, %v1766
    %1801 = vst.msk [vmem:[#allocation8 + $0xd8] sm:$0x7f] %vm1791, %v1768
    %1802 = vst.msk [vmem:[#allocation8 + $0xf0] sm:$0x7f] %vm1791, %v1770
    %1803 = vst.msk [vmem:[#allocation8 + $0x108] sm:$0x7f] %vm1791, %v1772
    %1804 = vst.msk [vmem:[#allocation8 + $0x120] sm:$0x7f] %vm1791, %v1774
    %1805 = vst.msk [vmem:[#allocation8 + $0x138] sm:$0x7f] %vm1791, %v1776
    %v1806 = vld [vmem:[#allocation3 + $0x1] sm:$0x7f]
    %v1807 = vld [vmem:[#allocation3 + $0x11] sm:$0x7f]
    %v1808 = vld [vmem:[#allocation3 + $0x21] sm:$0x7f]
    %v1809 = vld [vmem:[#allocation3 + $0x31] sm:$0x7f]
    %v1810 = vld [vmem:[#allocation3 + $0x41] sm:$0x7f]
    %v1811 = vld [vmem:[#allocation3 + $0x51] sm:$0x7f]
    %v1812 = vld [vmem:[#allocation3 + $0x61] sm:$0x7f]
    %v1813 = vld [vmem:[#allocation3 + $0x91] sm:$0x7f]
    %v1814 = vld [vmem:[#allocation3 + $0xa1] sm:$0x7f]
    %v1815 = vld [vmem:[#allocation3 + $0xb1] sm:$0x7f]
    %v1816 = vld [vmem:[#allocation3 + $0xc1] sm:$0x7f]
    %v1817 = vld [vmem:[#allocation3 + $0xd1] sm:$0x7f]
    %v1818 = vld [vmem:[#allocation3 + $0xe1] sm:$0x7f]
    %v1819 = vld [vmem:[#allocation3 + $0xf1] sm:$0x7f]
    %1834 = vrot.lane.b32.xlu0 %v1806, 24
    %v1835 = vpop.permute.xlu0 %1834
    %1836 = vrot.lane.b32.xlu0 %v1807, 24
    %v1837 = vpop.permute.xlu0 %1836
    %1838 = vrot.lane.b32.xlu0 %v1808, 24
    %v1839 = vpop.permute.xlu0 %1838
    %1840 = vrot.lane.b32.xlu0 %v1809, 24
    %v1841 = vpop.permute.xlu0 %1840
    %1842 = vrot.lane.b32.xlu0 %v1810, 24
    %v1843 = vpop.permute.xlu0 %1842
    %1844 = vrot.lane.b32.xlu0 %v1811, 24
    %v1845 = vpop.permute.xlu0 %1844
    %1846 = vrot.lane.b32.xlu0 %v1812, 24
    %v1847 = vpop.permute.xlu0 %1846
    %1848 = vrot.lane.b32.xlu0 %v1813, 24
    %v1849 = vpop.permute.xlu0 %1848
    %1850 = vrot.lane.b32.xlu0 %v1814, 24
    %v1851 = vpop.permute.xlu0 %1850
    %1852 = vrot.lane.b32.xlu0 %v1815, 24
    %v1853 = vpop.permute.xlu0 %1852
    %1854 = vrot.lane.b32.xlu0 %v1816, 24
    %v1855 = vpop.permute.xlu0 %1854
    %1856 = vrot.lane.b32.xlu0 %v1817, 24
    %v1857 = vpop.permute.xlu0 %1856
    %1858 = vrot.lane.b32.xlu0 %v1818, 24
    %v1859 = vpop.permute.xlu0 %1858
    %1860 = vrot.lane.b32.xlu0 %v1819, 24
    %v1861 = vpop.permute.xlu0 %1860
    %vm1876 = vcmask 293056
    %1877 = vst.msk [vmem:[#allocation8] sm:$0x7f] %vm1876, %v1835
    %1878 = vst.msk [vmem:[#allocation8 + $0x18] sm:$0x7f] %vm1876, %v1837
    %1879 = vst.msk [vmem:[#allocation8 + $0x30] sm:$0x7f] %vm1876, %v1839
    %1880 = vst.msk [vmem:[#allocation8 + $0x48] sm:$0x7f] %vm1876, %v1841
    %1881 = vst.msk [vmem:[#allocation8 + $0x60] sm:$0x7f] %vm1876, %v1843
    %1882 = vst.msk [vmem:[#allocation8 + $0x78] sm:$0x7f] %vm1876, %v1845
    %1883 = vst.msk [vmem:[#allocation8 + $0x90] sm:$0x7f] %vm1876, %v1847
    %1884 = vst.msk [vmem:[#allocation8 + $0xa8] sm:$0x7f] %vm1876, %v1849
    %1885 = vst.msk [vmem:[#allocation8 + $0xc0] sm:$0x7f] %vm1876, %v1851
    %1886 = vst.msk [vmem:[#allocation8 + $0xd8] sm:$0x7f] %vm1876, %v1853
    %1887 = vst.msk [vmem:[#allocation8 + $0xf0] sm:$0x7f] %vm1876, %v1855
    %1888 = vst.msk [vmem:[#allocation8 + $0x108] sm:$0x7f] %vm1876, %v1857
    %1889 = vst.msk [vmem:[#allocation8 + $0x120] sm:$0x7f] %vm1876, %v1859
    %1890 = vst.msk [vmem:[#allocation8 + $0x138] sm:$0x7f] %vm1876, %v1861
    %v1891 = vld [vmem:[#allocation4 + $0x1] sm:$0x7f]
    %v1892 = vld [vmem:[#allocation4 + $0x11] sm:$0x7f]
    %v1893 = vld [vmem:[#allocation4 + $0x21] sm:$0x7f]
    %v1894 = vld [vmem:[#allocation4 + $0x31] sm:$0x7f]
    %v1895 = vld [vmem:[#allocation4 + $0x41] sm:$0x7f]
    %v1896 = vld [vmem:[#allocation4 + $0x51] sm:$0x7f]
    %v1897 = vld [vmem:[#allocation4 + $0x61] sm:$0x7f]
    %v1898 = vld [vmem:[#allocation4 + $0x91] sm:$0x7f]
    %v1899 = vld [vmem:[#allocation4 + $0xa1] sm:$0x7f]
    %v1900 = vld [vmem:[#allocation4 + $0xb1] sm:$0x7f]
    %v1901 = vld [vmem:[#allocation4 + $0xc1] sm:$0x7f]
    %v1902 = vld [vmem:[#allocation4 + $0xd1] sm:$0x7f]
    %v1903 = vld [vmem:[#allocation4 + $0xe1] sm:$0x7f]
    %v1904 = vld [vmem:[#allocation4 + $0xf1] sm:$0x7f]
    %1919 = vrot.lane.b32.xlu0 %v1891, 36
    %v1920 = vpop.permute.xlu0 %1919
    %1921 = vrot.lane.b32.xlu0 %v1892, 36
    %v1922 = vpop.permute.xlu0 %1921
    %1923 = vrot.lane.b32.xlu0 %v1893, 36
    %v1924 = vpop.permute.xlu0 %1923
    %1925 = vrot.lane.b32.xlu0 %v1894, 36
    %v1926 = vpop.permute.xlu0 %1925
    %1927 = vrot.lane.b32.xlu0 %v1895, 36
    %v1928 = vpop.permute.xlu0 %1927
    %1929 = vrot.lane.b32.xlu0 %v1896, 36
    %v1930 = vpop.permute.xlu0 %1929
    %1931 = vrot.lane.b32.xlu0 %v1897, 36
    %v1932 = vpop.permute.xlu0 %1931
    %1933 = vrot.lane.b32.xlu0 %v1898, 36
    %v1934 = vpop.permute.xlu0 %1933
    %1935 = vrot.lane.b32.xlu0 %v1899, 36
    %v1936 = vpop.permute.xlu0 %1935
    %1937 = vrot.lane.b32.xlu0 %v1900, 36
    %v1938 = vpop.permute.xlu0 %1937
    %1939 = vrot.lane.b32.xlu0 %v1901, 36
    %v1940 = vpop.permute.xlu0 %1939
    %1941 = vrot.lane.b32.xlu0 %v1902, 36
    %v1942 = vpop.permute.xlu0 %1941
    %1943 = vrot.lane.b32.xlu0 %v1903, 36
    %v1944 = vpop.permute.xlu0 %1943
    %1945 = vrot.lane.b32.xlu0 %v1904, 36
    %v1946 = vpop.permute.xlu0 %1945
    %vm1961 = vcmask 391456
    %1962 = vst.msk [vmem:[#allocation8] sm:$0x7f] %vm1961, %v1920
    %1963 = vst.msk [vmem:[#allocation8 + $0x18] sm:$0x7f] %vm1961, %v1922
    %1964 = vst.msk [vmem:[#allocation8 + $0x30] sm:$0x7f] %vm1961, %v1924
    %1965 = vst.msk [vmem:[#allocation8 + $0x48] sm:$0x7f] %vm1961, %v1926
    %1966 = vst.msk [vmem:[#allocation8 + $0x60] sm:$0x7f] %vm1961, %v1928
    %1967 = vst.msk [vmem:[#allocation8 + $0x78] sm:$0x7f] %vm1961, %v1930
    %1968 = vst.msk [vmem:[#allocation8 + $0x90] sm:$0x7f] %vm1961, %v1932
    %1969 = vst.msk [vmem:[#allocation8 + $0xa8] sm:$0x7f] %vm1961, %v1934
    %1970 = vst.msk [vmem:[#allocation8 + $0xc0] sm:$0x7f] %vm1961, %v1936
    %1971 = vst.msk [vmem:[#allocation8 + $0xd8] sm:$0x7f] %vm1961, %v1938
    %1972 = vst.msk [vmem:[#allocation8 + $0xf0] sm:$0x7f] %vm1961, %v1940
    %1973 = vst.msk [vmem:[#allocation8 + $0x108] sm:$0x7f] %vm1961, %v1942
    %1974 = vst.msk [vmem:[#allocation8 + $0x120] sm:$0x7f] %vm1961, %v1944
    %1975 = vst.msk [vmem:[#allocation8 + $0x138] sm:$0x7f] %vm1961, %v1946
    %v1976 = vld [vmem:[#allocation3 + $0x2] sm:$0x7f]
    %v1977 = vld [vmem:[#allocation3 + $0x12] sm:$0x7f]
    %v1978 = vld [vmem:[#allocation3 + $0x22] sm:$0x7f]
    %v1979 = vld [vmem:[#allocation3 + $0x32] sm:$0x7f]
    %v1980 = vld [vmem:[#allocation3 + $0x42] sm:$0x7f]
    %v1981 = vld [vmem:[#allocation3 + $0x52] sm:$0x7f]
    %v1982 = vld [vmem:[#allocation3 + $0x62] sm:$0x7f]
    %v1983 = vld [vmem:[#allocation3 + $0x92] sm:$0x7f]
    %v1984 = vld [vmem:[#allocation3 + $0xa2] sm:$0x7f]
    %v1985 = vld [vmem:[#allocation3 + $0xb2] sm:$0x7f]
    %v1986 = vld [vmem:[#allocation3 + $0xc2] sm:$0x7f]
    %v1987 = vld [vmem:[#allocation3 + $0xd2] sm:$0x7f]
    %v1988 = vld [vmem:[#allocation3 + $0xe2] sm:$0x7f]
    %v1989 = vld [vmem:[#allocation3 + $0xf2] sm:$0x7f]
    %2004 = vrot.lane.b32.xlu0 %v1976, 48
    %v2005 = vpop.permute.xlu0 %2004
    %2006 = vrot.lane.b32.xlu0 %v1977, 48
    %v2007 = vpop.permute.xlu0 %2006
    %2008 = vrot.lane.b32.xlu0 %v1978, 48
    %v2009 = vpop.permute.xlu0 %2008
    %2010 = vrot.lane.b32.xlu0 %v1979, 48
    %v2011 = vpop.permute.xlu0 %2010
    %2012 = vrot.lane.b32.xlu0 %v1980, 48
    %v2013 = vpop.permute.xlu0 %2012
    %2014 = vrot.lane.b32.xlu0 %v1981, 48
    %v2015 = vpop.permute.xlu0 %2014
    %2016 = vrot.lane.b32.xlu0 %v1982, 48
    %v2017 = vpop.permute.xlu0 %2016
    %2018 = vrot.lane.b32.xlu0 %v1983, 48
    %v2019 = vpop.permute.xlu0 %2018
    %2020 = vrot.lane.b32.xlu0 %v1984, 48
    %v2021 = vpop.permute.xlu0 %2020
    %2022 = vrot.lane.b32.xlu0 %v1985, 48
    %v2023 = vpop.permute.xlu0 %2022
    %2024 = vrot.lane.b32.xlu0 %v1986, 48
    %v2025 = vpop.permute.xlu0 %2024
    %2026 = vrot.lane.b32.xlu0 %v1987, 48
    %v2027 = vpop.permute.xlu0 %2026
    %2028 = vrot.lane.b32.xlu0 %v1988, 48
    %v2029 = vpop.permute.xlu0 %2028
    %2030 = vrot.lane.b32.xlu0 %v1989, 48
    %v2031 = vpop.permute.xlu0 %2030
    %vm2046 = vcmask 489856
    %2047 = vst.msk [vmem:[#allocation8] sm:$0x7f] %vm2046, %v2005
    %2048 = vst.msk [vmem:[#allocation8 + $0x18] sm:$0x7f] %vm2046, %v2007
    %2049 = vst.msk [vmem:[#allocation8 + $0x30] sm:$0x7f] %vm2046, %v2009
    %2050 = vst.msk [vmem:[#allocation8 + $0x48] sm:$0x7f] %vm2046, %v2011
    %2051 = vst.msk [vmem:[#allocation8 + $0x60] sm:$0x7f] %vm2046, %v2013
    %2052 = vst.msk [vmem:[#allocation8 + $0x78] sm:$0x7f] %vm2046, %v2015
    %2053 = vst.msk [vmem:[#allocation8 + $0x90] sm:$0x7f] %vm2046, %v2017
    %2054 = vst.msk [vmem:[#allocation8 + $0xa8] sm:$0x7f] %vm2046, %v2019
    %2055 = vst.msk [vmem:[#allocation8 + $0xc0] sm:$0x7f] %vm2046, %v2021
    %2056 = vst.msk [vmem:[#allocation8 + $0xd8] sm:$0x7f] %vm2046, %v2023
    %2057 = vst.msk [vmem:[#allocation8 + $0xf0] sm:$0x7f] %vm2046, %v2025
    %2058 = vst.msk [vmem:[#allocation8 + $0x108] sm:$0x7f] %vm2046, %v2027
    %2059 = vst.msk [vmem:[#allocation8 + $0x120] sm:$0x7f] %vm2046, %v2029
    %2060 = vst.msk [vmem:[#allocation8 + $0x138] sm:$0x7f] %vm2046, %v2031
    %v2061 = vld [vmem:[#allocation5] sm:$0x7f]
    %v2062 = vld [vmem:[#allocation5 + $0x10] sm:$0x7f]
    %v2063 = vld [vmem:[#allocation5 + $0x20] sm:$0x7f]
    %v2064 = vld [vmem:[#allocation5 + $0x30] sm:$0x7f]
    %v2065 = vld [vmem:[#allocation5 + $0x40] sm:$0x7f]
    %v2066 = vld [vmem:[#allocation5 + $0x50] sm:$0x7f]
    %v2067 = vld [vmem:[#allocation5 + $0x60] sm:$0x7f]
    %v2068 = vld [vmem:[#allocation5 + $0x90] sm:$0x7f]
    %v2069 = vld [vmem:[#allocation5 + $0xa0] sm:$0x7f]
    %v2070 = vld [vmem:[#allocation5 + $0xb0] sm:$0x7f]
    %v2071 = vld [vmem:[#allocation5 + $0xc0] sm:$0x7f]
    %v2072 = vld [vmem:[#allocation5 + $0xd0] sm:$0x7f]
    %v2073 = vld [vmem:[#allocation5 + $0xe0] sm:$0x7f]
    %v2074 = vld [vmem:[#allocation5 + $0xf0] sm:$0x7f]
    %2089 = vrot.lane.b32.xlu0 %v2061, 60
    %v2090 = vpop.permute.xlu0 %2089
    %2091 = vrot.lane.b32.xlu0 %v2062, 60
    %v2092 = vpop.permute.xlu0 %2091
    %2093 = vrot.lane.b32.xlu0 %v2063, 60
    %v2094 = vpop.permute.xlu0 %2093
    %2095 = vrot.lane.b32.xlu0 %v2064, 60
    %v2096 = vpop.permute.xlu0 %2095
    %2097 = vrot.lane.b32.xlu0 %v2065, 60
    %v2098 = vpop.permute.xlu0 %2097
    %2099 = vrot.lane.b32.xlu0 %v2066, 60
    %v2100 = vpop.permute.xlu0 %2099
    %2101 = vrot.lane.b32.xlu0 %v2067, 60
    %v2102 = vpop.permute.xlu0 %2101
    %2103 = vrot.lane.b32.xlu0 %v2068, 60
    %v2104 = vpop.permute.xlu0 %2103
    %2105 = vrot.lane.b32.xlu0 %v2069, 60
    %v2106 = vpop.permute.xlu0 %2105
    %2107 = vrot.lane.b32.xlu0 %v2070, 60
    %v2108 = vpop.permute.xlu0 %2107
    %2109 = vrot.lane.b32.xlu0 %v2071, 60
    %v2110 = vpop.permute.xlu0 %2109
    %2111 = vrot.lane.b32.xlu0 %v2072, 60
    %v2112 = vpop.permute.xlu0 %2111
    %2113 = vrot.lane.b32.xlu0 %v2073, 60
    %v2114 = vpop.permute.xlu0 %2113
    %2115 = vrot.lane.b32.xlu0 %v2074, 60
    %v2116 = vpop.permute.xlu0 %2115
    %vm2131 = vcmask 588256
    %2132 = vst.msk [vmem:[#allocation8] sm:$0x7f] %vm2131, %v2090
    %2133 = vst.msk [vmem:[#allocation8 + $0x18] sm:$0x7f] %vm2131, %v2092
    %2134 = vst.msk [vmem:[#allocation8 + $0x30] sm:$0x7f] %vm2131, %v2094
    %2135 = vst.msk [vmem:[#allocation8 + $0x48] sm:$0x7f] %vm2131, %v2096
    %2136 = vst.msk [vmem:[#allocation8 + $0x60] sm:$0x7f] %vm2131, %v2098
    %2137 = vst.msk [vmem:[#allocation8 + $0x78] sm:$0x7f] %vm2131, %v2100
    %2138 = vst.msk [vmem:[#allocation8 + $0x90] sm:$0x7f] %vm2131, %v2102
    %2139 = vst.msk [vmem:[#allocation8 + $0xa8] sm:$0x7f] %vm2131, %v2104
    %2140 = vst.msk [vmem:[#allocation8 + $0xc0] sm:$0x7f] %vm2131, %v2106
    %2141 = vst.msk [vmem:[#allocation8 + $0xd8] sm:$0x7f] %vm2131, %v2108
    %2142 = vst.msk [vmem:[#allocation8 + $0xf0] sm:$0x7f] %vm2131, %v2110
    %2143 = vst.msk [vmem:[#allocation8 + $0x108] sm:$0x7f] %vm2131, %v2112
    %2144 = vst.msk [vmem:[#allocation8 + $0x120] sm:$0x7f] %vm2131, %v2114
    %2145 = vst.msk [vmem:[#allocation8 + $0x138] sm:$0x7f] %vm2131, %v2116
    %v2146 = vld [vmem:[#allocation6] sm:$0x7f]
    %v2147 = vld [vmem:[#allocation6 + $0x10] sm:$0x7f]
    %v2148 = vld [vmem:[#allocation6 + $0x20] sm:$0x7f]
    %v2149 = vld [vmem:[#allocation6 + $0x30] sm:$0x7f]
    %v2150 = vld [vmem:[#allocation6 + $0x40] sm:$0x7f]
    %v2151 = vld [vmem:[#allocation6 + $0x50] sm:$0x7f]
    %v2152 = vld [vmem:[#allocation6 + $0x60] sm:$0x7f]
    %v2153 = vld [vmem:[#allocation6 + $0x90] sm:$0x7f]
    %v2154 = vld [vmem:[#allocation6 + $0xa0] sm:$0x7f]
    %v2155 = vld [vmem:[#allocation6 + $0xb0] sm:$0x7f]
    %v2156 = vld [vmem:[#allocation6 + $0xc0] sm:$0x7f]
    %v2157 = vld [vmem:[#allocation6 + $0xd0] sm:$0x7f]
    %v2158 = vld [vmem:[#allocation6 + $0xe0] sm:$0x7f]
    %v2159 = vld [vmem:[#allocation6 + $0xf0] sm:$0x7f]
    %2174 = vrot.lane.b32.xlu0 %v2146, 72
    %v2175 = vpop.permute.xlu0 %2174
    %2176 = vrot.lane.b32.xlu0 %v2147, 72
    %v2177 = vpop.permute.xlu0 %2176
    %2178 = vrot.lane.b32.xlu0 %v2148, 72
    %v2179 = vpop.permute.xlu0 %2178
    %2180 = vrot.lane.b32.xlu0 %v2149, 72
    %v2181 = vpop.permute.xlu0 %2180
    %2182 = vrot.lane.b32.xlu0 %v2150, 72
    %v2183 = vpop.permute.xlu0 %2182
    %2184 = vrot.lane.b32.xlu0 %v2151, 72
    %v2185 = vpop.permute.xlu0 %2184
    %2186 = vrot.lane.b32.xlu0 %v2152, 72
    %v2187 = vpop.permute.xlu0 %2186
    %2188 = vrot.lane.b32.xlu0 %v2153, 72
    %v2189 = vpop.permute.xlu0 %2188
    %2190 = vrot.lane.b32.xlu0 %v2154, 72
    %v2191 = vpop.permute.xlu0 %2190
    %2192 = vrot.lane.b32.xlu0 %v2155, 72
    %v2193 = vpop.permute.xlu0 %2192
    %2194 = vrot.lane.b32.xlu0 %v2156, 72
    %v2195 = vpop.permute.xlu0 %2194
    %2196 = vrot.lane.b32.xlu0 %v2157, 72
    %v2197 = vpop.permute.xlu0 %2196
    %2198 = vrot.lane.b32.xlu0 %v2158, 72
    %v2199 = vpop.permute.xlu0 %2198
    %2200 = vrot.lane.b32.xlu0 %v2159, 72
    %v2201 = vpop.permute.xlu0 %2200
    %vm2216 = vcmask 686656
    %2217 = vst.msk [vmem:[#allocation8] sm:$0x7f] %vm2216, %v2175
    %2218 = vst.msk [vmem:[#allocation8 + $0x18] sm:$0x7f] %vm2216, %v2177
    %2219 = vst.msk [vmem:[#allocation8 + $0x30] sm:$0x7f] %vm2216, %v2179
    %2220 = vst.msk [vmem:[#allocation8 + $0x48] sm:$0x7f] %vm2216, %v2181
    %2221 = vst.msk [vmem:[#allocation8 + $0x60] sm:$0x7f] %vm2216, %v2183
    %2222 = vst.msk [vmem:[#allocation8 + $0x78] sm:$0x7f] %vm2216, %v2185
    %2223 = vst.msk [vmem:[#allocation8 + $0x90] sm:$0x7f] %vm2216, %v2187
    %2224 = vst.msk [vmem:[#allocation8 + $0xa8] sm:$0x7f] %vm2216, %v2189
    %2225 = vst.msk [vmem:[#allocation8 + $0xc0] sm:$0x7f] %vm2216, %v2191
    %2226 = vst.msk [vmem:[#allocation8 + $0xd8] sm:$0x7f] %vm2216, %v2193
    %2227 = vst.msk [vmem:[#allocation8 + $0xf0] sm:$0x7f] %vm2216, %v2195
    %2228 = vst.msk [vmem:[#allocation8 + $0x108] sm:$0x7f] %vm2216, %v2197
    %2229 = vst.msk [vmem:[#allocation8 + $0x120] sm:$0x7f] %vm2216, %v2199
    %2230 = vst.msk [vmem:[#allocation8 + $0x138] sm:$0x7f] %vm2216, %v2201
    %v2231 = vld [vmem:[#allocation5 + $0x1] sm:$0x7f]
    %v2232 = vld [vmem:[#allocation5 + $0x11] sm:$0x7f]
    %v2233 = vld [vmem:[#allocation5 + $0x21] sm:$0x7f]
    %v2234 = vld [vmem:[#allocation5 + $0x31] sm:$0x7f]
    %v2235 = vld [vmem:[#allocation5 + $0x41] sm:$0x7f]
    %v2236 = vld [vmem:[#allocation5 + $0x51] sm:$0x7f]
    %v2237 = vld [vmem:[#allocation5 + $0x61] sm:$0x7f]
    %v2238 = vld [vmem:[#allocation5 + $0x91] sm:$0x7f]
    %v2239 = vld [vmem:[#allocation5 + $0xa1] sm:$0x7f]
    %v2240 = vld [vmem:[#allocation5 + $0xb1] sm:$0x7f]
    %v2241 = vld [vmem:[#allocation5 + $0xc1] sm:$0x7f]
    %v2242 = vld [vmem:[#allocation5 + $0xd1] sm:$0x7f]
    %v2243 = vld [vmem:[#allocation5 + $0xe1] sm:$0x7f]
    %v2244 = vld [vmem:[#allocation5 + $0xf1] sm:$0x7f]
    %2259 = vrot.lane.b32.xlu0 %v2231, 84
    %v2260 = vpop.permute.xlu0 %2259
    %2261 = vrot.lane.b32.xlu0 %v2232, 84
    %v2262 = vpop.permute.xlu0 %2261
    %2263 = vrot.lane.b32.xlu0 %v2233, 84
    %v2264 = vpop.permute.xlu0 %2263
    %2265 = vrot.lane.b32.xlu0 %v2234, 84
    %v2266 = vpop.permute.xlu0 %2265
    %2267 = vrot.lane.b32.xlu0 %v2235, 84
    %v2268 = vpop.permute.xlu0 %2267
    %2269 = vrot.lane.b32.xlu0 %v2236, 84
    %v2270 = vpop.permute.xlu0 %2269
    %2271 = vrot.lane.b32.xlu0 %v2237, 84
    %v2272 = vpop.permute.xlu0 %2271
    %2273 = vrot.lane.b32.xlu0 %v2238, 84
    %v2274 = vpop.permute.xlu0 %2273
    %2275 = vrot.lane.b32.xlu0 %v2239, 84
    %v2276 = vpop.permute.xlu0 %2275
    %2277 = vrot.lane.b32.xlu0 %v2240, 84
    %v2278 = vpop.permute.xlu0 %2277
    %2279 = vrot.lane.b32.xlu0 %v2241, 84
    %v2280 = vpop.permute.xlu0 %2279
    %2281 = vrot.lane.b32.xlu0 %v2242, 84
    %v2282 = vpop.permute.xlu0 %2281
    %2283 = vrot.lane.b32.xlu0 %v2243, 84
    %v2284 = vpop.permute.xlu0 %2283
    %2285 = vrot.lane.b32.xlu0 %v2244, 84
    %v2286 = vpop.permute.xlu0 %2285
    %vm2301 = vcmask 785056
    %2302 = vst.msk [vmem:[#allocation8] sm:$0x7f] %vm2301, %v2260
    %2303 = vst.msk [vmem:[#allocation8 + $0x18] sm:$0x7f] %vm2301, %v2262
    %2304 = vst.msk [vmem:[#allocation8 + $0x30] sm:$0x7f] %vm2301, %v2264
    %2305 = vst.msk [vmem:[#allocation8 + $0x48] sm:$0x7f] %vm2301, %v2266
    %2306 = vst.msk [vmem:[#allocation8 + $0x60] sm:$0x7f] %vm2301, %v2268
    %2307 = vst.msk [vmem:[#allocation8 + $0x78] sm:$0x7f] %vm2301, %v2270
    %2308 = vst.msk [vmem:[#allocation8 + $0x90] sm:$0x7f] %vm2301, %v2272
    %2309 = vst.msk [vmem:[#allocation8 + $0xa8] sm:$0x7f] %vm2301, %v2274
    %2310 = vst.msk [vmem:[#allocation8 + $0xc0] sm:$0x7f] %vm2301, %v2276
    %2311 = vst.msk [vmem:[#allocation8 + $0xd8] sm:$0x7f] %vm2301, %v2278
    %2312 = vst.msk [vmem:[#allocation8 + $0xf0] sm:$0x7f] %vm2301, %v2280
    %2313 = vst.msk [vmem:[#allocation8 + $0x108] sm:$0x7f] %vm2301, %v2282
    %2314 = vst.msk [vmem:[#allocation8 + $0x120] sm:$0x7f] %vm2301, %v2284
    %2315 = vst.msk [vmem:[#allocation8 + $0x138] sm:$0x7f] %vm2301, %v2286
    %v2316 = vld [vmem:[#allocation6 + $0x1] sm:$0x7f]
    %v2317 = vld [vmem:[#allocation6 + $0x11] sm:$0x7f]
    %v2318 = vld [vmem:[#allocation6 + $0x21] sm:$0x7f]
    %v2319 = vld [vmem:[#allocation6 + $0x31] sm:$0x7f]
    %v2320 = vld [vmem:[#allocation6 + $0x41] sm:$0x7f]
    %v2321 = vld [vmem:[#allocation6 + $0x51] sm:$0x7f]
    %v2322 = vld [vmem:[#allocation6 + $0x61] sm:$0x7f]
    %v2323 = vld [vmem:[#allocation6 + $0x91] sm:$0x7f]
    %v2324 = vld [vmem:[#allocation6 + $0xa1] sm:$0x7f]
    %v2325 = vld [vmem:[#allocation6 + $0xb1] sm:$0x7f]
    %v2326 = vld [vmem:[#allocation6 + $0xc1] sm:$0x7f]
    %v2327 = vld [vmem:[#allocation6 + $0xd1] sm:$0x7f]
    %v2328 = vld [vmem:[#allocation6 + $0xe1] sm:$0x7f]
    %v2329 = vld [vmem:[#allocation6 + $0xf1] sm:$0x7f]
    %2344 = vrot.lane.b32.xlu0 %v2316, 96
    %v2345 = vpop.permute.xlu0 %2344
    %2346 = vrot.lane.b32.xlu0 %v2317, 96
    %v2347 = vpop.permute.xlu0 %2346
    %2348 = vrot.lane.b32.xlu0 %v2318, 96
    %v2349 = vpop.permute.xlu0 %2348
    %2350 = vrot.lane.b32.xlu0 %v2319, 96
    %v2351 = vpop.permute.xlu0 %2350
    %2352 = vrot.lane.b32.xlu0 %v2320, 96
    %v2353 = vpop.permute.xlu0 %2352
    %2354 = vrot.lane.b32.xlu0 %v2321, 96
    %v2355 = vpop.permute.xlu0 %2354
    %2356 = vrot.lane.b32.xlu0 %v2322, 96
    %v2357 = vpop.permute.xlu0 %2356
    %2358 = vrot.lane.b32.xlu0 %v2323, 96
    %v2359 = vpop.permute.xlu0 %2358
    %2360 = vrot.lane.b32.xlu0 %v2324, 96
    %v2361 = vpop.permute.xlu0 %2360
    %2362 = vrot.lane.b32.xlu0 %v2325, 96
    %v2363 = vpop.permute.xlu0 %2362
    %2364 = vrot.lane.b32.xlu0 %v2326, 96
    %v2365 = vpop.permute.xlu0 %2364
    %2366 = vrot.lane.b32.xlu0 %v2327, 96
    %v2367 = vpop.permute.xlu0 %2366
    %2368 = vrot.lane.b32.xlu0 %v2328, 96
    %v2369 = vpop.permute.xlu0 %2368
    %2370 = vrot.lane.b32.xlu0 %v2329, 96
    %v2371 = vpop.permute.xlu0 %2370
    %vm2386 = vcmask 883456
    %2387 = vst.msk [vmem:[#allocation8] sm:$0x7f] %vm2386, %v2345
    %2388 = vst.msk [vmem:[#allocation8 + $0x18] sm:$0x7f] %vm2386, %v2347
    %2389 = vst.msk [vmem:[#allocation8 + $0x30] sm:$0x7f] %vm2386, %v2349
    %2390 = vst.msk [vmem:[#allocation8 + $0x48] sm:$0x7f] %vm2386, %v2351
    %2391 = vst.msk [vmem:[#allocation8 + $0x60] sm:$0x7f] %vm2386, %v2353
    %2392 = vst.msk [vmem:[#allocation8 + $0x78] sm:$0x7f] %vm2386, %v2355
    %2393 = vst.msk [vmem:[#allocation8 + $0x90] sm:$0x7f] %vm2386, %v2357
    %2394 = vst.msk [vmem:[#allocation8 + $0xa8] sm:$0x7f] %vm2386, %v2359
    %2395 = vst.msk [vmem:[#allocation8 + $0xc0] sm:$0x7f] %vm2386, %v2361
    %2396 = vst.msk [vmem:[#allocation8 + $0xd8] sm:$0x7f] %vm2386, %v2363
    %2397 = vst.msk [vmem:[#allocation8 + $0xf0] sm:$0x7f] %vm2386, %v2365
    %2398 = vst.msk [vmem:[#allocation8 + $0x108] sm:$0x7f] %vm2386, %v2367
    %2399 = vst.msk [vmem:[#allocation8 + $0x120] sm:$0x7f] %vm2386, %v2369
    %2400 = vst.msk [vmem:[#allocation8 + $0x138] sm:$0x7f] %vm2386, %v2371
    %v2401 = vld [vmem:[#allocation5 + $0x2] sm:$0x7f]
    %v2402 = vld [vmem:[#allocation5 + $0x12] sm:$0x7f]
    %v2403 = vld [vmem:[#allocation5 + $0x22] sm:$0x7f]
    %v2404 = vld [vmem:[#allocation5 + $0x32] sm:$0x7f]
    %v2405 = vld [vmem:[#allocation5 + $0x42] sm:$0x7f]
    %v2406 = vld [vmem:[#allocation5 + $0x52] sm:$0x7f]
    %v2407 = vld [vmem:[#allocation5 + $0x62] sm:$0x7f]
    %v2408 = vld [vmem:[#allocation5 + $0x92] sm:$0x7f]
    %v2409 = vld [vmem:[#allocation5 + $0xa2] sm:$0x7f]
    %v2410 = vld [vmem:[#allocation5 + $0xb2] sm:$0x7f]
    %v2411 = vld [vmem:[#allocation5 + $0xc2] sm:$0x7f]
    %v2412 = vld [vmem:[#allocation5 + $0xd2] sm:$0x7f]
    %v2413 = vld [vmem:[#allocation5 + $0xe2] sm:$0x7f]
    %v2414 = vld [vmem:[#allocation5 + $0xf2] sm:$0x7f]
    %2429 = vrot.lane.b32.xlu0 %v2401, 108
    %v2430 = vpop.permute.xlu0 %2429
    %2431 = vrot.lane.b32.xlu0 %v2402, 108
    %v2432 = vpop.permute.xlu0 %2431
    %2433 = vrot.lane.b32.xlu0 %v2403, 108
    %v2434 = vpop.permute.xlu0 %2433
    %2435 = vrot.lane.b32.xlu0 %v2404, 108
    %v2436 = vpop.permute.xlu0 %2435
    %2437 = vrot.lane.b32.xlu0 %v2405, 108
    %v2438 = vpop.permute.xlu0 %2437
    %2439 = vrot.lane.b32.xlu0 %v2406, 108
    %v2440 = vpop.permute.xlu0 %2439
    %2441 = vrot.lane.b32.xlu0 %v2407, 108
    %v2442 = vpop.permute.xlu0 %2441
    %2443 = vrot.lane.b32.xlu0 %v2408, 108
    %v2444 = vpop.permute.xlu0 %2443
    %2445 = vrot.lane.b32.xlu0 %v2409, 108
    %v2446 = vpop.permute.xlu0 %2445
    %2447 = vrot.lane.b32.xlu0 %v2410, 108
    %v2448 = vpop.permute.xlu0 %2447
    %2449 = vrot.lane.b32.xlu0 %v2411, 108
    %v2450 = vpop.permute.xlu0 %2449
    %2451 = vrot.lane.b32.xlu0 %v2412, 108
    %v2452 = vpop.permute.xlu0 %2451
    %2453 = vrot.lane.b32.xlu0 %v2413, 108
    %v2454 = vpop.permute.xlu0 %2453
    %2455 = vrot.lane.b32.xlu0 %v2414, 108
    %v2456 = vpop.permute.xlu0 %2455
    %vm2471 = vcmask 981856
    %2472 = vst.msk [vmem:[#allocation8] sm:$0x7f] %vm2471, %v2430
    %2473 = vst.msk [vmem:[#allocation8 + $0x18] sm:$0x7f] %vm2471, %v2432
    %2474 = vst.msk [vmem:[#allocation8 + $0x30] sm:$0x7f] %vm2471, %v2434
    %2475 = vst.msk [vmem:[#allocation8 + $0x48] sm:$0x7f] %vm2471, %v2436
    %2476 = vst.msk [vmem:[#allocation8 + $0x60] sm:$0x7f] %vm2471, %v2438
    %2477 = vst.msk [vmem:[#allocation8 + $0x78] sm:$0x7f] %vm2471, %v2440
    %2478 = vst.msk [vmem:[#allocation8 + $0x90] sm:$0x7f] %vm2471, %v2442
    %2479 = vst.msk [vmem:[#allocation8 + $0xa8] sm:$0x7f] %vm2471, %v2444
    %2480 = vst.msk [vmem:[#allocation8 + $0xc0] sm:$0x7f] %vm2471, %v2446
    %2481 = vst.msk [vmem:[#allocation8 + $0xd8] sm:$0x7f] %vm2471, %v2448
    %2482 = vst.msk [vmem:[#allocation8 + $0xf0] sm:$0x7f] %vm2471, %v2450
    %2483 = vst.msk [vmem:[#allocation8 + $0x108] sm:$0x7f] %vm2471, %v2452
    %2484 = vst.msk [vmem:[#allocation8 + $0x120] sm:$0x7f] %vm2471, %v2454
    %2485 = vst.msk [vmem:[#allocation8 + $0x138] sm:$0x7f] %vm2471, %v2456
    %v2486 = vld [vmem:[%s1525] sm:$0x7f]
    %v2487 = vld [vmem:[%s1525 + $0x10] sm:$0x7f]
    %v2488 = vld [vmem:[%s1525 + $0x20] sm:$0x7f]
    %v2489 = vld [vmem:[%s1525 + $0x30] sm:$0x7f]
    %v2490 = vld [vmem:[%s1525 + $0x40] sm:$0x7f]
    %v2491 = vld [vmem:[%s1525 + $0x50] sm:$0x7f]
    %v2492 = vld [vmem:[%s1525 + $0x60] sm:$0x7f]
    %v2493 = vld [vmem:[%s1525 + $0x90] sm:$0x7f]
    %v2494 = vld [vmem:[%s1525 + $0xa0] sm:$0x7f]
    %v2495 = vld [vmem:[%s1525 + $0xb0] sm:$0x7f]
    %v2496 = vld [vmem:[%s1525 + $0xc0] sm:$0x7f]
    %v2497 = vld [vmem:[%s1525 + $0xd0] sm:$0x7f]
    %v2498 = vld [vmem:[%s1525 + $0xe0] sm:$0x7f]
    %v2499 = vld [vmem:[%s1525 + $0xf0] sm:$0x7f]
    %2514 = vrot.lane.b32.xlu0 %v2486, 120
    %v2515 = vpop.permute.xlu0 %2514
    %2516 = vrot.lane.b32.xlu0 %v2487, 120
    %v2517 = vpop.permute.xlu0 %2516
    %2518 = vrot.lane.b32.xlu0 %v2488, 120
    %v2519 = vpop.permute.xlu0 %2518
    %2520 = vrot.lane.b32.xlu0 %v2489, 120
    %v2521 = vpop.permute.xlu0 %2520
    %2522 = vrot.lane.b32.xlu0 %v2490, 120
    %v2523 = vpop.permute.xlu0 %2522
    %2524 = vrot.lane.b32.xlu0 %v2491, 120
    %v2525 = vpop.permute.xlu0 %2524
    %2526 = vrot.lane.b32.xlu0 %v2492, 120
    %v2527 = vpop.permute.xlu0 %2526
    %2528 = vrot.lane.b32.xlu0 %v2493, 120
    %v2529 = vpop.permute.xlu0 %2528
    %2530 = vrot.lane.b32.xlu0 %v2494, 120
    %v2531 = vpop.permute.xlu0 %2530
    %2532 = vrot.lane.b32.xlu0 %v2495, 120
    %v2533 = vpop.permute.xlu0 %2532
    %2534 = vrot.lane.b32.xlu0 %v2496, 120
    %v2535 = vpop.permute.xlu0 %2534
    %2536 = vrot.lane.b32.xlu0 %v2497, 120
    %v2537 = vpop.permute.xlu0 %2536
    %2538 = vrot.lane.b32.xlu0 %v2498, 120
    %v2539 = vpop.permute.xlu0 %2538
    %2540 = vrot.lane.b32.xlu0 %v2499, 120
    %v2541 = vpop.permute.xlu0 %2540
    %vm2556 = vcmask 1047488
    %2557 = vst.msk [vmem:[#allocation8] sm:$0x7f] %vm2556, %v2515
    %vm2558 = vcmask 30720
    %2559 = vst.msk [vmem:[#allocation8 + $0x8] sm:$0x7f] %vm2558, %v2515
    %2560 = vst.msk [vmem:[#allocation8 + $0x18] sm:$0x7f] %vm2556, %v2517
    %2561 = vst.msk [vmem:[#allocation8 + $0x20] sm:$0x7f] %vm2558, %v2517
    %2562 = vst.msk [vmem:[#allocation8 + $0x30] sm:$0x7f] %vm2556, %v2519
    %2563 = vst.msk [vmem:[#allocation8 + $0x38] sm:$0x7f] %vm2558, %v2519
    %2564 = vst.msk [vmem:[#allocation8 + $0x48] sm:$0x7f] %vm2556, %v2521
    %2565 = vst.msk [vmem:[#allocation8 + $0x50] sm:$0x7f] %vm2558, %v2521
    %2566 = vst.msk [vmem:[#allocation8 + $0x60] sm:$0x7f] %vm2556, %v2523
    %2567 = vst.msk [vmem:[#allocation8 + $0x68] sm:$0x7f] %vm2558, %v2523
    %2568 = vst.msk [vmem:[#allocation8 + $0x78] sm:$0x7f] %vm2556, %v2525
    %2569 = vst.msk [vmem:[#allocation8 + $0x80] sm:$0x7f] %vm2558, %v2525
    %2570 = vst.msk [vmem:[#allocation8 + $0x90] sm:$0x7f] %vm2556, %v2527
    %2571 = vst.msk [vmem:[#allocation8 + $0x98] sm:$0x7f] %vm2558, %v2527
    %2572 = vst.msk [vmem:[#allocation8 + $0xa8] sm:$0x7f] %vm2556, %v2529
    %2573 = vst.msk [vmem:[#allocation8 + $0xb0] sm:$0x7f] %vm2558, %v2529
    %2574 = vst.msk [vmem:[#allocation8 + $0xc0] sm:$0x7f] %vm2556, %v2531
    %2575 = vst.msk [vmem:[#allocation8 + $0xc8] sm:$0x7f] %vm2558, %v2531
    %2576 = vst.msk [vmem:[#allocation8 + $0xd8] sm:$0x7f] %vm2556, %v2533
    %2577 = vst.msk [vmem:[#allocation8 + $0xe0] sm:$0x7f] %vm2558, %v2533
    %2578 = vst.msk [vmem:[#allocation8 + $0xf0] sm:$0x7f] %vm2556, %v2535
    %2579 = vst.msk [vmem:[#allocation8 + $0xf8] sm:$0x7f] %vm2558, %v2535
    %2580 = vst.msk [vmem:[#allocation8 + $0x108] sm:$0x7f] %vm2556, %v2537
    %2581 = vst.msk [vmem:[#allocation8 + $0x110] sm:$0x7f] %vm2558, %v2537
    %2582 = vst.msk [vmem:[#allocation8 + $0x120] sm:$0x7f] %vm2556, %v2539
    %2583 = vst.msk [vmem:[#allocation8 + $0x128] sm:$0x7f] %vm2558, %v2539
    %2584 = vst.msk [vmem:[#allocation8 + $0x138] sm:$0x7f] %vm2556, %v2541
    %2585 = vst.msk [vmem:[#allocation8 + $0x140] sm:$0x7f] %vm2558, %v2541
    %v2586 = vld [vmem:[%s1529] sm:$0x7f]
    %v2587 = vld [vmem:[%s1529 + $0x10] sm:$0x7f]
    %v2588 = vld [vmem:[%s1529 + $0x20] sm:$0x7f]
    %v2589 = vld [vmem:[%s1529 + $0x30] sm:$0x7f]
    %v2590 = vld [vmem:[%s1529 + $0x40] sm:$0x7f]
    %v2591 = vld [vmem:[%s1529 + $0x50] sm:$0x7f]
    %v2592 = vld [vmem:[%s1529 + $0x60] sm:$0x7f]
    %v2593 = vld [vmem:[%s1529 + $0x90] sm:$0x7f]
    %v2594 = vld [vmem:[%s1529 + $0xa0] sm:$0x7f]
    %v2595 = vld [vmem:[%s1529 + $0xb0] sm:$0x7f]
    %v2596 = vld [vmem:[%s1529 + $0xc0] sm:$0x7f]
    %v2597 = vld [vmem:[%s1529 + $0xd0] sm:$0x7f]
    %v2598 = vld [vmem:[%s1529 + $0xe0] sm:$0x7f]
    %v2599 = vld [vmem:[%s1529 + $0xf0] sm:$0x7f]
    %2614 = vrot.lane.b32.xlu0 %v2586, 4
    %v2615 = vpop.permute.xlu0 %2614
    %2616 = vrot.lane.b32.xlu0 %v2587, 4
    %v2617 = vpop.permute.xlu0 %2616
    %2618 = vrot.lane.b32.xlu0 %v2588, 4
    %v2619 = vpop.permute.xlu0 %2618
    %2620 = vrot.lane.b32.xlu0 %v2589, 4
    %v2621 = vpop.permute.xlu0 %2620
    %2622 = vrot.lane.b32.xlu0 %v2590, 4
    %v2623 = vpop.permute.xlu0 %2622
    %2624 = vrot.lane.b32.xlu0 %v2591, 4
    %v2625 = vpop.permute.xlu0 %2624
    %2626 = vrot.lane.b32.xlu0 %v2592, 4
    %v2627 = vpop.permute.xlu0 %2626
    %2628 = vrot.lane.b32.xlu0 %v2593, 4
    %v2629 = vpop.permute.xlu0 %2628
    %2630 = vrot.lane.b32.xlu0 %v2594, 4
    %v2631 = vpop.permute.xlu0 %2630
    %2632 = vrot.lane.b32.xlu0 %v2595, 4
    %v2633 = vpop.permute.xlu0 %2632
    %2634 = vrot.lane.b32.xlu0 %v2596, 4
    %v2635 = vpop.permute.xlu0 %2634
    %2636 = vrot.lane.b32.xlu0 %v2597, 4
    %v2637 = vpop.permute.xlu0 %2636
    %2638 = vrot.lane.b32.xlu0 %v2598, 4
    %v2639 = vpop.permute.xlu0 %2638
    %2640 = vrot.lane.b32.xlu0 %v2599, 4
    %v2641 = vpop.permute.xlu0 %2640
    %vm2656 = vcmask 129056
    %2657 = vst.msk [vmem:[#allocation8 + $0x8] sm:$0x7f] %vm2656, %v2615
    %2658 = vst.msk [vmem:[#allocation8 + $0x20] sm:$0x7f] %vm2656, %v2617
    %2659 = vst.msk [vmem:[#allocation8 + $0x38] sm:$0x7f] %vm2656, %v2619
    %2660 = vst.msk [vmem:[#allocation8 + $0x50] sm:$0x7f] %vm2656, %v2621
    %2661 = vst.msk [vmem:[#allocation8 + $0x68] sm:$0x7f] %vm2656, %v2623
    %2662 = vst.msk [vmem:[#allocation8 + $0x80] sm:$0x7f] %vm2656, %v2625
    %2663 = vst.msk [vmem:[#allocation8 + $0x98] sm:$0x7f] %vm2656, %v2627
    %2664 = vst.msk [vmem:[#allocation8 + $0xb0] sm:$0x7f] %vm2656, %v2629
    %2665 = vst.msk [vmem:[#allocation8 + $0xc8] sm:$0x7f] %vm2656, %v2631
    %2666 = vst.msk [vmem:[#allocation8 + $0xe0] sm:$0x7f] %vm2656, %v2633
    %2667 = vst.msk [vmem:[#allocation8 + $0xf8] sm:$0x7f] %vm2656, %v2635
    %2668 = vst.msk [vmem:[#allocation8 + $0x110] sm:$0x7f] %vm2656, %v2637
    %2669 = vst.msk [vmem:[#allocation8 + $0x128] sm:$0x7f] %vm2656, %v2639
    %2670 = vst.msk [vmem:[#allocation8 + $0x140] sm:$0x7f] %vm2656, %v2641
    %v2671 = vld [vmem:[%s1525 + $0x1] sm:$0x7f]
    %v2672 = vld [vmem:[%s1525 + $0x11] sm:$0x7f]
    %v2673 = vld [vmem:[%s1525 + $0x21] sm:$0x7f]
    %v2674 = vld [vmem:[%s1525 + $0x31] sm:$0x7f]
    %v2675 = vld [vmem:[%s1525 + $0x41] sm:$0x7f]
    %v2676 = vld [vmem:[%s1525 + $0x51] sm:$0x7f]
    %v2677 = vld [vmem:[%s1525 + $0x61] sm:$0x7f]
    %v2678 = vld [vmem:[%s1525 + $0x91] sm:$0x7f]
    %v2679 = vld [vmem:[%s1525 + $0xa1] sm:$0x7f]
    %v2680 = vld [vmem:[%s1525 + $0xb1] sm:$0x7f]
    %v2681 = vld [vmem:[%s1525 + $0xc1] sm:$0x7f]
    %v2682 = vld [vmem:[%s1525 + $0xd1] sm:$0x7f]
    %v2683 = vld [vmem:[%s1525 + $0xe1] sm:$0x7f]
    %v2684 = vld [vmem:[%s1525 + $0xf1] sm:$0x7f]
    %2699 = vrot.lane.b32.xlu0 %v2671, 16
    %v2700 = vpop.permute.xlu0 %2699
    %2701 = vrot.lane.b32.xlu0 %v2672, 16
    %v2702 = vpop.permute.xlu0 %2701
    %2703 = vrot.lane.b32.xlu0 %v2673, 16
    %v2704 = vpop.permute.xlu0 %2703
    %2705 = vrot.lane.b32.xlu0 %v2674, 16
    %v2706 = vpop.permute.xlu0 %2705
    %2707 = vrot.lane.b32.xlu0 %v2675, 16
    %v2708 = vpop.permute.xlu0 %2707
    %2709 = vrot.lane.b32.xlu0 %v2676, 16
    %v2710 = vpop.permute.xlu0 %2709
    %2711 = vrot.lane.b32.xlu0 %v2677, 16
    %v2712 = vpop.permute.xlu0 %2711
    %2713 = vrot.lane.b32.xlu0 %v2678, 16
    %v2714 = vpop.permute.xlu0 %2713
    %2715 = vrot.lane.b32.xlu0 %v2679, 16
    %v2716 = vpop.permute.xlu0 %2715
    %2717 = vrot.lane.b32.xlu0 %v2680, 16
    %v2718 = vpop.permute.xlu0 %2717
    %2719 = vrot.lane.b32.xlu0 %v2681, 16
    %v2720 = vpop.permute.xlu0 %2719
    %2721 = vrot.lane.b32.xlu0 %v2682, 16
    %v2722 = vpop.permute.xlu0 %2721
    %2723 = vrot.lane.b32.xlu0 %v2683, 16
    %v2724 = vpop.permute.xlu0 %2723
    %2725 = vrot.lane.b32.xlu0 %v2684, 16
    %v2726 = vpop.permute.xlu0 %2725
    %vm2741 = vcmask 227456
    %2742 = vst.msk [vmem:[#allocation8 + $0x8] sm:$0x7f] %vm2741, %v2700
    %2743 = vst.msk [vmem:[#allocation8 + $0x20] sm:$0x7f] %vm2741, %v2702
    %2744 = vst.msk [vmem:[#allocation8 + $0x38] sm:$0x7f] %vm2741, %v2704
    %2745 = vst.msk [vmem:[#allocation8 + $0x50] sm:$0x7f] %vm2741, %v2706
    %2746 = vst.msk [vmem:[#allocation8 + $0x68] sm:$0x7f] %vm2741, %v2708
    %2747 = vst.msk [vmem:[#allocation8 + $0x80] sm:$0x7f] %vm2741, %v2710
    %2748 = vst.msk [vmem:[#allocation8 + $0x98] sm:$0x7f] %vm2741, %v2712
    %2749 = vst.msk [vmem:[#allocation8 + $0xb0] sm:$0x7f] %vm2741, %v2714
    %2750 = vst.msk [vmem:[#allocation8 + $0xc8] sm:$0x7f] %vm2741, %v2716
    %2751 = vst.msk [vmem:[#allocation8 + $0xe0] sm:$0x7f] %vm2741, %v2718
    %2752 = vst.msk [vmem:[#allocation8 + $0xf8] sm:$0x7f] %vm2741, %v2720
    %2753 = vst.msk [vmem:[#allocation8 + $0x110] sm:$0x7f] %vm2741, %v2722
    %2754 = vst.msk [vmem:[#allocation8 + $0x128] sm:$0x7f] %vm2741, %v2724
    %2755 = vst.msk [vmem:[#allocation8 + $0x140] sm:$0x7f] %vm2741, %v2726
    %v2756 = vld [vmem:[%s1529 + $0x1] sm:$0x7f]
    %v2757 = vld [vmem:[%s1529 + $0x11] sm:$0x7f]
    %v2758 = vld [vmem:[%s1529 + $0x21] sm:$0x7f]
    %v2759 = vld [vmem:[%s1529 + $0x31] sm:$0x7f]
    %v2760 = vld [vmem:[%s1529 + $0x41] sm:$0x7f]
    %v2761 = vld [vmem:[%s1529 + $0x51] sm:$0x7f]
    %v2762 = vld [vmem:[%s1529 + $0x61] sm:$0x7f]
    %v2763 = vld [vmem:[%s1529 + $0x91] sm:$0x7f]
    %v2764 = vld [vmem:[%s1529 + $0xa1] sm:$0x7f]
    %v2765 = vld [vmem:[%s1529 + $0xb1] sm:$0x7f]
    %v2766 = vld [vmem:[%s1529 + $0xc1] sm:$0x7f]
    %v2767 = vld [vmem:[%s1529 + $0xd1] sm:$0x7f]
    %v2768 = vld [vmem:[%s1529 + $0xe1] sm:$0x7f]
    %v2769 = vld [vmem:[%s1529 + $0xf1] sm:$0x7f]
    %2784 = vrot.lane.b32.xlu0 %v2756, 28
    %v2785 = vpop.permute.xlu0 %2784
    %2786 = vrot.lane.b32.xlu0 %v2757, 28
    %v2787 = vpop.permute.xlu0 %2786
    %2788 = vrot.lane.b32.xlu0 %v2758, 28
    %v2789 = vpop.permute.xlu0 %2788
    %2790 = vrot.lane.b32.xlu0 %v2759, 28
    %v2791 = vpop.permute.xlu0 %2790
    %2792 = vrot.lane.b32.xlu0 %v2760, 28
    %v2793 = vpop.permute.xlu0 %2792
    %2794 = vrot.lane.b32.xlu0 %v2761, 28
    %v2795 = vpop.permute.xlu0 %2794
    %2796 = vrot.lane.b32.xlu0 %v2762, 28
    %v2797 = vpop.permute.xlu0 %2796
    %2798 = vrot.lane.b32.xlu0 %v2763, 28
    %v2799 = vpop.permute.xlu0 %2798
    %2800 = vrot.lane.b32.xlu0 %v2764, 28
    %v2801 = vpop.permute.xlu0 %2800
    %2802 = vrot.lane.b32.xlu0 %v2765, 28
    %v2803 = vpop.permute.xlu0 %2802
    %2804 = vrot.lane.b32.xlu0 %v2766, 28
    %v2805 = vpop.permute.xlu0 %2804
    %2806 = vrot.lane.b32.xlu0 %v2767, 28
    %v2807 = vpop.permute.xlu0 %2806
    %2808 = vrot.lane.b32.xlu0 %v2768, 28
    %v2809 = vpop.permute.xlu0 %2808
    %2810 = vrot.lane.b32.xlu0 %v2769, 28
    %v2811 = vpop.permute.xlu0 %2810
    %vm2826 = vcmask 325856
    %2827 = vst.msk [vmem:[#allocation8 + $0x8] sm:$0x7f] %vm2826, %v2785
    %2828 = vst.msk [vmem:[#allocation8 + $0x20] sm:$0x7f] %vm2826, %v2787
    %2829 = vst.msk [vmem:[#allocation8 + $0x38] sm:$0x7f] %vm2826, %v2789
    %2830 = vst.msk [vmem:[#allocation8 + $0x50] sm:$0x7f] %vm2826, %v2791
    %2831 = vst.msk [vmem:[#allocation8 + $0x68] sm:$0x7f] %vm2826, %v2793
    %2832 = vst.msk [vmem:[#allocation8 + $0x80] sm:$0x7f] %vm2826, %v2795
    %2833 = vst.msk [vmem:[#allocation8 + $0x98] sm:$0x7f] %vm2826, %v2797
    %2834 = vst.msk [vmem:[#allocation8 + $0xb0] sm:$0x7f] %vm2826, %v2799
    %2835 = vst.msk [vmem:[#allocation8 + $0xc8] sm:$0x7f] %vm2826, %v2801
    %2836 = vst.msk [vmem:[#allocation8 + $0xe0] sm:$0x7f] %vm2826, %v2803
    %2837 = vst.msk [vmem:[#allocation8 + $0xf8] sm:$0x7f] %vm2826, %v2805
    %2838 = vst.msk [vmem:[#allocation8 + $0x110] sm:$0x7f] %vm2826, %v2807
    %2839 = vst.msk [vmem:[#allocation8 + $0x128] sm:$0x7f] %vm2826, %v2809
    %2840 = vst.msk [vmem:[#allocation8 + $0x140] sm:$0x7f] %vm2826, %v2811
    %v2841 = vld [vmem:[%s1525 + $0x2] sm:$0x7f]
    %v2842 = vld [vmem:[%s1525 + $0x12] sm:$0x7f]
    %v2843 = vld [vmem:[%s1525 + $0x22] sm:$0x7f]
    %v2844 = vld [vmem:[%s1525 + $0x32] sm:$0x7f]
    %v2845 = vld [vmem:[%s1525 + $0x42] sm:$0x7f]
    %v2846 = vld [vmem:[%s1525 + $0x52] sm:$0x7f]
    %v2847 = vld [vmem:[%s1525 + $0x62] sm:$0x7f]
    %v2848 = vld [vmem:[%s1525 + $0x92] sm:$0x7f]
    %v2849 = vld [vmem:[%s1525 + $0xa2] sm:$0x7f]
    %v2850 = vld [vmem:[%s1525 + $0xb2] sm:$0x7f]
    %v2851 = vld [vmem:[%s1525 + $0xc2] sm:$0x7f]
    %v2852 = vld [vmem:[%s1525 + $0xd2] sm:$0x7f]
    %v2853 = vld [vmem:[%s1525 + $0xe2] sm:$0x7f]
    %v2854 = vld [vmem:[%s1525 + $0xf2] sm:$0x7f]
    %2869 = vrot.lane.b32.xlu0 %v2841, 40
    %v2870 = vpop.permute.xlu0 %2869
    %2871 = vrot.lane.b32.xlu0 %v2842, 40
    %v2872 = vpop.permute.xlu0 %2871
    %2873 = vrot.lane.b32.xlu0 %v2843, 40
    %v2874 = vpop.permute.xlu0 %2873
    %2875 = vrot.lane.b32.xlu0 %v2844, 40
    %v2876 = vpop.permute.xlu0 %2875
    %2877 = vrot.lane.b32.xlu0 %v2845, 40
    %v2878 = vpop.permute.xlu0 %2877
    %2879 = vrot.lane.b32.xlu0 %v2846, 40
    %v2880 = vpop.permute.xlu0 %2879
    %2881 = vrot.lane.b32.xlu0 %v2847, 40
    %v2882 = vpop.permute.xlu0 %2881
    %2883 = vrot.lane.b32.xlu0 %v2848, 40
    %v2884 = vpop.permute.xlu0 %2883
    %2885 = vrot.lane.b32.xlu0 %v2849, 40
    %v2886 = vpop.permute.xlu0 %2885
    %2887 = vrot.lane.b32.xlu0 %v2850, 40
    %v2888 = vpop.permute.xlu0 %2887
    %2889 = vrot.lane.b32.xlu0 %v2851, 40
    %v2890 = vpop.permute.xlu0 %2889
    %2891 = vrot.lane.b32.xlu0 %v2852, 40
    %v2892 = vpop.permute.xlu0 %2891
    %2893 = vrot.lane.b32.xlu0 %v2853, 40
    %v2894 = vpop.permute.xlu0 %2893
    %2895 = vrot.lane.b32.xlu0 %v2854, 40
    %v2896 = vpop.permute.xlu0 %2895
    %vm2911 = vcmask 424256
    %2912 = vst.msk [vmem:[#allocation8 + $0x8] sm:$0x7f] %vm2911, %v2870
    %2913 = vst.msk [vmem:[#allocation8 + $0x20] sm:$0x7f] %vm2911, %v2872
    %2914 = vst.msk [vmem:[#allocation8 + $0x38] sm:$0x7f] %vm2911, %v2874
    %2915 = vst.msk [vmem:[#allocation8 + $0x50] sm:$0x7f] %vm2911, %v2876
    %2916 = vst.msk [vmem:[#allocation8 + $0x68] sm:$0x7f] %vm2911, %v2878
    %2917 = vst.msk [vmem:[#allocation8 + $0x80] sm:$0x7f] %vm2911, %v2880
    %2918 = vst.msk [vmem:[#allocation8 + $0x98] sm:$0x7f] %vm2911, %v2882
    %2919 = vst.msk [vmem:[#allocation8 + $0xb0] sm:$0x7f] %vm2911, %v2884
    %2920 = vst.msk [vmem:[#allocation8 + $0xc8] sm:$0x7f] %vm2911, %v2886
    %2921 = vst.msk [vmem:[#allocation8 + $0xe0] sm:$0x7f] %vm2911, %v2888
    %2922 = vst.msk [vmem:[#allocation8 + $0xf8] sm:$0x7f] %vm2911, %v2890
    %2923 = vst.msk [vmem:[#allocation8 + $0x110] sm:$0x7f] %vm2911, %v2892
    %2924 = vst.msk [vmem:[#allocation8 + $0x128] sm:$0x7f] %vm2911, %v2894
    %2925 = vst.msk [vmem:[#allocation8 + $0x140] sm:$0x7f] %vm2911, %v2896
    %v2926 = vld [vmem:[%s1532] sm:$0x7f]
    %v2927 = vld [vmem:[%s1532 + $0x10] sm:$0x7f]
    %v2928 = vld [vmem:[%s1532 + $0x20] sm:$0x7f]
    %v2929 = vld [vmem:[%s1532 + $0x30] sm:$0x7f]
    %v2930 = vld [vmem:[%s1532 + $0x40] sm:$0x7f]
    %v2931 = vld [vmem:[%s1532 + $0x50] sm:$0x7f]
    %v2932 = vld [vmem:[%s1532 + $0x60] sm:$0x7f]
    %v2933 = vld [vmem:[%s1532 + $0x90] sm:$0x7f]
    %v2934 = vld [vmem:[%s1532 + $0xa0] sm:$0x7f]
    %v2935 = vld [vmem:[%s1532 + $0xb0] sm:$0x7f]
    %v2936 = vld [vmem:[%s1532 + $0xc0] sm:$0x7f]
    %v2937 = vld [vmem:[%s1532 + $0xd0] sm:$0x7f]
    %v2938 = vld [vmem:[%s1532 + $0xe0] sm:$0x7f]
    %v2939 = vld [vmem:[%s1532 + $0xf0] sm:$0x7f]
    %2954 = vrot.lane.b32.xlu0 %v2926, 52
    %v2955 = vpop.permute.xlu0 %2954
    %2956 = vrot.lane.b32.xlu0 %v2927, 52
    %v2957 = vpop.permute.xlu0 %2956
    %2958 = vrot.lane.b32.xlu0 %v2928, 52
    %v2959 = vpop.permute.xlu0 %2958
    %2960 = vrot.lane.b32.xlu0 %v2929, 52
    %v2961 = vpop.permute.xlu0 %2960
    %2962 = vrot.lane.b32.xlu0 %v2930, 52
    %v2963 = vpop.permute.xlu0 %2962
    %2964 = vrot.lane.b32.xlu0 %v2931, 52
    %v2965 = vpop.permute.xlu0 %2964
    %2966 = vrot.lane.b32.xlu0 %v2932, 52
    %v2967 = vpop.permute.xlu0 %2966
    %2968 = vrot.lane.b32.xlu0 %v2933, 52
    %v2969 = vpop.permute.xlu0 %2968
    %2970 = vrot.lane.b32.xlu0 %v2934, 52
    %v2971 = vpop.permute.xlu0 %2970
    %2972 = vrot.lane.b32.xlu0 %v2935, 52
    %v2973 = vpop.permute.xlu0 %2972
    %2974 = vrot.lane.b32.xlu0 %v2936, 52
    %v2975 = vpop.permute.xlu0 %2974
    %2976 = vrot.lane.b32.xlu0 %v2937, 52
    %v2977 = vpop.permute.xlu0 %2976
    %2978 = vrot.lane.b32.xlu0 %v2938, 52
    %v2979 = vpop.permute.xlu0 %2978
    %2980 = vrot.lane.b32.xlu0 %v2939, 52
    %v2981 = vpop.permute.xlu0 %2980
    %vm2996 = vcmask 522656
    %2997 = vst.msk [vmem:[#allocation8 + $0x8] sm:$0x7f] %vm2996, %v2955
    %2998 = vst.msk [vmem:[#allocation8 + $0x20] sm:$0x7f] %vm2996, %v2957
    %2999 = vst.msk [vmem:[#allocation8 + $0x38] sm:$0x7f] %vm2996, %v2959
    %3000 = vst.msk [vmem:[#allocation8 + $0x50] sm:$0x7f] %vm2996, %v2961
    %3001 = vst.msk [vmem:[#allocation8 + $0x68] sm:$0x7f] %vm2996, %v2963
    %3002 = vst.msk [vmem:[#allocation8 + $0x80] sm:$0x7f] %vm2996, %v2965
    %3003 = vst.msk [vmem:[#allocation8 + $0x98] sm:$0x7f] %vm2996, %v2967
    %3004 = vst.msk [vmem:[#allocation8 + $0xb0] sm:$0x7f] %vm2996, %v2969
    %3005 = vst.msk [vmem:[#allocation8 + $0xc8] sm:$0x7f] %vm2996, %v2971
    %3006 = vst.msk [vmem:[#allocation8 + $0xe0] sm:$0x7f] %vm2996, %v2973
    %3007 = vst.msk [vmem:[#allocation8 + $0xf8] sm:$0x7f] %vm2996, %v2975
    %3008 = vst.msk [vmem:[#allocation8 + $0x110] sm:$0x7f] %vm2996, %v2977
    %3009 = vst.msk [vmem:[#allocation8 + $0x128] sm:$0x7f] %vm2996, %v2979
    %3010 = vst.msk [vmem:[#allocation8 + $0x140] sm:$0x7f] %vm2996, %v2981
    %v3011 = vld [vmem:[%s1535] sm:$0x7f]
    %v3012 = vld [vmem:[%s1535 + $0x10] sm:$0x7f]
    %v3013 = vld [vmem:[%s1535 + $0x20] sm:$0x7f]
    %v3014 = vld [vmem:[%s1535 + $0x30] sm:$0x7f]
    %v3015 = vld [vmem:[%s1535 + $0x40] sm:$0x7f]
    %v3016 = vld [vmem:[%s1535 + $0x50] sm:$0x7f]
    %v3017 = vld [vmem:[%s1535 + $0x60] sm:$0x7f]
    %v3018 = vld [vmem:[%s1535 + $0x90] sm:$0x7f]
    %v3019 = vld [vmem:[%s1535 + $0xa0] sm:$0x7f]
    %v3020 = vld [vmem:[%s1535 + $0xb0] sm:$0x7f]
    %v3021 = vld [vmem:[%s1535 + $0xc0] sm:$0x7f]
    %v3022 = vld [vmem:[%s1535 + $0xd0] sm:$0x7f]
    %v3023 = vld [vmem:[%s1535 + $0xe0] sm:$0x7f]
    %v3024 = vld [vmem:[%s1535 + $0xf0] sm:$0x7f]
    %3039 = vrot.lane.b32.xlu0 %v3011, 64
    %v3040 = vpop.permute.xlu0 %3039
    %3041 = vrot.lane.b32.xlu0 %v3012, 64
    %v3042 = vpop.permute.xlu0 %3041
    %3043 = vrot.lane.b32.xlu0 %v3013, 64
    %v3044 = vpop.permute.xlu0 %3043
    %3045 = vrot.lane.b32.xlu0 %v3014, 64
    %v3046 = vpop.permute.xlu0 %3045
    %3047 = vrot.lane.b32.xlu0 %v3015, 64
    %v3048 = vpop.permute.xlu0 %3047
    %3049 = vrot.lane.b32.xlu0 %v3016, 64
    %v3050 = vpop.permute.xlu0 %3049
    %3051 = vrot.lane.b32.xlu0 %v3017, 64
    %v3052 = vpop.permute.xlu0 %3051
    %3053 = vrot.lane.b32.xlu0 %v3018, 64
    %v3054 = vpop.permute.xlu0 %3053
    %3055 = vrot.lane.b32.xlu0 %v3019, 64
    %v3056 = vpop.permute.xlu0 %3055
    %3057 = vrot.lane.b32.xlu0 %v3020, 64
    %v3058 = vpop.permute.xlu0 %3057
    %3059 = vrot.lane.b32.xlu0 %v3021, 64
    %v3060 = vpop.permute.xlu0 %3059
    %3061 = vrot.lane.b32.xlu0 %v3022, 64
    %v3062 = vpop.permute.xlu0 %3061
    %3063 = vrot.lane.b32.xlu0 %v3023, 64
    %v3064 = vpop.permute.xlu0 %3063
    %3065 = vrot.lane.b32.xlu0 %v3024, 64
    %v3066 = vpop.permute.xlu0 %3065
    %vm3081 = vcmask 621056
    %3082 = vst.msk [vmem:[#allocation8 + $0x8] sm:$0x7f] %vm3081, %v3040
    %3083 = vst.msk [vmem:[#allocation8 + $0x20] sm:$0x7f] %vm3081, %v3042
    %3084 = vst.msk [vmem:[#allocation8 + $0x38] sm:$0x7f] %vm3081, %v3044
    %3085 = vst.msk [vmem:[#allocation8 + $0x50] sm:$0x7f] %vm3081, %v3046
    %3086 = vst.msk [vmem:[#allocation8 + $0x68] sm:$0x7f] %vm3081, %v3048
    %3087 = vst.msk [vmem:[#allocation8 + $0x80] sm:$0x7f] %vm3081, %v3050
    %3088 = vst.msk [vmem:[#allocation8 + $0x98] sm:$0x7f] %vm3081, %v3052
    %3089 = vst.msk [vmem:[#allocation8 + $0xb0] sm:$0x7f] %vm3081, %v3054
    %3090 = vst.msk [vmem:[#allocation8 + $0xc8] sm:$0x7f] %vm3081, %v3056
    %3091 = vst.msk [vmem:[#allocation8 + $0xe0] sm:$0x7f] %vm3081, %v3058
    %3092 = vst.msk [vmem:[#allocation8 + $0xf8] sm:$0x7f] %vm3081, %v3060
    %3093 = vst.msk [vmem:[#allocation8 + $0x110] sm:$0x7f] %vm3081, %v3062
    %3094 = vst.msk [vmem:[#allocation8 + $0x128] sm:$0x7f] %vm3081, %v3064
    %3095 = vst.msk [vmem:[#allocation8 + $0x140] sm:$0x7f] %vm3081, %v3066
    %v3096 = vld [vmem:[%s1532 + $0x1] sm:$0x7f]
    %v3097 = vld [vmem:[%s1532 + $0x11] sm:$0x7f]
    %v3098 = vld [vmem:[%s1532 + $0x21] sm:$0x7f]
    %v3099 = vld [vmem:[%s1532 + $0x31] sm:$0x7f]
    %v3100 = vld [vmem:[%s1532 + $0x41] sm:$0x7f]
    %v3101 = vld [vmem:[%s1532 + $0x51] sm:$0x7f]
    %v3102 = vld [vmem:[%s1532 + $0x61] sm:$0x7f]
    %v3103 = vld [vmem:[%s1532 + $0x91] sm:$0x7f]
    %v3104 = vld [vmem:[%s1532 + $0xa1] sm:$0x7f]
    %v3105 = vld [vmem:[%s1532 + $0xb1] sm:$0x7f]
    %v3106 = vld [vmem:[%s1532 + $0xc1] sm:$0x7f]
    %v3107 = vld [vmem:[%s1532 + $0xd1] sm:$0x7f]
    %v3108 = vld [vmem:[%s1532 + $0xe1] sm:$0x7f]
    %v3109 = vld [vmem:[%s1532 + $0xf1] sm:$0x7f]
    %3124 = vrot.lane.b32.xlu0 %v3096, 76
    %v3125 = vpop.permute.xlu0 %3124
    %3126 = vrot.lane.b32.xlu0 %v3097, 76
    %v3127 = vpop.permute.xlu0 %3126
    %3128 = vrot.lane.b32.xlu0 %v3098, 76
    %v3129 = vpop.permute.xlu0 %3128
    %3130 = vrot.lane.b32.xlu0 %v3099, 76
    %v3131 = vpop.permute.xlu0 %3130
    %3132 = vrot.lane.b32.xlu0 %v3100, 76
    %v3133 = vpop.permute.xlu0 %3132
    %3134 = vrot.lane.b32.xlu0 %v3101, 76
    %v3135 = vpop.permute.xlu0 %3134
    %3136 = vrot.lane.b32.xlu0 %v3102, 76
    %v3137 = vpop.permute.xlu0 %3136
    %3138 = vrot.lane.b32.xlu0 %v3103, 76
    %v3139 = vpop.permute.xlu0 %3138
    %3140 = vrot.lane.b32.xlu0 %v3104, 76
    %v3141 = vpop.permute.xlu0 %3140
    %3142 = vrot.lane.b32.xlu0 %v3105, 76
    %v3143 = vpop.permute.xlu0 %3142
    %3144 = vrot.lane.b32.xlu0 %v3106, 76
    %v3145 = vpop.permute.xlu0 %3144
    %3146 = vrot.lane.b32.xlu0 %v3107, 76
    %v3147 = vpop.permute.xlu0 %3146
    %3148 = vrot.lane.b32.xlu0 %v3108, 76
    %v3149 = vpop.permute.xlu0 %3148
    %3150 = vrot.lane.b32.xlu0 %v3109, 76
    %v3151 = vpop.permute.xlu0 %3150
    %vm3166 = vcmask 719456
    %3167 = vst.msk [vmem:[#allocation8 + $0x8] sm:$0x7f] %vm3166, %v3125
    %3168 = vst.msk [vmem:[#allocation8 + $0x20] sm:$0x7f] %vm3166, %v3127
    %3169 = vst.msk [vmem:[#allocation8 + $0x38] sm:$0x7f] %vm3166, %v3129
    %3170 = vst.msk [vmem:[#allocation8 + $0x50] sm:$0x7f] %vm3166, %v3131
    %3171 = vst.msk [vmem:[#allocation8 + $0x68] sm:$0x7f] %vm3166, %v3133
    %3172 = vst.msk [vmem:[#allocation8 + $0x80] sm:$0x7f] %vm3166, %v3135
    %3173 = vst.msk [vmem:[#allocation8 + $0x98] sm:$0x7f] %vm3166, %v3137
    %3174 = vst.msk [vmem:[#allocation8 + $0xb0] sm:$0x7f] %vm3166, %v3139
    %3175 = vst.msk [vmem:[#allocation8 + $0xc8] sm:$0x7f] %vm3166, %v3141
    %3176 = vst.msk [vmem:[#allocation8 + $0xe0] sm:$0x7f] %vm3166, %v3143
    %3177 = vst.msk [vmem:[#allocation8 + $0xf8] sm:$0x7f] %vm3166, %v3145
    %3178 = vst.msk [vmem:[#allocation8 + $0x110] sm:$0x7f] %vm3166, %v3147
    %3179 = vst.msk [vmem:[#allocation8 + $0x128] sm:$0x7f] %vm3166, %v3149
    %3180 = vst.msk [vmem:[#allocation8 + $0x140] sm:$0x7f] %vm3166, %v3151
    %v3181 = vld [vmem:[%s1535 + $0x1] sm:$0x7f]
    %v3182 = vld [vmem:[%s1535 + $0x11] sm:$0x7f]
    %v3183 = vld [vmem:[%s1535 + $0x21] sm:$0x7f]
    %v3184 = vld [vmem:[%s1535 + $0x31] sm:$0x7f]
    %v3185 = vld [vmem:[%s1535 + $0x41] sm:$0x7f]
    %v3186 = vld [vmem:[%s1535 + $0x51] sm:$0x7f]
    %v3187 = vld [vmem:[%s1535 + $0x61] sm:$0x7f]
    %v3188 = vld [vmem:[%s1535 + $0x91] sm:$0x7f]
    %v3189 = vld [vmem:[%s1535 + $0xa1] sm:$0x7f]
    %v3190 = vld [vmem:[%s1535 + $0xb1] sm:$0x7f]
    %v3191 = vld [vmem:[%s1535 + $0xc1] sm:$0x7f]
    %v3192 = vld [vmem:[%s1535 + $0xd1] sm:$0x7f]
    %v3193 = vld [vmem:[%s1535 + $0xe1] sm:$0x7f]
    %v3194 = vld [vmem:[%s1535 + $0xf1] sm:$0x7f]
    %3209 = vrot.lane.b32.xlu0 %v3181, 88
    %v3210 = vpop.permute.xlu0 %3209
    %3211 = vrot.lane.b32.xlu0 %v3182, 88
    %v3212 = vpop.permute.xlu0 %3211
    %3213 = vrot.lane.b32.xlu0 %v3183, 88
    %v3214 = vpop.permute.xlu0 %3213
    %3215 = vrot.lane.b32.xlu0 %v3184, 88
    %v3216 = vpop.permute.xlu0 %3215
    %3217 = vrot.lane.b32.xlu0 %v3185, 88
    %v3218 = vpop.permute.xlu0 %3217
    %3219 = vrot.lane.b32.xlu0 %v3186, 88
    %v3220 = vpop.permute.xlu0 %3219
    %3221 = vrot.lane.b32.xlu0 %v3187, 88
    %v3222 = vpop.permute.xlu0 %3221
    %3223 = vrot.lane.b32.xlu0 %v3188, 88
    %v3224 = vpop.permute.xlu0 %3223
    %3225 = vrot.lane.b32.xlu0 %v3189, 88
    %v3226 = vpop.permute.xlu0 %3225
    %3227 = vrot.lane.b32.xlu0 %v3190, 88
    %v3228 = vpop.permute.xlu0 %3227
    %3229 = vrot.lane.b32.xlu0 %v3191, 88
    %v3230 = vpop.permute.xlu0 %3229
    %3231 = vrot.lane.b32.xlu0 %v3192, 88
    %v3232 = vpop.permute.xlu0 %3231
    %3233 = vrot.lane.b32.xlu0 %v3193, 88
    %v3234 = vpop.permute.xlu0 %3233
    %3235 = vrot.lane.b32.xlu0 %v3194, 88
    %v3236 = vpop.permute.xlu0 %3235
    %vm3251 = vcmask 817856
    %3252 = vst.msk [vmem:[#allocation8 + $0x8] sm:$0x7f] %vm3251, %v3210
    %3253 = vst.msk [vmem:[#allocation8 + $0x20] sm:$0x7f] %vm3251, %v3212
    %3254 = vst.msk [vmem:[#allocation8 + $0x38] sm:$0x7f] %vm3251, %v3214
    %3255 = vst.msk [vmem:[#allocation8 + $0x50] sm:$0x7f] %vm3251, %v3216
    %3256 = vst.msk [vmem:[#allocation8 + $0x68] sm:$0x7f] %vm3251, %v3218
    %3257 = vst.msk [vmem:[#allocation8 + $0x80] sm:$0x7f] %vm3251, %v3220
    %3258 = vst.msk [vmem:[#allocation8 + $0x98] sm:$0x7f] %vm3251, %v3222
    %3259 = vst.msk [vmem:[#allocation8 + $0xb0] sm:$0x7f] %vm3251, %v3224
    %3260 = vst.msk [vmem:[#allocation8 + $0xc8] sm:$0x7f] %vm3251, %v3226
    %3261 = vst.msk [vmem:[#allocation8 + $0xe0] sm:$0x7f] %vm3251, %v3228
    %3262 = vst.msk [vmem:[#allocation8 + $0xf8] sm:$0x7f] %vm3251, %v3230
    %3263 = vst.msk [vmem:[#allocation8 + $0x110] sm:$0x7f] %vm3251, %v3232
    %3264 = vst.msk [vmem:[#allocation8 + $0x128] sm:$0x7f] %vm3251, %v3234
    %3265 = vst.msk [vmem:[#allocation8 + $0x140] sm:$0x7f] %vm3251, %v3236
    %v3266 = vld [vmem:[%s1532 + $0x2] sm:$0x7f]
    %v3267 = vld [vmem:[%s1532 + $0x12] sm:$0x7f]
    %v3268 = vld [vmem:[%s1532 + $0x22] sm:$0x7f]
    %v3269 = vld [vmem:[%s1532 + $0x32] sm:$0x7f]
    %v3270 = vld [vmem:[%s1532 + $0x42] sm:$0x7f]
    %v3271 = vld [vmem:[%s1532 + $0x52] sm:$0x7f]
    %v3272 = vld [vmem:[%s1532 + $0x62] sm:$0x7f]
    %v3273 = vld [vmem:[%s1532 + $0x92] sm:$0x7f]
    %v3274 = vld [vmem:[%s1532 + $0xa2] sm:$0x7f]
    %v3275 = vld [vmem:[%s1532 + $0xb2] sm:$0x7f]
    %v3276 = vld [vmem:[%s1532 + $0xc2] sm:$0x7f]
    %v3277 = vld [vmem:[%s1532 + $0xd2] sm:$0x7f]
    %v3278 = vld [vmem:[%s1532 + $0xe2] sm:$0x7f]
    %v3279 = vld [vmem:[%s1532 + $0xf2] sm:$0x7f]
    %3294 = vrot.lane.b32.xlu0 %v3266, 100
    %v3295 = vpop.permute.xlu0 %3294
    %3296 = vrot.lane.b32.xlu0 %v3267, 100
    %v3297 = vpop.permute.xlu0 %3296
    %3298 = vrot.lane.b32.xlu0 %v3268, 100
    %v3299 = vpop.permute.xlu0 %3298
    %3300 = vrot.lane.b32.xlu0 %v3269, 100
    %v3301 = vpop.permute.xlu0 %3300
    %3302 = vrot.lane.b32.xlu0 %v3270, 100
    %v3303 = vpop.permute.xlu0 %3302
    %3304 = vrot.lane.b32.xlu0 %v3271, 100
    %v3305 = vpop.permute.xlu0 %3304
    %3306 = vrot.lane.b32.xlu0 %v3272, 100
    %v3307 = vpop.permute.xlu0 %3306
    %3308 = vrot.lane.b32.xlu0 %v3273, 100
    %v3309 = vpop.permute.xlu0 %3308
    %3310 = vrot.lane.b32.xlu0 %v3274, 100
    %v3311 = vpop.permute.xlu0 %3310
    %3312 = vrot.lane.b32.xlu0 %v3275, 100
    %v3313 = vpop.permute.xlu0 %3312
    %3314 = vrot.lane.b32.xlu0 %v3276, 100
    %v3315 = vpop.permute.xlu0 %3314
    %3316 = vrot.lane.b32.xlu0 %v3277, 100
    %v3317 = vpop.permute.xlu0 %3316
    %3318 = vrot.lane.b32.xlu0 %v3278, 100
    %v3319 = vpop.permute.xlu0 %3318
    %3320 = vrot.lane.b32.xlu0 %v3279, 100
    %v3321 = vpop.permute.xlu0 %3320
    %vm3336 = vcmask 916256
    %3337 = vst.msk [vmem:[#allocation8 + $0x8] sm:$0x7f] %vm3336, %v3295
    %3338 = vst.msk [vmem:[#allocation8 + $0x20] sm:$0x7f] %vm3336, %v3297
    %3339 = vst.msk [vmem:[#allocation8 + $0x38] sm:$0x7f] %vm3336, %v3299
    %3340 = vst.msk [vmem:[#allocation8 + $0x50] sm:$0x7f] %vm3336, %v3301
    %3341 = vst.msk [vmem:[#allocation8 + $0x68] sm:$0x7f] %vm3336, %v3303
    %3342 = vst.msk [vmem:[#allocation8 + $0x80] sm:$0x7f] %vm3336, %v3305
    %3343 = vst.msk [vmem:[#allocation8 + $0x98] sm:$0x7f] %vm3336, %v3307
    %3344 = vst.msk [vmem:[#allocation8 + $0xb0] sm:$0x7f] %vm3336, %v3309
    %3345 = vst.msk [vmem:[#allocation8 + $0xc8] sm:$0x7f] %vm3336, %v3311
    %3346 = vst.msk [vmem:[#allocation8 + $0xe0] sm:$0x7f] %vm3336, %v3313
    %3347 = vst.msk [vmem:[#allocation8 + $0xf8] sm:$0x7f] %vm3336, %v3315
    %3348 = vst.msk [vmem:[#allocation8 + $0x110] sm:$0x7f] %vm3336, %v3317
    %3349 = vst.msk [vmem:[#allocation8 + $0x128] sm:$0x7f] %vm3336, %v3319
    %3350 = vst.msk [vmem:[#allocation8 + $0x140] sm:$0x7f] %vm3336, %v3321
    %v3351 = vld [vmem:[%s1538] sm:$0x7f]
    %v3352 = vld [vmem:[%s1538 + $0x10] sm:$0x7f]
    %v3353 = vld [vmem:[%s1538 + $0x20] sm:$0x7f]
    %v3354 = vld [vmem:[%s1538 + $0x30] sm:$0x7f]
    %v3355 = vld [vmem:[%s1538 + $0x40] sm:$0x7f]
    %v3356 = vld [vmem:[%s1538 + $0x50] sm:$0x7f]
    %v3357 = vld [vmem:[%s1538 + $0x60] sm:$0x7f]
    %v3358 = vld [vmem:[%s1538 + $0x90] sm:$0x7f]
    %v3359 = vld [vmem:[%s1538 + $0xa0] sm:$0x7f]
    %v3360 = vld [vmem:[%s1538 + $0xb0] sm:$0x7f]
    %v3361 = vld [vmem:[%s1538 + $0xc0] sm:$0x7f]
    %v3362 = vld [vmem:[%s1538 + $0xd0] sm:$0x7f]
    %v3363 = vld [vmem:[%s1538 + $0xe0] sm:$0x7f]
    %v3364 = vld [vmem:[%s1538 + $0xf0] sm:$0x7f]
    %3379 = vrot.lane.b32.xlu0 %v3351, 112
    %v3380 = vpop.permute.xlu0 %3379
    %3381 = vrot.lane.b32.xlu0 %v3352, 112
    %v3382 = vpop.permute.xlu0 %3381
    %3383 = vrot.lane.b32.xlu0 %v3353, 112
    %v3384 = vpop.permute.xlu0 %3383
    %3385 = vrot.lane.b32.xlu0 %v3354, 112
    %v3386 = vpop.permute.xlu0 %3385
    %3387 = vrot.lane.b32.xlu0 %v3355, 112
    %v3388 = vpop.permute.xlu0 %3387
    %3389 = vrot.lane.b32.xlu0 %v3356, 112
    %v3390 = vpop.permute.xlu0 %3389
    %3391 = vrot.lane.b32.xlu0 %v3357, 112
    %v3392 = vpop.permute.xlu0 %3391
    %3393 = vrot.lane.b32.xlu0 %v3358, 112
    %v3394 = vpop.permute.xlu0 %3393
    %3395 = vrot.lane.b32.xlu0 %v3359, 112
    %v3396 = vpop.permute.xlu0 %3395
    %3397 = vrot.lane.b32.xlu0 %v3360, 112
    %v3398 = vpop.permute.xlu0 %3397
    %3399 = vrot.lane.b32.xlu0 %v3361, 112
    %v3400 = vpop.permute.xlu0 %3399
    %3401 = vrot.lane.b32.xlu0 %v3362, 112
    %v3402 = vpop.permute.xlu0 %3401
    %3403 = vrot.lane.b32.xlu0 %v3363, 112
    %v3404 = vpop.permute.xlu0 %3403
    %3405 = vrot.lane.b32.xlu0 %v3364, 112
    %v3406 = vpop.permute.xlu0 %3405
    %vm3421 = vcmask 1014656
    %3422 = vst.msk [vmem:[#allocation8 + $0x8] sm:$0x7f] %vm3421, %v3380
    %3423 = vst.msk [vmem:[#allocation8 + $0x20] sm:$0x7f] %vm3421, %v3382
    %3424 = vst.msk [vmem:[#allocation8 + $0x38] sm:$0x7f] %vm3421, %v3384
    %3425 = vst.msk [vmem:[#allocation8 + $0x50] sm:$0x7f] %vm3421, %v3386
    %3426 = vst.msk [vmem:[#allocation8 + $0x68] sm:$0x7f] %vm3421, %v3388
    %3427 = vst.msk [vmem:[#allocation8 + $0x80] sm:$0x7f] %vm3421, %v3390
    %3428 = vst.msk [vmem:[#allocation8 + $0x98] sm:$0x7f] %vm3421, %v3392
    %3429 = vst.msk [vmem:[#allocation8 + $0xb0] sm:$0x7f] %vm3421, %v3394
    %3430 = vst.msk [vmem:[#allocation8 + $0xc8] sm:$0x7f] %vm3421, %v3396
    %3431 = vst.msk [vmem:[#allocation8 + $0xe0] sm:$0x7f] %vm3421, %v3398
    %3432 = vst.msk [vmem:[#allocation8 + $0xf8] sm:$0x7f] %vm3421, %v3400
    %3433 = vst.msk [vmem:[#allocation8 + $0x110] sm:$0x7f] %vm3421, %v3402
    %3434 = vst.msk [vmem:[#allocation8 + $0x128] sm:$0x7f] %vm3421, %v3404
    %3435 = vst.msk [vmem:[#allocation8 + $0x140] sm:$0x7f] %vm3421, %v3406
    %v3436 = vld [vmem:[%s1541] sm:$0x7f]
    %v3437 = vld [vmem:[%s1541 + $0x10] sm:$0x7f]
    %v3438 = vld [vmem:[%s1541 + $0x20] sm:$0x7f]
    %v3439 = vld [vmem:[%s1541 + $0x30] sm:$0x7f]
    %v3440 = vld [vmem:[%s1541 + $0x40] sm:$0x7f]
    %v3441 = vld [vmem:[%s1541 + $0x50] sm:$0x7f]
    %v3442 = vld [vmem:[%s1541 + $0x60] sm:$0x7f]
    %v3443 = vld [vmem:[%s1541 + $0x90] sm:$0x7f]
    %v3444 = vld [vmem:[%s1541 + $0xa0] sm:$0x7f]
    %v3445 = vld [vmem:[%s1541 + $0xb0] sm:$0x7f]
    %v3446 = vld [vmem:[%s1541 + $0xc0] sm:$0x7f]
    %v3447 = vld [vmem:[%s1541 + $0xd0] sm:$0x7f]
    %v3448 = vld [vmem:[%s1541 + $0xe0] sm:$0x7f]
    %v3449 = vld [vmem:[%s1541 + $0xf0] sm:$0x7f]
    %3464 = vrot.lane.b32.xlu0 %v3436, 124
    %v3465 = vpop.permute.xlu0 %3464
    %3466 = vrot.lane.b32.xlu0 %v3437, 124
    %v3467 = vpop.permute.xlu0 %3466
    %3468 = vrot.lane.b32.xlu0 %v3438, 124
    %v3469 = vpop.permute.xlu0 %3468
    %3470 = vrot.lane.b32.xlu0 %v3439, 124
    %v3471 = vpop.permute.xlu0 %3470
    %3472 = vrot.lane.b32.xlu0 %v3440, 124
    %v3473 = vpop.permute.xlu0 %3472
    %3474 = vrot.lane.b32.xlu0 %v3441, 124
    %v3475 = vpop.permute.xlu0 %3474
    %3476 = vrot.lane.b32.xlu0 %v3442, 124
    %v3477 = vpop.permute.xlu0 %3476
    %3478 = vrot.lane.b32.xlu0 %v3443, 124
    %v3479 = vpop.permute.xlu0 %3478
    %3480 = vrot.lane.b32.xlu0 %v3444, 124
    %v3481 = vpop.permute.xlu0 %3480
    %3482 = vrot.lane.b32.xlu0 %v3445, 124
    %v3483 = vpop.permute.xlu0 %3482
    %3484 = vrot.lane.b32.xlu0 %v3446, 124
    %v3485 = vpop.permute.xlu0 %3484
    %3486 = vrot.lane.b32.xlu0 %v3447, 124
    %v3487 = vpop.permute.xlu0 %3486
    %3488 = vrot.lane.b32.xlu0 %v3448, 124
    %v3489 = vpop.permute.xlu0 %3488
    %3490 = vrot.lane.b32.xlu0 %v3449, 124
    %v3491 = vpop.permute.xlu0 %3490
    %vm3506 = vcmask 1047520
    %3507 = vst.msk [vmem:[#allocation8 + $0x8] sm:$0x7f] %vm3506, %v3465
    %vm3508 = vcmask 63488
    %3509 = vst.msk [vmem:[#allocation8 + $0x10] sm:$0x7f] %vm3508, %v3465
    %3510 = vst.msk [vmem:[#allocation8 + $0x20] sm:$0x7f] %vm3506, %v3467
    %3511 = vst.msk [vmem:[#allocation8 + $0x28] sm:$0x7f] %vm3508, %v3467
    %3512 = vst.msk [vmem:[#allocation8 + $0x38] sm:$0x7f] %vm3506, %v3469
    %3513 = vst.msk [vmem:[#allocation8 + $0x40] sm:$0x7f] %vm3508, %v3469
    %3514 = vst.msk [vmem:[#allocation8 + $0x50] sm:$0x7f] %vm3506, %v3471
    %3515 = vst.msk [vmem:[#allocation8 + $0x58] sm:$0x7f] %vm3508, %v3471
    %3516 = vst.msk [vmem:[#allocation8 + $0x68] sm:$0x7f] %vm3506, %v3473
    %3517 = vst.msk [vmem:[#allocation8 + $0x70] sm:$0x7f] %vm3508, %v3473
    %3518 = vst.msk [vmem:[#allocation8 + $0x80] sm:$0x7f] %vm3506, %v3475
    %3519 = vst.msk [vmem:[#allocation8 + $0x88] sm:$0x7f] %vm3508, %v3475
    %3520 = vst.msk [vmem:[#allocation8 + $0x98] sm:$0x7f] %vm3506, %v3477
    %3521 = vst.msk [vmem:[#allocation8 + $0xa0] sm:$0x7f] %vm3508, %v3477
    %3522 = vst.msk [vmem:[#allocation8 + $0xb0] sm:$0x7f] %vm3506, %v3479
    %3523 = vst.msk [vmem:[#allocation8 + $0xb8] sm:$0x7f] %vm3508, %v3479
    %3524 = vst.msk [vmem:[#allocation8 + $0xc8] sm:$0x7f] %vm3506, %v3481
    %3525 = vst.msk [vmem:[#allocation8 + $0xd0] sm:$0x7f] %vm3508, %v3481
    %3526 = vst.msk [vmem:[#allocation8 + $0xe0] sm:$0x7f] %vm3506, %v3483
    %3527 = vst.msk [vmem:[#allocation8 + $0xe8] sm:$0x7f] %vm3508, %v3483
    %3528 = vst.msk [vmem:[#allocation8 + $0xf8] sm:$0x7f] %vm3506, %v3485
    %3529 = vst.msk [vmem:[#allocation8 + $0x100] sm:$0x7f] %vm3508, %v3485
    %3530 = vst.msk [vmem:[#allocation8 + $0x110] sm:$0x7f] %vm3506, %v3487
    %3531 = vst.msk [vmem:[#allocation8 + $0x118] sm:$0x7f] %vm3508, %v3487
    %3532 = vst.msk [vmem:[#allocation8 + $0x128] sm:$0x7f] %vm3506, %v3489
    %3533 = vst.msk [vmem:[#allocation8 + $0x130] sm:$0x7f] %vm3508, %v3489
    %3534 = vst.msk [vmem:[#allocation8 + $0x140] sm:$0x7f] %vm3506, %v3491
    %3535 = vst.msk [vmem:[#allocation8 + $0x148] sm:$0x7f] %vm3508, %v3491
    %v3536 = vld [vmem:[%s1538 + $0x1] sm:$0x7f]
    %v3537 = vld [vmem:[%s1538 + $0x11] sm:$0x7f]
    %v3538 = vld [vmem:[%s1538 + $0x21] sm:$0x7f]
    %v3539 = vld [vmem:[%s1538 + $0x31] sm:$0x7f]
    %v3540 = vld [vmem:[%s1538 + $0x41] sm:$0x7f]
    %v3541 = vld [vmem:[%s1538 + $0x51] sm:$0x7f]
    %v3542 = vld [vmem:[%s1538 + $0x61] sm:$0x7f]
    %v3543 = vld [vmem:[%s1538 + $0x91] sm:$0x7f]
    %v3544 = vld [vmem:[%s1538 + $0xa1] sm:$0x7f]
    %v3545 = vld [vmem:[%s1538 + $0xb1] sm:$0x7f]
    %v3546 = vld [vmem:[%s1538 + $0xc1] sm:$0x7f]
    %v3547 = vld [vmem:[%s1538 + $0xd1] sm:$0x7f]
    %v3548 = vld [vmem:[%s1538 + $0xe1] sm:$0x7f]
    %v3549 = vld [vmem:[%s1538 + $0xf1] sm:$0x7f]
    %3564 = vrot.lane.b32.xlu0 %v3536, 8
    %v3565 = vpop.permute.xlu0 %3564
    %3566 = vrot.lane.b32.xlu0 %v3537, 8
    %v3567 = vpop.permute.xlu0 %3566
    %3568 = vrot.lane.b32.xlu0 %v3538, 8
    %v3569 = vpop.permute.xlu0 %3568
    %3570 = vrot.lane.b32.xlu0 %v3539, 8
    %v3571 = vpop.permute.xlu0 %3570
    %3572 = vrot.lane.b32.xlu0 %v3540, 8
    %v3573 = vpop.permute.xlu0 %3572
    %3574 = vrot.lane.b32.xlu0 %v3541, 8
    %v3575 = vpop.permute.xlu0 %3574
    %3576 = vrot.lane.b32.xlu0 %v3542, 8
    %v3577 = vpop.permute.xlu0 %3576
    %3578 = vrot.lane.b32.xlu0 %v3543, 8
    %v3579 = vpop.permute.xlu0 %3578
    %3580 = vrot.lane.b32.xlu0 %v3544, 8
    %v3581 = vpop.permute.xlu0 %3580
    %3582 = vrot.lane.b32.xlu0 %v3545, 8
    %v3583 = vpop.permute.xlu0 %3582
    %3584 = vrot.lane.b32.xlu0 %v3546, 8
    %v3585 = vpop.permute.xlu0 %3584
    %3586 = vrot.lane.b32.xlu0 %v3547, 8
    %v3587 = vpop.permute.xlu0 %3586
    %3588 = vrot.lane.b32.xlu0 %v3548, 8
    %v3589 = vpop.permute.xlu0 %3588
    %3590 = vrot.lane.b32.xlu0 %v3549, 8
    %v3591 = vpop.permute.xlu0 %3590
    %vm3606 = vcmask 161856
    %3607 = vst.msk [vmem:[#allocation8 + $0x10] sm:$0x7f] %vm3606, %v3565
    %3608 = vst.msk [vmem:[#allocation8 + $0x28] sm:$0x7f] %vm3606, %v3567
    %3609 = vst.msk [vmem:[#allocation8 + $0x40] sm:$0x7f] %vm3606, %v3569
    %3610 = vst.msk [vmem:[#allocation8 + $0x58] sm:$0x7f] %vm3606, %v3571
    %3611 = vst.msk [vmem:[#allocation8 + $0x70] sm:$0x7f] %vm3606, %v3573
    %3612 = vst.msk [vmem:[#allocation8 + $0x88] sm:$0x7f] %vm3606, %v3575
    %3613 = vst.msk [vmem:[#allocation8 + $0xa0] sm:$0x7f] %vm3606, %v3577
    %3614 = vst.msk [vmem:[#allocation8 + $0xb8] sm:$0x7f] %vm3606, %v3579
    %3615 = vst.msk [vmem:[#allocation8 + $0xd0] sm:$0x7f] %vm3606, %v3581
    %3616 = vst.msk [vmem:[#allocation8 + $0xe8] sm:$0x7f] %vm3606, %v3583
    %3617 = vst.msk [vmem:[#allocation8 + $0x100] sm:$0x7f] %vm3606, %v3585
    %3618 = vst.msk [vmem:[#allocation8 + $0x118] sm:$0x7f] %vm3606, %v3587
    %3619 = vst.msk [vmem:[#allocation8 + $0x130] sm:$0x7f] %vm3606, %v3589
    %3620 = vst.msk [vmem:[#allocation8 + $0x148] sm:$0x7f] %vm3606, %v3591
    %v3621 = vld [vmem:[%s1541 + $0x1] sm:$0x7f]
    %v3622 = vld [vmem:[%s1541 + $0x11] sm:$0x7f]
    %v3623 = vld [vmem:[%s1541 + $0x21] sm:$0x7f]
    %v3624 = vld [vmem:[%s1541 + $0x31] sm:$0x7f]
    %v3625 = vld [vmem:[%s1541 + $0x41] sm:$0x7f]
    %v3626 = vld [vmem:[%s1541 + $0x51] sm:$0x7f]
    %v3627 = vld [vmem:[%s1541 + $0x61] sm:$0x7f]
    %v3628 = vld [vmem:[%s1541 + $0x91] sm:$0x7f]
    %v3629 = vld [vmem:[%s1541 + $0xa1] sm:$0x7f]
    %v3630 = vld [vmem:[%s1541 + $0xb1] sm:$0x7f]
    %v3631 = vld [vmem:[%s1541 + $0xc1] sm:$0x7f]
    %v3632 = vld [vmem:[%s1541 + $0xd1] sm:$0x7f]
    %v3633 = vld [vmem:[%s1541 + $0xe1] sm:$0x7f]
    %v3634 = vld [vmem:[%s1541 + $0xf1] sm:$0x7f]
    %3649 = vrot.lane.b32.xlu0 %v3621, 20
    %v3650 = vpop.permute.xlu0 %3649
    %3651 = vrot.lane.b32.xlu0 %v3622, 20
    %v3652 = vpop.permute.xlu0 %3651
    %3653 = vrot.lane.b32.xlu0 %v3623, 20
    %v3654 = vpop.permute.xlu0 %3653
    %3655 = vrot.lane.b32.xlu0 %v3624, 20
    %v3656 = vpop.permute.xlu0 %3655
    %3657 = vrot.lane.b32.xlu0 %v3625, 20
    %v3658 = vpop.permute.xlu0 %3657
    %3659 = vrot.lane.b32.xlu0 %v3626, 20
    %v3660 = vpop.permute.xlu0 %3659
    %3661 = vrot.lane.b32.xlu0 %v3627, 20
    %v3662 = vpop.permute.xlu0 %3661
    %3663 = vrot.lane.b32.xlu0 %v3628, 20
    %v3664 = vpop.permute.xlu0 %3663
    %3665 = vrot.lane.b32.xlu0 %v3629, 20
    %v3666 = vpop.permute.xlu0 %3665
    %3667 = vrot.lane.b32.xlu0 %v3630, 20
    %v3668 = vpop.permute.xlu0 %3667
    %3669 = vrot.lane.b32.xlu0 %v3631, 20
    %v3670 = vpop.permute.xlu0 %3669
    %3671 = vrot.lane.b32.xlu0 %v3632, 20
    %v3672 = vpop.permute.xlu0 %3671
    %3673 = vrot.lane.b32.xlu0 %v3633, 20
    %v3674 = vpop.permute.xlu0 %3673
    %3675 = vrot.lane.b32.xlu0 %v3634, 20
    %v3676 = vpop.permute.xlu0 %3675
    %vm3691 = vcmask 260256
    %3692 = vst.msk [vmem:[#allocation8 + $0x10] sm:$0x7f] %vm3691, %v3650
    %3693 = vst.msk [vmem:[#allocation8 + $0x28] sm:$0x7f] %vm3691, %v3652
    %3694 = vst.msk [vmem:[#allocation8 + $0x40] sm:$0x7f] %vm3691, %v3654
    %3695 = vst.msk [vmem:[#allocation8 + $0x58] sm:$0x7f] %vm3691, %v3656
    %3696 = vst.msk [vmem:[#allocation8 + $0x70] sm:$0x7f] %vm3691, %v3658
    %3697 = vst.msk [vmem:[#allocation8 + $0x88] sm:$0x7f] %vm3691, %v3660
    %3698 = vst.msk [vmem:[#allocation8 + $0xa0] sm:$0x7f] %vm3691, %v3662
    %3699 = vst.msk [vmem:[#allocation8 + $0xb8] sm:$0x7f] %vm3691, %v3664
    %3700 = vst.msk [vmem:[#allocation8 + $0xd0] sm:$0x7f] %vm3691, %v3666
    %3701 = vst.msk [vmem:[#allocation8 + $0xe8] sm:$0x7f] %vm3691, %v3668
    %3702 = vst.msk [vmem:[#allocation8 + $0x100] sm:$0x7f] %vm3691, %v3670
    %3703 = vst.msk [vmem:[#allocation8 + $0x118] sm:$0x7f] %vm3691, %v3672
    %3704 = vst.msk [vmem:[#allocation8 + $0x130] sm:$0x7f] %vm3691, %v3674
    %3705 = vst.msk [vmem:[#allocation8 + $0x148] sm:$0x7f] %vm3691, %v3676
    %v3706 = vld [vmem:[%s1538 + $0x2] sm:$0x7f]
    %v3707 = vld [vmem:[%s1538 + $0x12] sm:$0x7f]
    %v3708 = vld [vmem:[%s1538 + $0x22] sm:$0x7f]
    %v3709 = vld [vmem:[%s1538 + $0x32] sm:$0x7f]
    %v3710 = vld [vmem:[%s1538 + $0x42] sm:$0x7f]
    %v3711 = vld [vmem:[%s1538 + $0x52] sm:$0x7f]
    %v3712 = vld [vmem:[%s1538 + $0x62] sm:$0x7f]
    %v3713 = vld [vmem:[%s1538 + $0x92] sm:$0x7f]
    %v3714 = vld [vmem:[%s1538 + $0xa2] sm:$0x7f]
    %v3715 = vld [vmem:[%s1538 + $0xb2] sm:$0x7f]
    %v3716 = vld [vmem:[%s1538 + $0xc2] sm:$0x7f]
    %v3717 = vld [vmem:[%s1538 + $0xd2] sm:$0x7f]
    %v3718 = vld [vmem:[%s1538 + $0xe2] sm:$0x7f]
    %v3719 = vld [vmem:[%s1538 + $0xf2] sm:$0x7f]
    %3734 = vrot.lane.b32.xlu0 %v3706, 32
    %v3735 = vpop.permute.xlu0 %3734
    %3736 = vrot.lane.b32.xlu0 %v3707, 32
    %v3737 = vpop.permute.xlu0 %3736
    %3738 = vrot.lane.b32.xlu0 %v3708, 32
    %v3739 = vpop.permute.xlu0 %3738
    %3740 = vrot.lane.b32.xlu0 %v3709, 32
    %v3741 = vpop.permute.xlu0 %3740
    %3742 = vrot.lane.b32.xlu0 %v3710, 32
    %v3743 = vpop.permute.xlu0 %3742
    %3744 = vrot.lane.b32.xlu0 %v3711, 32
    %v3745 = vpop.permute.xlu0 %3744
    %3746 = vrot.lane.b32.xlu0 %v3712, 32
    %v3747 = vpop.permute.xlu0 %3746
    %3748 = vrot.lane.b32.xlu0 %v3713, 32
    %v3749 = vpop.permute.xlu0 %3748
    %3750 = vrot.lane.b32.xlu0 %v3714, 32
    %v3751 = vpop.permute.xlu0 %3750
    %3752 = vrot.lane.b32.xlu0 %v3715, 32
    %v3753 = vpop.permute.xlu0 %3752
    %3754 = vrot.lane.b32.xlu0 %v3716, 32
    %v3755 = vpop.permute.xlu0 %3754
    %3756 = vrot.lane.b32.xlu0 %v3717, 32
    %v3757 = vpop.permute.xlu0 %3756
    %3758 = vrot.lane.b32.xlu0 %v3718, 32
    %v3759 = vpop.permute.xlu0 %3758
    %3760 = vrot.lane.b32.xlu0 %v3719, 32
    %v3761 = vpop.permute.xlu0 %3760
    %vm3776 = vcmask 358656
    %3777 = vst.msk [vmem:[#allocation8 + $0x10] sm:$0x7f] %vm3776, %v3735
    %3778 = vst.msk [vmem:[#allocation8 + $0x28] sm:$0x7f] %vm3776, %v3737
    %3779 = vst.msk [vmem:[#allocation8 + $0x40] sm:$0x7f] %vm3776, %v3739
    %3780 = vst.msk [vmem:[#allocation8 + $0x58] sm:$0x7f] %vm3776, %v3741
    %3781 = vst.msk [vmem:[#allocation8 + $0x70] sm:$0x7f] %vm3776, %v3743
    %3782 = vst.msk [vmem:[#allocation8 + $0x88] sm:$0x7f] %vm3776, %v3745
    %3783 = vst.msk [vmem:[#allocation8 + $0xa0] sm:$0x7f] %vm3776, %v3747
    %3784 = vst.msk [vmem:[#allocation8 + $0xb8] sm:$0x7f] %vm3776, %v3749
    %3785 = vst.msk [vmem:[#allocation8 + $0xd0] sm:$0x7f] %vm3776, %v3751
    %3786 = vst.msk [vmem:[#allocation8 + $0xe8] sm:$0x7f] %vm3776, %v3753
    %3787 = vst.msk [vmem:[#allocation8 + $0x100] sm:$0x7f] %vm3776, %v3755
    %3788 = vst.msk [vmem:[#allocation8 + $0x118] sm:$0x7f] %vm3776, %v3757
    %3789 = vst.msk [vmem:[#allocation8 + $0x130] sm:$0x7f] %vm3776, %v3759
    %3790 = vst.msk [vmem:[#allocation8 + $0x148] sm:$0x7f] %vm3776, %v3761
    %v3791 = vld [vmem:[#allocation8] sm:$0x7f]
    %v3792 = vld [vmem:[#allocation8 + $0x8] sm:$0x7f]
    %v3793 = vld [vmem:[#allocation8 + $0x10] sm:$0x7f]
    %3794 = vst [vmem:[#allocation9] sm:$0x7f] %v3791
    %3795 = vst [vmem:[#allocation9 + $0x8] sm:$0x7f] %v3792
    %vm3796 = vcmask 358400
    %3797 = vst.msk [vmem:[#allocation9 + $0x10] sm:$0x7f] %vm3796, %v3793
    %s3798 = scalar_lea.vmem [#allocation8], 24
    %v3799 = vld [vmem:[%s3798] sm:$0x7f]
    %v3800 = vld [vmem:[%s3798 + $0x8] sm:$0x7f]
    %v3801 = vld [vmem:[%s3798 + $0x10] sm:$0x7f]
    %v3805 = vrot.slane %v3799, 1
    %v3806 = vrot.slane %v3800, 1
    %v3807 = vrot.slane %v3801, 1
    %3811 = vst [vmem:[#allocation9] sm:$0x80] %v3805
    %3812 = vst [vmem:[#allocation9 + $0x8] sm:$0x80] %v3806
    %vm3813 = vcmask 359431
    %3814 = vst.msk [vmem:[#allocation9 + $0x10] sm:$0x80] %vm3813, %v3807
    %3815 = vst [vmem:[#allocation9 + $0x18] sm:$0x3f] %v3805
    %3816 = vst [vmem:[#allocation9 + $0x20] sm:$0x3f] %v3806
    %vm3817 = vcmask 357376
    %3818 = vst.msk [vmem:[#allocation9 + $0x28] sm:$0x3f] %vm3817, %v3807
    %s3819 = scalar_lea.vmem [#allocation8], 48
    %v3820 = vld [vmem:[%s3819] sm:$0x7f]
    %v3821 = vld [vmem:[%s3819 + $0x8] sm:$0x7f]
    %v3822 = vld [vmem:[%s3819 + $0x10] sm:$0x7f]
    %v3826 = vrot.slane %v3820, 2
    %v3827 = vrot.slane %v3821, 2
    %v3828 = vrot.slane %v3822, 2
    %3832 = vst [vmem:[#allocation9 + $0x18] sm:$0xc0] %v3826
    %3833 = vst [vmem:[#allocation9 + $0x20] sm:$0xc0] %v3827
    %vm3834 = vcmask 359430
    %3835 = vst.msk [vmem:[#allocation9 + $0x28] sm:$0xc0] %vm3834, %v3828
    %3836 = vst [vmem:[#allocation9 + $0x30] sm:$0x1f] %v3826
    %3837 = vst [vmem:[#allocation9 + $0x38] sm:$0x1f] %v3827
    %vm3838 = vcmask 356352
    %3839 = vst.msk [vmem:[#allocation9 + $0x40] sm:$0x1f] %vm3838, %v3828
    %s3840 = scalar_lea.vmem [#allocation8], 72
    %v3841 = vld [vmem:[%s3840] sm:$0x7f]
    %v3842 = vld [vmem:[%s3840 + $0x8] sm:$0x7f]
    %v3843 = vld [vmem:[%s3840 + $0x10] sm:$0x7f]
    %v3847 = vrot.slane %v3841, 3
    %v3848 = vrot.slane %v3842, 3
    %v3849 = vrot.slane %v3843, 3
    %3853 = vst [vmem:[#allocation9 + $0x30] sm:$0xe0] %v3847
    %3854 = vst [vmem:[#allocation9 + $0x38] sm:$0xe0] %v3848
    %vm3855 = vcmask 359429
    %3856 = vst.msk [vmem:[#allocation9 + $0x40] sm:$0xe0] %vm3855, %v3849
    %3857 = vst [vmem:[#allocation9 + $0x48] sm:$0xf] %v3847
    %3858 = vst [vmem:[#allocation9 + $0x50] sm:$0xf] %v3848
    %vm3859 = vcmask 355328
    %3860 = vst.msk [vmem:[#allocation9 + $0x58] sm:$0xf] %vm3859, %v3849
    %s3861 = scalar_lea.vmem [#allocation8], 96
    %v3862 = vld [vmem:[%s3861] sm:$0x7f]
    %v3863 = vld [vmem:[%s3861 + $0x8] sm:$0x7f]
    %v3864 = vld [vmem:[%s3861 + $0x10] sm:$0x7f]
    %v3868 = vrot.slane %v3862, 4
    %v3869 = vrot.slane %v3863, 4
    %v3870 = vrot.slane %v3864, 4
    %3874 = vst [vmem:[#allocation9 + $0x48] sm:$0xf0] %v3868
    %3875 = vst [vmem:[#allocation9 + $0x50] sm:$0xf0] %v3869
    %vm3876 = vcmask 359428
    %3877 = vst.msk [vmem:[#allocation9 + $0x58] sm:$0xf0] %vm3876, %v3870
    %3878 = vst [vmem:[#allocation9 + $0x60] sm:$0x7] %v3868
    %3879 = vst [vmem:[#allocation9 + $0x68] sm:$0x7] %v3869
    %vm3880 = vcmask 354304
    %3881 = vst.msk [vmem:[#allocation9 + $0x70] sm:$0x7] %vm3880, %v3870
    %s3882 = scalar_lea.vmem [#allocation8], 120
    %v3883 = vld [vmem:[%s3882] sm:$0x7f]
    %v3884 = vld [vmem:[%s3882 + $0x8] sm:$0x7f]
    %v3885 = vld [vmem:[%s3882 + $0x10] sm:$0x7f]
    %v3889 = vrot.slane %v3883, 5
    %v3890 = vrot.slane %v3884, 5
    %v3891 = vrot.slane %v3885, 5
    %3895 = vst [vmem:[#allocation9 + $0x60] sm:$0xf8] %v3889
    %3896 = vst [vmem:[#allocation9 + $0x68] sm:$0xf8] %v3890
    %vm3897 = vcmask 359427
    %3898 = vst.msk [vmem:[#allocation9 + $0x70] sm:$0xf8] %vm3897, %v3891
    %3899 = vst [vmem:[#allocation9 + $0x78] sm:$0x3] %v3889
    %3900 = vst [vmem:[#allocation9 + $0x80] sm:$0x3] %v3890
    %vm3901 = vcmask 353280
    %3902 = vst.msk [vmem:[#allocation9 + $0x88] sm:$0x3] %vm3901, %v3891
    %s3903 = scalar_lea.vmem [#allocation8], 144
    %v3904 = vld [vmem:[%s3903] sm:$0x7f]
    %v3905 = vld [vmem:[%s3903 + $0x8] sm:$0x7f]
    %v3906 = vld [vmem:[%s3903 + $0x10] sm:$0x7f]
    %v3910 = vrot.slane %v3904, 6
    %v3911 = vrot.slane %v3905, 6
    %v3912 = vrot.slane %v3906, 6
    %3916 = vst [vmem:[#allocation9 + $0x78] sm:$0xfc] %v3910
    %3917 = vst [vmem:[#allocation9 + $0x80] sm:$0xfc] %v3911
    %vm3918 = vcmask 359426
    %3919 = vst.msk [vmem:[#allocation9 + $0x88] sm:$0xfc] %vm3918, %v3912
    %3920 = vst [vmem:[#allocation9 + $0x90] sm:$0x1] %v3910
    %3921 = vst [vmem:[#allocation9 + $0x98] sm:$0x1] %v3911
    %vm3922 = vcmask 352256
    %3923 = vst.msk [vmem:[#allocation9 + $0xa0] sm:$0x1] %vm3922, %v3912
    %s3924 = scalar_lea.vmem [#allocation8], 168
    %v3925 = vld [vmem:[%s3924] sm:$0x7f]
    %v3926 = vld [vmem:[%s3924 + $0x8] sm:$0x7f]
    %v3927 = vld [vmem:[%s3924 + $0x10] sm:$0x7f]
    %v3931 = vrot.slane %v3925, 7
    %v3932 = vrot.slane %v3926, 7
    %v3933 = vrot.slane %v3927, 7
    %3937 = vst [vmem:[#allocation9 + $0x90] sm:$0xfe] %v3931
    %3938 = vst [vmem:[#allocation9 + $0x98] sm:$0xfe] %v3932
    %vm3939 = vcmask 359425
    %3940 = vst.msk [vmem:[#allocation9 + $0xa0] sm:$0xfe] %vm3939, %v3933
    %s3941 = scalar_lea.vmem [#allocation8], 192
    %v3942 = vld [vmem:[%s3941] sm:$0x7f]
    %v3943 = vld [vmem:[%s3941 + $0x8] sm:$0x7f]
    %v3944 = vld [vmem:[%s3941 + $0x10] sm:$0x7f]
    %3945 = vst [vmem:[#allocation9 + $0xa8] sm:$0x7f] %v3942
    %3946 = vst [vmem:[#allocation9 + $0xb0] sm:$0x7f] %v3943
    %3947 = vst.msk [vmem:[#allocation9 + $0xb8] sm:$0x7f] %vm3796, %v3944
    %s3948 = scalar_lea.vmem [#allocation8], 216
    %v3949 = vld [vmem:[%s3948] sm:$0x7f]
    %v3950 = vld [vmem:[%s3948 + $0x8] sm:$0x7f]
    %v3951 = vld [vmem:[%s3948 + $0x10] sm:$0x7f]
    %v3955 = vrot.slane %v3949, 1
    %v3956 = vrot.slane %v3950, 1
    %v3957 = vrot.slane %v3951, 1
    %3961 = vst [vmem:[#allocation9 + $0xa8] sm:$0x80] %v3955
    %3962 = vst [vmem:[#allocation9 + $0xb0] sm:$0x80] %v3956
    %3963 = vst.msk [vmem:[#allocation9 + $0xb8] sm:$0x80] %vm3813, %v3957
    %3964 = vst [vmem:[#allocation9 + $0xc0] sm:$0x3f] %v3955
    %3965 = vst [vmem:[#allocation9 + $0xc8] sm:$0x3f] %v3956
    %3966 = vst.msk [vmem:[#allocation9 + $0xd0] sm:$0x3f] %vm3817, %v3957
    %s3967 = scalar_lea.vmem [#allocation8], 240
    %v3968 = vld [vmem:[%s3967] sm:$0x7f]
    %v3969 = vld [vmem:[%s3967 + $0x8] sm:$0x7f]
    %v3970 = vld [vmem:[%s3967 + $0x10] sm:$0x7f]
    %v3974 = vrot.slane %v3968, 2
    %v3975 = vrot.slane %v3969, 2
    %v3976 = vrot.slane %v3970, 2
    %3980 = vst [vmem:[#allocation9 + $0xc0] sm:$0xc0] %v3974
    %3981 = vst [vmem:[#allocation9 + $0xc8] sm:$0xc0] %v3975
    %3982 = vst.msk [vmem:[#allocation9 + $0xd0] sm:$0xc0] %vm3834, %v3976
    %3983 = vst [vmem:[#allocation9 + $0xd8] sm:$0x1f] %v3974
    %3984 = vst [vmem:[#allocation9 + $0xe0] sm:$0x1f] %v3975
    %3985 = vst.msk [vmem:[#allocation9 + $0xe8] sm:$0x1f] %vm3838, %v3976
    %s3986 = scalar_lea.vmem [#allocation8], 264
    %v3987 = vld [vmem:[%s3986] sm:$0x7f]
    %v3988 = vld [vmem:[%s3986 + $0x8] sm:$0x7f]
    %v3989 = vld [vmem:[%s3986 + $0x10] sm:$0x7f]
    %v3993 = vrot.slane %v3987, 3
    %v3994 = vrot.slane %v3988, 3
    %v3995 = vrot.slane %v3989, 3
    %3999 = vst [vmem:[#allocation9 + $0xd8] sm:$0xe0] %v3993
    %4000 = vst [vmem:[#allocation9 + $0xe0] sm:$0xe0] %v3994
    %4001 = vst.msk [vmem:[#allocation9 + $0xe8] sm:$0xe0] %vm3855, %v3995
    %4002 = vst [vmem:[#allocation9 + $0xf0] sm:$0xf] %v3993
    %4003 = vst [vmem:[#allocation9 + $0xf8] sm:$0xf] %v3994
    %4004 = vst.msk [vmem:[#allocation9 + $0x100] sm:$0xf] %vm3859, %v3995
    %s4005 = scalar_lea.vmem [#allocation8], 288
    %v4006 = vld [vmem:[%s4005] sm:$0x7f]
    %v4007 = vld [vmem:[%s4005 + $0x8] sm:$0x7f]
    %v4008 = vld [vmem:[%s4005 + $0x10] sm:$0x7f]
    %v4012 = vrot.slane %v4006, 4
    %v4013 = vrot.slane %v4007, 4
    %v4014 = vrot.slane %v4008, 4
    %4018 = vst [vmem:[#allocation9 + $0xf0] sm:$0xf0] %v4012
    %4019 = vst [vmem:[#allocation9 + $0xf8] sm:$0xf0] %v4013
    %4020 = vst.msk [vmem:[#allocation9 + $0x100] sm:$0xf0] %vm3876, %v4014
    %4021 = vst [vmem:[#allocation9 + $0x108] sm:$0x7] %v4012
    %4022 = vst [vmem:[#allocation9 + $0x110] sm:$0x7] %v4013
    %4023 = vst.msk [vmem:[#allocation9 + $0x118] sm:$0x7] %vm3880, %v4014
    %s4024 = scalar_lea.vmem [#allocation8], 312
    %v4025 = vld [vmem:[%s4024] sm:$0x7f]
    %v4026 = vld [vmem:[%s4024 + $0x8] sm:$0x7f]
    %v4027 = vld [vmem:[%s4024 + $0x10] sm:$0x7f]
    %v4031 = vrot.slane %v4025, 5
    %v4032 = vrot.slane %v4026, 5
    %v4033 = vrot.slane %v4027, 5
    %4037 = vst [vmem:[#allocation9 + $0x108] sm:$0xf8] %v4031
    %4038 = vst [vmem:[#allocation9 + $0x110] sm:$0xf8] %v4032
    %4039 = vst.msk [vmem:[#allocation9 + $0x118] sm:$0xf8] %vm3897, %v4033
    %4040 = vst [vmem:[#allocation9 + $0x120] sm:$0x3] %v4031
    %4041 = vst [vmem:[#allocation9 + $0x128] sm:$0x3] %v4032
    %4042 = vst.msk [vmem:[#allocation9 + $0x130] sm:$0x3] %vm3901, %v4033
    %v4043 = vld [vmem:[#allocation9] sm:$0xff]
    %v4044 = vld [vmem:[#allocation9 + $0x8] sm:$0xff]
    %v4045 = vld [vmem:[#allocation9 + $0x10] sm:$0xff]
    %v4046 = vld [vmem:[#allocation9 + $0x18] sm:$0xff]
    %v4047 = vld [vmem:[#allocation9 + $0x20] sm:$0xff]
    %v4048 = vld [vmem:[#allocation9 + $0x28] sm:$0xff]
    %v4049 = vld [vmem:[#allocation9 + $0x30] sm:$0xff]
    %v4050 = vld [vmem:[#allocation9 + $0x38] sm:$0xff]
    %v4051 = vld [vmem:[#allocation9 + $0x40] sm:$0xff]
    %v4052 = vld [vmem:[#allocation9 + $0x48] sm:$0xff]
    %v4053 = vld [vmem:[#allocation9 + $0x50] sm:$0xff]
    %v4054 = vld [vmem:[#allocation9 + $0x58] sm:$0xff]
    %v4055 = vld [vmem:[#allocation9 + $0x60] sm:$0xff]
    %v4056 = vld [vmem:[#allocation9 + $0x68] sm:$0xff]
    %v4057 = vld [vmem:[#allocation9 + $0x70] sm:$0xff]
    %v4058 = vld [vmem:[#allocation9 + $0x78] sm:$0xff]
    %v4059 = vld [vmem:[#allocation9 + $0x80] sm:$0xff]
    %v4060 = vld [vmem:[#allocation9 + $0x88] sm:$0xff]
    %v4061 = vld [vmem:[#allocation9 + $0x90] sm:$0xff]
    %v4062 = vld [vmem:[#allocation9 + $0x98] sm:$0xff]
    %v4063 = vld [vmem:[#allocation9 + $0xa0] sm:$0xff]
    %v4064 = vld [vmem:[#allocation9 + $0xa8] sm:$0xff]
    %v4065 = vld [vmem:[#allocation9 + $0xb0] sm:$0xff]
    %v4066 = vld [vmem:[#allocation9 + $0xb8] sm:$0xff]
    %v4067 = vld [vmem:[#allocation9 + $0xc0] sm:$0xff]
    %v4068 = vld [vmem:[#allocation9 + $0xc8] sm:$0xff]
    %v4069 = vld [vmem:[#allocation9 + $0xd0] sm:$0xff]
    %v4070 = vld [vmem:[#allocation9 + $0xd8] sm:$0xff]
    %v4071 = vld [vmem:[#allocation9 + $0xe0] sm:$0xff]
    %v4072 = vld [vmem:[#allocation9 + $0xe8] sm:$0xff]
    %v4073 = vld [vmem:[#allocation9 + $0xf0] sm:$0xff]
    %v4074 = vld [vmem:[#allocation9 + $0xf8] sm:$0xff]
    %v4075 = vld [vmem:[#allocation9 + $0x100] sm:$0xff]
    %v4076 = vld [vmem:[#allocation9 + $0x108] sm:$0xff]
    %v4077 = vld [vmem:[#allocation9 + $0x110] sm:$0xff]
    %v4078 = vld [vmem:[#allocation9 + $0x118] sm:$0xff]
    %v4079 = vld [vmem:[#allocation9 + $0x120] sm:$0x3]
    %v4080 = vld [vmem:[#allocation9 + $0x128] sm:$0x3]
    %v4081 = vld [vmem:[#allocation9 + $0x130] sm:$0x3]
    %v4082 = vld [vmem:[%s5] sm:$0xff]
    %v4083 = vld [vmem:[%s5 + $0x8] sm:$0xff]
    %v4084 = vld [vmem:[%s5 + $0x10] sm:$0xff]
    %v4085 = vld [vmem:[%s5 + $0x18] sm:$0xff]
    %v4086 = vld [vmem:[%s5 + $0x20] sm:$0xff]
    %v4087 = vld [vmem:[%s5 + $0x28] sm:$0xff]
    %v4088 = vld [vmem:[%s5 + $0x30] sm:$0xff]
    %v4089 = vld [vmem:[%s5 + $0x38] sm:$0xff]
    %v4090 = vld [vmem:[%s5 + $0x40] sm:$0xff]
    %v4091 = vld [vmem:[%s5 + $0x48] sm:$0xff]
    %v4092 = vld [vmem:[%s5 + $0x50] sm:$0xff]
    %v4093 = vld [vmem:[%s5 + $0x58] sm:$0xff]
    %v4094 = vld [vmem:[%s5 + $0x60] sm:$0xff]
    %v4095 = vld [vmem:[%s5 + $0x68] sm:$0xff]
    %v4096 = vld [vmem:[%s5 + $0x70] sm:$0xff]
    %v4097 = vld [vmem:[%s5 + $0x78] sm:$0xff]
    %v4098 = vld [vmem:[%s5 + $0x80] sm:$0xff]
    %v4099 = vld [vmem:[%s5 + $0x88] sm:$0xff]
    %v4100 = vld [vmem:[%s5 + $0x90] sm:$0xff]
    %v4101 = vld [vmem:[%s5 + $0x98] sm:$0xff]
    %v4102 = vld [vmem:[%s5 + $0xa0] sm:$0xff]
    %v4103 = vld [vmem:[%s5 + $0xa8] sm:$0xff]
    %v4104 = vld [vmem:[%s5 + $0xb0] sm:$0xff]
    %v4105 = vld [vmem:[%s5 + $0xb8] sm:$0xff]
    %v4106 = vld [vmem:[%s5 + $0xc0] sm:$0xff]
    %v4107 = vld [vmem:[%s5 + $0xc8] sm:$0xff]
    %v4108 = vld [vmem:[%s5 + $0xd0] sm:$0xff]
    %v4109 = vld [vmem:[%s5 + $0xd8] sm:$0xff]
    %v4110 = vld [vmem:[%s5 + $0xe0] sm:$0xff]
    %v4111 = vld [vmem:[%s5 + $0xe8] sm:$0xff]
    %v4112 = vld [vmem:[%s5 + $0xf0] sm:$0xff]
    %v4113 = vld [vmem:[%s5 + $0xf8] sm:$0xff]
    %v4114 = vld [vmem:[%s5 + $0x100] sm:$0xff]
    %v4115 = vld [vmem:[%s5 + $0x108] sm:$0xff]
    %v4116 = vld [vmem:[%s5 + $0x110] sm:$0xff]
    %v4117 = vld [vmem:[%s5 + $0x118] sm:$0xff]
    %v4118 = vld [vmem:[%s5 + $0x120] sm:$0xff]
    %v4119 = vld [vmem:[%s5 + $0x128] sm:$0xf]
    %v4120 = vld [vmem:[%s6] sm:$0x1]
    %v4122 = vlaneseq
    %v4123 = vshrl.u32 %v4122, 7
    %v4124 = vsub.s32 0, %v4123
    %v4125 = vrot.slane %v4120, %v4124
    %vm4127 = vcmask 359424
    %v4129 = vsel %vm4127, %v4045, 0
    %v4132 = vsel %vm4127, %v4048, 0
    %v4135 = vsel %vm4127, %v4051, 0
    %v4138 = vsel %vm4127, %v4054, 0
    %v4141 = vsel %vm4127, %v4057, 0
    %v4144 = vsel %vm4127, %v4060, 0
    %v4147 = vsel %vm4127, %v4063, 0
    %v4150 = vsel %vm4127, %v4066, 0
    %v4153 = vsel %vm4127, %v4069, 0
    %v4156 = vsel %vm4127, %v4072, 0
    %v4159 = vsel %vm4127, %v4075, 0
    %v4162 = vsel %vm4127, %v4078, 0
    %v4165 = vsel %vm4127, %v4081, 0
    %vm4167 = vcmask 1043456
    %v4169 = vsel %vm4167, %v4119, 0
    %4171 = vmatprep.subr.mxu0 0.0
    %4172 = vmatpush1.msra.mxu0 %v4082
    %4173 = vmatprep.subr.mxu0 0.0
    %4174 = vmatpush1.msra.mxu0 %v4083
    %4175 = vmatprep.subr.mxu0 0.0
    %4176 = vmatpush1.msra.mxu0 %v4084
    %4177 = vmatprep.subr.mxu0 0.0
    %4178 = vmatpush1.msra.mxu0 %v4085
    %4179 = vmatprep.subr.mxu0 0.0
    %4180 = vmatpush1.msra.mxu0 %v4086
    %4181 = vmatprep.subr.mxu0 0.0
    %4182 = vmatpush1.msra.mxu0 %v4087
    %4183 = vmatprep.subr.mxu0 0.0
    %4184 = vmatpush1.msra.mxu0 %v4088
    %4185 = vmatprep.subr.mxu0 0.0
    %4186 = vmatpush1.msra.mxu0 %v4089
    %4187 = vmatprep.subr.mxu0 0.0
    %4188 = vmatpush1.msra.mxu0 %v4090
    %4189 = vmatprep.subr.mxu0 0.0
    %4190 = vmatpush1.msra.mxu0 %v4091
    %4191 = vmatprep.subr.mxu0 0.0
    %4192 = vmatpush1.msra.mxu0 %v4092
    %4193 = vmatprep.subr.mxu0 0.0
    %4194 = vmatpush1.msra.mxu0 %v4093
    %4195 = vmatprep.subr.mxu0 0.0
    %4196 = vmatpush1.msra.mxu0 %v4094
    %4197 = vmatprep.subr.mxu0 0.0
    %4198 = vmatpush1.msra.mxu0 %v4095
    %4199 = vmatprep.subr.mxu0 0.0
    %4200 = vmatpush1.msra.mxu0 %v4096
    %4201 = vmatprep.subr.mxu0 0.0
    %4202 = vmatpush1.msra.mxu0 %v4097
    %4203 = vmatprep.subr.mxu0 0.0
    %4204 = vmatpush1.msra.mxu0 %v4098
    %4205 = vmatprep.subr.mxu0 0.0
    %4206 = vmatpush1.msra.mxu0 %v4099
    %4207 = vmatprep.subr.mxu0 0.0
    %4208 = vmatpush1.msra.mxu0 %v4100
    %4209 = vmatprep.subr.mxu0 0.0
    %4210 = vmatpush1.msra.mxu0 %v4101
    %4211 = vmatprep.subr.mxu0 0.0
    %4212 = vmatpush1.msra.mxu0 %v4102
    %4213 = vmatprep.subr.mxu0 0.0
    %4214 = vmatpush1.msra.mxu0 %v4103
    %4215 = vmatprep.subr.mxu0 0.0
    %4216 = vmatpush1.msra.mxu0 %v4104
    %4217 = vmatprep.subr.mxu0 0.0
    %4218 = vmatpush1.msra.mxu0 %v4105
    %4219 = vmatprep.subr.mxu0 0.0
    %4220 = vmatpush1.msra.mxu0 %v4106
    %4221 = vmatprep.subr.mxu0 0.0
    %4222 = vmatpush1.msra.mxu0 %v4107
    %4223 = vmatprep.subr.mxu0 0.0
    %4224 = vmatpush1.msra.mxu0 %v4108
    %4225 = vmatprep.subr.mxu0 0.0
    %4226 = vmatpush1.msra.mxu0 %v4109
    %4227 = vmatprep.subr.mxu0 0.0
    %4228 = vmatpush1.msra.mxu0 %v4110
    %4229 = vmatprep.subr.mxu0 0.0
    %4230 = vmatpush1.msra.mxu0 %v4111
    %4231 = vmatprep.subr.mxu0 0.0
    %4232 = vmatpush1.msra.mxu0 %v4112
    %4233 = vmatprep.subr.mxu0 0.0
    %4234 = vmatpush1.msra.mxu0 %v4113
    %4235 = vmatprep.mubr.f32.mxu0 %v4044
    %4236 = vmatmul.mubr.f32.gmra.mrb[0].mxu0 %v4043
    %v4237 = vpop.f32.mrb[0].mxu0
    %v4238 = vadd.f32 %v4125, %v4237
    %v4239 = vpop.f32.mrb[0].mxu0
    %4240 = vmatprep.mubr.f32.mxu0 %v4047
    %4241 = vmatmul.mubr.f32.gmra.mrb[0].mxu0 %v4046
    %v4242 = vpop.f32.mrb[0].mxu0
    %v4243 = vadd.f32 %v4125, %v4242
    %v4244 = vpop.f32.mrb[0].mxu0
    %4245 = vmatprep.mubr.f32.mxu0 %v4050
    %4246 = vmatmul.mubr.f32.gmra.mrb[0].mxu0 %v4049
    %v4247 = vpop.f32.mrb[0].mxu0
    %v4248 = vadd.f32 %v4125, %v4247
    %v4249 = vpop.f32.mrb[0].mxu0
    %4250 = vmatprep.mubr.f32.mxu0 %v4053
    %4251 = vmatmul.mubr.f32.gmra.mrb[0].mxu0 %v4052
    %v4252 = vpop.f32.mrb[0].mxu0
    %v4253 = vadd.f32 %v4125, %v4252
    %v4254 = vpop.f32.mrb[0].mxu0
    %4255 = vmatprep.mubr.f32.mxu0 %v4056
    %4256 = vmatmul.mubr.f32.gmra.mrb[0].mxu0 %v4055
    %v4257 = vpop.f32.mrb[0].mxu0
    %v4258 = vadd.f32 %v4125, %v4257
    %v4259 = vpop.f32.mrb[0].mxu0
    %4260 = vmatprep.mubr.f32.mxu0 %v4059
    %4261 = vmatmul.mubr.f32.gmra.mrb[0].mxu0 %v4058
    %v4262 = vpop.f32.mrb[0].mxu0
    %v4263 = vadd.f32 %v4125, %v4262
    %v4264 = vpop.f32.mrb[0].mxu0
    %4265 = vmatprep.mubr.f32.mxu0 %v4062
    %4266 = vmatmul.mubr.f32.gmra.mrb[0].mxu0 %v4061
    %v4267 = vpop.f32.mrb[0].mxu0
    %v4268 = vadd.f32 %v4125, %v4267
    %v4269 = vpop.f32.mrb[0].mxu0
    %4270 = vmatprep.mubr.f32.mxu0 %v4065
    %4271 = vmatmul.mubr.f32.gmra.mrb[0].mxu0 %v4064
    %v4272 = vpop.f32.mrb[0].mxu0
    %v4273 = vadd.f32 %v4125, %v4272
    %v4274 = vpop.f32.mrb[0].mxu0
    %4275 = vmatprep.mubr.f32.mxu0 %v4068
    %4276 = vmatmul.mubr.f32.gmra.mrb[0].mxu0 %v4067
    %v4277 = vpop.f32.mrb[0].mxu0
    %v4278 = vadd.f32 %v4125, %v4277
    %v4279 = vpop.f32.mrb[0].mxu0
    %4280 = vmatprep.mubr.f32.mxu0 %v4071
    %4281 = vmatmul.mubr.f32.gmra.mrb[0].mxu0 %v4070
    %v4282 = vpop.f32.mrb[0].mxu0
    %v4283 = vadd.f32 %v4125, %v4282
    %v4284 = vpop.f32.mrb[0].mxu0
    %4285 = vmatprep.mubr.f32.mxu0 %v4074
    %4286 = vmatmul.mubr.f32.gmra.mrb[0].mxu0 %v4073
    %v4287 = vpop.f32.mrb[0].mxu0
    %v4288 = vadd.f32 %v4125, %v4287
    %v4289 = vpop.f32.mrb[0].mxu0
    %4290 = vmatprep.mubr.f32.mxu0 %v4077
    %4291 = vmatmul.mubr.f32.gmra.mrb[0].mxu0 %v4076
    %v4292 = vpop.f32.mrb[0].mxu0
    %v4293 = vadd.f32 %v4125, %v4292
    %v4294 = vpop.f32.mrb[0].mxu0
    %4295 = vmatprep.mubr.f32.mxu0 %v4080
    %4296 = vmatmul.mubr.f32.gmra.mrb[0].mxu0 %v4079
    %v4297 = vpop.f32.mrb[0].mxu0
    %v4298 = vadd.f32 %v4125, %v4297
    %v4299 = vpop.f32.mrb[0].mxu0
    %4300 = vdwg.mxu0
    %4301 = vmatprep.subr.mxu0 0.0
    %4302 = vmatpush1.msra.mxu0 %v4114
    %4303 = vmatprep.subr.mxu0 0.0
    %4304 = vmatpush1.msra.mxu0 %v4115
    %4305 = vmatprep.subr.mxu0 0.0
    %4306 = vmatpush1.msra.mxu0 %v4116
    %4307 = vmatprep.subr.mxu0 0.0
    %4308 = vmatpush1.msra.mxu0 %v4117
    %4309 = vmatprep.subr.mxu0 0.0
    %4310 = vmatpush1.msra.mxu0 %v4118
    %4311 = vmatprep.subr.mxu0 0.0
    %4312 = vmatpush1.msra.mxu0 %v4169
    %4313 = vmatprep.subr.mxu0 0.0
    %4314 = vmatpush1.msra.mxu0 0.0
    %4315 = vmatprep.subr.mxu0 0.0
    %4316 = vmatpush1.msra.mxu0 0.0
    %4317 = vmatprep.subr.mxu0 0.0
    %4318 = vmatpush1.msra.mxu0 0.0
    %4319 = vmatprep.subr.mxu0 0.0
    %4320 = vmatpush1.msra.mxu0 0.0
    %4321 = vmatprep.subr.mxu0 0.0
    %4322 = vmatpush1.msra.mxu0 0.0
    %4323 = vmatprep.subr.mxu0 0.0
    %4324 = vmatpush1.msra.mxu0 0.0
    %4325 = vmatprep.subr.mxu0 0.0
    %4326 = vmatpush1.msra.mxu0 0.0
    %4327 = vmatprep.subr.mxu0 0.0
    %4328 = vmatpush1.msra.mxu0 0.0
    %4329 = vmatprep.subr.mxu0 0.0
    %4330 = vmatpush1.msra.mxu0 0.0
    %4331 = vmatprep.subr.mxu0 0.0
    %4332 = vmatpush1.msra.mxu0 0.0
    %4333 = vmatprep.subr.mxu0 0.0
    %4334 = vmatpush1.msra.mxu0 0.0
    %4335 = vmatprep.subr.mxu0 0.0
    %4336 = vmatpush1.msra.mxu0 0.0
    %4337 = vmatprep.subr.mxu0 0.0
    %4338 = vmatpush1.msra.mxu0 0.0
    %4339 = vmatprep.subr.mxu0 0.0
    %4340 = vmatpush1.msra.mxu0 0.0
    %4341 = vmatprep.subr.mxu0 0.0
    %4342 = vmatpush1.msra.mxu0 0.0
    %4343 = vmatprep.subr.mxu0 0.0
    %4344 = vmatpush1.msra.mxu0 0.0
    %4345 = vmatprep.subr.mxu0 0.0
    %4346 = vmatpush1.msra.mxu0 0.0
    %4347 = vmatprep.subr.mxu0 0.0
    %4348 = vmatpush1.msra.mxu0 0.0
    %4349 = vmatprep.subr.mxu0 0.0
    %4350 = vmatpush1.msra.mxu0 0.0
    %4351 = vmatprep.subr.mxu0 0.0
    %4352 = vmatpush1.msra.mxu0 0.0
    %4353 = vmatprep.subr.mxu0 0.0
    %4354 = vmatpush1.msra.mxu0 0.0
    %4355 = vmatprep.subr.mxu0 0.0
    %4356 = vmatpush1.msra.mxu0 0.0
    %4357 = vmatprep.subr.mxu0 0.0
    %4358 = vmatpush1.msra.mxu0 0.0
    %4359 = vmatprep.subr.mxu0 0.0
    %4360 = vmatpush1.msra.mxu0 0.0
    %4361 = vmatprep.subr.mxu0 0.0
    %4362 = vmatpush1.msra.mxu0 0.0
    %4363 = vmatprep.subr.mxu0 0.0
    %4364 = vmatpush1.msra.mxu0 0.0
    %4365 = vmatprep.mubr.f32.mxu0 0.0
    %4366 = vmatmul.mubr.f32.gmra.mrb[0].mxu0 %v4129
    %v4367 = vpop.f32.mrb[0].mxu0
    %v4368 = vadd.f32 %v4238, %v4367
    %v4369 = vpop.f32.mrb[0].mxu0
    %4370 = vmatprep.mubr.f32.mxu0 0.0
    %4371 = vmatmul.mubr.f32.gmra.mrb[0].mxu0 %v4132
    %v4372 = vpop.f32.mrb[0].mxu0
    %v4373 = vadd.f32 %v4243, %v4372
    %v4374 = vpop.f32.mrb[0].mxu0
    %4375 = vmatprep.mubr.f32.mxu0 0.0
    %4376 = vmatmul.mubr.f32.gmra.mrb[0].mxu0 %v4135
    %v4377 = vpop.f32.mrb[0].mxu0
    %v4378 = vadd.f32 %v4248, %v4377
    %v4379 = vpop.f32.mrb[0].mxu0
    %4380 = vmatprep.mubr.f32.mxu0 0.0
    %4381 = vmatmul.mubr.f32.gmra.mrb[0].mxu0 %v4138
    %v4382 = vpop.f32.mrb[0].mxu0
    %v4383 = vadd.f32 %v4253, %v4382
    %v4384 = vpop.f32.mrb[0].mxu0
    %4385 = vmatprep.mubr.f32.mxu0 0.0
    %4386 = vmatmul.mubr.f32.gmra.mrb[0].mxu0 %v4141
    %v4387 = vpop.f32.mrb[0].mxu0
    %v4388 = vadd.f32 %v4258, %v4387
    %v4389 = vpop.f32.mrb[0].mxu0
    %4390 = vmatprep.mubr.f32.mxu0 0.0
    %4391 = vmatmul.mubr.f32.gmra.mrb[0].mxu0 %v4144
    %v4392 = vpop.f32.mrb[0].mxu0
    %v4393 = vadd.f32 %v4263, %v4392
    %v4394 = vpop.f32.mrb[0].mxu0
    %4395 = vmatprep.mubr.f32.mxu0 0.0
    %4396 = vmatmul.mubr.f32.gmra.mrb[0].mxu0 %v4147
    %v4397 = vpop.f32.mrb[0].mxu0
    %v4398 = vadd.f32 %v4268, %v4397
    %v4399 = vpop.f32.mrb[0].mxu0
    %4400 = vmatprep.mubr.f32.mxu0 0.0
    %4401 = vmatmul.mubr.f32.gmra.mrb[0].mxu0 %v4150
    %v4402 = vpop.f32.mrb[0].mxu0
    %v4403 = vadd.f32 %v4273, %v4402
    %v4404 = vpop.f32.mrb[0].mxu0
    %4405 = vmatprep.mubr.f32.mxu0 0.0
    %4406 = vmatmul.mubr.f32.gmra.mrb[0].mxu0 %v4153
    %v4407 = vpop.f32.mrb[0].mxu0
    %v4408 = vadd.f32 %v4278, %v4407
    %v4409 = vpop.f32.mrb[0].mxu0
    %4410 = vmatprep.mubr.f32.mxu0 0.0
    %4411 = vmatmul.mubr.f32.gmra.mrb[0].mxu0 %v4156
    %v4412 = vpop.f32.mrb[0].mxu0
    %v4413 = vadd.f32 %v4283, %v4412
    %v4414 = vpop.f32.mrb[0].mxu0
    %4415 = vmatprep.mubr.f32.mxu0 0.0
    %4416 = vmatmul.mubr.f32.gmra.mrb[0].mxu0 %v4159
    %v4417 = vpop.f32.mrb[0].mxu0
    %v4418 = vadd.f32 %v4288, %v4417
    %v4419 = vpop.f32.mrb[0].mxu0
    %4420 = vmatprep.mubr.f32.mxu0 0.0
    %4421 = vmatmul.mubr.f32.gmra.mrb[0].mxu0 %v4162
    %v4422 = vpop.f32.mrb[0].mxu0
    %v4423 = vadd.f32 %v4293, %v4422
    %v4424 = vpop.f32.mrb[0].mxu0
    %4425 = vmatprep.mubr.f32.mxu0 0.0
    %4426 = vmatmul.mubr.f32.gmra.mrb[0].mxu0 %v4165
    %v4427 = vpop.f32.mrb[0].mxu0
    %v4428 = vadd.f32 %v4298, %v4427
    %v4429 = vpop.f32.mrb[0].mxu0
    %4430 = vdwg.mxu0
    %v4431 = vsel %vm51, %v4368, 0.0
    %v4432 = vsel %vm51, %v4373, 0.0
    %v4433 = vadd.f32 %v4431, %v4432
    %v4434 = vsel %vm51, %v4378, 0.0
    %v4435 = vadd.f32 %v4433, %v4434
    %v4436 = vsel %vm51, %v4383, 0.0
    %v4437 = vadd.f32 %v4435, %v4436
    %v4438 = vsel %vm51, %v4388, 0.0
    %v4439 = vadd.f32 %v4437, %v4438
    %v4440 = vsel %vm51, %v4393, 0.0
    %v4441 = vadd.f32 %v4439, %v4440
    %v4442 = vsel %vm51, %v4398, 0.0
    %v4443 = vadd.f32 %v4441, %v4442
    %v4444 = vsel %vm51, %v4403, 0.0
    %v4445 = vadd.f32 %v4443, %v4444
    %v4446 = vsel %vm51, %v4408, 0.0
    %v4447 = vadd.f32 %v4445, %v4446
    %v4448 = vsel %vm51, %v4413, 0.0
    %v4449 = vadd.f32 %v4447, %v4448
    %v4450 = vsel %vm51, %v4418, 0.0
    %v4451 = vadd.f32 %v4449, %v4450
    %v4452 = vsel %vm51, %v4423, 0.0
    %v4453 = vadd.f32 %v4451, %v4452
    %vm4454 = vcmask 91136
    %v4455 = vsel %vm4454, %v4428, 0.0
    %v4456 = vadd.f32 %v4453, %v4455
    %v4457 = vrot.slane %v4456, 4
    %v4458 = vadd.f32 %v4456, %v4457
    %v4459 = vrot.slane %v4458, 2
    %v4460 = vadd.f32 %v4458, %v4459
    %v4461 = vrot.slane %v4460, 1
    %v4462 = vadd.f32 %v4460, %v4461
    %v4463 = vrcp.pop 98.0
    %v4464 = vmul.f32 %v4462, %v4463
    %v4465 = vsub.f32 %v4368, %v4464
    %v4466 = vsub.f32 %v4373, %v4464
    %v4467 = vsub.f32 %v4378, %v4464
    %v4468 = vsub.f32 %v4383, %v4464
    %v4469 = vsub.f32 %v4388, %v4464
    %v4470 = vsub.f32 %v4393, %v4464
    %v4471 = vsub.f32 %v4398, %v4464
    %v4472 = vsub.f32 %v4403, %v4464
    %v4473 = vsub.f32 %v4408, %v4464
    %v4474 = vsub.f32 %v4413, %v4464
    %v4475 = vsub.f32 %v4418, %v4464
    %v4476 = vsub.f32 %v4423, %v4464
    %v4477 = vsub.f32 %v4428, %v4464
    %v4478 = vmul.f32 %v4465, %v4465
    %v4479 = vmul.f32 %v4466, %v4466
    %v4480 = vmul.f32 %v4467, %v4467
    %v4481 = vmul.f32 %v4468, %v4468
    %v4482 = vmul.f32 %v4469, %v4469
    %v4483 = vmul.f32 %v4470, %v4470
    %v4484 = vmul.f32 %v4471, %v4471
    %v4485 = vmul.f32 %v4472, %v4472
    %v4486 = vmul.f32 %v4473, %v4473
    %v4487 = vmul.f32 %v4474, %v4474
    %v4488 = vmul.f32 %v4475, %v4475
    %v4489 = vmul.f32 %v4476, %v4476
    %v4490 = vmul.f32 %v4477, %v4477
    %v4491 = vsel %vm51, %v4478, 0.0
    %v4492 = vsel %vm51, %v4479, 0.0
    %v4493 = vadd.f32 %v4491, %v4492
    %v4494 = vsel %vm51, %v4480, 0.0
    %v4495 = vadd.f32 %v4493, %v4494
    %v4496 = vsel %vm51, %v4481, 0.0
    %v4497 = vadd.f32 %v4495, %v4496
    %v4498 = vsel %vm51, %v4482, 0.0
    %v4499 = vadd.f32 %v4497, %v4498
    %v4500 = vsel %vm51, %v4483, 0.0
    %v4501 = vadd.f32 %v4499, %v4500
    %v4502 = vsel %vm51, %v4484, 0.0
    %v4503 = vadd.f32 %v4501, %v4502
    %v4504 = vsel %vm51, %v4485, 0.0
    %v4505 = vadd.f32 %v4503, %v4504
    %v4506 = vsel %vm51, %v4486, 0.0
    %v4507 = vadd.f32 %v4505, %v4506
    %v4508 = vsel %vm51, %v4487, 0.0
    %v4509 = vadd.f32 %v4507, %v4508
    %v4510 = vsel %vm51, %v4488, 0.0
    %v4511 = vadd.f32 %v4509, %v4510
    %v4512 = vsel %vm51, %v4489, 0.0
    %v4513 = vadd.f32 %v4511, %v4512
    %v4514 = vsel %vm4454, %v4490, 0.0
    %v4515 = vadd.f32 %v4513, %v4514
    %v4516 = vrot.slane %v4515, 4
    %v4517 = vadd.f32 %v4515, %v4516
    %v4518 = vrot.slane %v4517, 2
    %v4519 = vadd.f32 %v4517, %v4518
    %v4520 = vrot.slane %v4519, 1
    %v4521 = vadd.f32 %v4519, %v4520
    %v4522 = vmul.f32 %v4521, %v4463
    %v4523 = vld [vmem:[%s7] sm:$0x1]
    %v4524 = vadd.f32 %v4522, 1e-05
    %v4525 = vrsqrt.pop %v4524
    %v4526 = vmul.f32 %v4465, %v4525
    %v4527 = vmul.f32 %v4466, %v4525
    %v4528 = vmul.f32 %v4467, %v4525
    %v4529 = vmul.f32 %v4468, %v4525
    %v4530 = vmul.f32 %v4469, %v4525
    %v4531 = vmul.f32 %v4470, %v4525
    %v4532 = vmul.f32 %v4471, %v4525
    %v4533 = vmul.f32 %v4472, %v4525
    %v4534 = vmul.f32 %v4473, %v4525
    %v4535 = vmul.f32 %v4474, %v4525
    %v4536 = vmul.f32 %v4475, %v4525
    %v4537 = vmul.f32 %v4476, %v4525
    %v4538 = vmul.f32 %v4477, %v4525
    %v4540 = vlaneseq
    %v4541 = vshrl.u32 %v4540, 7
    %v4542 = vsub.s32 0, %v4541
    %v4543 = vrot.slane %v4523, %v4542
    %v4545 = vmul.f32 %v4543, %v4526
    %v4546 = vmul.f32 %v4543, %v4527
    %v4547 = vmul.f32 %v4543, %v4528
    %v4548 = vmul.f32 %v4543, %v4529
    %v4549 = vmul.f32 %v4543, %v4530
    %v4550 = vmul.f32 %v4543, %v4531
    %v4551 = vmul.f32 %v4543, %v4532
    %v4552 = vmul.f32 %v4543, %v4533
    %v4553 = vmul.f32 %v4543, %v4534
    %v4554 = vmul.f32 %v4543, %v4535
    %v4555 = vmul.f32 %v4543, %v4536
    %v4556 = vmul.f32 %v4543, %v4537
    %v4557 = vmul.f32 %v4543, %v4538
    %v4558 = vld [vmem:[%s8] sm:$0x1]
    %v4560 = vlaneseq
    %v4561 = vshrl.u32 %v4560, 7
    %v4562 = vsub.s32 0, %v4561
    %v4563 = vrot.slane %v4558, %v4562
    %v4565 = vadd.f32 %v4545, %v4563
    %v4566 = vadd.f32 %v4546, %v4563
    %v4567 = vadd.f32 %v4547, %v4563
    %v4568 = vadd.f32 %v4548, %v4563
    %v4569 = vadd.f32 %v4549, %v4563
    %v4570 = vadd.f32 %v4550, %v4563
    %v4571 = vadd.f32 %v4551, %v4563
    %v4572 = vadd.f32 %v4552, %v4563
    %v4573 = vadd.f32 %v4553, %v4563
    %v4574 = vadd.f32 %v4554, %v4563
    %v4575 = vadd.f32 %v4555, %v4563
    %v4576 = vadd.f32 %v4556, %v4563
    %v4577 = vadd.f32 %v4557, %v4563
    %v4578 = vsub.f32 0.0, %v4565
    %v4579 = vsub.f32 0.0, %v4566
    %v4580 = vsub.f32 0.0, %v4567
    %v4581 = vsub.f32 0.0, %v4568
    %v4582 = vsub.f32 0.0, %v4569
    %v4583 = vsub.f32 0.0, %v4570
    %v4584 = vsub.f32 0.0, %v4571
    %v4585 = vsub.f32 0.0, %v4572
    %v4586 = vsub.f32 0.0, %v4573
    %v4587 = vsub.f32 0.0, %v4574
    %v4588 = vsub.f32 0.0, %v4575
    %v4589 = vsub.f32 0.0, %v4576
    %v4590 = vsub.f32 0.0, %v4577
    %v4591 = vmul.f32 %v4578, 1.442695
    %v4592 = vpow.pop %v4591
    %v4593 = vmul.f32 %v4579, 1.442695
    %v4594 = vpow.pop %v4593
    %v4595 = vmul.f32 %v4580, 1.442695
    %v4596 = vpow.pop %v4595
    %v4597 = vmul.f32 %v4581, 1.442695
    %v4598 = vpow.pop %v4597
    %v4599 = vmul.f32 %v4582, 1.442695
    %v4600 = vpow.pop %v4599
    %v4601 = vmul.f32 %v4583, 1.442695
    %v4602 = vpow.pop %v4601
    %v4603 = vmul.f32 %v4584, 1.442695
    %v4604 = vpow.pop %v4603
    %v4605 = vmul.f32 %v4585, 1.442695
    %v4606 = vpow.pop %v4605
    %v4607 = vmul.f32 %v4586, 1.442695
    %v4608 = vpow.pop %v4607
    %v4609 = vmul.f32 %v4587, 1.442695
    %v4610 = vpow.pop %v4609
    %v4611 = vmul.f32 %v4588, 1.442695
    %v4612 = vpow.pop %v4611
    %v4613 = vmul.f32 %v4589, 1.442695
    %v4614 = vpow.pop %v4613
    %v4615 = vmul.f32 %v4590, 1.442695
    %v4616 = vpow.pop %v4615
    %v4617 = vadd.f32 %v4592, 1.0
    %v4618 = vadd.f32 %v4594, 1.0
    %v4619 = vadd.f32 %v4596, 1.0
    %v4620 = vadd.f32 %v4598, 1.0
    %v4621 = vadd.f32 %v4600, 1.0
    %v4622 = vadd.f32 %v4602, 1.0
    %v4623 = vadd.f32 %v4604, 1.0
    %v4624 = vadd.f32 %v4606, 1.0
    %v4625 = vadd.f32 %v4608, 1.0
    %v4626 = vadd.f32 %v4610, 1.0
    %v4627 = vadd.f32 %v4612, 1.0
    %v4628 = vadd.f32 %v4614, 1.0
    %v4629 = vadd.f32 %v4616, 1.0
    %v4630 = vrcp.pop %v4617
    %v4631 = vrcp.pop %v4618
    %v4632 = vrcp.pop %v4619
    %v4633 = vrcp.pop %v4620
    %v4634 = vrcp.pop %v4621
    %v4635 = vrcp.pop %v4622
    %v4636 = vrcp.pop %v4623
    %v4637 = vrcp.pop %v4624
    %v4638 = vrcp.pop %v4625
    %v4639 = vrcp.pop %v4626
    %v4640 = vrcp.pop %v4627
    %v4641 = vrcp.pop %v4628
    %v4642 = vrcp.pop %v4629
    %4643 = vst.msk [vmem:[#allocation10] sm:$0xff] %vm51, %v4630
    %4644 = vst.msk [vmem:[#allocation10 + $0x8] sm:$0xff] %vm51, %v4631
    %4645 = vst.msk [vmem:[#allocation10 + $0x10] sm:$0xff] %vm51, %v4632
    %4646 = vst.msk [vmem:[#allocation10 + $0x18] sm:$0xff] %vm51, %v4633
    %4647 = vst.msk [vmem:[#allocation10 + $0x20] sm:$0xff] %vm51, %v4634
    %4648 = vst.msk [vmem:[#allocation10 + $0x28] sm:$0xff] %vm51, %v4635
    %4649 = vst.msk [vmem:[#allocation10 + $0x30] sm:$0xff] %vm51, %v4636
    %4650 = vst.msk [vmem:[#allocation10 + $0x38] sm:$0xff] %vm51, %v4637
    %4651 = vst.msk [vmem:[#allocation10 + $0x40] sm:$0xff] %vm51, %v4638
    %4652 = vst.msk [vmem:[#allocation10 + $0x48] sm:$0xff] %vm51, %v4639
    %4653 = vst.msk [vmem:[#allocation10 + $0x50] sm:$0xff] %vm51, %v4640
    %4654 = vst.msk [vmem:[#allocation10 + $0x58] sm:$0xff] %vm51, %v4641
    %4655 = vst.msk [vmem:[#allocation10 + $0x60] sm:$0x3] %vm4454, %v4642
    %v4656 = vld [vmem:[#allocation10] sm:$0x7f]
    %s4657 = scalar_lea.vmem [#allocation7], 32
    %4658 = vst.msk [vmem:[%s4657 + $0x2] sm:$0x7f] %vm1526, %v4656
    %v4659 = vld [vmem:[#allocation10 + $0x7] sm:$0x7f]
    %s4660 = scalar_lea.vmem [#allocation7], 48
    %4661 = vst.msk [vmem:[%s4660 + $0x2] sm:$0x7f] %vm1526, %v4659
    %v4662 = vld [vmem:[#allocation10 + $0xe] sm:$0x7f]
    %s4663 = scalar_lea.vmem [#allocation7], 64
    %4664 = vst.msk [vmem:[%s4663 + $0x2] sm:$0x7f] %vm1526, %v4662
    %v4665 = vld [vmem:[#allocation10 + $0x15] sm:$0x7f]
    %s4666 = scalar_lea.vmem [#allocation7], 80
    %4667 = vst.msk [vmem:[%s4666 + $0x2] sm:$0x7f] %vm1526, %v4665
    %v4668 = vld [vmem:[#allocation10 + $0x1c] sm:$0x7f]
    %s4669 = scalar_lea.vmem [#allocation7], 96
    %4670 = vst.msk [vmem:[%s4669 + $0x2] sm:$0x7f] %vm1526, %v4668
    %v4671 = vld [vmem:[#allocation10 + $0x23] sm:$0x7f]
    %s4672 = scalar_lea.vmem [#allocation7], 112
    %4673 = vst.msk [vmem:[%s4672 + $0x2] sm:$0x7f] %vm1526, %v4671
    %v4674 = vld [vmem:[#allocation10 + $0x2a] sm:$0x7f]
    %s4675 = scalar_lea.vmem [#allocation7], 128
    %4676 = vst.msk [vmem:[%s4675 + $0x2] sm:$0x7f] %vm1526, %v4674
    %v4677 = vld [vmem:[#allocation10 + $0x31] sm:$0x7f]
    %s4678 = scalar_lea.vmem [#allocation7], 208
    %4679 = vst.msk [vmem:[%s4678 + $0x2] sm:$0x7f] %vm1526, %v4677
    %v4680 = vld [vmem:[#allocation10 + $0x38] sm:$0x7f]
    %s4681 = scalar_lea.vmem [#allocation7], 224
    %4682 = vst.msk [vmem:[%s4681 + $0x2] sm:$0x7f] %vm1526, %v4680
    %v4683 = vld [vmem:[#allocation10 + $0x3f] sm:$0x7f]
    %s4684 = scalar_lea.vmem [#allocation7], 240
    %4685 = vst.msk [vmem:[%s4684 + $0x2] sm:$0x7f] %vm1526, %v4683
    %v4686 = vld [vmem:[#allocation10 + $0x46] sm:$0x7f]
    %s4687 = scalar_lea.vmem [#allocation7], 256
    %4688 = vst.msk [vmem:[%s4687 + $0x2] sm:$0x7f] %vm1526, %v4686
    %v4689 = vld [vmem:[#allocation10 + $0x4d] sm:$0x7f]
    %s4690 = scalar_lea.vmem [#allocation7], 272
    %4691 = vst.msk [vmem:[%s4690 + $0x2] sm:$0x7f] %vm1526, %v4689
    %v4692 = vld [vmem:[#allocation10 + $0x54] sm:$0x7f]
    %s4693 = scalar_lea.vmem [#allocation7], 288
    %4694 = vst.msk [vmem:[%s4693 + $0x2] sm:$0x7f] %vm1526, %v4692
    %v4695 = vld [vmem:[#allocation10 + $0x5b] sm:$0x7f]
    %s4696 = scalar_lea.vmem [#allocation7], 304
    %4697 = vst.msk [vmem:[%s4696 + $0x2] sm:$0x7f] %vm1526, %v4695
    %v4698 = vld [vmem:[#allocation7] sm:$0x7f]
    %v4699 = vld [vmem:[#allocation7 + $0x10] sm:$0x7f]
    %v4700 = vld [vmem:[#allocation7 + $0x20] sm:$0x7f]
    %v4701 = vld [vmem:[#allocation7 + $0x30] sm:$0x7f]
    %v4702 = vld [vmem:[#allocation7 + $0x40] sm:$0x7f]
    %v4703 = vld [vmem:[#allocation7 + $0x50] sm:$0x7f]
    %v4704 = vld [vmem:[#allocation7 + $0x60] sm:$0x7f]
    %v4705 = vld [vmem:[#allocation7 + $0xb0] sm:$0x7f]
    %v4706 = vld [vmem:[#allocation7 + $0xc0] sm:$0x7f]
    %v4707 = vld [vmem:[#allocation7 + $0xd0] sm:$0x7f]
    %v4708 = vld [vmem:[#allocation7 + $0xe0] sm:$0x7f]
    %v4709 = vld [vmem:[#allocation7 + $0xf0] sm:$0x7f]
    %v4710 = vld [vmem:[#allocation7 + $0x100] sm:$0x7f]
    %v4711 = vld [vmem:[#allocation7 + $0x110] sm:$0x7f]
    %4712 = vst.msk [vmem:[#allocation8] sm:$0x7f] %vm1526, %v4698
    %4713 = vst.msk [vmem:[#allocation8 + $0x18] sm:$0x7f] %vm1526, %v4699
    %4714 = vst.msk [vmem:[#allocation8 + $0x30] sm:$0x7f] %vm1526, %v4700
    %4715 = vst.msk [vmem:[#allocation8 + $0x48] sm:$0x7f] %vm1526, %v4701
    %4716 = vst.msk [vmem:[#allocation8 + $0x60] sm:$0x7f] %vm1526, %v4702
    %4717 = vst.msk [vmem:[#allocation8 + $0x78] sm:$0x7f] %vm1526, %v4703
    %4718 = vst.msk [vmem:[#allocation8 + $0x90] sm:$0x7f] %vm1526, %v4704
    %4719 = vst.msk [vmem:[#allocation8 + $0xa8] sm:$0x7f] %vm1526, %v4705
    %4720 = vst.msk [vmem:[#allocation8 + $0xc0] sm:$0x7f] %vm1526, %v4706
    %4721 = vst.msk [vmem:[#allocation8 + $0xd8] sm:$0x7f] %vm1526, %v4707
    %4722 = vst.msk [vmem:[#allocation8 + $0xf0] sm:$0x7f] %vm1526, %v4708
    %4723 = vst.msk [vmem:[#allocation8 + $0x108] sm:$0x7f] %vm1526, %v4709
    %4724 = vst.msk [vmem:[#allocation8 + $0x120] sm:$0x7f] %vm1526, %v4710
    %4725 = vst.msk [vmem:[#allocation8 + $0x138] sm:$0x7f] %vm1526, %v4711
    %v4726 = vld [vmem:[#allocation7 + $0x1] sm:$0x7f]
    %v4727 = vld [vmem:[#allocation7 + $0x11] sm:$0x7f]
    %v4728 = vld [vmem:[#allocation7 + $0x21] sm:$0x7f]
    %v4729 = vld [vmem:[#allocation7 + $0x31] sm:$0x7f]
    %v4730 = vld [vmem:[#allocation7 + $0x41] sm:$0x7f]
    %v4731 = vld [vmem:[#allocation7 + $0x51] sm:$0x7f]
    %v4732 = vld [vmem:[#allocation7 + $0x61] sm:$0x7f]
    %v4733 = vld [vmem:[#allocation7 + $0xb1] sm:$0x7f]
    %v4734 = vld [vmem:[#allocation7 + $0xc1] sm:$0x7f]
    %v4735 = vld [vmem:[#allocation7 + $0xd1] sm:$0x7f]
    %v4736 = vld [vmem:[#allocation7 + $0xe1] sm:$0x7f]
    %v4737 = vld [vmem:[#allocation7 + $0xf1] sm:$0x7f]
    %v4738 = vld [vmem:[#allocation7 + $0x101] sm:$0x7f]
    %v4739 = vld [vmem:[#allocation7 + $0x111] sm:$0x7f]
    %4754 = vrot.lane.b32.xlu0 %v4726, 12
    %v4755 = vpop.permute.xlu0 %4754
    %4756 = vrot.lane.b32.xlu0 %v4727, 12
    %v4757 = vpop.permute.xlu0 %4756
    %4758 = vrot.lane.b32.xlu0 %v4728, 12
    %v4759 = vpop.permute.xlu0 %4758
    %4760 = vrot.lane.b32.xlu0 %v4729, 12
    %v4761 = vpop.permute.xlu0 %4760
    %4762 = vrot.lane.b32.xlu0 %v4730, 12
    %v4763 = vpop.permute.xlu0 %4762
    %4764 = vrot.lane.b32.xlu0 %v4731, 12
    %v4765 = vpop.permute.xlu0 %4764
    %4766 = vrot.lane.b32.xlu0 %v4732, 12
    %v4767 = vpop.permute.xlu0 %4766
    %4768 = vrot.lane.b32.xlu0 %v4733, 12
    %v4769 = vpop.permute.xlu0 %4768
    %4770 = vrot.lane.b32.xlu0 %v4734, 12
    %v4771 = vpop.permute.xlu0 %4770
    %4772 = vrot.lane.b32.xlu0 %v4735, 12
    %v4773 = vpop.permute.xlu0 %4772
    %4774 = vrot.lane.b32.xlu0 %v4736, 12
    %v4775 = vpop.permute.xlu0 %4774
    %4776 = vrot.lane.b32.xlu0 %v4737, 12
    %v4777 = vpop.permute.xlu0 %4776
    %4778 = vrot.lane.b32.xlu0 %v4738, 12
    %v4779 = vpop.permute.xlu0 %4778
    %4780 = vrot.lane.b32.xlu0 %v4739, 12
    %v4781 = vpop.permute.xlu0 %4780
    %4796 = vst.msk [vmem:[#allocation8] sm:$0x7f] %vm1791, %v4755
    %4797 = vst.msk [vmem:[#allocation8 + $0x18] sm:$0x7f] %vm1791, %v4757
    %4798 = vst.msk [vmem:[#allocation8 + $0x30] sm:$0x7f] %vm1791, %v4759
    %4799 = vst.msk [vmem:[#allocation8 + $0x48] sm:$0x7f] %vm1791, %v4761
    %4800 = vst.msk [vmem:[#allocation8 + $0x60] sm:$0x7f] %vm1791, %v4763
    %4801 = vst.msk [vmem:[#allocation8 + $0x78] sm:$0x7f] %vm1791, %v4765
    %4802 = vst.msk [vmem:[#allocation8 + $0x90] sm:$0x7f] %vm1791, %v4767
    %4803 = vst.msk [vmem:[#allocation8 + $0xa8] sm:$0x7f] %vm1791, %v4769
    %4804 = vst.msk [vmem:[#allocation8 + $0xc0] sm:$0x7f] %vm1791, %v4771
    %4805 = vst.msk [vmem:[#allocation8 + $0xd8] sm:$0x7f] %vm1791, %v4773
    %4806 = vst.msk [vmem:[#allocation8 + $0xf0] sm:$0x7f] %vm1791, %v4775
    %4807 = vst.msk [vmem:[#allocation8 + $0x108] sm:$0x7f] %vm1791, %v4777
    %4808 = vst.msk [vmem:[#allocation8 + $0x120] sm:$0x7f] %vm1791, %v4779
    %4809 = vst.msk [vmem:[#allocation8 + $0x138] sm:$0x7f] %vm1791, %v4781
    %v4810 = vld [vmem:[#allocation7 + $0x2] sm:$0x7f]
    %v4811 = vld [vmem:[#allocation7 + $0x12] sm:$0x7f]
    %v4812 = vld [vmem:[#allocation7 + $0x22] sm:$0x7f]
    %v4813 = vld [vmem:[#allocation7 + $0x32] sm:$0x7f]
    %v4814 = vld [vmem:[#allocation7 + $0x42] sm:$0x7f]
    %v4815 = vld [vmem:[#allocation7 + $0x52] sm:$0x7f]
    %v4816 = vld [vmem:[#allocation7 + $0x62] sm:$0x7f]
    %v4817 = vld [vmem:[#allocation7 + $0xb2] sm:$0x7f]
    %v4818 = vld [vmem:[#allocation7 + $0xc2] sm:$0x7f]
    %v4819 = vld [vmem:[#allocation7 + $0xd2] sm:$0x7f]
    %v4820 = vld [vmem:[#allocation7 + $0xe2] sm:$0x7f]
    %v4821 = vld [vmem:[#allocation7 + $0xf2] sm:$0x7f]
    %v4822 = vld [vmem:[#allocation7 + $0x102] sm:$0x7f]
    %v4823 = vld [vmem:[#allocation7 + $0x112] sm:$0x7f]
    %4838 = vrot.lane.b32.xlu0 %v4810, 24
    %v4839 = vpop.permute.xlu0 %4838
    %4840 = vrot.lane.b32.xlu0 %v4811, 24
    %v4841 = vpop.permute.xlu0 %4840
    %4842 = vrot.lane.b32.xlu0 %v4812, 24
    %v4843 = vpop.permute.xlu0 %4842
    %4844 = vrot.lane.b32.xlu0 %v4813, 24
    %v4845 = vpop.permute.xlu0 %4844
    %4846 = vrot.lane.b32.xlu0 %v4814, 24
    %v4847 = vpop.permute.xlu0 %4846
    %4848 = vrot.lane.b32.xlu0 %v4815, 24
    %v4849 = vpop.permute.xlu0 %4848
    %4850 = vrot.lane.b32.xlu0 %v4816, 24
    %v4851 = vpop.permute.xlu0 %4850
    %4852 = vrot.lane.b32.xlu0 %v4817, 24
    %v4853 = vpop.permute.xlu0 %4852
    %4854 = vrot.lane.b32.xlu0 %v4818, 24
    %v4855 = vpop.permute.xlu0 %4854
    %4856 = vrot.lane.b32.xlu0 %v4819, 24
    %v4857 = vpop.permute.xlu0 %4856
    %4858 = vrot.lane.b32.xlu0 %v4820, 24
    %v4859 = vpop.permute.xlu0 %4858
    %4860 = vrot.lane.b32.xlu0 %v4821, 24
    %v4861 = vpop.permute.xlu0 %4860
    %4862 = vrot.lane.b32.xlu0 %v4822, 24
    %v4863 = vpop.permute.xlu0 %4862
    %4864 = vrot.lane.b32.xlu0 %v4823, 24
    %v4865 = vpop.permute.xlu0 %4864
    %4880 = vst.msk [vmem:[#allocation8] sm:$0x7f] %vm1876, %v4839
    %4881 = vst.msk [vmem:[#allocation8 + $0x18] sm:$0x7f] %vm1876, %v4841
    %4882 = vst.msk [vmem:[#allocation8 + $0x30] sm:$0x7f] %vm1876, %v4843
    %4883 = vst.msk [vmem:[#allocation8 + $0x48] sm:$0x7f] %vm1876, %v4845
    %4884 = vst.msk [vmem:[#allocation8 + $0x60] sm:$0x7f] %vm1876, %v4847
    %4885 = vst.msk [vmem:[#allocation8 + $0x78] sm:$0x7f] %vm1876, %v4849
    %4886 = vst.msk [vmem:[#allocation8 + $0x90] sm:$0x7f] %vm1876, %v4851
    %4887 = vst.msk [vmem:[#allocation8 + $0xa8] sm:$0x7f] %vm1876, %v4853
    %4888 = vst.msk [vmem:[#allocation8 + $0xc0] sm:$0x7f] %vm1876, %v4855
    %4889 = vst.msk [vmem:[#allocation8 + $0xd8] sm:$0x7f] %vm1876, %v4857
    %4890 = vst.msk [vmem:[#allocation8 + $0xf0] sm:$0x7f] %vm1876, %v4859
    %4891 = vst.msk [vmem:[#allocation8 + $0x108] sm:$0x7f] %vm1876, %v4861
    %4892 = vst.msk [vmem:[#allocation8 + $0x120] sm:$0x7f] %vm1876, %v4863
    %4893 = vst.msk [vmem:[#allocation8 + $0x138] sm:$0x7f] %vm1876, %v4865
    %v4894 = vld [vmem:[#allocation7 + $0x3] sm:$0x7f]
    %v4895 = vld [vmem:[#allocation7 + $0x13] sm:$0x7f]
    %v4896 = vld [vmem:[#allocation7 + $0x23] sm:$0x7f]
    %v4897 = vld [vmem:[#allocation7 + $0x33] sm:$0x7f]
    %v4898 = vld [vmem:[#allocation7 + $0x43] sm:$0x7f]
    %v4899 = vld [vmem:[#allocation7 + $0x53] sm:$0x7f]
    %v4900 = vld [vmem:[#allocation7 + $0x63] sm:$0x7f]
    %v4901 = vld [vmem:[#allocation7 + $0xb3] sm:$0x7f]
    %v4902 = vld [vmem:[#allocation7 + $0xc3] sm:$0x7f]
    %v4903 = vld [vmem:[#allocation7 + $0xd3] sm:$0x7f]
    %v4904 = vld [vmem:[#allocation7 + $0xe3] sm:$0x7f]
    %v4905 = vld [vmem:[#allocation7 + $0xf3] sm:$0x7f]
    %v4906 = vld [vmem:[#allocation7 + $0x103] sm:$0x7f]
    %v4907 = vld [vmem:[#allocation7 + $0x113] sm:$0x7f]
    %4922 = vrot.lane.b32.xlu0 %v4894, 36
    %v4923 = vpop.permute.xlu0 %4922
    %4924 = vrot.lane.b32.xlu0 %v4895, 36
    %v4925 = vpop.permute.xlu0 %4924
    %4926 = vrot.lane.b32.xlu0 %v4896, 36
    %v4927 = vpop.permute.xlu0 %4926
    %4928 = vrot.lane.b32.xlu0 %v4897, 36
    %v4929 = vpop.permute.xlu0 %4928
    %4930 = vrot.lane.b32.xlu0 %v4898, 36
    %v4931 = vpop.permute.xlu0 %4930
    %4932 = vrot.lane.b32.xlu0 %v4899, 36
    %v4933 = vpop.permute.xlu0 %4932
    %4934 = vrot.lane.b32.xlu0 %v4900, 36
    %v4935 = vpop.permute.xlu0 %4934
    %4936 = vrot.lane.b32.xlu0 %v4901, 36
    %v4937 = vpop.permute.xlu0 %4936
    %4938 = vrot.lane.b32.xlu0 %v4902, 36
    %v4939 = vpop.permute.xlu0 %4938
    %4940 = vrot.lane.b32.xlu0 %v4903, 36
    %v4941 = vpop.permute.xlu0 %4940
    %4942 = vrot.lane.b32.xlu0 %v4904, 36
    %v4943 = vpop.permute.xlu0 %4942
    %4944 = vrot.lane.b32.xlu0 %v4905, 36
    %v4945 = vpop.permute.xlu0 %4944
    %4946 = vrot.lane.b32.xlu0 %v4906, 36
    %v4947 = vpop.permute.xlu0 %4946
    %4948 = vrot.lane.b32.xlu0 %v4907, 36
    %v4949 = vpop.permute.xlu0 %4948
    %4964 = vst.msk [vmem:[#allocation8] sm:$0x7f] %vm1961, %v4923
    %4965 = vst.msk [vmem:[#allocation8 + $0x18] sm:$0x7f] %vm1961, %v4925
    %4966 = vst.msk [vmem:[#allocation8 + $0x30] sm:$0x7f] %vm1961, %v4927
    %4967 = vst.msk [vmem:[#allocation8 + $0x48] sm:$0x7f] %vm1961, %v4929
    %4968 = vst.msk [vmem:[#allocation8 + $0x60] sm:$0x7f] %vm1961, %v4931
    %4969 = vst.msk [vmem:[#allocation8 + $0x78] sm:$0x7f] %vm1961, %v4933
    %4970 = vst.msk [vmem:[#allocation8 + $0x90] sm:$0x7f] %vm1961, %v4935
    %4971 = vst.msk [vmem:[#allocation8 + $0xa8] sm:$0x7f] %vm1961, %v4937
    %4972 = vst.msk [vmem:[#allocation8 + $0xc0] sm:$0x7f] %vm1961, %v4939
    %4973 = vst.msk [vmem:[#allocation8 + $0xd8] sm:$0x7f] %vm1961, %v4941
    %4974 = vst.msk [vmem:[#allocation8 + $0xf0] sm:$0x7f] %vm1961, %v4943
    %4975 = vst.msk [vmem:[#allocation8 + $0x108] sm:$0x7f] %vm1961, %v4945
    %4976 = vst.msk [vmem:[#allocation8 + $0x120] sm:$0x7f] %vm1961, %v4947
    %4977 = vst.msk [vmem:[#allocation8 + $0x138] sm:$0x7f] %vm1961, %v4949
    %v4978 = vld [vmem:[#allocation7 + $0x4] sm:$0x7f]
    %v4979 = vld [vmem:[#allocation7 + $0x14] sm:$0x7f]
    %v4980 = vld [vmem:[#allocation7 + $0x24] sm:$0x7f]
    %v4981 = vld [vmem:[#allocation7 + $0x34] sm:$0x7f]
    %v4982 = vld [vmem:[#allocation7 + $0x44] sm:$0x7f]
    %v4983 = vld [vmem:[#allocation7 + $0x54] sm:$0x7f]
    %v4984 = vld [vmem:[#allocation7 + $0x64] sm:$0x7f]
    %v4985 = vld [vmem:[#allocation7 + $0xb4] sm:$0x7f]
    %v4986 = vld [vmem:[#allocation7 + $0xc4] sm:$0x7f]
    %v4987 = vld [vmem:[#allocation7 + $0xd4] sm:$0x7f]
    %v4988 = vld [vmem:[#allocation7 + $0xe4] sm:$0x7f]
    %v4989 = vld [vmem:[#allocation7 + $0xf4] sm:$0x7f]
    %v4990 = vld [vmem:[#allocation7 + $0x104] sm:$0x7f]
    %v4991 = vld [vmem:[#allocation7 + $0x114] sm:$0x7f]
    %5006 = vrot.lane.b32.xlu0 %v4978, 48
    %v5007 = vpop.permute.xlu0 %5006
    %5008 = vrot.lane.b32.xlu0 %v4979, 48
    %v5009 = vpop.permute.xlu0 %5008
    %5010 = vrot.lane.b32.xlu0 %v4980, 48
    %v5011 = vpop.permute.xlu0 %5010
    %5012 = vrot.lane.b32.xlu0 %v4981, 48
    %v5013 = vpop.permute.xlu0 %5012
    %5014 = vrot.lane.b32.xlu0 %v4982, 48
    %v5015 = vpop.permute.xlu0 %5014
    %5016 = vrot.lane.b32.xlu0 %v4983, 48
    %v5017 = vpop.permute.xlu0 %5016
    %5018 = vrot.lane.b32.xlu0 %v4984, 48
    %v5019 = vpop.permute.xlu0 %5018
    %5020 = vrot.lane.b32.xlu0 %v4985, 48
    %v5021 = vpop.permute.xlu0 %5020
    %5022 = vrot.lane.b32.xlu0 %v4986, 48
    %v5023 = vpop.permute.xlu0 %5022
    %5024 = vrot.lane.b32.xlu0 %v4987, 48
    %v5025 = vpop.permute.xlu0 %5024
    %5026 = vrot.lane.b32.xlu0 %v4988, 48
    %v5027 = vpop.permute.xlu0 %5026
    %5028 = vrot.lane.b32.xlu0 %v4989, 48
    %v5029 = vpop.permute.xlu0 %5028
    %5030 = vrot.lane.b32.xlu0 %v4990, 48
    %v5031 = vpop.permute.xlu0 %5030
    %5032 = vrot.lane.b32.xlu0 %v4991, 48
    %v5033 = vpop.permute.xlu0 %5032
    %5048 = vst.msk [vmem:[#allocation8] sm:$0x7f] %vm2046, %v5007
    %5049 = vst.msk [vmem:[#allocation8 + $0x18] sm:$0x7f] %vm2046, %v5009
    %5050 = vst.msk [vmem:[#allocation8 + $0x30] sm:$0x7f] %vm2046, %v5011
    %5051 = vst.msk [vmem:[#allocation8 + $0x48] sm:$0x7f] %vm2046, %v5013
    %5052 = vst.msk [vmem:[#allocation8 + $0x60] sm:$0x7f] %vm2046, %v5015
    %5053 = vst.msk [vmem:[#allocation8 + $0x78] sm:$0x7f] %vm2046, %v5017
    %5054 = vst.msk [vmem:[#allocation8 + $0x90] sm:$0x7f] %vm2046, %v5019
    %5055 = vst.msk [vmem:[#allocation8 + $0xa8] sm:$0x7f] %vm2046, %v5021
    %5056 = vst.msk [vmem:[#allocation8 + $0xc0] sm:$0x7f] %vm2046, %v5023
    %5057 = vst.msk [vmem:[#allocation8 + $0xd8] sm:$0x7f] %vm2046, %v5025
    %5058 = vst.msk [vmem:[#allocation8 + $0xf0] sm:$0x7f] %vm2046, %v5027
    %5059 = vst.msk [vmem:[#allocation8 + $0x108] sm:$0x7f] %vm2046, %v5029
    %5060 = vst.msk [vmem:[#allocation8 + $0x120] sm:$0x7f] %vm2046, %v5031
    %5061 = vst.msk [vmem:[#allocation8 + $0x138] sm:$0x7f] %vm2046, %v5033
    %s5062 = scalar_lea.vmem [#allocation7], 16
    %v5063 = vld [vmem:[%s5062] sm:$0x7f]
    %v5064 = vld [vmem:[%s5062 + $0x10] sm:$0x7f]
    %v5065 = vld [vmem:[%s5062 + $0x20] sm:$0x7f]
    %v5066 = vld [vmem:[%s5062 + $0x30] sm:$0x7f]
    %v5067 = vld [vmem:[%s5062 + $0x40] sm:$0x7f]
    %v5068 = vld [vmem:[%s5062 + $0x50] sm:$0x7f]
    %v5069 = vld [vmem:[%s5062 + $0x60] sm:$0x7f]
    %v5070 = vld [vmem:[%s5062 + $0xb0] sm:$0x7f]
    %v5071 = vld [vmem:[%s5062 + $0xc0] sm:$0x7f]
    %v5072 = vld [vmem:[%s5062 + $0xd0] sm:$0x7f]
    %v5073 = vld [vmem:[%s5062 + $0xe0] sm:$0x7f]
    %v5074 = vld [vmem:[%s5062 + $0xf0] sm:$0x7f]
    %v5075 = vld [vmem:[%s5062 + $0x100] sm:$0x7f]
    %v5076 = vld [vmem:[%s5062 + $0x110] sm:$0x7f]
    %5091 = vrot.lane.b32.xlu0 %v5063, 60
    %v5092 = vpop.permute.xlu0 %5091
    %5093 = vrot.lane.b32.xlu0 %v5064, 60
    %v5094 = vpop.permute.xlu0 %5093
    %5095 = vrot.lane.b32.xlu0 %v5065, 60
    %v5096 = vpop.permute.xlu0 %5095
    %5097 = vrot.lane.b32.xlu0 %v5066, 60
    %v5098 = vpop.permute.xlu0 %5097
    %5099 = vrot.lane.b32.xlu0 %v5067, 60
    %v5100 = vpop.permute.xlu0 %5099
    %5101 = vrot.lane.b32.xlu0 %v5068, 60
    %v5102 = vpop.permute.xlu0 %5101
    %5103 = vrot.lane.b32.xlu0 %v5069, 60
    %v5104 = vpop.permute.xlu0 %5103
    %5105 = vrot.lane.b32.xlu0 %v5070, 60
    %v5106 = vpop.permute.xlu0 %5105
    %5107 = vrot.lane.b32.xlu0 %v5071, 60
    %v5108 = vpop.permute.xlu0 %5107
    %5109 = vrot.lane.b32.xlu0 %v5072, 60
    %v5110 = vpop.permute.xlu0 %5109
    %5111 = vrot.lane.b32.xlu0 %v5073, 60
    %v5112 = vpop.permute.xlu0 %5111
    %5113 = vrot.lane.b32.xlu0 %v5074, 60
    %v5114 = vpop.permute.xlu0 %5113
    %5115 = vrot.lane.b32.xlu0 %v5075, 60
    %v5116 = vpop.permute.xlu0 %5115
    %5117 = vrot.lane.b32.xlu0 %v5076, 60
    %v5118 = vpop.permute.xlu0 %5117
    %5133 = vst.msk [vmem:[#allocation8] sm:$0x7f] %vm2131, %v5092
    %5134 = vst.msk [vmem:[#allocation8 + $0x18] sm:$0x7f] %vm2131, %v5094
    %5135 = vst.msk [vmem:[#allocation8 + $0x30] sm:$0x7f] %vm2131, %v5096
    %5136 = vst.msk [vmem:[#allocation8 + $0x48] sm:$0x7f] %vm2131, %v5098
    %5137 = vst.msk [vmem:[#allocation8 + $0x60] sm:$0x7f] %vm2131, %v5100
    %5138 = vst.msk [vmem:[#allocation8 + $0x78] sm:$0x7f] %vm2131, %v5102
    %5139 = vst.msk [vmem:[#allocation8 + $0x90] sm:$0x7f] %vm2131, %v5104
    %5140 = vst.msk [vmem:[#allocation8 + $0xa8] sm:$0x7f] %vm2131, %v5106
    %5141 = vst.msk [vmem:[#allocation8 + $0xc0] sm:$0x7f] %vm2131, %v5108
    %5142 = vst.msk [vmem:[#allocation8 + $0xd8] sm:$0x7f] %vm2131, %v5110
    %5143 = vst.msk [vmem:[#allocation8 + $0xf0] sm:$0x7f] %vm2131, %v5112
    %5144 = vst.msk [vmem:[#allocation8 + $0x108] sm:$0x7f] %vm2131, %v5114
    %5145 = vst.msk [vmem:[#allocation8 + $0x120] sm:$0x7f] %vm2131, %v5116
    %5146 = vst.msk [vmem:[#allocation8 + $0x138] sm:$0x7f] %vm2131, %v5118
    %v5147 = vld [vmem:[%s5062 + $0x1] sm:$0x7f]
    %v5148 = vld [vmem:[%s5062 + $0x11] sm:$0x7f]
    %v5149 = vld [vmem:[%s5062 + $0x21] sm:$0x7f]
    %v5150 = vld [vmem:[%s5062 + $0x31] sm:$0x7f]
    %v5151 = vld [vmem:[%s5062 + $0x41] sm:$0x7f]
    %v5152 = vld [vmem:[%s5062 + $0x51] sm:$0x7f]
    %v5153 = vld [vmem:[%s5062 + $0x61] sm:$0x7f]
    %v5154 = vld [vmem:[%s5062 + $0xb1] sm:$0x7f]
    %v5155 = vld [vmem:[%s5062 + $0xc1] sm:$0x7f]
    %v5156 = vld [vmem:[%s5062 + $0xd1] sm:$0x7f]
    %v5157 = vld [vmem:[%s5062 + $0xe1] sm:$0x7f]
    %v5158 = vld [vmem:[%s5062 + $0xf1] sm:$0x7f]
    %v5159 = vld [vmem:[%s5062 + $0x101] sm:$0x7f]
    %v5160 = vld [vmem:[%s5062 + $0x111] sm:$0x7f]
    %5175 = vrot.lane.b32.xlu0 %v5147, 72
    %v5176 = vpop.permute.xlu0 %5175
    %5177 = vrot.lane.b32.xlu0 %v5148, 72
    %v5178 = vpop.permute.xlu0 %5177
    %5179 = vrot.lane.b32.xlu0 %v5149, 72
    %v5180 = vpop.permute.xlu0 %5179
    %5181 = vrot.lane.b32.xlu0 %v5150, 72
    %v5182 = vpop.permute.xlu0 %5181
    %5183 = vrot.lane.b32.xlu0 %v5151, 72
    %v5184 = vpop.permute.xlu0 %5183
    %5185 = vrot.lane.b32.xlu0 %v5152, 72
    %v5186 = vpop.permute.xlu0 %5185
    %5187 = vrot.lane.b32.xlu0 %v5153, 72
    %v5188 = vpop.permute.xlu0 %5187
    %5189 = vrot.lane.b32.xlu0 %v5154, 72
    %v5190 = vpop.permute.xlu0 %5189
    %5191 = vrot.lane.b32.xlu0 %v5155, 72
    %v5192 = vpop.permute.xlu0 %5191
    %5193 = vrot.lane.b32.xlu0 %v5156, 72
    %v5194 = vpop.permute.xlu0 %5193
    %5195 = vrot.lane.b32.xlu0 %v5157, 72
    %v5196 = vpop.permute.xlu0 %5195
    %5197 = vrot.lane.b32.xlu0 %v5158, 72
    %v5198 = vpop.permute.xlu0 %5197
    %5199 = vrot.lane.b32.xlu0 %v5159, 72
    %v5200 = vpop.permute.xlu0 %5199
    %5201 = vrot.lane.b32.xlu0 %v5160, 72
    %v5202 = vpop.permute.xlu0 %5201
    %5217 = vst.msk [vmem:[#allocation8] sm:$0x7f] %vm2216, %v5176
    %5218 = vst.msk [vmem:[#allocation8 + $0x18] sm:$0x7f] %vm2216, %v5178
    %5219 = vst.msk [vmem:[#allocation8 + $0x30] sm:$0x7f] %vm2216, %v5180
    %5220 = vst.msk [vmem:[#allocation8 + $0x48] sm:$0x7f] %vm2216, %v5182
    %5221 = vst.msk [vmem:[#allocation8 + $0x60] sm:$0x7f] %vm2216, %v5184
    %5222 = vst.msk [vmem:[#allocation8 + $0x78] sm:$0x7f] %vm2216, %v5186
    %5223 = vst.msk [vmem:[#allocation8 + $0x90] sm:$0x7f] %vm2216, %v5188
    %5224 = vst.msk [vmem:[#allocation8 + $0xa8] sm:$0x7f] %vm2216, %v5190
    %5225 = vst.msk [vmem:[#allocation8 + $0xc0] sm:$0x7f] %vm2216, %v5192
    %5226 = vst.msk [vmem:[#allocation8 + $0xd8] sm:$0x7f] %vm2216, %v5194
    %5227 = vst.msk [vmem:[#allocation8 + $0xf0] sm:$0x7f] %vm2216, %v5196
    %5228 = vst.msk [vmem:[#allocation8 + $0x108] sm:$0x7f] %vm2216, %v5198
    %5229 = vst.msk [vmem:[#allocation8 + $0x120] sm:$0x7f] %vm2216, %v5200
    %5230 = vst.msk [vmem:[#allocation8 + $0x138] sm:$0x7f] %vm2216, %v5202
    %v5231 = vld [vmem:[%s5062 + $0x2] sm:$0x7f]
    %v5232 = vld [vmem:[%s5062 + $0x12] sm:$0x7f]
    %v5233 = vld [vmem:[%s5062 + $0x22] sm:$0x7f]
    %v5234 = vld [vmem:[%s5062 + $0x32] sm:$0x7f]
    %v5235 = vld [vmem:[%s5062 + $0x42] sm:$0x7f]
    %v5236 = vld [vmem:[%s5062 + $0x52] sm:$0x7f]
    %v5237 = vld [vmem:[%s5062 + $0x62] sm:$0x7f]
    %v5238 = vld [vmem:[%s5062 + $0xb2] sm:$0x7f]
    %v5239 = vld [vmem:[%s5062 + $0xc2] sm:$0x7f]
    %v5240 = vld [vmem:[%s5062 + $0xd2] sm:$0x7f]
    %v5241 = vld [vmem:[%s5062 + $0xe2] sm:$0x7f]
    %v5242 = vld [vmem:[%s5062 + $0xf2] sm:$0x7f]
    %v5243 = vld [vmem:[%s5062 + $0x102] sm:$0x7f]
    %v5244 = vld [vmem:[%s5062 + $0x112] sm:$0x7f]
    %5259 = vrot.lane.b32.xlu0 %v5231, 84
    %v5260 = vpop.permute.xlu0 %5259
    %5261 = vrot.lane.b32.xlu0 %v5232, 84
    %v5262 = vpop.permute.xlu0 %5261
    %5263 = vrot.lane.b32.xlu0 %v5233, 84
    %v5264 = vpop.permute.xlu0 %5263
    %5265 = vrot.lane.b32.xlu0 %v5234, 84
    %v5266 = vpop.permute.xlu0 %5265
    %5267 = vrot.lane.b32.xlu0 %v5235, 84
    %v5268 = vpop.permute.xlu0 %5267
    %5269 = vrot.lane.b32.xlu0 %v5236, 84
    %v5270 = vpop.permute.xlu0 %5269
    %5271 = vrot.lane.b32.xlu0 %v5237, 84
    %v5272 = vpop.permute.xlu0 %5271
    %5273 = vrot.lane.b32.xlu0 %v5238, 84
    %v5274 = vpop.permute.xlu0 %5273
    %5275 = vrot.lane.b32.xlu0 %v5239, 84
    %v5276 = vpop.permute.xlu0 %5275
    %5277 = vrot.lane.b32.xlu0 %v5240, 84
    %v5278 = vpop.permute.xlu0 %5277
    %5279 = vrot.lane.b32.xlu0 %v5241, 84
    %v5280 = vpop.permute.xlu0 %5279
    %5281 = vrot.lane.b32.xlu0 %v5242, 84
    %v5282 = vpop.permute.xlu0 %5281
    %5283 = vrot.lane.b32.xlu0 %v5243, 84
    %v5284 = vpop.permute.xlu0 %5283
    %5285 = vrot.lane.b32.xlu0 %v5244, 84
    %v5286 = vpop.permute.xlu0 %5285
    %5301 = vst.msk [vmem:[#allocation8] sm:$0x7f] %vm2301, %v5260
    %5302 = vst.msk [vmem:[#allocation8 + $0x18] sm:$0x7f] %vm2301, %v5262
    %5303 = vst.msk [vmem:[#allocation8 + $0x30] sm:$0x7f] %vm2301, %v5264
    %5304 = vst.msk [vmem:[#allocation8 + $0x48] sm:$0x7f] %vm2301, %v5266
    %5305 = vst.msk [vmem:[#allocation8 + $0x60] sm:$0x7f] %vm2301, %v5268
    %5306 = vst.msk [vmem:[#allocation8 + $0x78] sm:$0x7f] %vm2301, %v5270
    %5307 = vst.msk [vmem:[#allocation8 + $0x90] sm:$0x7f] %vm2301, %v5272
    %5308 = vst.msk [vmem:[#allocation8 + $0xa8] sm:$0x7f] %vm2301, %v5274
    %5309 = vst.msk [vmem:[#allocation8 + $0xc0] sm:$0x7f] %vm2301, %v5276
    %5310 = vst.msk [vmem:[#allocation8 + $0xd8] sm:$0x7f] %vm2301, %v5278
    %5311 = vst.msk [vmem:[#allocation8 + $0xf0] sm:$0x7f] %vm2301, %v5280
    %5312 = vst.msk [vmem:[#allocation8 + $0x108] sm:$0x7f] %vm2301, %v5282
    %5313 = vst.msk [vmem:[#allocation8 + $0x120] sm:$0x7f] %vm2301, %v5284
    %5314 = vst.msk [vmem:[#allocation8 + $0x138] sm:$0x7f] %vm2301, %v5286
    %v5315 = vld [vmem:[%s5062 + $0x3] sm:$0x7f]
    %v5316 = vld [vmem:[%s5062 + $0x13] sm:$0x7f]
    %v5317 = vld [vmem:[%s5062 + $0x23] sm:$0x7f]
    %v5318 = vld [vmem:[%s5062 + $0x33] sm:$0x7f]
    %v5319 = vld [vmem:[%s5062 + $0x43] sm:$0x7f]
    %v5320 = vld [vmem:[%s5062 + $0x53] sm:$0x7f]
    %v5321 = vld [vmem:[%s5062 + $0x63] sm:$0x7f]
    %v5322 = vld [vmem:[%s5062 + $0xb3] sm:$0x7f]
    %v5323 = vld [vmem:[%s5062 + $0xc3] sm:$0x7f]
    %v5324 = vld [vmem:[%s5062 + $0xd3] sm:$0x7f]
    %v5325 = vld [vmem:[%s5062 + $0xe3] sm:$0x7f]
    %v5326 = vld [vmem:[%s5062 + $0xf3] sm:$0x7f]
    %v5327 = vld [vmem:[%s5062 + $0x103] sm:$0x7f]
    %v5328 = vld [vmem:[%s5062 + $0x113] sm:$0x7f]
    %5343 = vrot.lane.b32.xlu0 %v5315, 96
    %v5344 = vpop.permute.xlu0 %5343
    %5345 = vrot.lane.b32.xlu0 %v5316, 96
    %v5346 = vpop.permute.xlu0 %5345
    %5347 = vrot.lane.b32.xlu0 %v5317, 96
    %v5348 = vpop.permute.xlu0 %5347
    %5349 = vrot.lane.b32.xlu0 %v5318, 96
    %v5350 = vpop.permute.xlu0 %5349
    %5351 = vrot.lane.b32.xlu0 %v5319, 96
    %v5352 = vpop.permute.xlu0 %5351
    %5353 = vrot.lane.b32.xlu0 %v5320, 96
    %v5354 = vpop.permute.xlu0 %5353
    %5355 = vrot.lane.b32.xlu0 %v5321, 96
    %v5356 = vpop.permute.xlu0 %5355
    %5357 = vrot.lane.b32.xlu0 %v5322, 96
    %v5358 = vpop.permute.xlu0 %5357
    %5359 = vrot.lane.b32.xlu0 %v5323, 96
    %v5360 = vpop.permute.xlu0 %5359
    %5361 = vrot.lane.b32.xlu0 %v5324, 96
    %v5362 = vpop.permute.xlu0 %5361
    %5363 = vrot.lane.b32.xlu0 %v5325, 96
    %v5364 = vpop.permute.xlu0 %5363
    %5365 = vrot.lane.b32.xlu0 %v5326, 96
    %v5366 = vpop.permute.xlu0 %5365
    %5367 = vrot.lane.b32.xlu0 %v5327, 96
    %v5368 = vpop.permute.xlu0 %5367
    %5369 = vrot.lane.b32.xlu0 %v5328, 96
    %v5370 = vpop.permute.xlu0 %5369
    %5385 = vst.msk [vmem:[#allocation8] sm:$0x7f] %vm2386, %v5344
    %5386 = vst.msk [vmem:[#allocation8 + $0x18] sm:$0x7f] %vm2386, %v5346
    %5387 = vst.msk [vmem:[#allocation8 + $0x30] sm:$0x7f] %vm2386, %v5348
    %5388 = vst.msk [vmem:[#allocation8 + $0x48] sm:$0x7f] %vm2386, %v5350
    %5389 = vst.msk [vmem:[#allocation8 + $0x60] sm:$0x7f] %vm2386, %v5352
    %5390 = vst.msk [vmem:[#allocation8 + $0x78] sm:$0x7f] %vm2386, %v5354
    %5391 = vst.msk [vmem:[#allocation8 + $0x90] sm:$0x7f] %vm2386, %v5356
    %5392 = vst.msk [vmem:[#allocation8 + $0xa8] sm:$0x7f] %vm2386, %v5358
    %5393 = vst.msk [vmem:[#allocation8 + $0xc0] sm:$0x7f] %vm2386, %v5360
    %5394 = vst.msk [vmem:[#allocation8 + $0xd8] sm:$0x7f] %vm2386, %v5362
    %5395 = vst.msk [vmem:[#allocation8 + $0xf0] sm:$0x7f] %vm2386, %v5364
    %5396 = vst.msk [vmem:[#allocation8 + $0x108] sm:$0x7f] %vm2386, %v5366
    %5397 = vst.msk [vmem:[#allocation8 + $0x120] sm:$0x7f] %vm2386, %v5368
    %5398 = vst.msk [vmem:[#allocation8 + $0x138] sm:$0x7f] %vm2386, %v5370
    %v5399 = vld [vmem:[%s5062 + $0x4] sm:$0x7f]
    %v5400 = vld [vmem:[%s5062 + $0x14] sm:$0x7f]
    %v5401 = vld [vmem:[%s5062 + $0x24] sm:$0x7f]
    %v5402 = vld [vmem:[%s5062 + $0x34] sm:$0x7f]
    %v5403 = vld [vmem:[%s5062 + $0x44] sm:$0x7f]
    %v5404 = vld [vmem:[%s5062 + $0x54] sm:$0x7f]
    %v5405 = vld [vmem:[%s5062 + $0x64] sm:$0x7f]
    %v5406 = vld [vmem:[%s5062 + $0xb4] sm:$0x7f]
    %v5407 = vld [vmem:[%s5062 + $0xc4] sm:$0x7f]
    %v5408 = vld [vmem:[%s5062 + $0xd4] sm:$0x7f]
    %v5409 = vld [vmem:[%s5062 + $0xe4] sm:$0x7f]
    %v5410 = vld [vmem:[%s5062 + $0xf4] sm:$0x7f]
    %v5411 = vld [vmem:[%s5062 + $0x104] sm:$0x7f]
    %v5412 = vld [vmem:[%s5062 + $0x114] sm:$0x7f]
    %5427 = vrot.lane.b32.xlu0 %v5399, 108
    %v5428 = vpop.permute.xlu0 %5427
    %5429 = vrot.lane.b32.xlu0 %v5400, 108
    %v5430 = vpop.permute.xlu0 %5429
    %5431 = vrot.lane.b32.xlu0 %v5401, 108
    %v5432 = vpop.permute.xlu0 %5431
    %5433 = vrot.lane.b32.xlu0 %v5402, 108
    %v5434 = vpop.permute.xlu0 %5433
    %5435 = vrot.lane.b32.xlu0 %v5403, 108
    %v5436 = vpop.permute.xlu0 %5435
    %5437 = vrot.lane.b32.xlu0 %v5404, 108
    %v5438 = vpop.permute.xlu0 %5437
    %5439 = vrot.lane.b32.xlu0 %v5405, 108
    %v5440 = vpop.permute.xlu0 %5439
    %5441 = vrot.lane.b32.xlu0 %v5406, 108
    %v5442 = vpop.permute.xlu0 %5441
    %5443 = vrot.lane.b32.xlu0 %v5407, 108
    %v5444 = vpop.permute.xlu0 %5443
    %5445 = vrot.lane.b32.xlu0 %v5408, 108
    %v5446 = vpop.permute.xlu0 %5445
    %5447 = vrot.lane.b32.xlu0 %v5409, 108
    %v5448 = vpop.permute.xlu0 %5447
    %5449 = vrot.lane.b32.xlu0 %v5410, 108
    %v5450 = vpop.permute.xlu0 %5449
    %5451 = vrot.lane.b32.xlu0 %v5411, 108
    %v5452 = vpop.permute.xlu0 %5451
    %5453 = vrot.lane.b32.xlu0 %v5412, 108
    %v5454 = vpop.permute.xlu0 %5453
    %5469 = vst.msk [vmem:[#allocation8] sm:$0x7f] %vm2471, %v5428
    %5470 = vst.msk [vmem:[#allocation8 + $0x18] sm:$0x7f] %vm2471, %v5430
    %5471 = vst.msk [vmem:[#allocation8 + $0x30] sm:$0x7f] %vm2471, %v5432
    %5472 = vst.msk [vmem:[#allocation8 + $0x48] sm:$0x7f] %vm2471, %v5434
    %5473 = vst.msk [vmem:[#allocation8 + $0x60] sm:$0x7f] %vm2471, %v5436
    %5474 = vst.msk [vmem:[#allocation8 + $0x78] sm:$0x7f] %vm2471, %v5438
    %5475 = vst.msk [vmem:[#allocation8 + $0x90] sm:$0x7f] %vm2471, %v5440
    %5476 = vst.msk [vmem:[#allocation8 + $0xa8] sm:$0x7f] %vm2471, %v5442
    %5477 = vst.msk [vmem:[#allocation8 + $0xc0] sm:$0x7f] %vm2471, %v5444
    %5478 = vst.msk [vmem:[#allocation8 + $0xd8] sm:$0x7f] %vm2471, %v5446
    %5479 = vst.msk [vmem:[#allocation8 + $0xf0] sm:$0x7f] %vm2471, %v5448
    %5480 = vst.msk [vmem:[#allocation8 + $0x108] sm:$0x7f] %vm2471, %v5450
    %5481 = vst.msk [vmem:[#allocation8 + $0x120] sm:$0x7f] %vm2471, %v5452
    %5482 = vst.msk [vmem:[#allocation8 + $0x138] sm:$0x7f] %vm2471, %v5454
    %v5483 = vld [vmem:[%s4657] sm:$0x7f]
    %v5484 = vld [vmem:[%s4657 + $0x10] sm:$0x7f]
    %v5485 = vld [vmem:[%s4657 + $0x20] sm:$0x7f]
    %v5486 = vld [vmem:[%s4657 + $0x30] sm:$0x7f]
    %v5487 = vld [vmem:[%s4657 + $0x40] sm:$0x7f]
    %v5488 = vld [vmem:[%s4657 + $0x50] sm:$0x7f]
    %v5489 = vld [vmem:[%s4657 + $0x60] sm:$0x7f]
    %v5490 = vld [vmem:[%s4657 + $0xb0] sm:$0x7f]
    %v5491 = vld [vmem:[%s4657 + $0xc0] sm:$0x7f]
    %v5492 = vld [vmem:[%s4657 + $0xd0] sm:$0x7f]
    %v5493 = vld [vmem:[%s4657 + $0xe0] sm:$0x7f]
    %v5494 = vld [vmem:[%s4657 + $0xf0] sm:$0x7f]
    %v5495 = vld [vmem:[%s4657 + $0x100] sm:$0x7f]
    %v5496 = vld [vmem:[%s4657 + $0x110] sm:$0x7f]
    %5511 = vrot.lane.b32.xlu0 %v5483, 120
    %v5512 = vpop.permute.xlu0 %5511
    %5513 = vrot.lane.b32.xlu0 %v5484, 120
    %v5514 = vpop.permute.xlu0 %5513
    %5515 = vrot.lane.b32.xlu0 %v5485, 120
    %v5516 = vpop.permute.xlu0 %5515
    %5517 = vrot.lane.b32.xlu0 %v5486, 120
    %v5518 = vpop.permute.xlu0 %5517
    %5519 = vrot.lane.b32.xlu0 %v5487, 120
    %v5520 = vpop.permute.xlu0 %5519
    %5521 = vrot.lane.b32.xlu0 %v5488, 120
    %v5522 = vpop.permute.xlu0 %5521
    %5523 = vrot.lane.b32.xlu0 %v5489, 120
    %v5524 = vpop.permute.xlu0 %5523
    %5525 = vrot.lane.b32.xlu0 %v5490, 120
    %v5526 = vpop.permute.xlu0 %5525
    %5527 = vrot.lane.b32.xlu0 %v5491, 120
    %v5528 = vpop.permute.xlu0 %5527
    %5529 = vrot.lane.b32.xlu0 %v5492, 120
    %v5530 = vpop.permute.xlu0 %5529
    %5531 = vrot.lane.b32.xlu0 %v5493, 120
    %v5532 = vpop.permute.xlu0 %5531
    %5533 = vrot.lane.b32.xlu0 %v5494, 120
    %v5534 = vpop.permute.xlu0 %5533
    %5535 = vrot.lane.b32.xlu0 %v5495, 120
    %v5536 = vpop.permute.xlu0 %5535
    %5537 = vrot.lane.b32.xlu0 %v5496, 120
    %v5538 = vpop.permute.xlu0 %5537
    %5553 = vst.msk [vmem:[#allocation8] sm:$0x7f] %vm2556, %v5512
    %5554 = vst.msk [vmem:[#allocation8 + $0x8] sm:$0x7f] %vm2558, %v5512
    %5555 = vst.msk [vmem:[#allocation8 + $0x18] sm:$0x7f] %vm2556, %v5514
    %5556 = vst.msk [vmem:[#allocation8 + $0x20] sm:$0x7f] %vm2558, %v5514
    %5557 = vst.msk [vmem:[#allocation8 + $0x30] sm:$0x7f] %vm2556, %v5516
    %5558 = vst.msk [vmem:[#allocation8 + $0x38] sm:$0x7f] %vm2558, %v5516
    %5559 = vst.msk [vmem:[#allocation8 + $0x48] sm:$0x7f] %vm2556, %v5518
    %5560 = vst.msk [vmem:[#allocation8 + $0x50] sm:$0x7f] %vm2558, %v5518
    %5561 = vst.msk [vmem:[#allocation8 + $0x60] sm:$0x7f] %vm2556, %v5520
    %5562 = vst.msk [vmem:[#allocation8 + $0x68] sm:$0x7f] %vm2558, %v5520
    %5563 = vst.msk [vmem:[#allocation8 + $0x78] sm:$0x7f] %vm2556, %v5522
    %5564 = vst.msk [vmem:[#allocation8 + $0x80] sm:$0x7f] %vm2558, %v5522
    %5565 = vst.msk [vmem:[#allocation8 + $0x90] sm:$0x7f] %vm2556, %v5524
    %5566 = vst.msk [vmem:[#allocation8 + $0x98] sm:$0x7f] %vm2558, %v5524
    %5567 = vst.msk [vmem:[#allocation8 + $0xa8] sm:$0x7f] %vm2556, %v5526
    %5568 = vst.msk [vmem:[#allocation8 + $0xb0] sm:$0x7f] %vm2558, %v5526
    %5569 = vst.msk [vmem:[#allocation8 + $0xc0] sm:$0x7f] %vm2556, %v5528
    %5570 = vst.msk [vmem:[#allocation8 + $0xc8] sm:$0x7f] %vm2558, %v5528
    %5571 = vst.msk [vmem:[#allocation8 + $0xd8] sm:$0x7f] %vm2556, %v5530
    %5572 = vst.msk [vmem:[#allocation8 + $0xe0] sm:$0x7f] %vm2558, %v5530
    %5573 = vst.msk [vmem:[#allocation8 + $0xf0] sm:$0x7f] %vm2556, %v5532
    %5574 = vst.msk [vmem:[#allocation8 + $0xf8] sm:$0x7f] %vm2558, %v5532
    %5575 = vst.msk [vmem:[#allocation8 + $0x108] sm:$0x7f] %vm2556, %v5534
    %5576 = vst.msk [vmem:[#allocation8 + $0x110] sm:$0x7f] %vm2558, %v5534
    %5577 = vst.msk [vmem:[#allocation8 + $0x120] sm:$0x7f] %vm2556, %v5536
    %5578 = vst.msk [vmem:[#allocation8 + $0x128] sm:$0x7f] %vm2558, %v5536
    %5579 = vst.msk [vmem:[#allocation8 + $0x138] sm:$0x7f] %vm2556, %v5538
    %5580 = vst.msk [vmem:[#allocation8 + $0x140] sm:$0x7f] %vm2558, %v5538
    %v5581 = vld [vmem:[%s4657 + $0x1] sm:$0x7f]
    %v5582 = vld [vmem:[%s4657 + $0x11] sm:$0x7f]
    %v5583 = vld [vmem:[%s4657 + $0x21] sm:$0x7f]
    %v5584 = vld [vmem:[%s4657 + $0x31] sm:$0x7f]
    %v5585 = vld [vmem:[%s4657 + $0x41] sm:$0x7f]
    %v5586 = vld [vmem:[%s4657 + $0x51] sm:$0x7f]
    %v5587 = vld [vmem:[%s4657 + $0x61] sm:$0x7f]
    %v5588 = vld [vmem:[%s4657 + $0xb1] sm:$0x7f]
    %v5589 = vld [vmem:[%s4657 + $0xc1] sm:$0x7f]
    %v5590 = vld [vmem:[%s4657 + $0xd1] sm:$0x7f]
    %v5591 = vld [vmem:[%s4657 + $0xe1] sm:$0x7f]
    %v5592 = vld [vmem:[%s4657 + $0xf1] sm:$0x7f]
    %v5593 = vld [vmem:[%s4657 + $0x101] sm:$0x7f]
    %v5594 = vld [vmem:[%s4657 + $0x111] sm:$0x7f]
    %5609 = vrot.lane.b32.xlu0 %v5581, 4
    %v5610 = vpop.permute.xlu0 %5609
    %5611 = vrot.lane.b32.xlu0 %v5582, 4
    %v5612 = vpop.permute.xlu0 %5611
    %5613 = vrot.lane.b32.xlu0 %v5583, 4
    %v5614 = vpop.permute.xlu0 %5613
    %5615 = vrot.lane.b32.xlu0 %v5584, 4
    %v5616 = vpop.permute.xlu0 %5615
    %5617 = vrot.lane.b32.xlu0 %v5585, 4
    %v5618 = vpop.permute.xlu0 %5617
    %5619 = vrot.lane.b32.xlu0 %v5586, 4
    %v5620 = vpop.permute.xlu0 %5619
    %5621 = vrot.lane.b32.xlu0 %v5587, 4
    %v5622 = vpop.permute.xlu0 %5621
    %5623 = vrot.lane.b32.xlu0 %v5588, 4
    %v5624 = vpop.permute.xlu0 %5623
    %5625 = vrot.lane.b32.xlu0 %v5589, 4
    %v5626 = vpop.permute.xlu0 %5625
    %5627 = vrot.lane.b32.xlu0 %v5590, 4
    %v5628 = vpop.permute.xlu0 %5627
    %5629 = vrot.lane.b32.xlu0 %v5591, 4
    %v5630 = vpop.permute.xlu0 %5629
    %5631 = vrot.lane.b32.xlu0 %v5592, 4
    %v5632 = vpop.permute.xlu0 %5631
    %5633 = vrot.lane.b32.xlu0 %v5593, 4
    %v5634 = vpop.permute.xlu0 %5633
    %5635 = vrot.lane.b32.xlu0 %v5594, 4
    %v5636 = vpop.permute.xlu0 %5635
    %5651 = vst.msk [vmem:[#allocation8 + $0x8] sm:$0x7f] %vm2656, %v5610
    %5652 = vst.msk [vmem:[#allocation8 + $0x20] sm:$0x7f] %vm2656, %v5612
    %5653 = vst.msk [vmem:[#allocation8 + $0x38] sm:$0x7f] %vm2656, %v5614
    %5654 = vst.msk [vmem:[#allocation8 + $0x50] sm:$0x7f] %vm2656, %v5616
    %5655 = vst.msk [vmem:[#allocation8 + $0x68] sm:$0x7f] %vm2656, %v5618
    %5656 = vst.msk [vmem:[#allocation8 + $0x80] sm:$0x7f] %vm2656, %v5620
    %5657 = vst.msk [vmem:[#allocation8 + $0x98] sm:$0x7f] %vm2656, %v5622
    %5658 = vst.msk [vmem:[#allocation8 + $0xb0] sm:$0x7f] %vm2656, %v5624
    %5659 = vst.msk [vmem:[#allocation8 + $0xc8] sm:$0x7f] %vm2656, %v5626
    %5660 = vst.msk [vmem:[#allocation8 + $0xe0] sm:$0x7f] %vm2656, %v5628
    %5661 = vst.msk [vmem:[#allocation8 + $0xf8] sm:$0x7f] %vm2656, %v5630
    %5662 = vst.msk [vmem:[#allocation8 + $0x110] sm:$0x7f] %vm2656, %v5632
    %5663 = vst.msk [vmem:[#allocation8 + $0x128] sm:$0x7f] %vm2656, %v5634
    %5664 = vst.msk [vmem:[#allocation8 + $0x140] sm:$0x7f] %vm2656, %v5636
    %v5665 = vld [vmem:[%s4657 + $0x2] sm:$0x7f]
    %v5666 = vld [vmem:[%s4657 + $0x12] sm:$0x7f]
    %v5667 = vld [vmem:[%s4657 + $0x22] sm:$0x7f]
    %v5668 = vld [vmem:[%s4657 + $0x32] sm:$0x7f]
    %v5669 = vld [vmem:[%s4657 + $0x42] sm:$0x7f]
    %v5670 = vld [vmem:[%s4657 + $0x52] sm:$0x7f]
    %v5671 = vld [vmem:[%s4657 + $0x62] sm:$0x7f]
    %v5672 = vld [vmem:[%s4657 + $0xb2] sm:$0x7f]
    %v5673 = vld [vmem:[%s4657 + $0xc2] sm:$0x7f]
    %v5674 = vld [vmem:[%s4657 + $0xd2] sm:$0x7f]
    %v5675 = vld [vmem:[%s4657 + $0xe2] sm:$0x7f]
    %v5676 = vld [vmem:[%s4657 + $0xf2] sm:$0x7f]
    %v5677 = vld [vmem:[%s4657 + $0x102] sm:$0x7f]
    %v5678 = vld [vmem:[%s4657 + $0x112] sm:$0x7f]
    %5693 = vrot.lane.b32.xlu0 %v5665, 16
    %v5694 = vpop.permute.xlu0 %5693
    %5695 = vrot.lane.b32.xlu0 %v5666, 16
    %v5696 = vpop.permute.xlu0 %5695
    %5697 = vrot.lane.b32.xlu0 %v5667, 16
    %v5698 = vpop.permute.xlu0 %5697
    %5699 = vrot.lane.b32.xlu0 %v5668, 16
    %v5700 = vpop.permute.xlu0 %5699
    %5701 = vrot.lane.b32.xlu0 %v5669, 16
    %v5702 = vpop.permute.xlu0 %5701
    %5703 = vrot.lane.b32.xlu0 %v5670, 16
    %v5704 = vpop.permute.xlu0 %5703
    %5705 = vrot.lane.b32.xlu0 %v5671, 16
    %v5706 = vpop.permute.xlu0 %5705
    %5707 = vrot.lane.b32.xlu0 %v5672, 16
    %v5708 = vpop.permute.xlu0 %5707
    %5709 = vrot.lane.b32.xlu0 %v5673, 16
    %v5710 = vpop.permute.xlu0 %5709
    %5711 = vrot.lane.b32.xlu0 %v5674, 16
    %v5712 = vpop.permute.xlu0 %5711
    %5713 = vrot.lane.b32.xlu0 %v5675, 16
    %v5714 = vpop.permute.xlu0 %5713
    %5715 = vrot.lane.b32.xlu0 %v5676, 16
    %v5716 = vpop.permute.xlu0 %5715
    %5717 = vrot.lane.b32.xlu0 %v5677, 16
    %v5718 = vpop.permute.xlu0 %5717
    %5719 = vrot.lane.b32.xlu0 %v5678, 16
    %v5720 = vpop.permute.xlu0 %5719
    %5735 = vst.msk [vmem:[#allocation8 + $0x8] sm:$0x7f] %vm2741, %v5694
    %5736 = vst.msk [vmem:[#allocation8 + $0x20] sm:$0x7f] %vm2741, %v5696
    %5737 = vst.msk [vmem:[#allocation8 + $0x38] sm:$0x7f] %vm2741, %v5698
    %5738 = vst.msk [vmem:[#allocation8 + $0x50] sm:$0x7f] %vm2741, %v5700
    %5739 = vst.msk [vmem:[#allocation8 + $0x68] sm:$0x7f] %vm2741, %v5702
    %5740 = vst.msk [vmem:[#allocation8 + $0x80] sm:$0x7f] %vm2741, %v5704
    %5741 = vst.msk [vmem:[#allocation8 + $0x98] sm:$0x7f] %vm2741, %v5706
    %5742 = vst.msk [vmem:[#allocation8 + $0xb0] sm:$0x7f] %vm2741, %v5708
    %5743 = vst.msk [vmem:[#allocation8 + $0xc8] sm:$0x7f] %vm2741, %v5710
    %5744 = vst.msk [vmem:[#allocation8 + $0xe0] sm:$0x7f] %vm2741, %v5712
    %5745 = vst.msk [vmem:[#allocation8 + $0xf8] sm:$0x7f] %vm2741, %v5714
    %5746 = vst.msk [vmem:[#allocation8 + $0x110] sm:$0x7f] %vm2741, %v5716
    %5747 = vst.msk [vmem:[#allocation8 + $0x128] sm:$0x7f] %vm2741, %v5718
    %5748 = vst.msk [vmem:[#allocation8 + $0x140] sm:$0x7f] %vm2741, %v5720
    %v5749 = vld [vmem:[%s4657 + $0x3] sm:$0x7f]
    %v5750 = vld [vmem:[%s4657 + $0x13] sm:$0x7f]
    %v5751 = vld [vmem:[%s4657 + $0x23] sm:$0x7f]
    %v5752 = vld [vmem:[%s4657 + $0x33] sm:$0x7f]
    %v5753 = vld [vmem:[%s4657 + $0x43] sm:$0x7f]
    %v5754 = vld [vmem:[%s4657 + $0x53] sm:$0x7f]
    %v5755 = vld [vmem:[%s4657 + $0x63] sm:$0x7f]
    %v5756 = vld [vmem:[%s4657 + $0xb3] sm:$0x7f]
    %v5757 = vld [vmem:[%s4657 + $0xc3] sm:$0x7f]
    %v5758 = vld [vmem:[%s4657 + $0xd3] sm:$0x7f]
    %v5759 = vld [vmem:[%s4657 + $0xe3] sm:$0x7f]
    %v5760 = vld [vmem:[%s4657 + $0xf3] sm:$0x7f]
    %v5761 = vld [vmem:[%s4657 + $0x103] sm:$0x7f]
    %v5762 = vld [vmem:[%s4657 + $0x113] sm:$0x7f]
    %5777 = vrot.lane.b32.xlu0 %v5749, 28
    %v5778 = vpop.permute.xlu0 %5777
    %5779 = vrot.lane.b32.xlu0 %v5750, 28
    %v5780 = vpop.permute.xlu0 %5779
    %5781 = vrot.lane.b32.xlu0 %v5751, 28
    %v5782 = vpop.permute.xlu0 %5781
    %5783 = vrot.lane.b32.xlu0 %v5752, 28
    %v5784 = vpop.permute.xlu0 %5783
    %5785 = vrot.lane.b32.xlu0 %v5753, 28
    %v5786 = vpop.permute.xlu0 %5785
    %5787 = vrot.lane.b32.xlu0 %v5754, 28
    %v5788 = vpop.permute.xlu0 %5787
    %5789 = vrot.lane.b32.xlu0 %v5755, 28
    %v5790 = vpop.permute.xlu0 %5789
    %5791 = vrot.lane.b32.xlu0 %v5756, 28
    %v5792 = vpop.permute.xlu0 %5791
    %5793 = vrot.lane.b32.xlu0 %v5757, 28
    %v5794 = vpop.permute.xlu0 %5793
    %5795 = vrot.lane.b32.xlu0 %v5758, 28
    %v5796 = vpop.permute.xlu0 %5795
    %5797 = vrot.lane.b32.xlu0 %v5759, 28
    %v5798 = vpop.permute.xlu0 %5797
    %5799 = vrot.lane.b32.xlu0 %v5760, 28
    %v5800 = vpop.permute.xlu0 %5799
    %5801 = vrot.lane.b32.xlu0 %v5761, 28
    %v5802 = vpop.permute.xlu0 %5801
    %5803 = vrot.lane.b32.xlu0 %v5762, 28
    %v5804 = vpop.permute.xlu0 %5803
    %5819 = vst.msk [vmem:[#allocation8 + $0x8] sm:$0x7f] %vm2826, %v5778
    %5820 = vst.msk [vmem:[#allocation8 + $0x20] sm:$0x7f] %vm2826, %v5780
    %5821 = vst.msk [vmem:[#allocation8 + $0x38] sm:$0x7f] %vm2826, %v5782
    %5822 = vst.msk [vmem:[#allocation8 + $0x50] sm:$0x7f] %vm2826, %v5784
    %5823 = vst.msk [vmem:[#allocation8 + $0x68] sm:$0x7f] %vm2826, %v5786
    %5824 = vst.msk [vmem:[#allocation8 + $0x80] sm:$0x7f] %vm2826, %v5788
    %5825 = vst.msk [vmem:[#allocation8 + $0x98] sm:$0x7f] %vm2826, %v5790
    %5826 = vst.msk [vmem:[#allocation8 + $0xb0] sm:$0x7f] %vm2826, %v5792
    %5827 = vst.msk [vmem:[#allocation8 + $0xc8] sm:$0x7f] %vm2826, %v5794
    %5828 = vst.msk [vmem:[#allocation8 + $0xe0] sm:$0x7f] %vm2826, %v5796
    %5829 = vst.msk [vmem:[#allocation8 + $0xf8] sm:$0x7f] %vm2826, %v5798
    %5830 = vst.msk [vmem:[#allocation8 + $0x110] sm:$0x7f] %vm2826, %v5800
    %5831 = vst.msk [vmem:[#allocation8 + $0x128] sm:$0x7f] %vm2826, %v5802
    %5832 = vst.msk [vmem:[#allocation8 + $0x140] sm:$0x7f] %vm2826, %v5804
    %v5833 = vld [vmem:[%s4657 + $0x4] sm:$0x7f]
    %v5834 = vld [vmem:[%s4657 + $0x14] sm:$0x7f]
    %v5835 = vld [vmem:[%s4657 + $0x24] sm:$0x7f]
    %v5836 = vld [vmem:[%s4657 + $0x34] sm:$0x7f]
    %v5837 = vld [vmem:[%s4657 + $0x44] sm:$0x7f]
    %v5838 = vld [vmem:[%s4657 + $0x54] sm:$0x7f]
    %v5839 = vld [vmem:[%s4657 + $0x64] sm:$0x7f]
    %v5840 = vld [vmem:[%s4657 + $0xb4] sm:$0x7f]
    %v5841 = vld [vmem:[%s4657 + $0xc4] sm:$0x7f]
    %v5842 = vld [vmem:[%s4657 + $0xd4] sm:$0x7f]
    %v5843 = vld [vmem:[%s4657 + $0xe4] sm:$0x7f]
    %v5844 = vld [vmem:[%s4657 + $0xf4] sm:$0x7f]
    %v5845 = vld [vmem:[%s4657 + $0x104] sm:$0x7f]
    %v5846 = vld [vmem:[%s4657 + $0x114] sm:$0x7f]
    %5861 = vrot.lane.b32.xlu0 %v5833, 40
    %v5862 = vpop.permute.xlu0 %5861
    %5863 = vrot.lane.b32.xlu0 %v5834, 40
    %v5864 = vpop.permute.xlu0 %5863
    %5865 = vrot.lane.b32.xlu0 %v5835, 40
    %v5866 = vpop.permute.xlu0 %5865
    %5867 = vrot.lane.b32.xlu0 %v5836, 40
    %v5868 = vpop.permute.xlu0 %5867
    %5869 = vrot.lane.b32.xlu0 %v5837, 40
    %v5870 = vpop.permute.xlu0 %5869
    %5871 = vrot.lane.b32.xlu0 %v5838, 40
    %v5872 = vpop.permute.xlu0 %5871
    %5873 = vrot.lane.b32.xlu0 %v5839, 40
    %v5874 = vpop.permute.xlu0 %5873
    %5875 = vrot.lane.b32.xlu0 %v5840, 40
    %v5876 = vpop.permute.xlu0 %5875
    %5877 = vrot.lane.b32.xlu0 %v5841, 40
    %v5878 = vpop.permute.xlu0 %5877
    %5879 = vrot.lane.b32.xlu0 %v5842, 40
    %v5880 = vpop.permute.xlu0 %5879
    %5881 = vrot.lane.b32.xlu0 %v5843, 40
    %v5882 = vpop.permute.xlu0 %5881
    %5883 = vrot.lane.b32.xlu0 %v5844, 40
    %v5884 = vpop.permute.xlu0 %5883
    %5885 = vrot.lane.b32.xlu0 %v5845, 40
    %v5886 = vpop.permute.xlu0 %5885
    %5887 = vrot.lane.b32.xlu0 %v5846, 40
    %v5888 = vpop.permute.xlu0 %5887
    %5903 = vst.msk [vmem:[#allocation8 + $0x8] sm:$0x7f] %vm2911, %v5862
    %5904 = vst.msk [vmem:[#allocation8 + $0x20] sm:$0x7f] %vm2911, %v5864
    %5905 = vst.msk [vmem:[#allocation8 + $0x38] sm:$0x7f] %vm2911, %v5866
    %5906 = vst.msk [vmem:[#allocation8 + $0x50] sm:$0x7f] %vm2911, %v5868
    %5907 = vst.msk [vmem:[#allocation8 + $0x68] sm:$0x7f] %vm2911, %v5870
    %5908 = vst.msk [vmem:[#allocation8 + $0x80] sm:$0x7f] %vm2911, %v5872
    %5909 = vst.msk [vmem:[#allocation8 + $0x98] sm:$0x7f] %vm2911, %v5874
    %5910 = vst.msk [vmem:[#allocation8 + $0xb0] sm:$0x7f] %vm2911, %v5876
    %5911 = vst.msk [vmem:[#allocation8 + $0xc8] sm:$0x7f] %vm2911, %v5878
    %5912 = vst.msk [vmem:[#allocation8 + $0xe0] sm:$0x7f] %vm2911, %v5880
    %5913 = vst.msk [vmem:[#allocation8 + $0xf8] sm:$0x7f] %vm2911, %v5882
    %5914 = vst.msk [vmem:[#allocation8 + $0x110] sm:$0x7f] %vm2911, %v5884
    %5915 = vst.msk [vmem:[#allocation8 + $0x128] sm:$0x7f] %vm2911, %v5886
    %5916 = vst.msk [vmem:[#allocation8 + $0x140] sm:$0x7f] %vm2911, %v5888
    %v5917 = vld [vmem:[%s4660] sm:$0x7f]
    %v5918 = vld [vmem:[%s4660 + $0x10] sm:$0x7f]
    %v5919 = vld [vmem:[%s4660 + $0x20] sm:$0x7f]
    %v5920 = vld [vmem:[%s4660 + $0x30] sm:$0x7f]
    %v5921 = vld [vmem:[%s4660 + $0x40] sm:$0x7f]
    %v5922 = vld [vmem:[%s4660 + $0x50] sm:$0x7f]
    %v5923 = vld [vmem:[%s4660 + $0x60] sm:$0x7f]
    %v5924 = vld [vmem:[%s4660 + $0xb0] sm:$0x7f]
    %v5925 = vld [vmem:[%s4660 + $0xc0] sm:$0x7f]
    %v5926 = vld [vmem:[%s4660 + $0xd0] sm:$0x7f]
    %v5927 = vld [vmem:[%s4660 + $0xe0] sm:$0x7f]
    %v5928 = vld [vmem:[%s4660 + $0xf0] sm:$0x7f]
    %v5929 = vld [vmem:[%s4660 + $0x100] sm:$0x7f]
    %v5930 = vld [vmem:[%s4660 + $0x110] sm:$0x7f]
    %5945 = vrot.lane.b32.xlu0 %v5917, 52
    %v5946 = vpop.permute.xlu0 %5945
    %5947 = vrot.lane.b32.xlu0 %v5918, 52
    %v5948 = vpop.permute.xlu0 %5947
    %5949 = vrot.lane.b32.xlu0 %v5919, 52
    %v5950 = vpop.permute.xlu0 %5949
    %5951 = vrot.lane.b32.xlu0 %v5920, 52
    %v5952 = vpop.permute.xlu0 %5951
    %5953 = vrot.lane.b32.xlu0 %v5921, 52
    %v5954 = vpop.permute.xlu0 %5953
    %5955 = vrot.lane.b32.xlu0 %v5922, 52
    %v5956 = vpop.permute.xlu0 %5955
    %5957 = vrot.lane.b32.xlu0 %v5923, 52
    %v5958 = vpop.permute.xlu0 %5957
    %5959 = vrot.lane.b32.xlu0 %v5924, 52
    %v5960 = vpop.permute.xlu0 %5959
    %5961 = vrot.lane.b32.xlu0 %v5925, 52
    %v5962 = vpop.permute.xlu0 %5961
    %5963 = vrot.lane.b32.xlu0 %v5926, 52
    %v5964 = vpop.permute.xlu0 %5963
    %5965 = vrot.lane.b32.xlu0 %v5927, 52
    %v5966 = vpop.permute.xlu0 %5965
    %5967 = vrot.lane.b32.xlu0 %v5928, 52
    %v5968 = vpop.permute.xlu0 %5967
    %5969 = vrot.lane.b32.xlu0 %v5929, 52
    %v5970 = vpop.permute.xlu0 %5969
    %5971 = vrot.lane.b32.xlu0 %v5930, 52
    %v5972 = vpop.permute.xlu0 %5971
    %5987 = vst.msk [vmem:[#allocation8 + $0x8] sm:$0x7f] %vm2996, %v5946
    %5988 = vst.msk [vmem:[#allocation8 + $0x20] sm:$0x7f] %vm2996, %v5948
    %5989 = vst.msk [vmem:[#allocation8 + $0x38] sm:$0x7f] %vm2996, %v5950
    %5990 = vst.msk [vmem:[#allocation8 + $0x50] sm:$0x7f] %vm2996, %v5952
    %5991 = vst.msk [vmem:[#allocation8 + $0x68] sm:$0x7f] %vm2996, %v5954
    %5992 = vst.msk [vmem:[#allocation8 + $0x80] sm:$0x7f] %vm2996, %v5956
    %5993 = vst.msk [vmem:[#allocation8 + $0x98] sm:$0x7f] %vm2996, %v5958
    %5994 = vst.msk [vmem:[#allocation8 + $0xb0] sm:$0x7f] %vm2996, %v5960
    %5995 = vst.msk [vmem:[#allocation8 + $0xc8] sm:$0x7f] %vm2996, %v5962
    %5996 = vst.msk [vmem:[#allocation8 + $0xe0] sm:$0x7f] %vm2996, %v5964
    %5997 = vst.msk [vmem:[#allocation8 + $0xf8] sm:$0x7f] %vm2996, %v5966
    %5998 = vst.msk [vmem:[#allocation8 + $0x110] sm:$0x7f] %vm2996, %v5968
    %5999 = vst.msk [vmem:[#allocation8 + $0x128] sm:$0x7f] %vm2996, %v5970
    %6000 = vst.msk [vmem:[#allocation8 + $0x140] sm:$0x7f] %vm2996, %v5972
    %v6001 = vld [vmem:[%s4660 + $0x1] sm:$0x7f]
    %v6002 = vld [vmem:[%s4660 + $0x11] sm:$0x7f]
    %v6003 = vld [vmem:[%s4660 + $0x21] sm:$0x7f]
    %v6004 = vld [vmem:[%s4660 + $0x31] sm:$0x7f]
    %v6005 = vld [vmem:[%s4660 + $0x41] sm:$0x7f]
    %v6006 = vld [vmem:[%s4660 + $0x51] sm:$0x7f]
    %v6007 = vld [vmem:[%s4660 + $0x61] sm:$0x7f]
    %v6008 = vld [vmem:[%s4660 + $0xb1] sm:$0x7f]
    %v6009 = vld [vmem:[%s4660 + $0xc1] sm:$0x7f]
    %v6010 = vld [vmem:[%s4660 + $0xd1] sm:$0x7f]
    %v6011 = vld [vmem:[%s4660 + $0xe1] sm:$0x7f]
    %v6012 = vld [vmem:[%s4660 + $0xf1] sm:$0x7f]
    %v6013 = vld [vmem:[%s4660 + $0x101] sm:$0x7f]
    %v6014 = vld [vmem:[%s4660 + $0x111] sm:$0x7f]
    %6029 = vrot.lane.b32.xlu0 %v6001, 64
    %v6030 = vpop.permute.xlu0 %6029
    %6031 = vrot.lane.b32.xlu0 %v6002, 64
    %v6032 = vpop.permute.xlu0 %6031
    %6033 = vrot.lane.b32.xlu0 %v6003, 64
    %v6034 = vpop.permute.xlu0 %6033
    %6035 = vrot.lane.b32.xlu0 %v6004, 64
    %v6036 = vpop.permute.xlu0 %6035
    %6037 = vrot.lane.b32.xlu0 %v6005, 64
    %v6038 = vpop.permute.xlu0 %6037
    %6039 = vrot.lane.b32.xlu0 %v6006, 64
    %v6040 = vpop.permute.xlu0 %6039
    %6041 = vrot.lane.b32.xlu0 %v6007, 64
    %v6042 = vpop.permute.xlu0 %6041
    %6043 = vrot.lane.b32.xlu0 %v6008, 64
    %v6044 = vpop.permute.xlu0 %6043
    %6045 = vrot.lane.b32.xlu0 %v6009, 64
    %v6046 = vpop.permute.xlu0 %6045
    %6047 = vrot.lane.b32.xlu0 %v6010, 64
    %v6048 = vpop.permute.xlu0 %6047
    %6049 = vrot.lane.b32.xlu0 %v6011, 64
    %v6050 = vpop.permute.xlu0 %6049
    %6051 = vrot.lane.b32.xlu0 %v6012, 64
    %v6052 = vpop.permute.xlu0 %6051
    %6053 = vrot.lane.b32.xlu0 %v6013, 64
    %v6054 = vpop.permute.xlu0 %6053
    %6055 = vrot.lane.b32.xlu0 %v6014, 64
    %v6056 = vpop.permute.xlu0 %6055
    %6071 = vst.msk [vmem:[#allocation8 + $0x8] sm:$0x7f] %vm3081, %v6030
    %6072 = vst.msk [vmem:[#allocation8 + $0x20] sm:$0x7f] %vm3081, %v6032
    %6073 = vst.msk [vmem:[#allocation8 + $0x38] sm:$0x7f] %vm3081, %v6034
    %6074 = vst.msk [vmem:[#allocation8 + $0x50] sm:$0x7f] %vm3081, %v6036
    %6075 = vst.msk [vmem:[#allocation8 + $0x68] sm:$0x7f] %vm3081, %v6038
    %6076 = vst.msk [vmem:[#allocation8 + $0x80] sm:$0x7f] %vm3081, %v6040
    %6077 = vst.msk [vmem:[#allocation8 + $0x98] sm:$0x7f] %vm3081, %v6042
    %6078 = vst.msk [vmem:[#allocation8 + $0xb0] sm:$0x7f] %vm3081, %v6044
    %6079 = vst.msk [vmem:[#allocation8 + $0xc8] sm:$0x7f] %vm3081, %v6046
    %6080 = vst.msk [vmem:[#allocation8 + $0xe0] sm:$0x7f] %vm3081, %v6048
    %6081 = vst.msk [vmem:[#allocation8 + $0xf8] sm:$0x7f] %vm3081, %v6050
    %6082 = vst.msk [vmem:[#allocation8 + $0x110] sm:$0x7f] %vm3081, %v6052
    %6083 = vst.msk [vmem:[#allocation8 + $0x128] sm:$0x7f] %vm3081, %v6054
    %6084 = vst.msk [vmem:[#allocation8 + $0x140] sm:$0x7f] %vm3081, %v6056
    %v6085 = vld [vmem:[%s4660 + $0x2] sm:$0x7f]
    %v6086 = vld [vmem:[%s4660 + $0x12] sm:$0x7f]
    %v6087 = vld [vmem:[%s4660 + $0x22] sm:$0x7f]
    %v6088 = vld [vmem:[%s4660 + $0x32] sm:$0x7f]
    %v6089 = vld [vmem:[%s4660 + $0x42] sm:$0x7f]
    %v6090 = vld [vmem:[%s4660 + $0x52] sm:$0x7f]
    %v6091 = vld [vmem:[%s4660 + $0x62] sm:$0x7f]
    %v6092 = vld [vmem:[%s4660 + $0xb2] sm:$0x7f]
    %v6093 = vld [vmem:[%s4660 + $0xc2] sm:$0x7f]
    %v6094 = vld [vmem:[%s4660 + $0xd2] sm:$0x7f]
    %v6095 = vld [vmem:[%s4660 + $0xe2] sm:$0x7f]
    %v6096 = vld [vmem:[%s4660 + $0xf2] sm:$0x7f]
    %v6097 = vld [vmem:[%s4660 + $0x102] sm:$0x7f]
    %v6098 = vld [vmem:[%s4660 + $0x112] sm:$0x7f]
    %6113 = vrot.lane.b32.xlu0 %v6085, 76
    %v6114 = vpop.permute.xlu0 %6113
    %6115 = vrot.lane.b32.xlu0 %v6086, 76
    %v6116 = vpop.permute.xlu0 %6115
    %6117 = vrot.lane.b32.xlu0 %v6087, 76
    %v6118 = vpop.permute.xlu0 %6117
    %6119 = vrot.lane.b32.xlu0 %v6088, 76
    %v6120 = vpop.permute.xlu0 %6119
    %6121 = vrot.lane.b32.xlu0 %v6089, 76
    %v6122 = vpop.permute.xlu0 %6121
    %6123 = vrot.lane.b32.xlu0 %v6090, 76
    %v6124 = vpop.permute.xlu0 %6123
    %6125 = vrot.lane.b32.xlu0 %v6091, 76
    %v6126 = vpop.permute.xlu0 %6125
    %6127 = vrot.lane.b32.xlu0 %v6092, 76
    %v6128 = vpop.permute.xlu0 %6127
    %6129 = vrot.lane.b32.xlu0 %v6093, 76
    %v6130 = vpop.permute.xlu0 %6129
    %6131 = vrot.lane.b32.xlu0 %v6094, 76
    %v6132 = vpop.permute.xlu0 %6131
    %6133 = vrot.lane.b32.xlu0 %v6095, 76
    %v6134 = vpop.permute.xlu0 %6133
    %6135 = vrot.lane.b32.xlu0 %v6096, 76
    %v6136 = vpop.permute.xlu0 %6135
    %6137 = vrot.lane.b32.xlu0 %v6097, 76
    %v6138 = vpop.permute.xlu0 %6137
    %6139 = vrot.lane.b32.xlu0 %v6098, 76
    %v6140 = vpop.permute.xlu0 %6139
    %6155 = vst.msk [vmem:[#allocation8 + $0x8] sm:$0x7f] %vm3166, %v6114
    %6156 = vst.msk [vmem:[#allocation8 + $0x20] sm:$0x7f] %vm3166, %v6116
    %6157 = vst.msk [vmem:[#allocation8 + $0x38] sm:$0x7f] %vm3166, %v6118
    %6158 = vst.msk [vmem:[#allocation8 + $0x50] sm:$0x7f] %vm3166, %v6120
    %6159 = vst.msk [vmem:[#allocation8 + $0x68] sm:$0x7f] %vm3166, %v6122
    %6160 = vst.msk [vmem:[#allocation8 + $0x80] sm:$0x7f] %vm3166, %v6124
    %6161 = vst.msk [vmem:[#allocation8 + $0x98] sm:$0x7f] %vm3166, %v6126
    %6162 = vst.msk [vmem:[#allocation8 + $0xb0] sm:$0x7f] %vm3166, %v6128
    %6163 = vst.msk [vmem:[#allocation8 + $0xc8] sm:$0x7f] %vm3166, %v6130
    %6164 = vst.msk [vmem:[#allocation8 + $0xe0] sm:$0x7f] %vm3166, %v6132
    %6165 = vst.msk [vmem:[#allocation8 + $0xf8] sm:$0x7f] %vm3166, %v6134
    %6166 = vst.msk [vmem:[#allocation8 + $0x110] sm:$0x7f] %vm3166, %v6136
    %6167 = vst.msk [vmem:[#allocation8 + $0x128] sm:$0x7f] %vm3166, %v6138
    %6168 = vst.msk [vmem:[#allocation8 + $0x140] sm:$0x7f] %vm3166, %v6140
    %v6169 = vld [vmem:[%s4660 + $0x3] sm:$0x7f]
    %v6170 = vld [vmem:[%s4660 + $0x13] sm:$0x7f]
    %v6171 = vld [vmem:[%s4660 + $0x23] sm:$0x7f]
    %v6172 = vld [vmem:[%s4660 + $0x33] sm:$0x7f]
    %v6173 = vld [vmem:[%s4660 + $0x43] sm:$0x7f]
    %v6174 = vld [vmem:[%s4660 + $0x53] sm:$0x7f]
    %v6175 = vld [vmem:[%s4660 + $0x63] sm:$0x7f]
    %v6176 = vld [vmem:[%s4660 + $0xb3] sm:$0x7f]
    %v6177 = vld [vmem:[%s4660 + $0xc3] sm:$0x7f]
    %v6178 = vld [vmem:[%s4660 + $0xd3] sm:$0x7f]
    %v6179 = vld [vmem:[%s4660 + $0xe3] sm:$0x7f]
    %v6180 = vld [vmem:[%s4660 + $0xf3] sm:$0x7f]
    %v6181 = vld [vmem:[%s4660 + $0x103] sm:$0x7f]
    %v6182 = vld [vmem:[%s4660 + $0x113] sm:$0x7f]
    %6197 = vrot.lane.b32.xlu0 %v6169, 88
    %v6198 = vpop.permute.xlu0 %6197
    %6199 = vrot.lane.b32.xlu0 %v6170, 88
    %v6200 = vpop.permute.xlu0 %6199
    %6201 = vrot.lane.b32.xlu0 %v6171, 88
    %v6202 = vpop.permute.xlu0 %6201
    %6203 = vrot.lane.b32.xlu0 %v6172, 88
    %v6204 = vpop.permute.xlu0 %6203
    %6205 = vrot.lane.b32.xlu0 %v6173, 88
    %v6206 = vpop.permute.xlu0 %6205
    %6207 = vrot.lane.b32.xlu0 %v6174, 88
    %v6208 = vpop.permute.xlu0 %6207
    %6209 = vrot.lane.b32.xlu0 %v6175, 88
    %v6210 = vpop.permute.xlu0 %6209
    %6211 = vrot.lane.b32.xlu0 %v6176, 88
    %v6212 = vpop.permute.xlu0 %6211
    %6213 = vrot.lane.b32.xlu0 %v6177, 88
    %v6214 = vpop.permute.xlu0 %6213
    %6215 = vrot.lane.b32.xlu0 %v6178, 88
    %v6216 = vpop.permute.xlu0 %6215
    %6217 = vrot.lane.b32.xlu0 %v6179, 88
    %v6218 = vpop.permute.xlu0 %6217
    %6219 = vrot.lane.b32.xlu0 %v6180, 88
    %v6220 = vpop.permute.xlu0 %6219
    %6221 = vrot.lane.b32.xlu0 %v6181, 88
    %v6222 = vpop.permute.xlu0 %6221
    %6223 = vrot.lane.b32.xlu0 %v6182, 88
    %v6224 = vpop.permute.xlu0 %6223
    %6239 = vst.msk [vmem:[#allocation8 + $0x8] sm:$0x7f] %vm3251, %v6198
    %6240 = vst.msk [vmem:[#allocation8 + $0x20] sm:$0x7f] %vm3251, %v6200
    %6241 = vst.msk [vmem:[#allocation8 + $0x38] sm:$0x7f] %vm3251, %v6202
    %6242 = vst.msk [vmem:[#allocation8 + $0x50] sm:$0x7f] %vm3251, %v6204
    %6243 = vst.msk [vmem:[#allocation8 + $0x68] sm:$0x7f] %vm3251, %v6206
    %6244 = vst.msk [vmem:[#allocation8 + $0x80] sm:$0x7f] %vm3251, %v6208
    %6245 = vst.msk [vmem:[#allocation8 + $0x98] sm:$0x7f] %vm3251, %v6210
    %6246 = vst.msk [vmem:[#allocation8 + $0xb0] sm:$0x7f] %vm3251, %v6212
    %6247 = vst.msk [vmem:[#allocation8 + $0xc8] sm:$0x7f] %vm3251, %v6214
    %6248 = vst.msk [vmem:[#allocation8 + $0xe0] sm:$0x7f] %vm3251, %v6216
    %6249 = vst.msk [vmem:[#allocation8 + $0xf8] sm:$0x7f] %vm3251, %v6218
    %6250 = vst.msk [vmem:[#allocation8 + $0x110] sm:$0x7f] %vm3251, %v6220
    %6251 = vst.msk [vmem:[#allocation8 + $0x128] sm:$0x7f] %vm3251, %v6222
    %6252 = vst.msk [vmem:[#allocation8 + $0x140] sm:$0x7f] %vm3251, %v6224
    %v6253 = vld [vmem:[%s4660 + $0x4] sm:$0x7f]
    %v6254 = vld [vmem:[%s4660 + $0x14] sm:$0x7f]
    %v6255 = vld [vmem:[%s4660 + $0x24] sm:$0x7f]
    %v6256 = vld [vmem:[%s4660 + $0x34] sm:$0x7f]
    %v6257 = vld [vmem:[%s4660 + $0x44] sm:$0x7f]
    %v6258 = vld [vmem:[%s4660 + $0x54] sm:$0x7f]
    %v6259 = vld [vmem:[%s4660 + $0x64] sm:$0x7f]
    %v6260 = vld [vmem:[%s4660 + $0xb4] sm:$0x7f]
    %v6261 = vld [vmem:[%s4660 + $0xc4] sm:$0x7f]
    %v6262 = vld [vmem:[%s4660 + $0xd4] sm:$0x7f]
    %v6263 = vld [vmem:[%s4660 + $0xe4] sm:$0x7f]
    %v6264 = vld [vmem:[%s4660 + $0xf4] sm:$0x7f]
    %v6265 = vld [vmem:[%s4660 + $0x104] sm:$0x7f]
    %v6266 = vld [vmem:[%s4660 + $0x114] sm:$0x7f]
    %6281 = vrot.lane.b32.xlu0 %v6253, 100
    %v6282 = vpop.permute.xlu0 %6281
    %6283 = vrot.lane.b32.xlu0 %v6254, 100
    %v6284 = vpop.permute.xlu0 %6283
    %6285 = vrot.lane.b32.xlu0 %v6255, 100
    %v6286 = vpop.permute.xlu0 %6285
    %6287 = vrot.lane.b32.xlu0 %v6256, 100
    %v6288 = vpop.permute.xlu0 %6287
    %6289 = vrot.lane.b32.xlu0 %v6257, 100
    %v6290 = vpop.permute.xlu0 %6289
    %6291 = vrot.lane.b32.xlu0 %v6258, 100
    %v6292 = vpop.permute.xlu0 %6291
    %6293 = vrot.lane.b32.xlu0 %v6259, 100
    %v6294 = vpop.permute.xlu0 %6293
    %6295 = vrot.lane.b32.xlu0 %v6260, 100
    %v6296 = vpop.permute.xlu0 %6295
    %6297 = vrot.lane.b32.xlu0 %v6261, 100
    %v6298 = vpop.permute.xlu0 %6297
    %6299 = vrot.lane.b32.xlu0 %v6262, 100
    %v6300 = vpop.permute.xlu0 %6299
    %6301 = vrot.lane.b32.xlu0 %v6263, 100
    %v6302 = vpop.permute.xlu0 %6301
    %6303 = vrot.lane.b32.xlu0 %v6264, 100
    %v6304 = vpop.permute.xlu0 %6303
    %6305 = vrot.lane.b32.xlu0 %v6265, 100
    %v6306 = vpop.permute.xlu0 %6305
    %6307 = vrot.lane.b32.xlu0 %v6266, 100
    %v6308 = vpop.permute.xlu0 %6307
    %6323 = vst.msk [vmem:[#allocation8 + $0x8] sm:$0x7f] %vm3336, %v6282
    %6324 = vst.msk [vmem:[#allocation8 + $0x20] sm:$0x7f] %vm3336, %v6284
    %6325 = vst.msk [vmem:[#allocation8 + $0x38] sm:$0x7f] %vm3336, %v6286
    %6326 = vst.msk [vmem:[#allocation8 + $0x50] sm:$0x7f] %vm3336, %v6288
    %6327 = vst.msk [vmem:[#allocation8 + $0x68] sm:$0x7f] %vm3336, %v6290
    %6328 = vst.msk [vmem:[#allocation8 + $0x80] sm:$0x7f] %vm3336, %v6292
    %6329 = vst.msk [vmem:[#allocation8 + $0x98] sm:$0x7f] %vm3336, %v6294
    %6330 = vst.msk [vmem:[#allocation8 + $0xb0] sm:$0x7f] %vm3336, %v6296
    %6331 = vst.msk [vmem:[#allocation8 + $0xc8] sm:$0x7f] %vm3336, %v6298
    %6332 = vst.msk [vmem:[#allocation8 + $0xe0] sm:$0x7f] %vm3336, %v6300
    %6333 = vst.msk [vmem:[#allocation8 + $0xf8] sm:$0x7f] %vm3336, %v6302
    %6334 = vst.msk [vmem:[#allocation8 + $0x110] sm:$0x7f] %vm3336, %v6304
    %6335 = vst.msk [vmem:[#allocation8 + $0x128] sm:$0x7f] %vm3336, %v6306
    %6336 = vst.msk [vmem:[#allocation8 + $0x140] sm:$0x7f] %vm3336, %v6308
    %v6337 = vld [vmem:[%s4663] sm:$0x7f]
    %v6338 = vld [vmem:[%s4663 + $0x10] sm:$0x7f]
    %v6339 = vld [vmem:[%s4663 + $0x20] sm:$0x7f]
    %v6340 = vld [vmem:[%s4663 + $0x30] sm:$0x7f]
    %v6341 = vld [vmem:[%s4663 + $0x40] sm:$0x7f]
    %v6342 = vld [vmem:[%s4663 + $0x50] sm:$0x7f]
    %v6343 = vld [vmem:[%s4663 + $0x60] sm:$0x7f]
    %v6344 = vld [vmem:[%s4663 + $0xb0] sm:$0x7f]
    %v6345 = vld [vmem:[%s4663 + $0xc0] sm:$0x7f]
    %v6346 = vld [vmem:[%s4663 + $0xd0] sm:$0x7f]
    %v6347 = vld [vmem:[%s4663 + $0xe0] sm:$0x7f]
    %v6348 = vld [vmem:[%s4663 + $0xf0] sm:$0x7f]
    %v6349 = vld [vmem:[%s4663 + $0x100] sm:$0x7f]
    %v6350 = vld [vmem:[%s4663 + $0x110] sm:$0x7f]
    %6365 = vrot.lane.b32.xlu0 %v6337, 112
    %v6366 = vpop.permute.xlu0 %6365
    %6367 = vrot.lane.b32.xlu0 %v6338, 112
    %v6368 = vpop.permute.xlu0 %6367
    %6369 = vrot.lane.b32.xlu0 %v6339, 112
    %v6370 = vpop.permute.xlu0 %6369
    %6371 = vrot.lane.b32.xlu0 %v6340, 112
    %v6372 = vpop.permute.xlu0 %6371
    %6373 = vrot.lane.b32.xlu0 %v6341, 112
    %v6374 = vpop.permute.xlu0 %6373
    %6375 = vrot.lane.b32.xlu0 %v6342, 112
    %v6376 = vpop.permute.xlu0 %6375
    %6377 = vrot.lane.b32.xlu0 %v6343, 112
    %v6378 = vpop.permute.xlu0 %6377
    %6379 = vrot.lane.b32.xlu0 %v6344, 112
    %v6380 = vpop.permute.xlu0 %6379
    %6381 = vrot.lane.b32.xlu0 %v6345, 112
    %v6382 = vpop.permute.xlu0 %6381
    %6383 = vrot.lane.b32.xlu0 %v6346, 112
    %v6384 = vpop.permute.xlu0 %6383
    %6385 = vrot.lane.b32.xlu0 %v6347, 112
    %v6386 = vpop.permute.xlu0 %6385
    %6387 = vrot.lane.b32.xlu0 %v6348, 112
    %v6388 = vpop.permute.xlu0 %6387
    %6389 = vrot.lane.b32.xlu0 %v6349, 112
    %v6390 = vpop.permute.xlu0 %6389
    %6391 = vrot.lane.b32.xlu0 %v6350, 112
    %v6392 = vpop.permute.xlu0 %6391
    %6407 = vst.msk [vmem:[#allocation8 + $0x8] sm:$0x7f] %vm3421, %v6366
    %6408 = vst.msk [vmem:[#allocation8 + $0x20] sm:$0x7f] %vm3421, %v6368
    %6409 = vst.msk [vmem:[#allocation8 + $0x38] sm:$0x7f] %vm3421, %v6370
    %6410 = vst.msk [vmem:[#allocation8 + $0x50] sm:$0x7f] %vm3421, %v6372
    %6411 = vst.msk [vmem:[#allocation8 + $0x68] sm:$0x7f] %vm3421, %v6374
    %6412 = vst.msk [vmem:[#allocation8 + $0x80] sm:$0x7f] %vm3421, %v6376
    %6413 = vst.msk [vmem:[#allocation8 + $0x98] sm:$0x7f] %vm3421, %v6378
    %6414 = vst.msk [vmem:[#allocation8 + $0xb0] sm:$0x7f] %vm3421, %v6380
    %6415 = vst.msk [vmem:[#allocation8 + $0xc8] sm:$0x7f] %vm3421, %v6382
    %6416 = vst.msk [vmem:[#allocation8 + $0xe0] sm:$0x7f] %vm3421, %v6384
    %6417 = vst.msk [vmem:[#allocation8 + $0xf8] sm:$0x7f] %vm3421, %v6386
    %6418 = vst.msk [vmem:[#allocation8 + $0x110] sm:$0x7f] %vm3421, %v6388
    %6419 = vst.msk [vmem:[#allocation8 + $0x128] sm:$0x7f] %vm3421, %v6390
    %6420 = vst.msk [vmem:[#allocation8 + $0x140] sm:$0x7f] %vm3421, %v6392
    %v6421 = vld [vmem:[%s4663 + $0x1] sm:$0x7f]
    %v6422 = vld [vmem:[%s4663 + $0x11] sm:$0x7f]
    %v6423 = vld [vmem:[%s4663 + $0x21] sm:$0x7f]
    %v6424 = vld [vmem:[%s4663 + $0x31] sm:$0x7f]
    %v6425 = vld [vmem:[%s4663 + $0x41] sm:$0x7f]
    %v6426 = vld [vmem:[%s4663 + $0x51] sm:$0x7f]
    %v6427 = vld [vmem:[%s4663 + $0x61] sm:$0x7f]
    %v6428 = vld [vmem:[%s4663 + $0xb1] sm:$0x7f]
    %v6429 = vld [vmem:[%s4663 + $0xc1] sm:$0x7f]
    %v6430 = vld [vmem:[%s4663 + $0xd1] sm:$0x7f]
    %v6431 = vld [vmem:[%s4663 + $0xe1] sm:$0x7f]
    %v6432 = vld [vmem:[%s4663 + $0xf1] sm:$0x7f]
    %v6433 = vld [vmem:[%s4663 + $0x101] sm:$0x7f]
    %v6434 = vld [vmem:[%s4663 + $0x111] sm:$0x7f]
    %6449 = vrot.lane.b32.xlu0 %v6421, 124
    %v6450 = vpop.permute.xlu0 %6449
    %6451 = vrot.lane.b32.xlu0 %v6422, 124
    %v6452 = vpop.permute.xlu0 %6451
    %6453 = vrot.lane.b32.xlu0 %v6423, 124
    %v6454 = vpop.permute.xlu0 %6453
    %6455 = vrot.lane.b32.xlu0 %v6424, 124
    %v6456 = vpop.permute.xlu0 %6455
    %6457 = vrot.lane.b32.xlu0 %v6425, 124
    %v6458 = vpop.permute.xlu0 %6457
    %6459 = vrot.lane.b32.xlu0 %v6426, 124
    %v6460 = vpop.permute.xlu0 %6459
    %6461 = vrot.lane.b32.xlu0 %v6427, 124
    %v6462 = vpop.permute.xlu0 %6461
    %6463 = vrot.lane.b32.xlu0 %v6428, 124
    %v6464 = vpop.permute.xlu0 %6463
    %6465 = vrot.lane.b32.xlu0 %v6429, 124
    %v6466 = vpop.permute.xlu0 %6465
    %6467 = vrot.lane.b32.xlu0 %v6430, 124
    %v6468 = vpop.permute.xlu0 %6467
    %6469 = vrot.lane.b32.xlu0 %v6431, 124
    %v6470 = vpop.permute.xlu0 %6469
    %6471 = vrot.lane.b32.xlu0 %v6432, 124
    %v6472 = vpop.permute.xlu0 %6471
    %6473 = vrot.lane.b32.xlu0 %v6433, 124
    %v6474 = vpop.permute.xlu0 %6473
    %6475 = vrot.lane.b32.xlu0 %v6434, 124
    %v6476 = vpop.permute.xlu0 %6475
    %6491 = vst.msk [vmem:[#allocation8 + $0x8] sm:$0x7f] %vm3506, %v6450
    %6492 = vst.msk [vmem:[#allocation8 + $0x10] sm:$0x7f] %vm3508, %v6450
    %6493 = vst.msk [vmem:[#allocation8 + $0x20] sm:$0x7f] %vm3506, %v6452
    %6494 = vst.msk [vmem:[#allocation8 + $0x28] sm:$0x7f] %vm3508, %v6452
    %6495 = vst.msk [vmem:[#allocation8 + $0x38] sm:$0x7f] %vm3506, %v6454
    %6496 = vst.msk [vmem:[#allocation8 + $0x40] sm:$0x7f] %vm3508, %v6454
    %6497 = vst.msk [vmem:[#allocation8 + $0x50] sm:$0x7f] %vm3506, %v6456
    %6498 = vst.msk [vmem:[#allocation8 + $0x58] sm:$0x7f] %vm3508, %v6456
    %6499 = vst.msk [vmem:[#allocation8 + $0x68] sm:$0x7f] %vm3506, %v6458
    %6500 = vst.msk [vmem:[#allocation8 + $0x70] sm:$0x7f] %vm3508, %v6458
    %6501 = vst.msk [vmem:[#allocation8 + $0x80] sm:$0x7f] %vm3506, %v6460
    %6502 = vst.msk [vmem:[#allocation8 + $0x88] sm:$0x7f] %vm3508, %v6460
    %6503 = vst.msk [vmem:[#allocation8 + $0x98] sm:$0x7f] %vm3506, %v6462
    %6504 = vst.msk [vmem:[#allocation8 + $0xa0] sm:$0x7f] %vm3508, %v6462
    %6505 = vst.msk [vmem:[#allocation8 + $0xb0] sm:$0x7f] %vm3506, %v6464
    %6506 = vst.msk [vmem:[#allocation8 + $0xb8] sm:$0x7f] %vm3508, %v6464
    %6507 = vst.msk [vmem:[#allocation8 + $0xc8] sm:$0x7f] %vm3506, %v6466
    %6508 = vst.msk [vmem:[#allocation8 + $0xd0] sm:$0x7f] %vm3508, %v6466
    %6509 = vst.msk [vmem:[#allocation8 + $0xe0] sm:$0x7f] %vm3506, %v6468
    %6510 = vst.msk [vmem:[#allocation8 + $0xe8] sm:$0x7f] %vm3508, %v6468
    %6511 = vst.msk [vmem:[#allocation8 + $0xf8] sm:$0x7f] %vm3506, %v6470
    %6512 = vst.msk [vmem:[#allocation8 + $0x100] sm:$0x7f] %vm3508, %v6470
    %6513 = vst.msk [vmem:[#allocation8 + $0x110] sm:$0x7f] %vm3506, %v6472
    %6514 = vst.msk [vmem:[#allocation8 + $0x118] sm:$0x7f] %vm3508, %v6472
    %6515 = vst.msk [vmem:[#allocation8 + $0x128] sm:$0x7f] %vm3506, %v6474
    %6516 = vst.msk [vmem:[#allocation8 + $0x130] sm:$0x7f] %vm3508, %v6474
    %6517 = vst.msk [vmem:[#allocation8 + $0x140] sm:$0x7f] %vm3506, %v6476
    %6518 = vst.msk [vmem:[#allocation8 + $0x148] sm:$0x7f] %vm3508, %v6476
    %v6519 = vld [vmem:[%s4663 + $0x2] sm:$0x7f]
    %v6520 = vld [vmem:[%s4663 + $0x12] sm:$0x7f]
    %v6521 = vld [vmem:[%s4663 + $0x22] sm:$0x7f]
    %v6522 = vld [vmem:[%s4663 + $0x32] sm:$0x7f]
    %v6523 = vld [vmem:[%s4663 + $0x42] sm:$0x7f]
    %v6524 = vld [vmem:[%s4663 + $0x52] sm:$0x7f]
    %v6525 = vld [vmem:[%s4663 + $0x62] sm:$0x7f]
    %v6526 = vld [vmem:[%s4663 + $0xb2] sm:$0x7f]
    %v6527 = vld [vmem:[%s4663 + $0xc2] sm:$0x7f]
    %v6528 = vld [vmem:[%s4663 + $0xd2] sm:$0x7f]
    %v6529 = vld [vmem:[%s4663 + $0xe2] sm:$0x7f]
    %v6530 = vld [vmem:[%s4663 + $0xf2] sm:$0x7f]
    %v6531 = vld [vmem:[%s4663 + $0x102] sm:$0x7f]
    %v6532 = vld [vmem:[%s4663 + $0x112] sm:$0x7f]
    %6547 = vrot.lane.b32.xlu0 %v6519, 8
    %v6548 = vpop.permute.xlu0 %6547
    %6549 = vrot.lane.b32.xlu0 %v6520, 8
    %v6550 = vpop.permute.xlu0 %6549
    %6551 = vrot.lane.b32.xlu0 %v6521, 8
    %v6552 = vpop.permute.xlu0 %6551
    %6553 = vrot.lane.b32.xlu0 %v6522, 8
    %v6554 = vpop.permute.xlu0 %6553
    %6555 = vrot.lane.b32.xlu0 %v6523, 8
    %v6556 = vpop.permute.xlu0 %6555
    %6557 = vrot.lane.b32.xlu0 %v6524, 8
    %v6558 = vpop.permute.xlu0 %6557
    %6559 = vrot.lane.b32.xlu0 %v6525, 8
    %v6560 = vpop.permute.xlu0 %6559
    %6561 = vrot.lane.b32.xlu0 %v6526, 8
    %v6562 = vpop.permute.xlu0 %6561
    %6563 = vrot.lane.b32.xlu0 %v6527, 8
    %v6564 = vpop.permute.xlu0 %6563
    %6565 = vrot.lane.b32.xlu0 %v6528, 8
    %v6566 = vpop.permute.xlu0 %6565
    %6567 = vrot.lane.b32.xlu0 %v6529, 8
    %v6568 = vpop.permute.xlu0 %6567
    %6569 = vrot.lane.b32.xlu0 %v6530, 8
    %v6570 = vpop.permute.xlu0 %6569
    %6571 = vrot.lane.b32.xlu0 %v6531, 8
    %v6572 = vpop.permute.xlu0 %6571
    %6573 = vrot.lane.b32.xlu0 %v6532, 8
    %v6574 = vpop.permute.xlu0 %6573
    %6589 = vst.msk [vmem:[#allocation8 + $0x10] sm:$0x7f] %vm3606, %v6548
    %6590 = vst.msk [vmem:[#allocation8 + $0x28] sm:$0x7f] %vm3606, %v6550
    %6591 = vst.msk [vmem:[#allocation8 + $0x40] sm:$0x7f] %vm3606, %v6552
    %6592 = vst.msk [vmem:[#allocation8 + $0x58] sm:$0x7f] %vm3606, %v6554
    %6593 = vst.msk [vmem:[#allocation8 + $0x70] sm:$0x7f] %vm3606, %v6556
    %6594 = vst.msk [vmem:[#allocation8 + $0x88] sm:$0x7f] %vm3606, %v6558
    %6595 = vst.msk [vmem:[#allocation8 + $0xa0] sm:$0x7f] %vm3606, %v6560
    %6596 = vst.msk [vmem:[#allocation8 + $0xb8] sm:$0x7f] %vm3606, %v6562
    %6597 = vst.msk [vmem:[#allocation8 + $0xd0] sm:$0x7f] %vm3606, %v6564
    %6598 = vst.msk [vmem:[#allocation8 + $0xe8] sm:$0x7f] %vm3606, %v6566
    %6599 = vst.msk [vmem:[#allocation8 + $0x100] sm:$0x7f] %vm3606, %v6568
    %6600 = vst.msk [vmem:[#allocation8 + $0x118] sm:$0x7f] %vm3606, %v6570
    %6601 = vst.msk [vmem:[#allocation8 + $0x130] sm:$0x7f] %vm3606, %v6572
    %6602 = vst.msk [vmem:[#allocation8 + $0x148] sm:$0x7f] %vm3606, %v6574
    %v6603 = vld [vmem:[%s4663 + $0x3] sm:$0x7f]
    %v6604 = vld [vmem:[%s4663 + $0x13] sm:$0x7f]
    %v6605 = vld [vmem:[%s4663 + $0x23] sm:$0x7f]
    %v6606 = vld [vmem:[%s4663 + $0x33] sm:$0x7f]
    %v6607 = vld [vmem:[%s4663 + $0x43] sm:$0x7f]
    %v6608 = vld [vmem:[%s4663 + $0x53] sm:$0x7f]
    %v6609 = vld [vmem:[%s4663 + $0x63] sm:$0x7f]
    %v6610 = vld [vmem:[%s4663 + $0xb3] sm:$0x7f]
    %v6611 = vld [vmem:[%s4663 + $0xc3] sm:$0x7f]
    %v6612 = vld [vmem:[%s4663 + $0xd3] sm:$0x7f]
    %v6613 = vld [vmem:[%s4663 + $0xe3] sm:$0x7f]
    %v6614 = vld [vmem:[%s4663 + $0xf3] sm:$0x7f]
    %v6615 = vld [vmem:[%s4663 + $0x103] sm:$0x7f]
    %v6616 = vld [vmem:[%s4663 + $0x113] sm:$0x7f]
    %6631 = vrot.lane.b32.xlu0 %v6603, 20
    %v6632 = vpop.permute.xlu0 %6631
    %6633 = vrot.lane.b32.xlu0 %v6604, 20
    %v6634 = vpop.permute.xlu0 %6633
    %6635 = vrot.lane.b32.xlu0 %v6605, 20
    %v6636 = vpop.permute.xlu0 %6635
    %6637 = vrot.lane.b32.xlu0 %v6606, 20
    %v6638 = vpop.permute.xlu0 %6637
    %6639 = vrot.lane.b32.xlu0 %v6607, 20
    %v6640 = vpop.permute.xlu0 %6639
    %6641 = vrot.lane.b32.xlu0 %v6608, 20
    %v6642 = vpop.permute.xlu0 %6641
    %6643 = vrot.lane.b32.xlu0 %v6609, 20
    %v6644 = vpop.permute.xlu0 %6643
    %6645 = vrot.lane.b32.xlu0 %v6610, 20
    %v6646 = vpop.permute.xlu0 %6645
    %6647 = vrot.lane.b32.xlu0 %v6611, 20
    %v6648 = vpop.permute.xlu0 %6647
    %6649 = vrot.lane.b32.xlu0 %v6612, 20
    %v6650 = vpop.permute.xlu0 %6649
    %6651 = vrot.lane.b32.xlu0 %v6613, 20
    %v6652 = vpop.permute.xlu0 %6651
    %6653 = vrot.lane.b32.xlu0 %v6614, 20
    %v6654 = vpop.permute.xlu0 %6653
    %6655 = vrot.lane.b32.xlu0 %v6615, 20
    %v6656 = vpop.permute.xlu0 %6655
    %6657 = vrot.lane.b32.xlu0 %v6616, 20
    %v6658 = vpop.permute.xlu0 %6657
    %6673 = vst.msk [vmem:[#allocation8 + $0x10] sm:$0x7f] %vm3691, %v6632
    %6674 = vst.msk [vmem:[#allocation8 + $0x28] sm:$0x7f] %vm3691, %v6634
    %6675 = vst.msk [vmem:[#allocation8 + $0x40] sm:$0x7f] %vm3691, %v6636
    %6676 = vst.msk [vmem:[#allocation8 + $0x58] sm:$0x7f] %vm3691, %v6638
    %6677 = vst.msk [vmem:[#allocation8 + $0x70] sm:$0x7f] %vm3691, %v6640
    %6678 = vst.msk [vmem:[#allocation8 + $0x88] sm:$0x7f] %vm3691, %v6642
    %6679 = vst.msk [vmem:[#allocation8 + $0xa0] sm:$0x7f] %vm3691, %v6644
    %6680 = vst.msk [vmem:[#allocation8 + $0xb8] sm:$0x7f] %vm3691, %v6646
    %6681 = vst.msk [vmem:[#allocation8 + $0xd0] sm:$0x7f] %vm3691, %v6648
    %6682 = vst.msk [vmem:[#allocation8 + $0xe8] sm:$0x7f] %vm3691, %v6650
    %6683 = vst.msk [vmem:[#allocation8 + $0x100] sm:$0x7f] %vm3691, %v6652
    %6684 = vst.msk [vmem:[#allocation8 + $0x118] sm:$0x7f] %vm3691, %v6654
    %6685 = vst.msk [vmem:[#allocation8 + $0x130] sm:$0x7f] %vm3691, %v6656
    %6686 = vst.msk [vmem:[#allocation8 + $0x148] sm:$0x7f] %vm3691, %v6658
    %v6687 = vld [vmem:[%s4663 + $0x4] sm:$0x7f]
    %v6688 = vld [vmem:[%s4663 + $0x14] sm:$0x7f]
    %v6689 = vld [vmem:[%s4663 + $0x24] sm:$0x7f]
    %v6690 = vld [vmem:[%s4663 + $0x34] sm:$0x7f]
    %v6691 = vld [vmem:[%s4663 + $0x44] sm:$0x7f]
    %v6692 = vld [vmem:[%s4663 + $0x54] sm:$0x7f]
    %v6693 = vld [vmem:[%s4663 + $0x64] sm:$0x7f]
    %v6694 = vld [vmem:[%s4663 + $0xb4] sm:$0x7f]
    %v6695 = vld [vmem:[%s4663 + $0xc4] sm:$0x7f]
    %v6696 = vld [vmem:[%s4663 + $0xd4] sm:$0x7f]
    %v6697 = vld [vmem:[%s4663 + $0xe4] sm:$0x7f]
    %v6698 = vld [vmem:[%s4663 + $0xf4] sm:$0x7f]
    %v6699 = vld [vmem:[%s4663 + $0x104] sm:$0x7f]
    %v6700 = vld [vmem:[%s4663 + $0x114] sm:$0x7f]
    %6715 = vrot.lane.b32.xlu0 %v6687, 32
    %v6716 = vpop.permute.xlu0 %6715
    %6717 = vrot.lane.b32.xlu0 %v6688, 32
    %v6718 = vpop.permute.xlu0 %6717
    %6719 = vrot.lane.b32.xlu0 %v6689, 32
    %v6720 = vpop.permute.xlu0 %6719
    %6721 = vrot.lane.b32.xlu0 %v6690, 32
    %v6722 = vpop.permute.xlu0 %6721
    %6723 = vrot.lane.b32.xlu0 %v6691, 32
    %v6724 = vpop.permute.xlu0 %6723
    %6725 = vrot.lane.b32.xlu0 %v6692, 32
    %v6726 = vpop.permute.xlu0 %6725
    %6727 = vrot.lane.b32.xlu0 %v6693, 32
    %v6728 = vpop.permute.xlu0 %6727
    %6729 = vrot.lane.b32.xlu0 %v6694, 32
    %v6730 = vpop.permute.xlu0 %6729
    %6731 = vrot.lane.b32.xlu0 %v6695, 32
    %v6732 = vpop.permute.xlu0 %6731
    %6733 = vrot.lane.b32.xlu0 %v6696, 32
    %v6734 = vpop.permute.xlu0 %6733
    %6735 = vrot.lane.b32.xlu0 %v6697, 32
    %v6736 = vpop.permute.xlu0 %6735
    %6737 = vrot.lane.b32.xlu0 %v6698, 32
    %v6738 = vpop.permute.xlu0 %6737
    %6739 = vrot.lane.b32.xlu0 %v6699, 32
    %v6740 = vpop.permute.xlu0 %6739
    %6741 = vrot.lane.b32.xlu0 %v6700, 32
    %v6742 = vpop.permute.xlu0 %6741
    %6757 = vst.msk [vmem:[#allocation8 + $0x10] sm:$0x7f] %vm3776, %v6716
    %6758 = vst.msk [vmem:[#allocation8 + $0x28] sm:$0x7f] %vm3776, %v6718
    %6759 = vst.msk [vmem:[#allocation8 + $0x40] sm:$0x7f] %vm3776, %v6720
    %6760 = vst.msk [vmem:[#allocation8 + $0x58] sm:$0x7f] %vm3776, %v6722
    %6761 = vst.msk [vmem:[#allocation8 + $0x70] sm:$0x7f] %vm3776, %v6724
    %6762 = vst.msk [vmem:[#allocation8 + $0x88] sm:$0x7f] %vm3776, %v6726
    %6763 = vst.msk [vmem:[#allocation8 + $0xa0] sm:$0x7f] %vm3776, %v6728
    %6764 = vst.msk [vmem:[#allocation8 + $0xb8] sm:$0x7f] %vm3776, %v6730
    %6765 = vst.msk [vmem:[#allocation8 + $0xd0] sm:$0x7f] %vm3776, %v6732
    %6766 = vst.msk [vmem:[#allocation8 + $0xe8] sm:$0x7f] %vm3776, %v6734
    %6767 = vst.msk [vmem:[#allocation8 + $0x100] sm:$0x7f] %vm3776, %v6736
    %6768 = vst.msk [vmem:[#allocation8 + $0x118] sm:$0x7f] %vm3776, %v6738
    %6769 = vst.msk [vmem:[#allocation8 + $0x130] sm:$0x7f] %vm3776, %v6740
    %6770 = vst.msk [vmem:[#allocation8 + $0x148] sm:$0x7f] %vm3776, %v6742
    %v6771 = vld [vmem:[#allocation8] sm:$0x7f]
    %v6772 = vld [vmem:[#allocation8 + $0x8] sm:$0x7f]
    %v6773 = vld [vmem:[#allocation8 + $0x10] sm:$0x7f]
    %6774 = vst [vmem:[#allocation9] sm:$0x7f] %v6771
    %6775 = vst [vmem:[#allocation9 + $0x8] sm:$0x7f] %v6772
    %6776 = vst.msk [vmem:[#allocation9 + $0x10] sm:$0x7f] %vm3796, %v6773
    %v6777 = vld [vmem:[%s3798] sm:$0x7f]
    %v6778 = vld [vmem:[%s3798 + $0x8] sm:$0x7f]
    %v6779 = vld [vmem:[%s3798 + $0x10] sm:$0x7f]
    %v6783 = vrot.slane %v6777, 1
    %v6784 = vrot.slane %v6778, 1
    %v6785 = vrot.slane %v6779, 1
    %6789 = vst [vmem:[#allocation9] sm:$0x80] %v6783
    %6790 = vst [vmem:[#allocation9 + $0x8] sm:$0x80] %v6784
    %6791 = vst.msk [vmem:[#allocation9 + $0x10] sm:$0x80] %vm3813, %v6785
    %6792 = vst [vmem:[#allocation9 + $0x18] sm:$0x3f] %v6783
    %6793 = vst [vmem:[#allocation9 + $0x20] sm:$0x3f] %v6784
    %6794 = vst.msk [vmem:[#allocation9 + $0x28] sm:$0x3f] %vm3817, %v6785
    %v6795 = vld [vmem:[%s3819] sm:$0x7f]
    %v6796 = vld [vmem:[%s3819 + $0x8] sm:$0x7f]
    %v6797 = vld [vmem:[%s3819 + $0x10] sm:$0x7f]
    %v6801 = vrot.slane %v6795, 2
    %v6802 = vrot.slane %v6796, 2
    %v6803 = vrot.slane %v6797, 2
    %6807 = vst [vmem:[#allocation9 + $0x18] sm:$0xc0] %v6801
    %6808 = vst [vmem:[#allocation9 + $0x20] sm:$0xc0] %v6802
    %6809 = vst.msk [vmem:[#allocation9 + $0x28] sm:$0xc0] %vm3834, %v6803
    %6810 = vst [vmem:[#allocation9 + $0x30] sm:$0x1f] %v6801
    %6811 = vst [vmem:[#allocation9 + $0x38] sm:$0x1f] %v6802
    %6812 = vst.msk [vmem:[#allocation9 + $0x40] sm:$0x1f] %vm3838, %v6803
    %v6813 = vld [vmem:[%s3840] sm:$0x7f]
    %v6814 = vld [vmem:[%s3840 + $0x8] sm:$0x7f]
    %v6815 = vld [vmem:[%s3840 + $0x10] sm:$0x7f]
    %v6819 = vrot.slane %v6813, 3
    %v6820 = vrot.slane %v6814, 3
    %v6821 = vrot.slane %v6815, 3
    %6825 = vst [vmem:[#allocation9 + $0x30] sm:$0xe0] %v6819
    %6826 = vst [vmem:[#allocation9 + $0x38] sm:$0xe0] %v6820
    %6827 = vst.msk [vmem:[#allocation9 + $0x40] sm:$0xe0] %vm3855, %v6821
    %6828 = vst [vmem:[#allocation9 + $0x48] sm:$0xf] %v6819
    %6829 = vst [vmem:[#allocation9 + $0x50] sm:$0xf] %v6820
    %6830 = vst.msk [vmem:[#allocation9 + $0x58] sm:$0xf] %vm3859, %v6821
    %v6831 = vld [vmem:[%s3861] sm:$0x7f]
    %v6832 = vld [vmem:[%s3861 + $0x8] sm:$0x7f]
    %v6833 = vld [vmem:[%s3861 + $0x10] sm:$0x7f]
    %v6837 = vrot.slane %v6831, 4
    %v6838 = vrot.slane %v6832, 4
    %v6839 = vrot.slane %v6833, 4
    %6843 = vst [vmem:[#allocation9 + $0x48] sm:$0xf0] %v6837
    %6844 = vst [vmem:[#allocation9 + $0x50] sm:$0xf0] %v6838
    %6845 = vst.msk [vmem:[#allocation9 + $0x58] sm:$0xf0] %vm3876, %v6839
    %6846 = vst [vmem:[#allocation9 + $0x60] sm:$0x7] %v6837
    %6847 = vst [vmem:[#allocation9 + $0x68] sm:$0x7] %v6838
    %6848 = vst.msk [vmem:[#allocation9 + $0x70] sm:$0x7] %vm3880, %v6839
    %v6849 = vld [vmem:[%s3882] sm:$0x7f]
    %v6850 = vld [vmem:[%s3882 + $0x8] sm:$0x7f]
    %v6851 = vld [vmem:[%s3882 + $0x10] sm:$0x7f]
    %v6855 = vrot.slane %v6849, 5
    %v6856 = vrot.slane %v6850, 5
    %v6857 = vrot.slane %v6851, 5
    %6861 = vst [vmem:[#allocation9 + $0x60] sm:$0xf8] %v6855
    %6862 = vst [vmem:[#allocation9 + $0x68] sm:$0xf8] %v6856
    %6863 = vst.msk [vmem:[#allocation9 + $0x70] sm:$0xf8] %vm3897, %v6857
    %6864 = vst [vmem:[#allocation9 + $0x78] sm:$0x3] %v6855
    %6865 = vst [vmem:[#allocation9 + $0x80] sm:$0x3] %v6856
    %6866 = vst.msk [vmem:[#allocation9 + $0x88] sm:$0x3] %vm3901, %v6857
    %v6867 = vld [vmem:[%s3903] sm:$0x7f]
    %v6868 = vld [vmem:[%s3903 + $0x8] sm:$0x7f]
    %v6869 = vld [vmem:[%s3903 + $0x10] sm:$0x7f]
    %v6873 = vrot.slane %v6867, 6
    %v6874 = vrot.slane %v6868, 6
    %v6875 = vrot.slane %v6869, 6
    %6879 = vst [vmem:[#allocation9 + $0x78] sm:$0xfc] %v6873
    %6880 = vst [vmem:[#allocation9 + $0x80] sm:$0xfc] %v6874
    %6881 = vst.msk [vmem:[#allocation9 + $0x88] sm:$0xfc] %vm3918, %v6875
    %6882 = vst [vmem:[#allocation9 + $0x90] sm:$0x1] %v6873
    %6883 = vst [vmem:[#allocation9 + $0x98] sm:$0x1] %v6874
    %6884 = vst.msk [vmem:[#allocation9 + $0xa0] sm:$0x1] %vm3922, %v6875
    %v6885 = vld [vmem:[%s3924] sm:$0x7f]
    %v6886 = vld [vmem:[%s3924 + $0x8] sm:$0x7f]
    %v6887 = vld [vmem:[%s3924 + $0x10] sm:$0x7f]
    %v6891 = vrot.slane %v6885, 7
    %v6892 = vrot.slane %v6886, 7
    %v6893 = vrot.slane %v6887, 7
    %6897 = vst [vmem:[#allocation9 + $0x90] sm:$0xfe] %v6891
    %6898 = vst [vmem:[#allocation9 + $0x98] sm:$0xfe] %v6892
    %6899 = vst.msk [vmem:[#allocation9 + $0xa0] sm:$0xfe] %vm3939, %v6893
    %v6900 = vld [vmem:[%s3941] sm:$0x7f]
    %v6901 = vld [vmem:[%s3941 + $0x8] sm:$0x7f]
    %v6902 = vld [vmem:[%s3941 + $0x10] sm:$0x7f]
    %6903 = vst [vmem:[#allocation9 + $0xa8] sm:$0x7f] %v6900
    %6904 = vst [vmem:[#allocation9 + $0xb0] sm:$0x7f] %v6901
    %6905 = vst.msk [vmem:[#allocation9 + $0xb8] sm:$0x7f] %vm3796, %v6902
    %v6906 = vld [vmem:[%s3948] sm:$0x7f]
    %v6907 = vld [vmem:[%s3948 + $0x8] sm:$0x7f]
    %v6908 = vld [vmem:[%s3948 + $0x10] sm:$0x7f]
    %v6912 = vrot.slane %v6906, 1
    %v6913 = vrot.slane %v6907, 1
    %v6914 = vrot.slane %v6908, 1
    %6918 = vst [vmem:[#allocation9 + $0xa8] sm:$0x80] %v6912
    %6919 = vst [vmem:[#allocation9 + $0xb0] sm:$0x80] %v6913
    %6920 = vst.msk [vmem:[#allocation9 + $0xb8] sm:$0x80] %vm3813, %v6914
    %6921 = vst [vmem:[#allocation9 + $0xc0] sm:$0x3f] %v6912
    %6922 = vst [vmem:[#allocation9 + $0xc8] sm:$0x3f] %v6913
    %6923 = vst.msk [vmem:[#allocation9 + $0xd0] sm:$0x3f] %vm3817, %v6914
    %v6924 = vld [vmem:[%s3967] sm:$0x7f]
    %v6925 = vld [vmem:[%s3967 + $0x8] sm:$0x7f]
    %v6926 = vld [vmem:[%s3967 + $0x10] sm:$0x7f]
    %v6930 = vrot.slane %v6924, 2
    %v6931 = vrot.slane %v6925, 2
    %v6932 = vrot.slane %v6926, 2
    %6936 = vst [vmem:[#allocation9 + $0xc0] sm:$0xc0] %v6930
    %6937 = vst [vmem:[#allocation9 + $0xc8] sm:$0xc0] %v6931
    %6938 = vst.msk [vmem:[#allocation9 + $0xd0] sm:$0xc0] %vm3834, %v6932
    %6939 = vst [vmem:[#allocation9 + $0xd8] sm:$0x1f] %v6930
    %6940 = vst [vmem:[#allocation9 + $0xe0] sm:$0x1f] %v6931
    %6941 = vst.msk [vmem:[#allocation9 + $0xe8] sm:$0x1f] %vm3838, %v6932
    %v6942 = vld [vmem:[%s3986] sm:$0x7f]
    %v6943 = vld [vmem:[%s3986 + $0x8] sm:$0x7f]
    %v6944 = vld [vmem:[%s3986 + $0x10] sm:$0x7f]
    %v6948 = vrot.slane %v6942, 3
    %v6949 = vrot.slane %v6943, 3
    %v6950 = vrot.slane %v6944, 3
    %6954 = vst [vmem:[#allocation9 + $0xd8] sm:$0xe0] %v6948
    %6955 = vst [vmem:[#allocation9 + $0xe0] sm:$0xe0] %v6949
    %6956 = vst.msk [vmem:[#allocation9 + $0xe8] sm:$0xe0] %vm3855, %v6950
    %6957 = vst [vmem:[#allocation9 + $0xf0] sm:$0xf] %v6948
    %6958 = vst [vmem:[#allocation9 + $0xf8] sm:$0xf] %v6949
    %6959 = vst.msk [vmem:[#allocation9 + $0x100] sm:$0xf] %vm3859, %v6950
    %v6960 = vld [vmem:[%s4005] sm:$0x7f]
    %v6961 = vld [vmem:[%s4005 + $0x8] sm:$0x7f]
    %v6962 = vld [vmem:[%s4005 + $0x10] sm:$0x7f]
    %v6966 = vrot.slane %v6960, 4
    %v6967 = vrot.slane %v6961, 4
    %v6968 = vrot.slane %v6962, 4
    %6972 = vst [vmem:[#allocation9 + $0xf0] sm:$0xf0] %v6966
    %6973 = vst [vmem:[#allocation9 + $0xf8] sm:$0xf0] %v6967
    %6974 = vst.msk [vmem:[#allocation9 + $0x100] sm:$0xf0] %vm3876, %v6968
    %6975 = vst [vmem:[#allocation9 + $0x108] sm:$0x7] %v6966
    %6976 = vst [vmem:[#allocation9 + $0x110] sm:$0x7] %v6967
    %6977 = vst.msk [vmem:[#allocation9 + $0x118] sm:$0x7] %vm3880, %v6968
    %v6978 = vld [vmem:[%s4024] sm:$0x7f]
    %v6979 = vld [vmem:[%s4024 + $0x8] sm:$0x7f]
    %v6980 = vld [vmem:[%s4024 + $0x10] sm:$0x7f]
    %v6984 = vrot.slane %v6978, 5
    %v6985 = vrot.slane %v6979, 5
    %v6986 = vrot.slane %v6980, 5
    %6990 = vst [vmem:[#allocation9 + $0x108] sm:$0xf8] %v6984
    %6991 = vst [vmem:[#allocation9 + $0x110] sm:$0xf8] %v6985
    %6992 = vst.msk [vmem:[#allocation9 + $0x118] sm:$0xf8] %vm3897, %v6986
    %6993 = vst [vmem:[#allocation9 + $0x120] sm:$0x3] %v6984
    %6994 = vst [vmem:[#allocation9 + $0x128] sm:$0x3] %v6985
    %6995 = vst.msk [vmem:[#allocation9 + $0x130] sm:$0x3] %vm3901, %v6986
    %v6996 = vld [vmem:[#allocation9] sm:$0xff]
    %v6997 = vld [vmem:[#allocation9 + $0x8] sm:$0xff]
    %v6998 = vld [vmem:[#allocation9 + $0x10] sm:$0xff]
    %v6999 = vld [vmem:[#allocation9 + $0x18] sm:$0xff]
    %v7000 = vld [vmem:[#allocation9 + $0x20] sm:$0xff]
    %v7001 = vld [vmem:[#allocation9 + $0x28] sm:$0xff]
    %v7002 = vld [vmem:[#allocation9 + $0x30] sm:$0xff]
    %v7003 = vld [vmem:[#allocation9 + $0x38] sm:$0xff]
    %v7004 = vld [vmem:[#allocation9 + $0x40] sm:$0xff]
    %v7005 = vld [vmem:[#allocation9 + $0x48] sm:$0xff]
    %v7006 = vld [vmem:[#allocation9 + $0x50] sm:$0xff]
    %v7007 = vld [vmem:[#allocation9 + $0x58] sm:$0xff]
    %v7008 = vld [vmem:[#allocation9 + $0x60] sm:$0xff]
    %v7009 = vld [vmem:[#allocation9 + $0x68] sm:$0xff]
    %v7010 = vld [vmem:[#allocation9 + $0x70] sm:$0xff]
    %v7011 = vld [vmem:[#allocation9 + $0x78] sm:$0xff]
    %v7012 = vld [vmem:[#allocation9 + $0x80] sm:$0xff]
    %v7013 = vld [vmem:[#allocation9 + $0x88] sm:$0xff]
    %v7014 = vld [vmem:[#allocation9 + $0x90] sm:$0xff]
    %v7015 = vld [vmem:[#allocation9 + $0x98] sm:$0xff]
    %v7016 = vld [vmem:[#allocation9 + $0xa0] sm:$0xff]
    %v7017 = vld [vmem:[#allocation9 + $0xa8] sm:$0xff]
    %v7018 = vld [vmem:[#allocation9 + $0xb0] sm:$0xff]
    %v7019 = vld [vmem:[#allocation9 + $0xb8] sm:$0xff]
    %v7020 = vld [vmem:[#allocation9 + $0xc0] sm:$0xff]
    %v7021 = vld [vmem:[#allocation9 + $0xc8] sm:$0xff]
    %v7022 = vld [vmem:[#allocation9 + $0xd0] sm:$0xff]
    %v7023 = vld [vmem:[#allocation9 + $0xd8] sm:$0xff]
    %v7024 = vld [vmem:[#allocation9 + $0xe0] sm:$0xff]
    %v7025 = vld [vmem:[#allocation9 + $0xe8] sm:$0xff]
    %v7026 = vld [vmem:[#allocation9 + $0xf0] sm:$0xff]
    %v7027 = vld [vmem:[#allocation9 + $0xf8] sm:$0xff]
    %v7028 = vld [vmem:[#allocation9 + $0x100] sm:$0xff]
    %v7029 = vld [vmem:[#allocation9 + $0x108] sm:$0xff]
    %v7030 = vld [vmem:[#allocation9 + $0x110] sm:$0xff]
    %v7031 = vld [vmem:[#allocation9 + $0x118] sm:$0xff]
    %v7032 = vld [vmem:[#allocation9 + $0x120] sm:$0x3]
    %v7033 = vld [vmem:[#allocation9 + $0x128] sm:$0x3]
    %v7034 = vld [vmem:[#allocation9 + $0x130] sm:$0x3]
    %v7035 = vld [vmem:[%s9] sm:$0xff]
    %v7036 = vld [vmem:[%s9 + $0x8] sm:$0xff]
    %v7037 = vld [vmem:[%s9 + $0x10] sm:$0xff]
    %v7038 = vld [vmem:[%s9 + $0x18] sm:$0xff]
    %v7039 = vld [vmem:[%s9 + $0x20] sm:$0xff]
    %v7040 = vld [vmem:[%s9 + $0x28] sm:$0xff]
    %v7041 = vld [vmem:[%s9 + $0x30] sm:$0xff]
    %v7042 = vld [vmem:[%s9 + $0x38] sm:$0xff]
    %v7043 = vld [vmem:[%s9 + $0x40] sm:$0xff]
    %v7044 = vld [vmem:[%s9 + $0x48] sm:$0xff]
    %v7045 = vld [vmem:[%s9 + $0x50] sm:$0xff]
    %v7046 = vld [vmem:[%s9 + $0x58] sm:$0xff]
    %v7047 = vld [vmem:[%s9 + $0x60] sm:$0xff]
    %v7048 = vld [vmem:[%s9 + $0x68] sm:$0xff]
    %v7049 = vld [vmem:[%s9 + $0x70] sm:$0xff]
    %v7050 = vld [vmem:[%s9 + $0x78] sm:$0xff]
    %v7051 = vld [vmem:[%s9 + $0x80] sm:$0xff]
    %v7052 = vld [vmem:[%s9 + $0x88] sm:$0xff]
    %v7053 = vld [vmem:[%s9 + $0x90] sm:$0xff]
    %v7054 = vld [vmem:[%s9 + $0x98] sm:$0xff]
    %v7055 = vld [vmem:[%s9 + $0xa0] sm:$0xff]
    %v7056 = vld [vmem:[%s9 + $0xa8] sm:$0xff]
    %v7057 = vld [vmem:[%s9 + $0xb0] sm:$0xff]
    %v7058 = vld [vmem:[%s9 + $0xb8] sm:$0xff]
    %v7059 = vld [vmem:[%s9 + $0xc0] sm:$0xff]
    %v7060 = vld [vmem:[%s9 + $0xc8] sm:$0xff]
    %v7061 = vld [vmem:[%s9 + $0xd0] sm:$0xff]
    %v7062 = vld [vmem:[%s9 + $0xd8] sm:$0xff]
    %v7063 = vld [vmem:[%s9 + $0xe0] sm:$0xff]
    %v7064 = vld [vmem:[%s9 + $0xe8] sm:$0xff]
    %v7065 = vld [vmem:[%s9 + $0xf0] sm:$0xff]
    %v7066 = vld [vmem:[%s9 + $0xf8] sm:$0xff]
    %v7067 = vld [vmem:[%s9 + $0x100] sm:$0xff]
    %v7068 = vld [vmem:[%s9 + $0x108] sm:$0xff]
    %v7069 = vld [vmem:[%s9 + $0x110] sm:$0xff]
    %v7070 = vld [vmem:[%s9 + $0x118] sm:$0xff]
    %v7071 = vld [vmem:[%s9 + $0x120] sm:$0xff]
    %v7072 = vld [vmem:[%s9 + $0x128] sm:$0xf]
    %v7073 = vld [vmem:[%s10] sm:$0x1]
    %v7075 = vlaneseq
    %v7076 = vshrl.u32 %v7075, 7
    %v7077 = vsub.s32 0, %v7076
    %v7078 = vrot.slane %v7073, %v7077
    %v7081 = vsel %vm4127, %v6998, 0
    %v7084 = vsel %vm4127, %v7001, 0
    %v7087 = vsel %vm4127, %v7004, 0
    %v7090 = vsel %vm4127, %v7007, 0
    %v7093 = vsel %vm4127, %v7010, 0
    %v7096 = vsel %vm4127, %v7013, 0
    %v7099 = vsel %vm4127, %v7016, 0
    %v7102 = vsel %vm4127, %v7019, 0
    %v7105 = vsel %vm4127, %v7022, 0
    %v7108 = vsel %vm4127, %v7025, 0
    %v7111 = vsel %vm4127, %v7028, 0
    %v7114 = vsel %vm4127, %v7031, 0
    %v7117 = vsel %vm4127, %v7034, 0
    %v7120 = vsel %vm4167, %v7072, 0
    %7122 = vmatprep.subr.mxu0 0.0
    %7123 = vmatpush1.msra.mxu0 %v7035
    %7124 = vmatprep.subr.mxu0 0.0
    %7125 = vmatpush1.msra.mxu0 %v7036
    %7126 = vmatprep.subr.mxu0 0.0
    %7127 = vmatpush1.msra.mxu0 %v7037
    %7128 = vmatprep.subr.mxu0 0.0
    %7129 = vmatpush1.msra.mxu0 %v7038
    %7130 = vmatprep.subr.mxu0 0.0
    %7131 = vmatpush1.msra.mxu0 %v7039
    %7132 = vmatprep.subr.mxu0 0.0
    %7133 = vmatpush1.msra.mxu0 %v7040
    %7134 = vmatprep.subr.mxu0 0.0
    %7135 = vmatpush1.msra.mxu0 %v7041
    %7136 = vmatprep.subr.mxu0 0.0
    %7137 = vmatpush1.msra.mxu0 %v7042
    %7138 = vmatprep.subr.mxu0 0.0
    %7139 = vmatpush1.msra.mxu0 %v7043
    %7140 = vmatprep.subr.mxu0 0.0
    %7141 = vmatpush1.msra.mxu0 %v7044
    %7142 = vmatprep.subr.mxu0 0.0
    %7143 = vmatpush1.msra.mxu0 %v7045
    %7144 = vmatprep.subr.mxu0 0.0
    %7145 = vmatpush1.msra.mxu0 %v7046
    %7146 = vmatprep.subr.mxu0 0.0
    %7147 = vmatpush1.msra.mxu0 %v7047
    %7148 = vmatprep.subr.mxu0 0.0
    %7149 = vmatpush1.msra.mxu0 %v7048
    %7150 = vmatprep.subr.mxu0 0.0
    %7151 = vmatpush1.msra.mxu0 %v7049
    %7152 = vmatprep.subr.mxu0 0.0
    %7153 = vmatpush1.msra.mxu0 %v7050
    %7154 = vmatprep.subr.mxu0 0.0
    %7155 = vmatpush1.msra.mxu0 %v7051
    %7156 = vmatprep.subr.mxu0 0.0
    %7157 = vmatpush1.msra.mxu0 %v7052
    %7158 = vmatprep.subr.mxu0 0.0
    %7159 = vmatpush1.msra.mxu0 %v7053
    %7160 = vmatprep.subr.mxu0 0.0
    %7161 = vmatpush1.msra.mxu0 %v7054
    %7162 = vmatprep.subr.mxu0 0.0
    %7163 = vmatpush1.msra.mxu0 %v7055
    %7164 = vmatprep.subr.mxu0 0.0
    %7165 = vmatpush1.msra.mxu0 %v7056
    %7166 = vmatprep.subr.mxu0 0.0
    %7167 = vmatpush1.msra.mxu0 %v7057
    %7168 = vmatprep.subr.mxu0 0.0
    %7169 = vmatpush1.msra.mxu0 %v7058
    %7170 = vmatprep.subr.mxu0 0.0
    %7171 = vmatpush1.msra.mxu0 %v7059
    %7172 = vmatprep.subr.mxu0 0.0
    %7173 = vmatpush1.msra.mxu0 %v7060
    %7174 = vmatprep.subr.mxu0 0.0
    %7175 = vmatpush1.msra.mxu0 %v7061
    %7176 = vmatprep.subr.mxu0 0.0
    %7177 = vmatpush1.msra.mxu0 %v7062
    %7178 = vmatprep.subr.mxu0 0.0
    %7179 = vmatpush1.msra.mxu0 %v7063
    %7180 = vmatprep.subr.mxu0 0.0
    %7181 = vmatpush1.msra.mxu0 %v7064
    %7182 = vmatprep.subr.mxu0 0.0
    %7183 = vmatpush1.msra.mxu0 %v7065
    %7184 = vmatprep.subr.mxu0 0.0
    %7185 = vmatpush1.msra.mxu0 %v7066
    %7186 = vmatprep.mubr.f32.mxu0 %v6997
    %7187 = vmatmul.mubr.f32.gmra.mrb[0].mxu0 %v6996
    %v7188 = vpop.f32.mrb[0].mxu0
    %v7189 = vadd.f32 %v7078, %v7188
    %v7190 = vpop.f32.mrb[0].mxu0
    %7191 = vmatprep.mubr.f32.mxu0 %v7000
    %7192 = vmatmul.mubr.f32.gmra.mrb[0].mxu0 %v6999
    %v7193 = vpop.f32.mrb[0].mxu0
    %v7194 = vadd.f32 %v7078, %v7193
    %v7195 = vpop.f32.mrb[0].mxu0
    %7196 = vmatprep.mubr.f32.mxu0 %v7003
    %7197 = vmatmul.mubr.f32.gmra.mrb[0].mxu0 %v7002
    %v7198 = vpop.f32.mrb[0].mxu0
    %v7199 = vadd.f32 %v7078, %v7198
    %v7200 = vpop.f32.mrb[0].mxu0
    %7201 = vmatprep.mubr.f32.mxu0 %v7006
    %7202 = vmatmul.mubr.f32.gmra.mrb[0].mxu0 %v7005
    %v7203 = vpop.f32.mrb[0].mxu0
    %v7204 = vadd.f32 %v7078, %v7203
    %v7205 = vpop.f32.mrb[0].mxu0
    %7206 = vmatprep.mubr.f32.mxu0 %v7009
    %7207 = vmatmul.mubr.f32.gmra.mrb[0].mxu0 %v7008
    %v7208 = vpop.f32.mrb[0].mxu0
    %v7209 = vadd.f32 %v7078, %v7208
    %v7210 = vpop.f32.mrb[0].mxu0
    %7211 = vmatprep.mubr.f32.mxu0 %v7012
    %7212 = vmatmul.mubr.f32.gmra.mrb[0].mxu0 %v7011
    %v7213 = vpop.f32.mrb[0].mxu0
    %v7214 = vadd.f32 %v7078, %v7213
    %v7215 = vpop.f32.mrb[0].mxu0
    %7216 = vmatprep.mubr.f32.mxu0 %v7015
    %7217 = vmatmul.mubr.f32.gmra.mrb[0].mxu0 %v7014
    %v7218 = vpop.f32.mrb[0].mxu0
    %v7219 = vadd.f32 %v7078, %v7218
    %v7220 = vpop.f32.mrb[0].mxu0
    %7221 = vmatprep.mubr.f32.mxu0 %v7018
    %7222 = vmatmul.mubr.f32.gmra.mrb[0].mxu0 %v7017
    %v7223 = vpop.f32.mrb[0].mxu0
    %v7224 = vadd.f32 %v7078, %v7223
    %v7225 = vpop.f32.mrb[0].mxu0
    %7226 = vmatprep.mubr.f32.mxu0 %v7021
    %7227 = vmatmul.mubr.f32.gmra.mrb[0].mxu0 %v7020
    %v7228 = vpop.f32.mrb[0].mxu0
    %v7229 = vadd.f32 %v7078, %v7228
    %v7230 = vpop.f32.mrb[0].mxu0
    %7231 = vmatprep.mubr.f32.mxu0 %v7024
    %7232 = vmatmul.mubr.f32.gmra.mrb[0].mxu0 %v7023
    %v7233 = vpop.f32.mrb[0].mxu0
    %v7234 = vadd.f32 %v7078, %v7233
    %v7235 = vpop.f32.mrb[0].mxu0
    %7236 = vmatprep.mubr.f32.mxu0 %v7027
    %7237 = vmatmul.mubr.f32.gmra.mrb[0].mxu0 %v7026
    %v7238 = vpop.f32.mrb[0].mxu0
    %v7239 = vadd.f32 %v7078, %v7238
    %v7240 = vpop.f32.mrb[0].mxu0
    %7241 = vmatprep.mubr.f32.mxu0 %v7030
    %7242 = vmatmul.mubr.f32.gmra.mrb[0].mxu0 %v7029
    %v7243 = vpop.f32.mrb[0].mxu0
    %v7244 = vadd.f32 %v7078, %v7243
    %v7245 = vpop.f32.mrb[0].mxu0
    %7246 = vmatprep.mubr.f32.mxu0 %v7033
    %7247 = vmatmul.mubr.f32.gmra.mrb[0].mxu0 %v7032
    %v7248 = vpop.f32.mrb[0].mxu0
    %v7249 = vadd.f32 %v7078, %v7248
    %v7250 = vpop.f32.mrb[0].mxu0
    %7251 = vdwg.mxu0
    %7252 = vmatprep.subr.mxu0 0.0
    %7253 = vmatpush1.msra.mxu0 %v7067
    %7254 = vmatprep.subr.mxu0 0.0
    %7255 = vmatpush1.msra.mxu0 %v7068
    %7256 = vmatprep.subr.mxu0 0.0
    %7257 = vmatpush1.msra.mxu0 %v7069
    %7258 = vmatprep.subr.mxu0 0.0
    %7259 = vmatpush1.msra.mxu0 %v7070
    %7260 = vmatprep.subr.mxu0 0.0
    %7261 = vmatpush1.msra.mxu0 %v7071
    %7262 = vmatprep.subr.mxu0 0.0
    %7263 = vmatpush1.msra.mxu0 %v7120
    %7264 = vmatprep.subr.mxu0 0.0
    %7265 = vmatpush1.msra.mxu0 0.0
    %7266 = vmatprep.subr.mxu0 0.0
    %7267 = vmatpush1.msra.mxu0 0.0
    %7268 = vmatprep.subr.mxu0 0.0
    %7269 = vmatpush1.msra.mxu0 0.0
    %7270 = vmatprep.subr.mxu0 0.0
    %7271 = vmatpush1.msra.mxu0 0.0
    %7272 = vmatprep.subr.mxu0 0.0
    %7273 = vmatpush1.msra.mxu0 0.0
    %7274 = vmatprep.subr.mxu0 0.0
    %7275 = vmatpush1.msra.mxu0 0.0
    %7276 = vmatprep.subr.mxu0 0.0
    %7277 = vmatpush1.msra.mxu0 0.0
    %7278 = vmatprep.subr.mxu0 0.0
    %7279 = vmatpush1.msra.mxu0 0.0
    %7280 = vmatprep.subr.mxu0 0.0
    %7281 = vmatpush1.msra.mxu0 0.0
    %7282 = vmatprep.subr.mxu0 0.0
    %7283 = vmatpush1.msra.mxu0 0.0
    %7284 = vmatprep.subr.mxu0 0.0
    %7285 = vmatpush1.msra.mxu0 0.0
    %7286 = vmatprep.subr.mxu0 0.0
    %7287 = vmatpush1.msra.mxu0 0.0
    %7288 = vmatprep.subr.mxu0 0.0
    %7289 = vmatpush1.msra.mxu0 0.0
    %7290 = vmatprep.subr.mxu0 0.0
    %7291 = vmatpush1.msra.mxu0 0.0
    %7292 = vmatprep.subr.mxu0 0.0
    %7293 = vmatpush1.msra.mxu0 0.0
    %7294 = vmatprep.subr.mxu0 0.0
    %7295 = vmatpush1.msra.mxu0 0.0
    %7296 = vmatprep.subr.mxu0 0.0
    %7297 = vmatpush1.msra.mxu0 0.0
    %7298 = vmatprep.subr.mxu0 0.0
    %7299 = vmatpush1.msra.mxu0 0.0
    %7300 = vmatprep.subr.mxu0 0.0
    %7301 = vmatpush1.msra.mxu0 0.0
    %7302 = vmatprep.subr.mxu0 0.0
    %7303 = vmatpush1.msra.mxu0 0.0
    %7304 = vmatprep.subr.mxu0 0.0
    %7305 = vmatpush1.msra.mxu0 0.0
    %7306 = vmatprep.subr.mxu0 0.0
    %7307 = vmatpush1.msra.mxu0 0.0
    %7308 = vmatprep.subr.mxu0 0.0
    %7309 = vmatpush1.msra.mxu0 0.0
    %7310 = vmatprep.subr.mxu0 0.0
    %7311 = vmatpush1.msra.mxu0 0.0
    %7312 = vmatprep.subr.mxu0 0.0
    %7313 = vmatpush1.msra.mxu0 0.0
    %7314 = vmatprep.subr.mxu0 0.0
    %7315 = vmatpush1.msra.mxu0 0.0
    %7316 = vmatprep.mubr.f32.mxu0 0.0
    %7317 = vmatmul.mubr.f32.gmra.mrb[0].mxu0 %v7081
    %v7318 = vpop.f32.mrb[0].mxu0
    %v7319 = vadd.f32 %v7189, %v7318
    %v7320 = vpop.f32.mrb[0].mxu0
    %7321 = vmatprep.mubr.f32.mxu0 0.0
    %7322 = vmatmul.mubr.f32.gmra.mrb[0].mxu0 %v7084
    %v7323 = vpop.f32.mrb[0].mxu0
    %v7324 = vadd.f32 %v7194, %v7323
    %v7325 = vpop.f32.mrb[0].mxu0
    %7326 = vmatprep.mubr.f32.mxu0 0.0
    %7327 = vmatmul.mubr.f32.gmra.mrb[0].mxu0 %v7087
    %v7328 = vpop.f32.mrb[0].mxu0
    %v7329 = vadd.f32 %v7199, %v7328
    %v7330 = vpop.f32.mrb[0].mxu0
    %7331 = vmatprep.mubr.f32.mxu0 0.0
    %7332 = vmatmul.mubr.f32.gmra.mrb[0].mxu0 %v7090
    %v7333 = vpop.f32.mrb[0].mxu0
    %v7334 = vadd.f32 %v7204, %v7333
    %v7335 = vpop.f32.mrb[0].mxu0
    %7336 = vmatprep.mubr.f32.mxu0 0.0
    %7337 = vmatmul.mubr.f32.gmra.mrb[0].mxu0 %v7093
    %v7338 = vpop.f32.mrb[0].mxu0
    %v7339 = vadd.f32 %v7209, %v7338
    %v7340 = vpop.f32.mrb[0].mxu0
    %7341 = vmatprep.mubr.f32.mxu0 0.0
    %7342 = vmatmul.mubr.f32.gmra.mrb[0].mxu0 %v7096
    %v7343 = vpop.f32.mrb[0].mxu0
    %v7344 = vadd.f32 %v7214, %v7343
    %v7345 = vpop.f32.mrb[0].mxu0
    %7346 = vmatprep.mubr.f32.mxu0 0.0
    %7347 = vmatmul.mubr.f32.gmra.mrb[0].mxu0 %v7099
    %v7348 = vpop.f32.mrb[0].mxu0
    %v7349 = vadd.f32 %v7219, %v7348
    %v7350 = vpop.f32.mrb[0].mxu0
    %7351 = vmatprep.mubr.f32.mxu0 0.0
    %7352 = vmatmul.mubr.f32.gmra.mrb[0].mxu0 %v7102
    %v7353 = vpop.f32.mrb[0].mxu0
    %v7354 = vadd.f32 %v7224, %v7353
    %v7355 = vpop.f32.mrb[0].mxu0
    %7356 = vmatprep.mubr.f32.mxu0 0.0
    %7357 = vmatmul.mubr.f32.gmra.mrb[0].mxu0 %v7105
    %v7358 = vpop.f32.mrb[0].mxu0
    %v7359 = vadd.f32 %v7229, %v7358
    %v7360 = vpop.f32.mrb[0].mxu0
    %7361 = vmatprep.mubr.f32.mxu0 0.0
    %7362 = vmatmul.mubr.f32.gmra.mrb[0].mxu0 %v7108
    %v7363 = vpop.f32.mrb[0].mxu0
    %v7364 = vadd.f32 %v7234, %v7363
    %v7365 = vpop.f32.mrb[0].mxu0
    %7366 = vmatprep.mubr.f32.mxu0 0.0
    %7367 = vmatmul.mubr.f32.gmra.mrb[0].mxu0 %v7111
    %v7368 = vpop.f32.mrb[0].mxu0
    %v7369 = vadd.f32 %v7239, %v7368
    %v7370 = vpop.f32.mrb[0].mxu0
    %7371 = vmatprep.mubr.f32.mxu0 0.0
    %7372 = vmatmul.mubr.f32.gmra.mrb[0].mxu0 %v7114
    %v7373 = vpop.f32.mrb[0].mxu0
    %v7374 = vadd.f32 %v7244, %v7373
    %v7375 = vpop.f32.mrb[0].mxu0
    %7376 = vmatprep.mubr.f32.mxu0 0.0
    %7377 = vmatmul.mubr.f32.gmra.mrb[0].mxu0 %v7117
    %v7378 = vpop.f32.mrb[0].mxu0
    %v7379 = vadd.f32 %v7249, %v7378
    %v7380 = vpop.f32.mrb[0].mxu0
    %7381 = vdwg.mxu0
    %v7382 = vsel %vm51, %v7319, 0.0
    %v7383 = vsel %vm51, %v7324, 0.0
    %v7384 = vadd.f32 %v7382, %v7383
    %v7385 = vsel %vm51, %v7329, 0.0
    %v7386 = vadd.f32 %v7384, %v7385
    %v7387 = vsel %vm51, %v7334, 0.0
    %v7388 = vadd.f32 %v7386, %v7387
    %v7389 = vsel %vm51, %v7339, 0.0
    %v7390 = vadd.f32 %v7388, %v7389
    %v7391 = vsel %vm51, %v7344, 0.0
    %v7392 = vadd.f32 %v7390, %v7391
    %v7393 = vsel %vm51, %v7349, 0.0
    %v7394 = vadd.f32 %v7392, %v7393
    %v7395 = vsel %vm51, %v7354, 0.0
    %v7396 = vadd.f32 %v7394, %v7395
    %v7397 = vsel %vm51, %v7359, 0.0
    %v7398 = vadd.f32 %v7396, %v7397
    %v7399 = vsel %vm51, %v7364, 0.0
    %v7400 = vadd.f32 %v7398, %v7399
    %v7401 = vsel %vm51, %v7369, 0.0
    %v7402 = vadd.f32 %v7400, %v7401
    %v7403 = vsel %vm51, %v7374, 0.0
    %v7404 = vadd.f32 %v7402, %v7403
    %v7405 = vsel %vm4454, %v7379, 0.0
    %v7406 = vadd.f32 %v7404, %v7405
    %v7407 = vrot.slane %v7406, 4
    %v7408 = vadd.f32 %v7406, %v7407
    %v7409 = vrot.slane %v7408, 2
    %v7410 = vadd.f32 %v7408, %v7409
    %v7411 = vrot.slane %v7410, 1
    %v7412 = vadd.f32 %v7410, %v7411
    %v7413 = vmul.f32 %v7412, %v4463
    %v7414 = vsub.f32 %v7319, %v7413
    %v7415 = vsub.f32 %v7324, %v7413
    %v7416 = vsub.f32 %v7329, %v7413
    %v7417 = vsub.f32 %v7334, %v7413
    %v7418 = vsub.f32 %v7339, %v7413
    %v7419 = vsub.f32 %v7344, %v7413
    %v7420 = vsub.f32 %v7349, %v7413
    %v7421 = vsub.f32 %v7354, %v7413
    %v7422 = vsub.f32 %v7359, %v7413
    %v7423 = vsub.f32 %v7364, %v7413
    %v7424 = vsub.f32 %v7369, %v7413
    %v7425 = vsub.f32 %v7374, %v7413
    %v7426 = vsub.f32 %v7379, %v7413
    %v7427 = vmul.f32 %v7414, %v7414
    %v7428 = vmul.f32 %v7415, %v7415
    %v7429 = vmul.f32 %v7416, %v7416
    %v7430 = vmul.f32 %v7417, %v7417
    %v7431 = vmul.f32 %v7418, %v7418
    %v7432 = vmul.f32 %v7419, %v7419
    %v7433 = vmul.f32 %v7420, %v7420
    %v7434 = vmul.f32 %v7421, %v7421
    %v7435 = vmul.f32 %v7422, %v7422
    %v7436 = vmul.f32 %v7423, %v7423
    %v7437 = vmul.f32 %v7424, %v7424
    %v7438 = vmul.f32 %v7425, %v7425
    %v7439 = vmul.f32 %v7426, %v7426
    %v7440 = vsel %vm51, %v7427, 0.0
    %v7441 = vsel %vm51, %v7428, 0.0
    %v7442 = vadd.f32 %v7440, %v7441
    %v7443 = vsel %vm51, %v7429, 0.0
    %v7444 = vadd.f32 %v7442, %v7443
    %v7445 = vsel %vm51, %v7430, 0.0
    %v7446 = vadd.f32 %v7444, %v7445
    %v7447 = vsel %vm51, %v7431, 0.0
    %v7448 = vadd.f32 %v7446, %v7447
    %v7449 = vsel %vm51, %v7432, 0.0
    %v7450 = vadd.f32 %v7448, %v7449
    %v7451 = vsel %vm51, %v7433, 0.0
    %v7452 = vadd.f32 %v7450, %v7451
    %v7453 = vsel %vm51, %v7434, 0.0
    %v7454 = vadd.f32 %v7452, %v7453
    %v7455 = vsel %vm51, %v7435, 0.0
    %v7456 = vadd.f32 %v7454, %v7455
    %v7457 = vsel %vm51, %v7436, 0.0
    %v7458 = vadd.f32 %v7456, %v7457
    %v7459 = vsel %vm51, %v7437, 0.0
    %v7460 = vadd.f32 %v7458, %v7459
    %v7461 = vsel %vm51, %v7438, 0.0
    %v7462 = vadd.f32 %v7460, %v7461
    %v7463 = vsel %vm4454, %v7439, 0.0
    %v7464 = vadd.f32 %v7462, %v7463
    %v7465 = vrot.slane %v7464, 4
    %v7466 = vadd.f32 %v7464, %v7465
    %v7467 = vrot.slane %v7466, 2
    %v7468 = vadd.f32 %v7466, %v7467
    %v7469 = vrot.slane %v7468, 1
    %v7470 = vadd.f32 %v7468, %v7469
    %v7471 = vmul.f32 %v7470, %v4463
    %v7472 = vld [vmem:[%s11] sm:$0x1]
    %v7473 = vadd.f32 %v7471, 1e-05
    %v7474 = vrsqrt.pop %v7473
    %v7475 = vmul.f32 %v7414, %v7474
    %v7476 = vmul.f32 %v7415, %v7474
    %v7477 = vmul.f32 %v7416, %v7474
    %v7478 = vmul.f32 %v7417, %v7474
    %v7479 = vmul.f32 %v7418, %v7474
    %v7480 = vmul.f32 %v7419, %v7474
    %v7481 = vmul.f32 %v7420, %v7474
    %v7482 = vmul.f32 %v7421, %v7474
    %v7483 = vmul.f32 %v7422, %v7474
    %v7484 = vmul.f32 %v7423, %v7474
    %v7485 = vmul.f32 %v7424, %v7474
    %v7486 = vmul.f32 %v7425, %v7474
    %v7487 = vmul.f32 %v7426, %v7474
    %v7489 = vlaneseq
    %v7490 = vshrl.u32 %v7489, 7
    %v7491 = vsub.s32 0, %v7490
    %v7492 = vrot.slane %v7472, %v7491
    %v7494 = vmul.f32 %v7492, %v7475
    %v7495 = vmul.f32 %v7492, %v7476
    %v7496 = vmul.f32 %v7492, %v7477
    %v7497 = vmul.f32 %v7492, %v7478
    %v7498 = vmul.f32 %v7492, %v7479
    %v7499 = vmul.f32 %v7492, %v7480
    %v7500 = vmul.f32 %v7492, %v7481
    %v7501 = vmul.f32 %v7492, %v7482
    %v7502 = vmul.f32 %v7492, %v7483
    %v7503 = vmul.f32 %v7492, %v7484
    %v7504 = vmul.f32 %v7492, %v7485
    %v7505 = vmul.f32 %v7492, %v7486
    %v7506 = vmul.f32 %v7492, %v7487
    %v7507 = vld [vmem:[%s12] sm:$0x1]
    %v7509 = vlaneseq
    %v7510 = vshrl.u32 %v7509, 7
    %v7511 = vsub.s32 0, %v7510
    %v7512 = vrot.slane %v7507, %v7511
    %v7514 = vadd.f32 %v7494, %v7512
    %v7515 = vadd.f32 %v7495, %v7512
    %v7516 = vadd.f32 %v7496, %v7512
    %v7517 = vadd.f32 %v7497, %v7512
    %v7518 = vadd.f32 %v7498, %v7512
    %v7519 = vadd.f32 %v7499, %v7512
    %v7520 = vadd.f32 %v7500, %v7512
    %v7521 = vadd.f32 %v7501, %v7512
    %v7522 = vadd.f32 %v7502, %v7512
    %v7523 = vadd.f32 %v7503, %v7512
    %v7524 = vadd.f32 %v7504, %v7512
    %v7525 = vadd.f32 %v7505, %v7512
    %v7526 = vadd.f32 %v7506, %v7512
    %v7527 = vsub.f32 0.0, %v7514
    %v7528 = vsub.f32 0.0, %v7515
    %v7529 = vsub.f32 0.0, %v7516
    %v7530 = vsub.f32 0.0, %v7517
    %v7531 = vsub.f32 0.0, %v7518
    %v7532 = vsub.f32 0.0, %v7519
    %v7533 = vsub.f32 0.0, %v7520
    %v7534 = vsub.f32 0.0, %v7521
    %v7535 = vsub.f32 0.0, %v7522
    %v7536 = vsub.f32 0.0, %v7523
    %v7537 = vsub.f32 0.0, %v7524
    %v7538 = vsub.f32 0.0, %v7525
    %v7539 = vsub.f32 0.0, %v7526
    %v7540 = vmul.f32 %v7527, 1.442695
    %v7541 = vpow.pop %v7540
    %v7542 = vmul.f32 %v7528, 1.442695
    %v7543 = vpow.pop %v7542
    %v7544 = vmul.f32 %v7529, 1.442695
    %v7545 = vpow.pop %v7544
    %v7546 = vmul.f32 %v7530, 1.442695
    %v7547 = vpow.pop %v7546
    %v7548 = vmul.f32 %v7531, 1.442695
    %v7549 = vpow.pop %v7548
    %v7550 = vmul.f32 %v7532, 1.442695
    %v7551 = vpow.pop %v7550
    %v7552 = vmul.f32 %v7533, 1.442695
    %v7553 = vpow.pop %v7552
    %v7554 = vmul.f32 %v7534, 1.442695
    %v7555 = vpow.pop %v7554
    %v7556 = vmul.f32 %v7535, 1.442695
    %v7557 = vpow.pop %v7556
    %v7558 = vmul.f32 %v7536, 1.442695
    %v7559 = vpow.pop %v7558
    %v7560 = vmul.f32 %v7537, 1.442695
    %v7561 = vpow.pop %v7560
    %v7562 = vmul.f32 %v7538, 1.442695
    %v7563 = vpow.pop %v7562
    %v7564 = vmul.f32 %v7539, 1.442695
    %v7565 = vpow.pop %v7564
    %v7566 = vadd.f32 %v7541, 1.0
    %v7567 = vadd.f32 %v7543, 1.0
    %v7568 = vadd.f32 %v7545, 1.0
    %v7569 = vadd.f32 %v7547, 1.0
    %v7570 = vadd.f32 %v7549, 1.0
    %v7571 = vadd.f32 %v7551, 1.0
    %v7572 = vadd.f32 %v7553, 1.0
    %v7573 = vadd.f32 %v7555, 1.0
    %v7574 = vadd.f32 %v7557, 1.0
    %v7575 = vadd.f32 %v7559, 1.0
    %v7576 = vadd.f32 %v7561, 1.0
    %v7577 = vadd.f32 %v7563, 1.0
    %v7578 = vadd.f32 %v7565, 1.0
    %v7579 = vrcp.pop %v7566
    %v7580 = vrcp.pop %v7567
    %v7581 = vrcp.pop %v7568
    %v7582 = vrcp.pop %v7569
    %v7583 = vrcp.pop %v7570
    %v7584 = vrcp.pop %v7571
    %v7585 = vrcp.pop %v7572
    %v7586 = vrcp.pop %v7573
    %v7587 = vrcp.pop %v7574
    %v7588 = vrcp.pop %v7575
    %v7589 = vrcp.pop %v7576
    %v7590 = vrcp.pop %v7577
    %v7591 = vrcp.pop %v7578
    %7592 = vst.msk [vmem:[#allocation10] sm:$0xff] %vm51, %v7579
    %7593 = vst.msk [vmem:[#allocation10 + $0x8] sm:$0xff] %vm51, %v7580
    %7594 = vst.msk [vmem:[#allocation10 + $0x10] sm:$0xff] %vm51, %v7581
    %7595 = vst.msk [vmem:[#allocation10 + $0x18] sm:$0xff] %vm51, %v7582
    %7596 = vst.msk [vmem:[#allocation10 + $0x20] sm:$0xff] %vm51, %v7583
    %7597 = vst.msk [vmem:[#allocation10 + $0x28] sm:$0xff] %vm51, %v7584
    %7598 = vst.msk [vmem:[#allocation10 + $0x30] sm:$0xff] %vm51, %v7585
    %7599 = vst.msk [vmem:[#allocation10 + $0x38] sm:$0xff] %vm51, %v7586
    %7600 = vst.msk [vmem:[#allocation10 + $0x40] sm:$0xff] %vm51, %v7587
    %7601 = vst.msk [vmem:[#allocation10 + $0x48] sm:$0xff] %vm51, %v7588
    %7602 = vst.msk [vmem:[#allocation10 + $0x50] sm:$0xff] %vm51, %v7589
    %7603 = vst.msk [vmem:[#allocation10 + $0x58] sm:$0xff] %vm51, %v7590
    %7604 = vst.msk [vmem:[#allocation10 + $0x60] sm:$0x3] %vm4454, %v7591
    %v7605 = vld [vmem:[#allocation10] sm:$0xff]
    %v7606 = vld [vmem:[#allocation10 + $0x8] sm:$0xff]
    %v7607 = vld [vmem:[#allocation10 + $0x10] sm:$0xff]
    %v7608 = vld [vmem:[#allocation10 + $0x18] sm:$0xff]
    %v7609 = vld [vmem:[#allocation10 + $0x20] sm:$0xff]
    %v7610 = vld [vmem:[#allocation10 + $0x28] sm:$0xff]
    %v7611 = vld [vmem:[#allocation10 + $0x30] sm:$0x1]
    %v7612 = vld [vmem:[%s13] sm:$0xff]
    %v7613 = vld [vmem:[%s13 + $0x8] sm:$0xff]
    %v7614 = vld [vmem:[%s13 + $0x10] sm:$0xff]
    %v7615 = vld [vmem:[%s13 + $0x18] sm:$0xff]
    %v7616 = vld [vmem:[%s13 + $0x20] sm:$0xff]
    %v7617 = vld [vmem:[%s13 + $0x28] sm:$0xff]
    %v7618 = vld [vmem:[%s13 + $0x30] sm:$0x1]
    %7620 = vset.pattern.permute.xlu0 0
    %7621 = vperm.xlu0 %7620, %v7605
    %v7622 = vpop.permute.xlu0 %7621
    %7625 = vset.pattern.permute.xlu0 0
    %7626 = vperm.xlu0 %7625, %v7606
    %v7627 = vpop.permute.xlu0 %7626
    %7630 = vset.pattern.permute.xlu0 0
    %7631 = vperm.xlu0 %7630, %v7607
    %v7632 = vpop.permute.xlu0 %7631
    %7635 = vset.pattern.permute.xlu0 0
    %7636 = vperm.xlu0 %7635, %v7608
    %v7637 = vpop.permute.xlu0 %7636
    %7640 = vset.pattern.permute.xlu0 0
    %7641 = vperm.xlu0 %7640, %v7609
    %v7642 = vpop.permute.xlu0 %7641
    %7645 = vset.pattern.permute.xlu0 0
    %7646 = vperm.xlu0 %7645, %v7610
    %v7647 = vpop.permute.xlu0 %7646
    %7650 = vset.pattern.permute.xlu0 0
    %7651 = vperm.xlu0 %7650, %v7611
    %v7652 = vpop.permute.xlu0 %7651
    %v7654 = vmul.f32 %v7622, %v7612
    %v7655 = vmul.f32 %v7627, %v7613
    %v7656 = vmul.f32 %v7632, %v7614
    %v7657 = vmul.f32 %v7637, %v7615
    %v7658 = vmul.f32 %v7642, %v7616
    %v7659 = vmul.f32 %v7647, %v7617
    %v7660 = vmul.f32 %v7652, %v7618
    %v7661 = vadd.f32 %v7654, 0.0
    %v7662 = vadd.f32 %v7655, 0.0
    %v7663 = vadd.f32 %v7656, 0.0
    %v7664 = vadd.f32 %v7657, 0.0
    %v7665 = vadd.f32 %v7658, 0.0
    %v7666 = vadd.f32 %v7659, 0.0
    %v7667 = vadd.f32 %v7660, 0.0
    %s7668 = scalar_lea.vmem %s13, 56
    %v7669 = vld [vmem:[%s7668] sm:$0xff]
    %v7670 = vld [vmem:[%s7668 + $0x8] sm:$0xff]
    %v7671 = vld [vmem:[%s7668 + $0x10] sm:$0xff]
    %v7672 = vld [vmem:[%s7668 + $0x18] sm:$0xff]
    %v7673 = vld [vmem:[%s7668 + $0x20] sm:$0xff]
    %v7674 = vld [vmem:[%s7668 + $0x28] sm:$0xff]
    %v7675 = vld [vmem:[%s7668 + $0x30] sm:$0x1]
    %7676 = vset.pattern.permute.xlu0 1
    %7677 = vperm.xlu0 %7676, %v7605
    %v7678 = vpop.permute.xlu0 %7677
    %7680 = vset.pattern.permute.xlu0 1
    %7681 = vperm.xlu0 %7680, %v7606
    %v7682 = vpop.permute.xlu0 %7681
    %7684 = vset.pattern.permute.xlu0 1
    %7685 = vperm.xlu0 %7684, %v7607
    %v7686 = vpop.permute.xlu0 %7685
    %7688 = vset.pattern.permute.xlu0 1
    %7689 = vperm.xlu0 %7688, %v7608
    %v7690 = vpop.permute.xlu0 %7689
    %7692 = vset.pattern.permute.xlu0 1
    %7693 = vperm.xlu0 %7692, %v7609
    %v7694 = vpop.permute.xlu0 %7693
    %7696 = vset.pattern.permute.xlu0 1
    %7697 = vperm.xlu0 %7696, %v7610
    %v7698 = vpop.permute.xlu0 %7697
    %7700 = vset.pattern.permute.xlu0 1
    %7701 = vperm.xlu0 %7700, %v7611
    %v7702 = vpop.permute.xlu0 %7701
    %v7704 = vmul.f32 %v7678, %v7669
    %v7705 = vmul.f32 %v7682, %v7670
    %v7706 = vmul.f32 %v7686, %v7671
    %v7707 = vmul.f32 %v7690, %v7672
    %v7708 = vmul.f32 %v7694, %v7673
    %v7709 = vmul.f32 %v7698, %v7674
    %v7710 = vmul.f32 %v7702, %v7675
    %v7711 = vadd.f32 %v7661, %v7704
    %v7712 = vadd.f32 %v7662, %v7705
    %v7713 = vadd.f32 %v7663, %v7706
    %v7714 = vadd.f32 %v7664, %v7707
    %v7715 = vadd.f32 %v7665, %v7708
    %v7716 = vadd.f32 %v7666, %v7709
    %v7717 = vadd.f32 %v7667, %v7710
    %s7718 = scalar_lea.vmem %s13, 112
    %v7719 = vld [vmem:[%s7718] sm:$0xff]
    %v7720 = vld [vmem:[%s7718 + $0x8] sm:$0xff]
    %v7721 = vld [vmem:[%s7718 + $0x10] sm:$0xff]
    %v7722 = vld [vmem:[%s7718 + $0x18] sm:$0xff]
    %v7723 = vld [vmem:[%s7718 + $0x20] sm:$0xff]
    %v7724 = vld [vmem:[%s7718 + $0x28] sm:$0xff]
    %v7725 = vld [vmem:[%s7718 + $0x30] sm:$0x1]
    %7726 = vset.pattern.permute.xlu0 2
    %7727 = vperm.xlu0 %7726, %v7605
    %v7728 = vpop.permute.xlu0 %7727
    %7730 = vset.pattern.permute.xlu0 2
    %7731 = vperm.xlu0 %7730, %v7606
    %v7732 = vpop.permute.xlu0 %7731
    %7734 = vset.pattern.permute.xlu0 2
    %7735 = vperm.xlu0 %7734, %v7607
    %v7736 = vpop.permute.xlu0 %7735
    %7738 = vset.pattern.permute.xlu0 2
    %7739 = vperm.xlu0 %7738, %v7608
    %v7740 = vpop.permute.xlu0 %7739
    %7742 = vset.pattern.permute.xlu0 2
    %7743 = vperm.xlu0 %7742, %v7609
    %v7744 = vpop.permute.xlu0 %7743
    %7746 = vset.pattern.permute.xlu0 2
    %7747 = vperm.xlu0 %7746, %v7610
    %v7748 = vpop.permute.xlu0 %7747
    %7750 = vset.pattern.permute.xlu0 2
    %7751 = vperm.xlu0 %7750, %v7611
    %v7752 = vpop.permute.xlu0 %7751
    %v7754 = vmul.f32 %v7728, %v7719
    %v7755 = vmul.f32 %v7732, %v7720
    %v7756 = vmul.f32 %v7736, %v7721
    %v7757 = vmul.f32 %v7740, %v7722
    %v7758 = vmul.f32 %v7744, %v7723
    %v7759 = vmul.f32 %v7748, %v7724
    %v7760 = vmul.f32 %v7752, %v7725
    %v7761 = vadd.f32 %v7711, %v7754
    %v7762 = vadd.f32 %v7712, %v7755
    %v7763 = vadd.f32 %v7713, %v7756
    %v7764 = vadd.f32 %v7714, %v7757
    %v7765 = vadd.f32 %v7715, %v7758
    %v7766 = vadd.f32 %v7716, %v7759
    %v7767 = vadd.f32 %v7717, %v7760
    %s7768 = scalar_lea.vmem %s13, 168
    %v7769 = vld [vmem:[%s7768] sm:$0xff]
    %v7770 = vld [vmem:[%s7768 + $0x8] sm:$0xff]
    %v7771 = vld [vmem:[%s7768 + $0x10] sm:$0xff]
    %v7772 = vld [vmem:[%s7768 + $0x18] sm:$0xff]
    %v7773 = vld [vmem:[%s7768 + $0x20] sm:$0xff]
    %v7774 = vld [vmem:[%s7768 + $0x28] sm:$0xff]
    %v7775 = vld [vmem:[%s7768 + $0x30] sm:$0x1]
    %7776 = vset.pattern.permute.xlu0 3
    %7777 = vperm.xlu0 %7776, %v7605
    %v7778 = vpop.permute.xlu0 %7777
    %7780 = vset.pattern.permute.xlu0 3
    %7781 = vperm.xlu0 %7780, %v7606
    %v7782 = vpop.permute.xlu0 %7781
    %7784 = vset.pattern.permute.xlu0 3
    %7785 = vperm.xlu0 %7784, %v7607
    %v7786 = vpop.permute.xlu0 %7785
    %7788 = vset.pattern.permute.xlu0 3
    %7789 = vperm.xlu0 %7788, %v7608
    %v7790 = vpop.permute.xlu0 %7789
    %7792 = vset.pattern.permute.xlu0 3
    %7793 = vperm.xlu0 %7792, %v7609
    %v7794 = vpop.permute.xlu0 %7793
    %7796 = vset.pattern.permute.xlu0 3
    %7797 = vperm.xlu0 %7796, %v7610
    %v7798 = vpop.permute.xlu0 %7797
    %7800 = vset.pattern.permute.xlu0 3
    %7801 = vperm.xlu0 %7800, %v7611
    %v7802 = vpop.permute.xlu0 %7801
    %v7804 = vmul.f32 %v7778, %v7769
    %v7805 = vmul.f32 %v7782, %v7770
    %v7806 = vmul.f32 %v7786, %v7771
    %v7807 = vmul.f32 %v7790, %v7772
    %v7808 = vmul.f32 %v7794, %v7773
    %v7809 = vmul.f32 %v7798, %v7774
    %v7810 = vmul.f32 %v7802, %v7775
    %v7811 = vadd.f32 %v7761, %v7804
    %v7812 = vadd.f32 %v7762, %v7805
    %v7813 = vadd.f32 %v7763, %v7806
    %v7814 = vadd.f32 %v7764, %v7807
    %v7815 = vadd.f32 %v7765, %v7808
    %v7816 = vadd.f32 %v7766, %v7809
    %v7817 = vadd.f32 %v7767, %v7810
    %s7818 = scalar_lea.vmem %s13, 224
    %v7819 = vld [vmem:[%s7818] sm:$0xff]
    %v7820 = vld [vmem:[%s7818 + $0x8] sm:$0xff]
    %v7821 = vld [vmem:[%s7818 + $0x10] sm:$0xff]
    %v7822 = vld [vmem:[%s7818 + $0x18] sm:$0xff]
    %v7823 = vld [vmem:[%s7818 + $0x20] sm:$0xff]
    %v7824 = vld [vmem:[%s7818 + $0x28] sm:$0xff]
    %v7825 = vld [vmem:[%s7818 + $0x30] sm:$0x1]
    %7826 = vset.pattern.permute.xlu0 4
    %7827 = vperm.xlu0 %7826, %v7605
    %v7828 = vpop.permute.xlu0 %7827
    %7830 = vset.pattern.permute.xlu0 4
    %7831 = vperm.xlu0 %7830, %v7606
    %v7832 = vpop.permute.xlu0 %7831
    %7834 = vset.pattern.permute.xlu0 4
    %7835 = vperm.xlu0 %7834, %v7607
    %v7836 = vpop.permute.xlu0 %7835
    %7838 = vset.pattern.permute.xlu0 4
    %7839 = vperm.xlu0 %7838, %v7608
    %v7840 = vpop.permute.xlu0 %7839
    %7842 = vset.pattern.permute.xlu0 4
    %7843 = vperm.xlu0 %7842, %v7609
    %v7844 = vpop.permute.xlu0 %7843
    %7846 = vset.pattern.permute.xlu0 4
    %7847 = vperm.xlu0 %7846, %v7610
    %v7848 = vpop.permute.xlu0 %7847
    %7850 = vset.pattern.permute.xlu0 4
    %7851 = vperm.xlu0 %7850, %v7611
    %v7852 = vpop.permute.xlu0 %7851
    %v7854 = vmul.f32 %v7828, %v7819
    %v7855 = vmul.f32 %v7832, %v7820
    %v7856 = vmul.f32 %v7836, %v7821
    %v7857 = vmul.f32 %v7840, %v7822
    %v7858 = vmul.f32 %v7844, %v7823
    %v7859 = vmul.f32 %v7848, %v7824
    %v7860 = vmul.f32 %v7852, %v7825
    %v7861 = vadd.f32 %v7811, %v7854
    %v7862 = vadd.f32 %v7812, %v7855
    %v7863 = vadd.f32 %v7813, %v7856
    %v7864 = vadd.f32 %v7814, %v7857
    %v7865 = vadd.f32 %v7815, %v7858
    %v7866 = vadd.f32 %v7816, %v7859
    %v7867 = vadd.f32 %v7817, %v7860
    %s7868 = scalar_lea.vmem %s13, 280
    %v7869 = vld [vmem:[%s7868] sm:$0xff]
    %v7870 = vld [vmem:[%s7868 + $0x8] sm:$0xff]
    %v7871 = vld [vmem:[%s7868 + $0x10] sm:$0xff]
    %v7872 = vld [vmem:[%s7868 + $0x18] sm:$0xff]
    %v7873 = vld [vmem:[%s7868 + $0x20] sm:$0xff]
    %v7874 = vld [vmem:[%s7868 + $0x28] sm:$0xff]
    %v7875 = vld [vmem:[%s7868 + $0x30] sm:$0x1]
    %7876 = vset.pattern.permute.xlu0 5
    %7877 = vperm.xlu0 %7876, %v7605
    %v7878 = vpop.permute.xlu0 %7877
    %7880 = vset.pattern.permute.xlu0 5
    %7881 = vperm.xlu0 %7880, %v7606
    %v7882 = vpop.permute.xlu0 %7881
    %7884 = vset.pattern.permute.xlu0 5
    %7885 = vperm.xlu0 %7884, %v7607
    %v7886 = vpop.permute.xlu0 %7885
    %7888 = vset.pattern.permute.xlu0 5
    %7889 = vperm.xlu0 %7888, %v7608
    %v7890 = vpop.permute.xlu0 %7889
    %7892 = vset.pattern.permute.xlu0 5
    %7893 = vperm.xlu0 %7892, %v7609
    %v7894 = vpop.permute.xlu0 %7893
    %7896 = vset.pattern.permute.xlu0 5
    %7897 = vperm.xlu0 %7896, %v7610
    %v7898 = vpop.permute.xlu0 %7897
    %7900 = vset.pattern.permute.xlu0 5
    %7901 = vperm.xlu0 %7900, %v7611
    %v7902 = vpop.permute.xlu0 %7901
    %v7904 = vmul.f32 %v7878, %v7869
    %v7905 = vmul.f32 %v7882, %v7870
    %v7906 = vmul.f32 %v7886, %v7871
    %v7907 = vmul.f32 %v7890, %v7872
    %v7908 = vmul.f32 %v7894, %v7873
    %v7909 = vmul.f32 %v7898, %v7874
    %v7910 = vmul.f32 %v7902, %v7875
    %v7911 = vadd.f32 %v7861, %v7904
    %v7912 = vadd.f32 %v7862, %v7905
    %v7913 = vadd.f32 %v7863, %v7906
    %v7914 = vadd.f32 %v7864, %v7907
    %v7915 = vadd.f32 %v7865, %v7908
    %v7916 = vadd.f32 %v7866, %v7909
    %v7917 = vadd.f32 %v7867, %v7910
    %s7918 = scalar_lea.vmem %s13, 336
    %v7919 = vld [vmem:[%s7918] sm:$0xff]
    %v7920 = vld [vmem:[%s7918 + $0x8] sm:$0xff]
    %v7921 = vld [vmem:[%s7918 + $0x10] sm:$0xff]
    %v7922 = vld [vmem:[%s7918 + $0x18] sm:$0xff]
    %v7923 = vld [vmem:[%s7918 + $0x20] sm:$0xff]
    %v7924 = vld [vmem:[%s7918 + $0x28] sm:$0xff]
    %v7925 = vld [vmem:[%s7918 + $0x30] sm:$0x1]
    %7926 = vset.pattern.permute.xlu0 6
    %7927 = vperm.xlu0 %7926, %v7605
    %v7928 = vpop.permute.xlu0 %7927
    %7930 = vset.pattern.permute.xlu0 6
    %7931 = vperm.xlu0 %7930, %v7606
    %v7932 = vpop.permute.xlu0 %7931
    %7934 = vset.pattern.permute.xlu0 6
    %7935 = vperm.xlu0 %7934, %v7607
    %v7936 = vpop.permute.xlu0 %7935
    %7938 = vset.pattern.permute.xlu0 6
    %7939 = vperm.xlu0 %7938, %v7608
    %v7940 = vpop.permute.xlu0 %7939
    %7942 = vset.pattern.permute.xlu0 6
    %7943 = vperm.xlu0 %7942, %v7609
    %v7944 = vpop.permute.xlu0 %7943
    %7946 = vset.pattern.permute.xlu0 6
    %7947 = vperm.xlu0 %7946, %v7610
    %v7948 = vpop.permute.xlu0 %7947
    %7950 = vset.pattern.permute.xlu0 6
    %7951 = vperm.xlu0 %7950, %v7611
    %v7952 = vpop.permute.xlu0 %7951
    %v7954 = vmul.f32 %v7928, %v7919
    %v7955 = vmul.f32 %v7932, %v7920
    %v7956 = vmul.f32 %v7936, %v7921
    %v7957 = vmul.f32 %v7940, %v7922
    %v7958 = vmul.f32 %v7944, %v7923
    %v7959 = vmul.f32 %v7948, %v7924
    %v7960 = vmul.f32 %v7952, %v7925
    %v7961 = vadd.f32 %v7911, %v7954
    %v7962 = vadd.f32 %v7912, %v7955
    %v7963 = vadd.f32 %v7913, %v7956
    %v7964 = vadd.f32 %v7914, %v7957
    %v7965 = vadd.f32 %v7915, %v7958
    %v7966 = vadd.f32 %v7916, %v7959
    %v7967 = vadd.f32 %v7917, %v7960
    %s7968 = scalar_lea.vmem %s13, 392
    %v7969 = vld [vmem:[%s7968] sm:$0xff]
    %v7970 = vld [vmem:[%s7968 + $0x8] sm:$0xff]
    %v7971 = vld [vmem:[%s7968 + $0x10] sm:$0xff]
    %v7972 = vld [vmem:[%s7968 + $0x18] sm:$0xff]
    %v7973 = vld [vmem:[%s7968 + $0x20] sm:$0xff]
    %v7974 = vld [vmem:[%s7968 + $0x28] sm:$0xff]
    %v7975 = vld [vmem:[%s7968 + $0x30] sm:$0x1]
    %7976 = vset.pattern.permute.xlu0 7
    %7977 = vperm.xlu0 %7976, %v7605
    %v7978 = vpop.permute.xlu0 %7977
    %7980 = vset.pattern.permute.xlu0 7
    %7981 = vperm.xlu0 %7980, %v7606
    %v7982 = vpop.permute.xlu0 %7981
    %7984 = vset.pattern.permute.xlu0 7
    %7985 = vperm.xlu0 %7984, %v7607
    %v7986 = vpop.permute.xlu0 %7985
    %7988 = vset.pattern.permute.xlu0 7
    %7989 = vperm.xlu0 %7988, %v7608
    %v7990 = vpop.permute.xlu0 %7989
    %7992 = vset.pattern.permute.xlu0 7
    %7993 = vperm.xlu0 %7992, %v7609
    %v7994 = vpop.permute.xlu0 %7993
    %7996 = vset.pattern.permute.xlu0 7
    %7997 = vperm.xlu0 %7996, %v7610
    %v7998 = vpop.permute.xlu0 %7997
    %8000 = vset.pattern.permute.xlu0 7
    %8001 = vperm.xlu0 %8000, %v7611
    %v8002 = vpop.permute.xlu0 %8001
    %v8004 = vmul.f32 %v7978, %v7969
    %v8005 = vmul.f32 %v7982, %v7970
    %v8006 = vmul.f32 %v7986, %v7971
    %v8007 = vmul.f32 %v7990, %v7972
    %v8008 = vmul.f32 %v7994, %v7973
    %v8009 = vmul.f32 %v7998, %v7974
    %v8010 = vmul.f32 %v8002, %v7975
    %v8011 = vadd.f32 %v7961, %v8004
    %v8012 = vadd.f32 %v7962, %v8005
    %v8013 = vadd.f32 %v7963, %v8006
    %v8014 = vadd.f32 %v7964, %v8007
    %v8015 = vadd.f32 %v7965, %v8008
    %v8016 = vadd.f32 %v7966, %v8009
    %v8017 = vadd.f32 %v7967, %v8010
    %s8018 = scalar_lea.vmem %s13, 448
    %v8019 = vld [vmem:[%s8018] sm:$0xff]
    %v8020 = vld [vmem:[%s8018 + $0x8] sm:$0xff]
    %v8021 = vld [vmem:[%s8018 + $0x10] sm:$0xff]
    %v8022 = vld [vmem:[%s8018 + $0x18] sm:$0xff]
    %v8023 = vld [vmem:[%s8018 + $0x20] sm:$0xff]
    %v8024 = vld [vmem:[%s8018 + $0x28] sm:$0xff]
    %v8025 = vld [vmem:[%s8018 + $0x30] sm:$0x1]
    %8026 = vset.pattern.permute.xlu0 8
    %8027 = vperm.xlu0 %8026, %v7605
    %v8028 = vpop.permute.xlu0 %8027
    %8030 = vset.pattern.permute.xlu0 8
    %8031 = vperm.xlu0 %8030, %v7606
    %v8032 = vpop.permute.xlu0 %8031
    %8034 = vset.pattern.permute.xlu0 8
    %8035 = vperm.xlu0 %8034, %v7607
    %v8036 = vpop.permute.xlu0 %8035
    %8038 = vset.pattern.permute.xlu0 8
    %8039 = vperm.xlu0 %8038, %v7608
    %v8040 = vpop.permute.xlu0 %8039
    %8042 = vset.pattern.permute.xlu0 8
    %8043 = vperm.xlu0 %8042, %v7609
    %v8044 = vpop.permute.xlu0 %8043
    %8046 = vset.pattern.permute.xlu0 8
    %8047 = vperm.xlu0 %8046, %v7610
    %v8048 = vpop.permute.xlu0 %8047
    %8050 = vset.pattern.permute.xlu0 8
    %8051 = vperm.xlu0 %8050, %v7611
    %v8052 = vpop.permute.xlu0 %8051
    %v8054 = vmul.f32 %v8028, %v8019
    %v8055 = vmul.f32 %v8032, %v8020
    %v8056 = vmul.f32 %v8036, %v8021
    %v8057 = vmul.f32 %v8040, %v8022
    %v8058 = vmul.f32 %v8044, %v8023
    %v8059 = vmul.f32 %v8048, %v8024
    %v8060 = vmul.f32 %v8052, %v8025
    %v8061 = vadd.f32 %v8011, %v8054
    %v8062 = vadd.f32 %v8012, %v8055
    %v8063 = vadd.f32 %v8013, %v8056
    %v8064 = vadd.f32 %v8014, %v8057
    %v8065 = vadd.f32 %v8015, %v8058
    %v8066 = vadd.f32 %v8016, %v8059
    %v8067 = vadd.f32 %v8017, %v8060
    %s8068 = scalar_lea.vmem %s13, 504
    %v8069 = vld [vmem:[%s8068] sm:$0xff]
    %v8070 = vld [vmem:[%s8068 + $0x8] sm:$0xff]
    %v8071 = vld [vmem:[%s8068 + $0x10] sm:$0xff]
    %v8072 = vld [vmem:[%s8068 + $0x18] sm:$0xff]
    %v8073 = vld [vmem:[%s8068 + $0x20] sm:$0xff]
    %v8074 = vld [vmem:[%s8068 + $0x28] sm:$0xff]
    %v8075 = vld [vmem:[%s8068 + $0x30] sm:$0x1]
    %8076 = vset.pattern.permute.xlu0 9
    %8077 = vperm.xlu0 %8076, %v7605
    %v8078 = vpop.permute.xlu0 %8077
    %8080 = vset.pattern.permute.xlu0 9
    %8081 = vperm.xlu0 %8080, %v7606
    %v8082 = vpop.permute.xlu0 %8081
    %8084 = vset.pattern.permute.xlu0 9
    %8085 = vperm.xlu0 %8084, %v7607
    %v8086 = vpop.permute.xlu0 %8085
    %8088 = vset.pattern.permute.xlu0 9
    %8089 = vperm.xlu0 %8088, %v7608
    %v8090 = vpop.permute.xlu0 %8089
    %8092 = vset.pattern.permute.xlu0 9
    %8093 = vperm.xlu0 %8092, %v7609
    %v8094 = vpop.permute.xlu0 %8093
    %8096 = vset.pattern.permute.xlu0 9
    %8097 = vperm.xlu0 %8096, %v7610
    %v8098 = vpop.permute.xlu0 %8097
    %8100 = vset.pattern.permute.xlu0 9
    %8101 = vperm.xlu0 %8100, %v7611
    %v8102 = vpop.permute.xlu0 %8101
    %v8104 = vmul.f32 %v8078, %v8069
    %v8105 = vmul.f32 %v8082, %v8070
    %v8106 = vmul.f32 %v8086, %v8071
    %v8107 = vmul.f32 %v8090, %v8072
    %v8108 = vmul.f32 %v8094, %v8073
    %v8109 = vmul.f32 %v8098, %v8074
    %v8110 = vmul.f32 %v8102, %v8075
    %v8111 = vadd.f32 %v8061, %v8104
    %v8112 = vadd.f32 %v8062, %v8105
    %v8113 = vadd.f32 %v8063, %v8106
    %v8114 = vadd.f32 %v8064, %v8107
    %v8115 = vadd.f32 %v8065, %v8108
    %v8116 = vadd.f32 %v8066, %v8109
    %v8117 = vadd.f32 %v8067, %v8110
    %s8118 = scalar_lea.vmem %s13, 560
    %v8119 = vld [vmem:[%s8118] sm:$0xff]
    %v8120 = vld [vmem:[%s8118 + $0x8] sm:$0xff]
    %v8121 = vld [vmem:[%s8118 + $0x10] sm:$0xff]
    %v8122 = vld [vmem:[%s8118 + $0x18] sm:$0xff]
    %v8123 = vld [vmem:[%s8118 + $0x20] sm:$0xff]
    %v8124 = vld [vmem:[%s8118 + $0x28] sm:$0xff]
    %v8125 = vld [vmem:[%s8118 + $0x30] sm:$0x1]
    %8126 = vset.pattern.permute.xlu0 10
    %8127 = vperm.xlu0 %8126, %v7605
    %v8128 = vpop.permute.xlu0 %8127
    %8130 = vset.pattern.permute.xlu0 10
    %8131 = vperm.xlu0 %8130, %v7606
    %v8132 = vpop.permute.xlu0 %8131
    %8134 = vset.pattern.permute.xlu0 10
    %8135 = vperm.xlu0 %8134, %v7607
    %v8136 = vpop.permute.xlu0 %8135
    %8138 = vset.pattern.permute.xlu0 10
    %8139 = vperm.xlu0 %8138, %v7608
    %v8140 = vpop.permute.xlu0 %8139
    %8142 = vset.pattern.permute.xlu0 10
    %8143 = vperm.xlu0 %8142, %v7609
    %v8144 = vpop.permute.xlu0 %8143
    %8146 = vset.pattern.permute.xlu0 10
    %8147 = vperm.xlu0 %8146, %v7610
    %v8148 = vpop.permute.xlu0 %8147
    %8150 = vset.pattern.permute.xlu0 10
    %8151 = vperm.xlu0 %8150, %v7611
    %v8152 = vpop.permute.xlu0 %8151
    %v8154 = vmul.f32 %v8128, %v8119
    %v8155 = vmul.f32 %v8132, %v8120
    %v8156 = vmul.f32 %v8136, %v8121
    %v8157 = vmul.f32 %v8140, %v8122
    %v8158 = vmul.f32 %v8144, %v8123
    %v8159 = vmul.f32 %v8148, %v8124
    %v8160 = vmul.f32 %v8152, %v8125
    %v8161 = vadd.f32 %v8111, %v8154
    %v8162 = vadd.f32 %v8112, %v8155
    %v8163 = vadd.f32 %v8113, %v8156
    %v8164 = vadd.f32 %v8114, %v8157
    %v8165 = vadd.f32 %v8115, %v8158
    %v8166 = vadd.f32 %v8116, %v8159
    %v8167 = vadd.f32 %v8117, %v8160
    %s8168 = scalar_lea.vmem %s13, 616
    %v8169 = vld [vmem:[%s8168] sm:$0xff]
    %v8170 = vld [vmem:[%s8168 + $0x8] sm:$0xff]
    %v8171 = vld [vmem:[%s8168 + $0x10] sm:$0xff]
    %v8172 = vld [vmem:[%s8168 + $0x18] sm:$0xff]
    %v8173 = vld [vmem:[%s8168 + $0x20] sm:$0xff]
    %v8174 = vld [vmem:[%s8168 + $0x28] sm:$0xff]
    %v8175 = vld [vmem:[%s8168 + $0x30] sm:$0x1]
    %8176 = vset.pattern.permute.xlu0 11
    %8177 = vperm.xlu0 %8176, %v7605
    %v8178 = vpop.permute.xlu0 %8177
    %8180 = vset.pattern.permute.xlu0 11
    %8181 = vperm.xlu0 %8180, %v7606
    %v8182 = vpop.permute.xlu0 %8181
    %8184 = vset.pattern.permute.xlu0 11
    %8185 = vperm.xlu0 %8184, %v7607
    %v8186 = vpop.permute.xlu0 %8185
    %8188 = vset.pattern.permute.xlu0 11
    %8189 = vperm.xlu0 %8188, %v7608
    %v8190 = vpop.permute.xlu0 %8189
    %8192 = vset.pattern.permute.xlu0 11
    %8193 = vperm.xlu0 %8192, %v7609
    %v8194 = vpop.permute.xlu0 %8193
    %8196 = vset.pattern.permute.xlu0 11
    %8197 = vperm.xlu0 %8196, %v7610
    %v8198 = vpop.permute.xlu0 %8197
    %8200 = vset.pattern.permute.xlu0 11
    %8201 = vperm.xlu0 %8200, %v7611
    %v8202 = vpop.permute.xlu0 %8201
    %v8204 = vmul.f32 %v8178, %v8169
    %v8205 = vmul.f32 %v8182, %v8170
    %v8206 = vmul.f32 %v8186, %v8171
    %v8207 = vmul.f32 %v8190, %v8172
    %v8208 = vmul.f32 %v8194, %v8173
    %v8209 = vmul.f32 %v8198, %v8174
    %v8210 = vmul.f32 %v8202, %v8175
    %v8211 = vadd.f32 %v8161, %v8204
    %v8212 = vadd.f32 %v8162, %v8205
    %v8213 = vadd.f32 %v8163, %v8206
    %v8214 = vadd.f32 %v8164, %v8207
    %v8215 = vadd.f32 %v8165, %v8208
    %v8216 = vadd.f32 %v8166, %v8209
    %v8217 = vadd.f32 %v8167, %v8210
    %vm8218 = vcmask 80896
    %v8219 = vsel %vm8218, %v8211, 0.0
    %v8220 = vsel %vm8218, %v8212, 0.0
    %v8221 = vadd.f32 %v8219, %v8220
    %v8222 = vsel %vm8218, %v8213, 0.0
    %v8223 = vadd.f32 %v8221, %v8222
    %v8224 = vsel %vm8218, %v8214, 0.0
    %v8225 = vadd.f32 %v8223, %v8224
    %v8226 = vsel %vm8218, %v8215, 0.0
    %v8227 = vadd.f32 %v8225, %v8226
    %v8228 = vsel %vm8218, %v8216, 0.0
    %v8229 = vadd.f32 %v8227, %v8228
    %vm8230 = vcmask 73728
    %v8231 = vsel %vm8230, %v8217, 0.0
    %v8232 = vadd.f32 %v8229, %v8231
    %v8233 = vrot.slane %v8232, 4
    %v8234 = vadd.f32 %v8232, %v8233
    %v8235 = vrot.slane %v8234, 2
    %v8236 = vadd.f32 %v8234, %v8235
    %v8237 = vrot.slane %v8236, 1
    %v8238 = vadd.f32 %v8236, %v8237
    %v8239 = vld [vmem:[%s14] sm:$0x1]
    %v8240 = vadd.f32 %v8238, %v8239
    %8241 = vst.msk [vmem:[#allocation11] sm:$0x1] %vm8230, %v8240
    %v8242 = vld [vmem:[#allocation10 + $0x31] sm:$0xff]
    %v8243 = vld [vmem:[#allocation10 + $0x39] sm:$0xff]
    %v8244 = vld [vmem:[#allocation10 + $0x41] sm:$0xff]
    %v8245 = vld [vmem:[#allocation10 + $0x49] sm:$0xff]
    %v8246 = vld [vmem:[#allocation10 + $0x51] sm:$0xff]
    %v8247 = vld [vmem:[#allocation10 + $0x59] sm:$0xff]
    %v8248 = vld [vmem:[#allocation10 + $0x61] sm:$0x1]
    %v8249 = vld [vmem:[%s13] sm:$0xff]
    %v8250 = vld [vmem:[%s13 + $0x8] sm:$0xff]
    %v8251 = vld [vmem:[%s13 + $0x10] sm:$0xff]
    %v8252 = vld [vmem:[%s13 + $0x18] sm:$0xff]
    %v8253 = vld [vmem:[%s13 + $0x20] sm:$0xff]
    %v8254 = vld [vmem:[%s13 + $0x28] sm:$0xff]
    %v8255 = vld [vmem:[%s13 + $0x30] sm:$0x1]
    %8257 = vset.pattern.permute.xlu0 0
    %8258 = vperm.xlu0 %8257, %v8242
    %v8259 = vpop.permute.xlu0 %8258
    %8262 = vset.pattern.permute.xlu0 0
    %8263 = vperm.xlu0 %8262, %v8243
    %v8264 = vpop.permute.xlu0 %8263
    %8267 = vset.pattern.permute.xlu0 0
    %8268 = vperm.xlu0 %8267, %v8244
    %v8269 = vpop.permute.xlu0 %8268
    %8272 = vset.pattern.permute.xlu0 0
    %8273 = vperm.xlu0 %8272, %v8245
    %v8274 = vpop.permute.xlu0 %8273
    %8277 = vset.pattern.permute.xlu0 0
    %8278 = vperm.xlu0 %8277, %v8246
    %v8279 = vpop.permute.xlu0 %8278
    %8282 = vset.pattern.permute.xlu0 0
    %8283 = vperm.xlu0 %8282, %v8247
    %v8284 = vpop.permute.xlu0 %8283
    %8287 = vset.pattern.permute.xlu0 0
    %8288 = vperm.xlu0 %8287, %v8248
    %v8289 = vpop.permute.xlu0 %8288
    %v8291 = vmul.f32 %v8259, %v8249
    %v8292 = vmul.f32 %v8264, %v8250
    %v8293 = vmul.f32 %v8269, %v8251
    %v8294 = vmul.f32 %v8274, %v8252
    %v8295 = vmul.f32 %v8279, %v8253
    %v8296 = vmul.f32 %v8284, %v8254
    %v8297 = vmul.f32 %v8289, %v8255
    %v8298 = vadd.f32 %v8291, 0.0
    %v8299 = vadd.f32 %v8292, 0.0
    %v8300 = vadd.f32 %v8293, 0.0
    %v8301 = vadd.f32 %v8294, 0.0
    %v8302 = vadd.f32 %v8295, 0.0
    %v8303 = vadd.f32 %v8296, 0.0
    %v8304 = vadd.f32 %v8297, 0.0
    %v8305 = vld [vmem:[%s7668] sm:$0xff]
    %v8306 = vld [vmem:[%s7668 + $0x8] sm:$0xff]
    %v8307 = vld [vmem:[%s7668 + $0x10] sm:$0xff]
    %v8308 = vld [vmem:[%s7668 + $0x18] sm:$0xff]
    %v8309 = vld [vmem:[%s7668 + $0x20] sm:$0xff]
    %v8310 = vld [vmem:[%s7668 + $0x28] sm:$0xff]
    %v8311 = vld [vmem:[%s7668 + $0x30] sm:$0x1]
    %8312 = vset.pattern.permute.xlu0 1
    %8313 = vperm.xlu0 %8312, %v8242
    %v8314 = vpop.permute.xlu0 %8313
    %8316 = vset.pattern.permute.xlu0 1
    %8317 = vperm.xlu0 %8316, %v8243
    %v8318 = vpop.permute.xlu0 %8317
    %8320 = vset.pattern.permute.xlu0 1
    %8321 = vperm.xlu0 %8320, %v8244
    %v8322 = vpop.permute.xlu0 %8321
    %8324 = vset.pattern.permute.xlu0 1
    %8325 = vperm.xlu0 %8324, %v8245
    %v8326 = vpop.permute.xlu0 %8325
    %8328 = vset.pattern.permute.xlu0 1
    %8329 = vperm.xlu0 %8328, %v8246
    %v8330 = vpop.permute.xlu0 %8329
    %8332 = vset.pattern.permute.xlu0 1
    %8333 = vperm.xlu0 %8332, %v8247
    %v8334 = vpop.permute.xlu0 %8333
    %8336 = vset.pattern.permute.xlu0 1
    %8337 = vperm.xlu0 %8336, %v8248
    %v8338 = vpop.permute.xlu0 %8337
    %v8340 = vmul.f32 %v8314, %v8305
    %v8341 = vmul.f32 %v8318, %v8306
    %v8342 = vmul.f32 %v8322, %v8307
    %v8343 = vmul.f32 %v8326, %v8308
    %v8344 = vmul.f32 %v8330, %v8309
    %v8345 = vmul.f32 %v8334, %v8310
    %v8346 = vmul.f32 %v8338, %v8311
    %v8347 = vadd.f32 %v8298, %v8340
    %v8348 = vadd.f32 %v8299, %v8341
    %v8349 = vadd.f32 %v8300, %v8342
    %v8350 = vadd.f32 %v8301, %v8343
    %v8351 = vadd.f32 %v8302, %v8344
    %v8352 = vadd.f32 %v8303, %v8345
    %v8353 = vadd.f32 %v8304, %v8346
    %v8354 = vld [vmem:[%s7718] sm:$0xff]
    %v8355 = vld [vmem:[%s7718 + $0x8] sm:$0xff]
    %v8356 = vld [vmem:[%s7718 + $0x10] sm:$0xff]
    %v8357 = vld [vmem:[%s7718 + $0x18] sm:$0xff]
    %v8358 = vld [vmem:[%s7718 + $0x20] sm:$0xff]
    %v8359 = vld [vmem:[%s7718 + $0x28] sm:$0xff]
    %v8360 = vld [vmem:[%s7718 + $0x30] sm:$0x1]
    %8361 = vset.pattern.permute.xlu0 2
    %8362 = vperm.xlu0 %8361, %v8242
    %v8363 = vpop.permute.xlu0 %8362
    %8365 = vset.pattern.permute.xlu0 2
    %8366 = vperm.xlu0 %8365, %v8243
    %v8367 = vpop.permute.xlu0 %8366
    %8369 = vset.pattern.permute.xlu0 2
    %8370 = vperm.xlu0 %8369, %v8244
    %v8371 = vpop.permute.xlu0 %8370
    %8373 = vset.pattern.permute.xlu0 2
    %8374 = vperm.xlu0 %8373, %v8245
    %v8375 = vpop.permute.xlu0 %8374
    %8377 = vset.pattern.permute.xlu0 2
    %8378 = vperm.xlu0 %8377, %v8246
    %v8379 = vpop.permute.xlu0 %8378
    %8381 = vset.pattern.permute.xlu0 2
    %8382 = vperm.xlu0 %8381, %v8247
    %v8383 = vpop.permute.xlu0 %8382
    %8385 = vset.pattern.permute.xlu0 2
    %8386 = vperm.xlu0 %8385, %v8248
    %v8387 = vpop.permute.xlu0 %8386
    %v8389 = vmul.f32 %v8363, %v8354
    %v8390 = vmul.f32 %v8367, %v8355
    %v8391 = vmul.f32 %v8371, %v8356
    %v8392 = vmul.f32 %v8375, %v8357
    %v8393 = vmul.f32 %v8379, %v8358
    %v8394 = vmul.f32 %v8383, %v8359
    %v8395 = vmul.f32 %v8387, %v8360
    %v8396 = vadd.f32 %v8347, %v8389
    %v8397 = vadd.f32 %v8348, %v8390
    %v8398 = vadd.f32 %v8349, %v8391
    %v8399 = vadd.f32 %v8350, %v8392
    %v8400 = vadd.f32 %v8351, %v8393
    %v8401 = vadd.f32 %v8352, %v8394
    %v8402 = vadd.f32 %v8353, %v8395
    %v8403 = vld [vmem:[%s7768] sm:$0xff]
    %v8404 = vld [vmem:[%s7768 + $0x8] sm:$0xff]
    %v8405 = vld [vmem:[%s7768 + $0x10] sm:$0xff]
    %v8406 = vld [vmem:[%s7768 + $0x18] sm:$0xff]
    %v8407 = vld [vmem:[%s7768 + $0x20] sm:$0xff]
    %v8408 = vld [vmem:[%s7768 + $0x28] sm:$0xff]
    %v8409 = vld [vmem:[%s7768 + $0x30] sm:$0x1]
    %8410 = vset.pattern.permute.xlu0 3
    %8411 = vperm.xlu0 %8410, %v8242
    %v8412 = vpop.permute.xlu0 %8411
    %8414 = vset.pattern.permute.xlu0 3
    %8415 = vperm.xlu0 %8414, %v8243
    %v8416 = vpop.permute.xlu0 %8415
    %8418 = vset.pattern.permute.xlu0 3
    %8419 = vperm.xlu0 %8418, %v8244
    %v8420 = vpop.permute.xlu0 %8419
    %8422 = vset.pattern.permute.xlu0 3
    %8423 = vperm.xlu0 %8422, %v8245
    %v8424 = vpop.permute.xlu0 %8423
    %8426 = vset.pattern.permute.xlu0 3
    %8427 = vperm.xlu0 %8426, %v8246
    %v8428 = vpop.permute.xlu0 %8427
    %8430 = vset.pattern.permute.xlu0 3
    %8431 = vperm.xlu0 %8430, %v8247
    %v8432 = vpop.permute.xlu0 %8431
    %8434 = vset.pattern.permute.xlu0 3
    %8435 = vperm.xlu0 %8434, %v8248
    %v8436 = vpop.permute.xlu0 %8435
    %v8438 = vmul.f32 %v8412, %v8403
    %v8439 = vmul.f32 %v8416, %v8404
    %v8440 = vmul.f32 %v8420, %v8405
    %v8441 = vmul.f32 %v8424, %v8406
    %v8442 = vmul.f32 %v8428, %v8407
    %v8443 = vmul.f32 %v8432, %v8408
    %v8444 = vmul.f32 %v8436, %v8409
    %v8445 = vadd.f32 %v8396, %v8438
    %v8446 = vadd.f32 %v8397, %v8439
    %v8447 = vadd.f32 %v8398, %v8440
    %v8448 = vadd.f32 %v8399, %v8441
    %v8449 = vadd.f32 %v8400, %v8442
    %v8450 = vadd.f32 %v8401, %v8443
    %v8451 = vadd.f32 %v8402, %v8444
    %v8452 = vld [vmem:[%s7818] sm:$0xff]
    %v8453 = vld [vmem:[%s7818 + $0x8] sm:$0xff]
    %v8454 = vld [vmem:[%s7818 + $0x10] sm:$0xff]
    %v8455 = vld [vmem:[%s7818 + $0x18] sm:$0xff]
    %v8456 = vld [vmem:[%s7818 + $0x20] sm:$0xff]
    %v8457 = vld [vmem:[%s7818 + $0x28] sm:$0xff]
    %v8458 = vld [vmem:[%s7818 + $0x30] sm:$0x1]
    %8459 = vset.pattern.permute.xlu0 4
    %8460 = vperm.xlu0 %8459, %v8242
    %v8461 = vpop.permute.xlu0 %8460
    %8463 = vset.pattern.permute.xlu0 4
    %8464 = vperm.xlu0 %8463, %v8243
    %v8465 = vpop.permute.xlu0 %8464
    %8467 = vset.pattern.permute.xlu0 4
    %8468 = vperm.xlu0 %8467, %v8244
    %v8469 = vpop.permute.xlu0 %8468
    %8471 = vset.pattern.permute.xlu0 4
    %8472 = vperm.xlu0 %8471, %v8245
    %v8473 = vpop.permute.xlu0 %8472
    %8475 = vset.pattern.permute.xlu0 4
    %8476 = vperm.xlu0 %8475, %v8246
    %v8477 = vpop.permute.xlu0 %8476
    %8479 = vset.pattern.permute.xlu0 4
    %8480 = vperm.xlu0 %8479, %v8247
    %v8481 = vpop.permute.xlu0 %8480
    %8483 = vset.pattern.permute.xlu0 4
    %8484 = vperm.xlu0 %8483, %v8248
    %v8485 = vpop.permute.xlu0 %8484
    %v8487 = vmul.f32 %v8461, %v8452
    %v8488 = vmul.f32 %v8465, %v8453
    %v8489 = vmul.f32 %v8469, %v8454
    %v8490 = vmul.f32 %v8473, %v8455
    %v8491 = vmul.f32 %v8477, %v8456
    %v8492 = vmul.f32 %v8481, %v8457
    %v8493 = vmul.f32 %v8485, %v8458
    %v8494 = vadd.f32 %v8445, %v8487
    %v8495 = vadd.f32 %v8446, %v8488
    %v8496 = vadd.f32 %v8447, %v8489
    %v8497 = vadd.f32 %v8448, %v8490
    %v8498 = vadd.f32 %v8449, %v8491
    %v8499 = vadd.f32 %v8450, %v8492
    %v8500 = vadd.f32 %v8451, %v8493
    %v8501 = vld [vmem:[%s7868] sm:$0xff]
    %v8502 = vld [vmem:[%s7868 + $0x8] sm:$0xff]
    %v8503 = vld [vmem:[%s7868 + $0x10] sm:$0xff]
    %v8504 = vld [vmem:[%s7868 + $0x18] sm:$0xff]
    %v8505 = vld [vmem:[%s7868 + $0x20] sm:$0xff]
    %v8506 = vld [vmem:[%s7868 + $0x28] sm:$0xff]
    %v8507 = vld [vmem:[%s7868 + $0x30] sm:$0x1]
    %8508 = vset.pattern.permute.xlu0 5
    %8509 = vperm.xlu0 %8508, %v8242
    %v8510 = vpop.permute.xlu0 %8509
    %8512 = vset.pattern.permute.xlu0 5
    %8513 = vperm.xlu0 %8512, %v8243
    %v8514 = vpop.permute.xlu0 %8513
    %8516 = vset.pattern.permute.xlu0 5
    %8517 = vperm.xlu0 %8516, %v8244
    %v8518 = vpop.permute.xlu0 %8517
    %8520 = vset.pattern.permute.xlu0 5
    %8521 = vperm.xlu0 %8520, %v8245
    %v8522 = vpop.permute.xlu0 %8521
    %8524 = vset.pattern.permute.xlu0 5
    %8525 = vperm.xlu0 %8524, %v8246
    %v8526 = vpop.permute.xlu0 %8525
    %8528 = vset.pattern.permute.xlu0 5
    %8529 = vperm.xlu0 %8528, %v8247
    %v8530 = vpop.permute.xlu0 %8529
    %8532 = vset.pattern.permute.xlu0 5
    %8533 = vperm.xlu0 %8532, %v8248
    %v8534 = vpop.permute.xlu0 %8533
    %v8536 = vmul.f32 %v8510, %v8501
    %v8537 = vmul.f32 %v8514, %v8502
    %v8538 = vmul.f32 %v8518, %v8503
    %v8539 = vmul.f32 %v8522, %v8504
    %v8540 = vmul.f32 %v8526, %v8505
    %v8541 = vmul.f32 %v8530, %v8506
    %v8542 = vmul.f32 %v8534, %v8507
    %v8543 = vadd.f32 %v8494, %v8536
    %v8544 = vadd.f32 %v8495, %v8537
    %v8545 = vadd.f32 %v8496, %v8538
    %v8546 = vadd.f32 %v8497, %v8539
    %v8547 = vadd.f32 %v8498, %v8540
    %v8548 = vadd.f32 %v8499, %v8541
    %v8549 = vadd.f32 %v8500, %v8542
    %v8550 = vld [vmem:[%s7918] sm:$0xff]
    %v8551 = vld [vmem:[%s7918 + $0x8] sm:$0xff]
    %v8552 = vld [vmem:[%s7918 + $0x10] sm:$0xff]
    %v8553 = vld [vmem:[%s7918 + $0x18] sm:$0xff]
    %v8554 = vld [vmem:[%s7918 + $0x20] sm:$0xff]
    %v8555 = vld [vmem:[%s7918 + $0x28] sm:$0xff]
    %v8556 = vld [vmem:[%s7918 + $0x30] sm:$0x1]
    %8557 = vset.pattern.permute.xlu0 6
    %8558 = vperm.xlu0 %8557, %v8242
    %v8559 = vpop.permute.xlu0 %8558
    %8561 = vset.pattern.permute.xlu0 6
    %8562 = vperm.xlu0 %8561, %v8243
    %v8563 = vpop.permute.xlu0 %8562
    %8565 = vset.pattern.permute.xlu0 6
    %8566 = vperm.xlu0 %8565, %v8244
    %v8567 = vpop.permute.xlu0 %8566
    %8569 = vset.pattern.permute.xlu0 6
    %8570 = vperm.xlu0 %8569, %v8245
    %v8571 = vpop.permute.xlu0 %8570
    %8573 = vset.pattern.permute.xlu0 6
    %8574 = vperm.xlu0 %8573, %v8246
    %v8575 = vpop.permute.xlu0 %8574
    %8577 = vset.pattern.permute.xlu0 6
    %8578 = vperm.xlu0 %8577, %v8247
    %v8579 = vpop.permute.xlu0 %8578
    %8581 = vset.pattern.permute.xlu0 6
    %8582 = vperm.xlu0 %8581, %v8248
    %v8583 = vpop.permute.xlu0 %8582
    %v8585 = vmul.f32 %v8559, %v8550
    %v8586 = vmul.f32 %v8563, %v8551
    %v8587 = vmul.f32 %v8567, %v8552
    %v8588 = vmul.f32 %v8571, %v8553
    %v8589 = vmul.f32 %v8575, %v8554
    %v8590 = vmul.f32 %v8579, %v8555
    %v8591 = vmul.f32 %v8583, %v8556
    %v8592 = vadd.f32 %v8543, %v8585
    %v8593 = vadd.f32 %v8544, %v8586
    %v8594 = vadd.f32 %v8545, %v8587
    %v8595 = vadd.f32 %v8546, %v8588
    %v8596 = vadd.f32 %v8547, %v8589
    %v8597 = vadd.f32 %v8548, %v8590
    %v8598 = vadd.f32 %v8549, %v8591
    %v8599 = vld [vmem:[%s7968] sm:$0xff]
    %v8600 = vld [vmem:[%s7968 + $0x8] sm:$0xff]
    %v8601 = vld [vmem:[%s7968 + $0x10] sm:$0xff]
    %v8602 = vld [vmem:[%s7968 + $0x18] sm:$0xff]
    %v8603 = vld [vmem:[%s7968 + $0x20] sm:$0xff]
    %v8604 = vld [vmem:[%s7968 + $0x28] sm:$0xff]
    %v8605 = vld [vmem:[%s7968 + $0x30] sm:$0x1]
    %8606 = vset.pattern.permute.xlu0 7
    %8607 = vperm.xlu0 %8606, %v8242
    %v8608 = vpop.permute.xlu0 %8607
    %8610 = vset.pattern.permute.xlu0 7
    %8611 = vperm.xlu0 %8610, %v8243
    %v8612 = vpop.permute.xlu0 %8611
    %8614 = vset.pattern.permute.xlu0 7
    %8615 = vperm.xlu0 %8614, %v8244
    %v8616 = vpop.permute.xlu0 %8615
    %8618 = vset.pattern.permute.xlu0 7
    %8619 = vperm.xlu0 %8618, %v8245
    %v8620 = vpop.permute.xlu0 %8619
    %8622 = vset.pattern.permute.xlu0 7
    %8623 = vperm.xlu0 %8622, %v8246
    %v8624 = vpop.permute.xlu0 %8623
    %8626 = vset.pattern.permute.xlu0 7
    %8627 = vperm.xlu0 %8626, %v8247
    %v8628 = vpop.permute.xlu0 %8627
    %8630 = vset.pattern.permute.xlu0 7
    %8631 = vperm.xlu0 %8630, %v8248
    %v8632 = vpop.permute.xlu0 %8631
    %v8634 = vmul.f32 %v8608, %v8599
    %v8635 = vmul.f32 %v8612, %v8600
    %v8636 = vmul.f32 %v8616, %v8601
    %v8637 = vmul.f32 %v8620, %v8602
    %v8638 = vmul.f32 %v8624, %v8603
    %v8639 = vmul.f32 %v8628, %v8604
    %v8640 = vmul.f32 %v8632, %v8605
    %v8641 = vadd.f32 %v8592, %v8634
    %v8642 = vadd.f32 %v8593, %v8635
    %v8643 = vadd.f32 %v8594, %v8636
    %v8644 = vadd.f32 %v8595, %v8637
    %v8645 = vadd.f32 %v8596, %v8638
    %v8646 = vadd.f32 %v8597, %v8639
    %v8647 = vadd.f32 %v8598, %v8640
    %v8648 = vld [vmem:[%s8018] sm:$0xff]
    %v8649 = vld [vmem:[%s8018 + $0x8] sm:$0xff]
    %v8650 = vld [vmem:[%s8018 + $0x10] sm:$0xff]
    %v8651 = vld [vmem:[%s8018 + $0x18] sm:$0xff]
    %v8652 = vld [vmem:[%s8018 + $0x20] sm:$0xff]
    %v8653 = vld [vmem:[%s8018 + $0x28] sm:$0xff]
    %v8654 = vld [vmem:[%s8018 + $0x30] sm:$0x1]
    %8655 = vset.pattern.permute.xlu0 8
    %8656 = vperm.xlu0 %8655, %v8242
    %v8657 = vpop.permute.xlu0 %8656
    %8659 = vset.pattern.permute.xlu0 8
    %8660 = vperm.xlu0 %8659, %v8243
    %v8661 = vpop.permute.xlu0 %8660
    %8663 = vset.pattern.permute.xlu0 8
    %8664 = vperm.xlu0 %8663, %v8244
    %v8665 = vpop.permute.xlu0 %8664
    %8667 = vset.pattern.permute.xlu0 8
    %8668 = vperm.xlu0 %8667, %v8245
    %v8669 = vpop.permute.xlu0 %8668
    %8671 = vset.pattern.permute.xlu0 8
    %8672 = vperm.xlu0 %8671, %v8246
    %v8673 = vpop.permute.xlu0 %8672
    %8675 = vset.pattern.permute.xlu0 8
    %8676 = vperm.xlu0 %8675, %v8247
    %v8677 = vpop.permute.xlu0 %8676
    %8679 = vset.pattern.permute.xlu0 8
    %8680 = vperm.xlu0 %8679, %v8248
    %v8681 = vpop.permute.xlu0 %8680
    %v8683 = vmul.f32 %v8657, %v8648
    %v8684 = vmul.f32 %v8661, %v8649
    %v8685 = vmul.f32 %v8665, %v8650
    %v8686 = vmul.f32 %v8669, %v8651
    %v8687 = vmul.f32 %v8673, %v8652
    %v8688 = vmul.f32 %v8677, %v8653
    %v8689 = vmul.f32 %v8681, %v8654
    %v8690 = vadd.f32 %v8641, %v8683
    %v8691 = vadd.f32 %v8642, %v8684
    %v8692 = vadd.f32 %v8643, %v8685
    %v8693 = vadd.f32 %v8644, %v8686
    %v8694 = vadd.f32 %v8645, %v8687
    %v8695 = vadd.f32 %v8646, %v8688
    %v8696 = vadd.f32 %v8647, %v8689
    %v8697 = vld [vmem:[%s8068] sm:$0xff]
    %v8698 = vld [vmem:[%s8068 + $0x8] sm:$0xff]
    %v8699 = vld [vmem:[%s8068 + $0x10] sm:$0xff]
    %v8700 = vld [vmem:[%s8068 + $0x18] sm:$0xff]
    %v8701 = vld [vmem:[%s8068 + $0x20] sm:$0xff]
    %v8702 = vld [vmem:[%s8068 + $0x28] sm:$0xff]
    %v8703 = vld [vmem:[%s8068 + $0x30] sm:$0x1]
    %8704 = vset.pattern.permute.xlu0 9
    %8705 = vperm.xlu0 %8704, %v8242
    %v8706 = vpop.permute.xlu0 %8705
    %8708 = vset.pattern.permute.xlu0 9
    %8709 = vperm.xlu0 %8708, %v8243
    %v8710 = vpop.permute.xlu0 %8709
    %8712 = vset.pattern.permute.xlu0 9
    %8713 = vperm.xlu0 %8712, %v8244
    %v8714 = vpop.permute.xlu0 %8713
    %8716 = vset.pattern.permute.xlu0 9
    %8717 = vperm.xlu0 %8716, %v8245
    %v8718 = vpop.permute.xlu0 %8717
    %8720 = vset.pattern.permute.xlu0 9
    %8721 = vperm.xlu0 %8720, %v8246
    %v8722 = vpop.permute.xlu0 %8721
    %8724 = vset.pattern.permute.xlu0 9
    %8725 = vperm.xlu0 %8724, %v8247
    %v8726 = vpop.permute.xlu0 %8725
    %8728 = vset.pattern.permute.xlu0 9
    %8729 = vperm.xlu0 %8728, %v8248
    %v8730 = vpop.permute.xlu0 %8729
    %v8732 = vmul.f32 %v8706, %v8697
    %v8733 = vmul.f32 %v8710, %v8698
    %v8734 = vmul.f32 %v8714, %v8699
    %v8735 = vmul.f32 %v8718, %v8700
    %v8736 = vmul.f32 %v8722, %v8701
    %v8737 = vmul.f32 %v8726, %v8702
    %v8738 = vmul.f32 %v8730, %v8703
    %v8739 = vadd.f32 %v8690, %v8732
    %v8740 = vadd.f32 %v8691, %v8733
    %v8741 = vadd.f32 %v8692, %v8734
    %v8742 = vadd.f32 %v8693, %v8735
    %v8743 = vadd.f32 %v8694, %v8736
    %v8744 = vadd.f32 %v8695, %v8737
    %v8745 = vadd.f32 %v8696, %v8738
    %v8746 = vld [vmem:[%s8118] sm:$0xff]
    %v8747 = vld [vmem:[%s8118 + $0x8] sm:$0xff]
    %v8748 = vld [vmem:[%s8118 + $0x10] sm:$0xff]
    %v8749 = vld [vmem:[%s8118 + $0x18] sm:$0xff]
    %v8750 = vld [vmem:[%s8118 + $0x20] sm:$0xff]
    %v8751 = vld [vmem:[%s8118 + $0x28] sm:$0xff]
    %v8752 = vld [vmem:[%s8118 + $0x30] sm:$0x1]
    %8753 = vset.pattern.permute.xlu0 10
    %8754 = vperm.xlu0 %8753, %v8242
    %v8755 = vpop.permute.xlu0 %8754
    %8757 = vset.pattern.permute.xlu0 10
    %8758 = vperm.xlu0 %8757, %v8243
    %v8759 = vpop.permute.xlu0 %8758
    %8761 = vset.pattern.permute.xlu0 10
    %8762 = vperm.xlu0 %8761, %v8244
    %v8763 = vpop.permute.xlu0 %8762
    %8765 = vset.pattern.permute.xlu0 10
    %8766 = vperm.xlu0 %8765, %v8245
    %v8767 = vpop.permute.xlu0 %8766
    %8769 = vset.pattern.permute.xlu0 10
    %8770 = vperm.xlu0 %8769, %v8246
    %v8771 = vpop.permute.xlu0 %8770
    %8773 = vset.pattern.permute.xlu0 10
    %8774 = vperm.xlu0 %8773, %v8247
    %v8775 = vpop.permute.xlu0 %8774
    %8777 = vset.pattern.permute.xlu0 10
    %8778 = vperm.xlu0 %8777, %v8248
    %v8779 = vpop.permute.xlu0 %8778
    %v8781 = vmul.f32 %v8755, %v8746
    %v8782 = vmul.f32 %v8759, %v8747
    %v8783 = vmul.f32 %v8763, %v8748
    %v8784 = vmul.f32 %v8767, %v8749
    %v8785 = vmul.f32 %v8771, %v8750
    %v8786 = vmul.f32 %v8775, %v8751
    %v8787 = vmul.f32 %v8779, %v8752
    %v8788 = vadd.f32 %v8739, %v8781
    %v8789 = vadd.f32 %v8740, %v8782
    %v8790 = vadd.f32 %v8741, %v8783
    %v8791 = vadd.f32 %v8742, %v8784
    %v8792 = vadd.f32 %v8743, %v8785
    %v8793 = vadd.f32 %v8744, %v8786
    %v8794 = vadd.f32 %v8745, %v8787
    %v8795 = vld [vmem:[%s8168] sm:$0xff]
    %v8796 = vld [vmem:[%s8168 + $0x8] sm:$0xff]
    %v8797 = vld [vmem:[%s8168 + $0x10] sm:$0xff]
    %v8798 = vld [vmem:[%s8168 + $0x18] sm:$0xff]
    %v8799 = vld [vmem:[%s8168 + $0x20] sm:$0xff]
    %v8800 = vld [vmem:[%s8168 + $0x28] sm:$0xff]
    %v8801 = vld [vmem:[%s8168 + $0x30] sm:$0x1]
    %8802 = vset.pattern.permute.xlu0 11
    %8803 = vperm.xlu0 %8802, %v8242
    %v8804 = vpop.permute.xlu0 %8803
    %8806 = vset.pattern.permute.xlu0 11
    %8807 = vperm.xlu0 %8806, %v8243
    %v8808 = vpop.permute.xlu0 %8807
    %8810 = vset.pattern.permute.xlu0 11
    %8811 = vperm.xlu0 %8810, %v8244
    %v8812 = vpop.permute.xlu0 %8811
    %8814 = vset.pattern.permute.xlu0 11
    %8815 = vperm.xlu0 %8814, %v8245
    %v8816 = vpop.permute.xlu0 %8815
    %8818 = vset.pattern.permute.xlu0 11
    %8819 = vperm.xlu0 %8818, %v8246
    %v8820 = vpop.permute.xlu0 %8819
    %8822 = vset.pattern.permute.xlu0 11
    %8823 = vperm.xlu0 %8822, %v8247
    %v8824 = vpop.permute.xlu0 %8823
    %8826 = vset.pattern.permute.xlu0 11
    %8827 = vperm.xlu0 %8826, %v8248
    %v8828 = vpop.permute.xlu0 %8827
    %v8830 = vmul.f32 %v8804, %v8795
    %v8831 = vmul.f32 %v8808, %v8796
    %v8832 = vmul.f32 %v8812, %v8797
    %v8833 = vmul.f32 %v8816, %v8798
    %v8834 = vmul.f32 %v8820, %v8799
    %v8835 = vmul.f32 %v8824, %v8800
    %v8836 = vmul.f32 %v8828, %v8801
    %v8837 = vadd.f32 %v8788, %v8830
    %v8838 = vadd.f32 %v8789, %v8831
    %v8839 = vadd.f32 %v8790, %v8832
    %v8840 = vadd.f32 %v8791, %v8833
    %v8841 = vadd.f32 %v8792, %v8834
    %v8842 = vadd.f32 %v8793, %v8835
    %v8843 = vadd.f32 %v8794, %v8836
    %v8844 = vsel %vm8218, %v8837, 0.0
    %v8845 = vsel %vm8218, %v8838, 0.0
    %v8846 = vadd.f32 %v8844, %v8845
    %v8847 = vsel %vm8218, %v8839, 0.0
    %v8848 = vadd.f32 %v8846, %v8847
    %v8849 = vsel %vm8218, %v8840, 0.0
    %v8850 = vadd.f32 %v8848, %v8849
    %v8851 = vsel %vm8218, %v8841, 0.0
    %v8852 = vadd.f32 %v8850, %v8851
    %v8853 = vsel %vm8218, %v8842, 0.0
    %v8854 = vadd.f32 %v8852, %v8853
    %v8855 = vsel %vm8230, %v8843, 0.0
    %v8856 = vadd.f32 %v8854, %v8855
    %v8857 = vrot.slane %v8856, 4
    %v8858 = vadd.f32 %v8856, %v8857
    %v8859 = vrot.slane %v8858, 2
    %v8860 = vadd.f32 %v8858, %v8859
    %v8861 = vrot.slane %v8860, 1
    %v8862 = vadd.f32 %v8860, %v8861
    %v8863 = vld [vmem:[%s14] sm:$0x1]
    %v8864 = vadd.f32 %v8862, %v8863
    %8865 = vst.msk [vmem:[#allocation11 + $0x1] sm:$0x1] %vm8230, %v8864
    // Predicated region
    $region62: #{lenet_forward.1} parent=1 // pred_check
      _
    $region63: #{lenet_forward.1} parent=1 // pred_check_branch
      %8867 = sbr.rel (0) target = $region65
    $region64: #{lenet_forward.1} parent=1 // pred_region
      %s8869 = ssub.s32 32, 32
      %8870 = vsyncadd [#allocation12], %s8869
      %s8872 = sshll.u32 [#allocation11], 4
      %s8873 = int_to_ptr.vmem [resolvable:$true] %s8872
      %8875 = dma.vmem_to_hbm [thread:$0]  %s8873, 32, %s15, [#allocation12]
    $region65: #{lenet_forward.1} parent=1 // pred_fallthru
      _
    // Predicated region
    $region66: #{lenet_forward.1} parent=1 // pred_check
      _
    $region67: #{lenet_forward.1} parent=1 // pred_check_branch
      %8877 = sbr.rel (0) target = $region69
    $region68: #{lenet_forward.1} parent=1 // pred_region
      %8878 = dma.done [#allocation12], 32
    $region69: #{lenet_forward.1} parent=1 // pred_fallthru
      _
    %8879 = vsyncpa [#allocation12], 1

</llo_original>
